<compile_context>
chip_gen: v7x
topology: tpu7x:2x2x1
jax: 0.10.0
libtpu: 0.0.40
codegen_flags: <defaults>
</compile_context>

<pallas_src>
import jax
import jax.numpy as jnp
from jax.experimental import pallas as pl
from jax.experimental.pallas import tpu as pltpu

EXPANSION = 2                     # ResNeXtBottleneck.expansion
TM_MAX = 512                      # M tile: ~85% of HBM roofline vs ~29% at 128
TKN_MAX = 512                     # K / N tile caps
VMEM_LIMIT = 48 * 1024 * 1024     # explicit scoped-VMEM budget (v7x: 64 MiB phys)


def _round_up(x, m):
    return (x + m - 1) // m * m


def _pick_tile(dim, max_tile=TKN_MAX, align=128):
    """Largest tile <= max_tile that is a multiple of `align` and divides `dim`
    (or the full dim if it already fits / nothing divides)."""
    if dim <= max_tile:
        return dim
    t = (max_tile // align) * align
    while t >= align:
        if dim % t == 0:
            return t
        t -= align
    return dim


def _pick_m_tile(M, max_tm=TM_MAX):
    Mp = _round_up(M, 8)
    if Mp <= max_tm:
        return Mp, Mp
    for tm in (512, 256, 128):
        if Mp % tm == 0:
            return Mp, tm
    Mp = _round_up(Mp, 128)
    return Mp, 128


# ---------------------------------------------------------------------------
# Pallas kernel: K-tiled matmul (bf16 x bf16 -> f32 accumulate) with fused
# folded-BN bias, optional residual add and ReLU in the epilogue.
# ---------------------------------------------------------------------------
def _make_fused_kernel(add_residual, apply_relu):
    def _epilogue(acc_ref, sh_ref, res_ref, o_ref):
        y = acc_ref[...] + sh_ref[...]
        if add_residual:
            y = y + res_ref[...].astype(jnp.float32)
        if apply_relu:
            y = jnp.maximum(y, 0.0)
        o_ref[...] = y.astype(o_ref.dtype)

    if add_residual:
        def kernel(x_ref, w_ref, sh_ref, res_ref, o_ref, acc_ref):
            k = pl.program_id(2)

            @pl.when(k == 0)
            def _():
                acc_ref[...] = jnp.zeros_like(acc_ref)

            acc_ref[...] += jnp.dot(x_ref[...], w_ref[...],
                                    preferred_element_type=jnp.float32)

            @pl.when(k == pl.num_programs(2) - 1)
            def _():
                _epilogue(acc_ref, sh_ref, res_ref, o_ref)
    else:
        def kernel(x_ref, w_ref, sh_ref, o_ref, acc_ref):
            k = pl.program_id(2)

            @pl.when(k == 0)
            def _():
                acc_ref[...] = jnp.zeros_like(acc_ref)

            acc_ref[...] += jnp.dot(x_ref[...], w_ref[...],
                                    preferred_element_type=jnp.float32)

            @pl.when(k == pl.num_programs(2) - 1)
            def _():
                _epilogue(acc_ref, sh_ref, None, o_ref)

    return kernel


def matmul_bn_act(x, w, shift, residual=None, relu=True):
    """y = act(x @ w + shift [+ residual]); bf16 operands, fp32 accumulation."""
    M, K = x.shape
    K2, N = w.shape
    assert K == K2
    Mp, tm = _pick_m_tile(M)
    tk = _pick_tile(K)
    tn = _pick_tile(N)

    x = x.astype(jnp.bfloat16)
    w = w.astype(jnp.bfloat16)
    if Mp != M:
        x = jnp.pad(x, ((0, Mp - M), (0, 0)))
    sh = shift.reshape(1, N).astype(jnp.float32)

    ins = [x, w, sh]
    in_specs = [
        pl.BlockSpec((tm, tk), lambda i, j, k: (i, k)),
        pl.BlockSpec((tk, tn), lambda i, j, k: (k, j)),
        pl.BlockSpec((1, tn), lambda i, j, k: (0, j)),
    ]
    if residual is not None:
        r = residual.astype(jnp.bfloat16)
        if Mp != M:
            r = jnp.pad(r, ((0, Mp - M), (0, 0)))
        ins.append(r)
        in_specs.append(pl.BlockSpec((tm, tn), lambda i, j, k: (i, j)))

    out = pl.pallas_call(
        _make_fused_kernel(residual is not None, relu),
        out_shape=jax.ShapeDtypeStruct((Mp, N), jnp.bfloat16),
        grid=(Mp // tm, N // tn, K // tk),
        in_specs=in_specs,
        out_specs=pl.BlockSpec((tm, tn), lambda i, j, k: (i, j)),
        scratch_shapes=[pltpu.VMEM((tm, tn), jnp.float32)],
        compiler_params=pltpu.CompilerParams(
            dimension_semantics=("parallel", "parallel", "arbitrary"),
            vmem_limit_bytes=VMEM_LIMIT),
    )(*ins)
    return out[:M] if Mp != M else out


def matmul_bn_act_ref(x, w, shift, residual=None, relu=True):
    """Pure-JAX reference of the fused kernel (same bf16-in / f32-acc math)."""
    y = jnp.dot(x.astype(jnp.bfloat16), w.astype(jnp.bfloat16),
                preferred_element_type=jnp.float32)
    y = y + shift[None, :].astype(jnp.float32)
    if residual is not None:
        y = y + residual.astype(jnp.float32)
    if relu:
        y = jnp.maximum(y, 0.0)
    return y.astype(jnp.bfloat16)


# ---------------------------------------------------------------------------
# Grouped 3x3x3 conv (pad=1, stride) tiled over group chunks
# ---------------------------------------------------------------------------
def _im2col_group_chunks(x, stride, n_chunks, chunk_lanes):
    """3x3x3 / pad=1 im2col laid out per group chunk: (G, M, 27*chunk_lanes) bf16."""
    Nb, D, H, W, C = x.shape
    Do = (D + 2 - 3) // stride + 1
    Ho = (H + 2 - 3) // stride + 1
    Wo = (W + 2 - 3) // stride + 1
    xp = jnp.pad(x, ((0, 0), (1, 1), (1, 1), (1, 1), (0, 0)))
    cols = []
    for kd in range(3):
        for kh in range(3):
            for kw in range(3):
                cols.append(xp[:,
                               kd:kd + (Do - 1) * stride + 1:stride,
                               kh:kh + (Ho - 1) * stride + 1:stride,
                               kw:kw + (Wo - 1) * stride + 1:stride, :])
    patches = jnp.stack(cols, axis=4)            # (Nb, Do, Ho, Wo, 27, C) bf16
    M = Nb * Do * Ho * Wo
    patches = patches.reshape(M, 27, n_chunks, chunk_lanes)
    patches = jnp.transpose(patches, (2, 0, 1, 3)).reshape(
        n_chunks, M, 27 * chunk_lanes)
    return patches, (Do, Ho, Wo)


def grouped_conv_bn_relu(x, w_chunks, shift, stride):
    """Grouped 3x3x3 conv + BN + ReLU: grid over (M tiles, group chunks, K tiles)
    so only the block-diagonal weight chunk for each group chunk hits the MXU."""
    Nb, D, H, W, C = x.shape
    G, Kc, cl = w_chunks.shape
    patches, (Do, Ho, Wo) = _im2col_group_chunks(
        x.astype(jnp.bfloat16), stride, G, cl)
    M = Nb * Do * Ho * Wo
    Mp, tm = _pick_m_tile(M)
    if Mp != M:
        patches = jnp.pad(patches, ((0, 0), (0, Mp - M), (0, 0)))
    tk = _pick_tile(Kc)
    sh = shift.reshape(1, C).astype(jnp.float32)

    out = pl.pallas_call(
        _make_fused_kernel(False, True),
        out_shape=jax.ShapeDtypeStruct((Mp, C), jnp.bfloat16),
        grid=(Mp // tm, G, Kc // tk),
        in_specs=[
            pl.BlockSpec((None, tm, tk), lambda i, g, k: (g, i, k)),
            pl.BlockSpec((None, tk, cl), lambda i, g, k: (g, k, 0)),
            pl.BlockSpec((1, cl), lambda i, g, k: (0, g)),
        ],
        out_specs=pl.BlockSpec((tm, cl), lambda i, g, k: (i, g)),
        scratch_shapes=[pltpu.VMEM((tm, cl), jnp.float32)],
        compiler_params=pltpu.CompilerParams(
            dimension_semantics=("parallel", "parallel", "arbitrary"),
            vmem_limit_bytes=VMEM_LIMIT),
    )(patches, w_chunks.astype(jnp.bfloat16), sh)
    out = out[:M] if Mp != M else out
    return out.reshape(Nb, Do, Ho, Wo, C)


def grouped_conv_bn_relu_ref(x, w_chunks, shift, stride):
    """Pure-JAX reference for the chunked grouped conv (identical math)."""
    Nb, D, H, W, C = x.shape
    G, Kc, cl = w_chunks.shape
    patches, (Do, Ho, Wo) = _im2col_group_chunks(
        x.astype(jnp.bfloat16), stride, G, cl)
    y = jnp.einsum("gmk,gkn->gmn", patches, w_chunks.astype(jnp.bfloat16),
                   preferred_element_type=jnp.float32)
    y = y + shift.reshape(G, 1, cl).astype(jnp.float32)
    y = jnp.maximum(y, 0.0)
    M = Nb * Do * Ho * Wo
    y = jnp.transpose(y, (1, 0, 2)).reshape(M, C).astype(jnp.bfloat16)
    return y.reshape(Nb, Do, Ho, Wo, C)


# ---------------------------------------------------------------------------
# Parameter init (deterministic kaiming-style; BN eval-mode, scale folded)
# ---------------------------------------------------------------------------
def _bn_scale_shift(c, eps=1e-5):
    gamma = jnp.ones((c,), jnp.float32)
    beta = jnp.zeros((c,), jnp.float32)
    mean = jnp.zeros((c,), jnp.float32)
    var = jnp.ones((c,), jnp.float32)
    scale = gamma / jnp.sqrt(var + eps)
    shift = beta - mean * scale
    return scale, shift


def _conv1x1_folded(key, cin, cout, scale):
    std = (2.0 / cin) ** 0.5
    w = jax.random.normal(key, (cin, cout), jnp.float32) * std
    return (w * scale[None, :]).astype(jnp.bfloat16)


def _pick_chunk_groups(groups, cg):
    """Smallest #groups per chunk whose lane width is a multiple of 128."""
    for n in range(1, groups):
        if groups % n == 0 and (n * cg) % 128 == 0:
            return n
    return groups


def _grouped_conv_folded(key, cmid, groups, chunk_groups, scale):
    cg = cmid // groups
    cl = chunk_groups * cg
    n_chunks = groups // chunk_groups
    std = (2.0 / (cg * 27)) ** 0.5
    w = jax.random.normal(key, (groups, 27, cg, cg), jnp.float32) * std
    w = w * scale.reshape(groups, 1, 1, cg)          # fold BN scale (per out-ch)
    dense = jnp.zeros((n_chunks, 27, cl, cl), jnp.float32)
    for c in range(n_chunks):
        for j in range(chunk_groups):
            g = c * chunk_groups + j
            dense = dense.at[c, :, j * cg:(j + 1) * cg,
                             j * cg:(j + 1) * cg].set(w[g])
    # row index within a chunk = tap*cl + cin, matching _im2col_group_chunks.
    return dense.reshape(n_chunks, 27 * cl, cl).astype(jnp.bfloat16)


def init_block(key, inplanes, planes, cardinality, stride, has_downsample):
    mid = cardinality * planes // 32
    out = planes * EXPANSION
    k1, k2, k3, kd = jax.random.split(key, 4)
    sc1, sh1 = _bn_scale_shift(mid)
    sc2, sh2 = _bn_scale_shift(mid)
    sc3, sh3 = _bn_scale_shift(out)
    cg = mid // cardinality
    chunk_groups = _pick_chunk_groups(cardinality, cg)
    p = dict(
        stride=stride,
        w1=_conv1x1_folded(k1, inplanes, mid, sc1), sh1=sh1,
        w2=_grouped_conv_folded(k2, mid, cardinality, chunk_groups, sc2), sh2=sh2,
        w3=_conv1x1_folded(k3, mid, out, sc3), sh3=sh3,
        downsample=None,
    )
    if has_downsample:
        scd, shd = _bn_scale_shift(out)
        p["downsample"] = (_conv1x1_folded(kd, inplanes, out, scd), shd)
    return p


def extranet_init(key, layers, inplanes, planes, cardinality):
    params = []
    keys = iter(jax.random.split(key, max(sum(layers), 1)))
    for nblocks in layers:
        layer = []
        for b in range(nblocks):
            if b == 0:
                stride = 2
                has_ds = (stride != 1) or (inplanes != planes * EXPANSION)
            else:
                stride = 1
                has_ds = False
            layer.append(init_block(next(keys), inplanes, planes,
                                    cardinality, stride, has_ds))
            inplanes = planes * EXPANSION
        params.append(layer)
    return params


# ---------------------------------------------------------------------------
# Forward
# ---------------------------------------------------------------------------
def block_forward(x, p, mm, gconv):
    stride = p["stride"]
    Nb, D, H, W, C = x.shape

    # conv1 (1x1x1) + bn1 + relu
    h = mm(x.reshape(-1, C), p["w1"], p["sh1"], relu=True)
    h = h.reshape(Nb, D, H, W, -1)

    # conv2 (3x3x3 grouped, stride) + bn2 + relu
    h = gconv(h, p["w2"], p["sh2"], stride)
    N2, Do, Ho, Wo, Cm = h.shape
    M2 = N2 * Do * Ho * Wo
    out_ch = p["w3"].shape[1]

    # residual path
    if p["downsample"] is not None:
        wd, shd = p["downsample"]
        xs = x[:, ::stride, ::stride, ::stride, :] if stride != 1 else x
        res = mm(xs.reshape(M2, C), wd, shd, relu=False)
    else:
        assert stride == 1 and C == out_ch, "identity shortcut shape mismatch"
        res = x.reshape(M2, C)

    # conv3 (1x1x1) + bn3 + residual + relu  (single fused kernel call)
    out = mm(h.reshape(M2, Cm), p["w3"], p["sh3"], residual=res, relu=True)
    return out.reshape(N2, Do, Ho, Wo, out_ch)


def extranet_forward(x, params, mm, gconv):
    for layer in params:
        for blk in layer:
            x = block_forward(x, blk, mm, gconv)
    return x


# ---------------------------------------------------------------------------
if __name__ == "__main__":
    key = jax.random.PRNGKey(0)
    kparam, kx = jax.random.split(key)

    # Small, module-consistent config (real ExtraNet: inplanes=64, planes=1024,
    # cardinality=32). Chosen so group-chunking (2 chunks of 128 lanes) and
    # K/N tiling (K=N=1024 in layer2) are actually exercised.
    inplanes, planes, cardinality = 32, 512, 16
    layers = (1, 1)

    params = extranet_init(kparam, layers, inplanes, planes, cardinality)

    # PyTorch-style NCDHW input, transposed to the kernels' NDHWC layout.
    x_ncdhw = jax.random.normal(kx, (2, inplanes, 4, 8, 8), jnp.float32)
    x = jnp.transpose(x_ncdhw, (0, 2, 3, 4, 1)).astype(jnp.bfloat16)

    fwd = jax.jit(lambda xx: extranet_forward(
        xx, params, mm=matmul_bn_act, gconv=grouped_conv_bn_relu))
    out = jax.block_until_ready(fwd(x))

    # Pure-JAX reference of the identical bf16-in / fp32-accumulate math.
    ref = extranet_forward(x, params, mm=matmul_bn_act_ref,
                           gconv=grouped_conv_bn_relu_ref)
    o32, r32 = out.astype(jnp.float32), ref.astype(jnp.float32)
    err = float(jnp.max(jnp.abs(o32 - r32)))
    scale = float(jnp.max(jnp.abs(r32))) + 1e-6
    assert err / scale < 3e-2, f"relative err {err / scale} (abs {err})"

    out_ncdhw = jnp.transpose(out, (0, 4, 1, 2, 3))
    expected = (2, planes * EXPANSION, 1, 2, 2)
    assert out_ncdhw.shape == expected, (out_ncdhw.shape, expected)

    print("KERNEL_OK")
</pallas_src>

<mosaic_0001>
module attributes {stable_mosaic.version = 11 : i64} {
  func.func @kernel(%arg0: i32, %arg1: i32, %arg2: i32, %arg3: memref<512x32xbf16, #tpu.memory_space<vmem>>, %arg4: memref<32x256xbf16, #tpu.memory_space<vmem>>, %arg5: memref<1x256xf32, #tpu.memory_space<vmem>>, %arg6: memref<512x256xbf16, #tpu.memory_space<vmem>>, %arg7: memref<512x256xf32, #tpu.memory_space<vmem>>) attributes {dimension_semantics = [#tpu.dimension_semantics<parallel>, #tpu.dimension_semantics<parallel>, #tpu.dimension_semantics<arbitrary>], iteration_bounds = array<i64: 1, 1, 1>, scalar_prefetch = 0 : i64, scratch_operands = 1 : i64, tpu.core_type = #tpu.core_type<tc>, window_params = [{transform_indices = @transform_0, window_bounds = array<i64: 512, 32>}, {transform_indices = @transform_1, window_bounds = array<i64: 32, 256>}, {transform_indices = @transform_2, window_bounds = array<i64: 1, 256>}, {transform_indices = @transform_3, window_bounds = array<i64: 512, 256>}]} {
    %c0_i32 = arith.constant 0 : i32
    %0 = arith.cmpi eq, %arg2, %c0_i32 : i32
    %1 = arith.extui %0 : i1 to i32
    %c0_i32_0 = arith.constant 0 : i32
    %2 = arith.cmpi ne, %1, %c0_i32_0 : i32
    scf.if %2 {
      %cst_10 = arith.constant 0.000000e+00 : f32
      %12 = vector.broadcast %cst_10 : f32 to vector<512x256xf32>
      %c0_11 = arith.constant 0 : index
      %c0_12 = arith.constant 0 : index
      %13 = vector.load %arg7[%c0_11, %c0_12] : memref<512x256xf32, #tpu.memory_space<vmem>>, vector<512x256xf32>
      tpu.vector_store %arg7[%c0_11, %c0_12], %12 {strides = array<i32>} : memref<512x256xf32, #tpu.memory_space<vmem>>, vector<512x256xf32>,
    } else {
    }
    %c0 = arith.constant 0 : index
    %c0_1 = arith.constant 0 : index
    %3 = vector.load %arg7[%c0, %c0_1] : memref<512x256xf32, #tpu.memory_space<vmem>>, vector<512x256xf32>
    %c0_2 = arith.constant 0 : index
    %c0_3 = arith.constant 0 : index
    %4 = vector.load %arg3[%c0_2, %c0_3] : memref<512x32xbf16, #tpu.memory_space<vmem>>, vector<512x32xbf16>
    %c0_4 = arith.constant 0 : index
    %c0_5 = arith.constant 0 : index
    %5 = vector.load %arg4[%c0_4, %c0_5] : memref<32x256xbf16, #tpu.memory_space<vmem>>, vector<32x256xbf16>
    %cst = arith.constant dense<0.000000e+00> : vector<512x256xf32>
    %6 = tpu.matmul %4, %5, %cst {dimension_numbers = #tpu.dot_dimension_numbers<[1], [0], [0], [1], [0, 0, 1, 1], [], []>} : vector<512x32xbf16>, vector<32x256xbf16>, vector<512x256xf32> -> vector<512x256xf32>
    %7 = arith.addf %3, %6 : vector<512x256xf32>
    %c0_6 = arith.constant 0 : index
    %c0_7 = arith.constant 0 : index
    %8 = vector.load %arg7[%c0_6, %c0_7] : memref<512x256xf32, #tpu.memory_space<vmem>>, vector<512x256xf32>
    tpu.vector_store %arg7[%c0_6, %c0_7], %7 {strides = array<i32>} : memref<512x256xf32, #tpu.memory_space<vmem>>, vector<512x256xf32>,
    %c0_i32_8 = arith.constant 0 : i32
    %9 = arith.cmpi eq, %arg2, %c0_i32_8 : i32
    %10 = arith.extui %9 : i1 to i32
    %c0_i32_9 = arith.constant 0 : i32
    %11 = arith.cmpi ne, %10, %c0_i32_9 : i32
    scf.if %11 {
      %c0_10 = arith.constant 0 : index
      %c0_11 = arith.constant 0 : index
      %12 = vector.load %arg7[%c0_10, %c0_11] : memref<512x256xf32, #tpu.memory_space<vmem>>, vector<512x256xf32>
      %c0_12 = arith.constant 0 : index
      %c0_13 = arith.constant 0 : index
      %13 = vector.load %arg5[%c0_12, %c0_13] : memref<1x256xf32, #tpu.memory_space<vmem>>, vector<1x256xf32>
      %14 = vector.broadcast %13 : vector<1x256xf32> to vector<512x256xf32>
      %15 = arith.addf %12, %14 : vector<512x256xf32>
      %cst_14 = arith.constant 0.000000e+00 : f32
      %16 = vector.broadcast %cst_14 : f32 to vector<512x256xf32>
      %17 = arith.maximumf %15, %16 : vector<512x256xf32>
      %18 = arith.truncf %17 : vector<512x256xf32> to vector<512x256xbf16>
      %c0_15 = arith.constant 0 : index
      %c0_16 = arith.constant 0 : index
      %19 = vector.load %arg6[%c0_15, %c0_16] : memref<512x256xbf16, #tpu.memory_space<vmem>>, vector<512x256xbf16>
      tpu.vector_store %arg6[%c0_15, %c0_16], %18 {strides = array<i32>} : memref<512x256xbf16, #tpu.memory_space<vmem>>, vector<512x256xbf16>,
    } else {
    }
    return
  }
  func.func @transform_0(%arg0: i32, %arg1: i32, %arg2: i32) -> (i32, i32) {
    %c0_i32 = arith.constant 0 : i32
    return %arg0, %arg2 : i32, i32
  }
  func.func @transform_1(%arg0: i32, %arg1: i32, %arg2: i32) -> (i32, i32) {
    %c0_i32 = arith.constant 0 : i32
    return %arg2, %arg1 : i32, i32
  }
  func.func @transform_2(%arg0: i32, %arg1: i32, %arg2: i32) -> (i32, i32) {
    %c0_i32 = arith.constant 0 : i32
    %c0_i32_0 = arith.constant 0 : i32
    return %c0_i32, %arg1 : i32, i32
  }
  func.func @transform_3(%arg0: i32, %arg1: i32, %arg2: i32) -> (i32, i32) {
    %c0_i32 = arith.constant 0 : i32
    return %arg0, %arg1 : i32, i32
  }
}

module attributes {stable_mosaic.version = 11 : i64} {
  func.func @kernel(%arg0: i32, %arg1: i32, %arg2: i32, %arg3: memref<1x64x384xbf16, #tpu.memory_space<vmem>>, %arg4: memref<1x384x128xbf16, #tpu.memory_space<vmem>>, %arg5: memref<1x128xf32, #tpu.memory_space<vmem>>, %arg6: memref<64x128xbf16, #tpu.memory_space<vmem>>, %arg7: memref<64x128xf32, #tpu.memory_space<vmem>>) attributes {dimension_semantics = [#tpu.dimension_semantics<parallel>, #tpu.dimension_semantics<parallel>, #tpu.dimension_semantics<arbitrary>], iteration_bounds = array<i64: 1, 2, 9>, scalar_prefetch = 0 : i64, scratch_operands = 1 : i64, tpu.core_type = #tpu.core_type<tc>, window_params = [{transform_indices = @transform_0, window_bounds = array<i64: 1, 64, 384>}, {transform_indices = @transform_1, window_bounds = array<i64: 1, 384, 128>}, {transform_indices = @transform_2, window_bounds = array<i64: 1, 128>}, {transform_indices = @transform_3, window_bounds = array<i64: 64, 128>}]} {
    %c0_i32 = arith.constant 0 : i32
    %0 = arith.cmpi eq, %arg2, %c0_i32 : i32
    %1 = arith.extui %0 : i1 to i32
    %c0_i32_0 = arith.constant 0 : i32
    %2 = arith.cmpi ne, %1, %c0_i32_0 : i32
    scf.if %2 {
      %cst_11 = arith.constant 0.000000e+00 : f32
      %14 = vector.broadcast %cst_11 : f32 to vector<64x128xf32>
      %c0_12 = arith.constant 0 : index
      %c0_13 = arith.constant 0 : index
      %15 = vector.load %arg7[%c0_12, %c0_13] : memref<64x128xf32, #tpu.memory_space<vmem>>, vector<64x128xf32>
      tpu.vector_store %arg7[%c0_12, %c0_13], %14 {strides = array<i32>} : memref<64x128xf32, #tpu.memory_space<vmem>>, vector<64x128xf32>,
    } else {
    }
    %c0 = arith.constant 0 : index
    %c0_1 = arith.constant 0 : index
    %3 = vector.load %arg7[%c0, %c0_1] : memref<64x128xf32, #tpu.memory_space<vmem>>, vector<64x128xf32>
    %c0_2 = arith.constant 0 : index
    %c0_3 = arith.constant 0 : index
    %c0_4 = arith.constant 0 : index
    %4 = vector.load %arg3[%c0_2, %c0_3, %c0_4] : memref<1x64x384xbf16, #tpu.memory_space<vmem>>, vector<1x64x384xbf16>
    %5 = vector.shape_cast %4 : vector<1x64x384xbf16> to vector<64x384xbf16>
    %c0_5 = arith.constant 0 : index
    %c0_6 = arith.constant 0 : index
    %c0_7 = arith.constant 0 : index
    %6 = vector.load %arg4[%c0_5, %c0_6, %c0_7] : memref<1x384x128xbf16, #tpu.memory_space<vmem>>, vector<1x384x128xbf16>
    %7 = vector.shape_cast %6 : vector<1x384x128xbf16> to vector<384x128xbf16>
    %cst = arith.constant dense<0.000000e+00> : vector<64x128xf32>
    %8 = tpu.matmul %5, %7, %cst {dimension_numbers = #tpu.dot_dimension_numbers<[1], [0], [0], [1], [0, 0, 1, 1], [], []>} : vector<64x384xbf16>, vector<384x128xbf16>, vector<64x128xf32> -> vector<64x128xf32>
    %9 = arith.addf %3, %8 : vector<64x128xf32>
    %c0_8 = arith.constant 0 : index
    %c0_9 = arith.constant 0 : index
    %10 = vector.load %arg7[%c0_8, %c0_9] : memref<64x128xf32, #tpu.memory_space<vmem>>, vector<64x128xf32>
    tpu.vector_store %arg7[%c0_8, %c0_9], %9 {strides = array<i32>} : memref<64x128xf32, #tpu.memory_space<vmem>>, vector<64x128xf32>,
    %c8_i32 = arith.constant 8 : i32
    %11 = arith.cmpi eq, %arg2, %c8_i32 : i32
    %12 = arith.extui %11 : i1 to i32
    %c0_i32_10 = arith.constant 0 : i32
    %13 = arith.cmpi ne, %12, %c0_i32_10 : i32
    scf.if %13 {
      %c0_11 = arith.constant 0 : index
      %c0_12 = arith.constant 0 : index
      %14 = vector.load %arg7[%c0_11, %c0_12] : memref<64x128xf32, #tpu.memory_space<vmem>>, vector<64x128xf32>
      %c0_13 = arith.constant 0 : index
      %c0_14 = arith.constant 0 : index
      %15 = vector.load %arg5[%c0_13, %c0_14] : memref<1x128xf32, #tpu.memory_space<vmem>>, vector<1x128xf32>
      %16 = vector.broadcast %15 : vector<1x128xf32> to vector<64x128xf32>
      %17 = arith.addf %14, %16 : vector<64x128xf32>
      %cst_15 = arith.constant 0.000000e+00 : f32
      %18 = vector.broadcast %cst_15 : f32 to vector<64x128xf32>
      %19 = arith.maximumf %17, %18 : vector<64x128xf32>
      %20 = arith.truncf %19 : vector<64x128xf32> to vector<64x128xbf16>
      %c0_16 = arith.constant 0 : index
      %c0_17 = arith.constant 0 : index
      %21 = vector.load %arg6[%c0_16, %c0_17] : memref<64x128xbf16, #tpu.memory_space<vmem>>, vector<64x128xbf16>
      tpu.vector_store %arg6[%c0_16, %c0_17], %20 {strides = array<i32>} : memref<64x128xbf16, #tpu.memory_space<vmem>>, vector<64x128xbf16>,
    } else {
    }
    return
  }
  func.func @transform_0(%arg0: i32, %arg1: i32, %arg2: i32) -> (i32, i32, i32) {
    %c0_i32 = arith.constant 0 : i32
    return %arg1, %arg0, %arg2 : i32, i32, i32
  }
  func.func @transform_1(%arg0: i32, %arg1: i32, %arg2: i32) -> (i32, i32, i32) {
    %c0_i32 = arith.constant 0 : i32
    %c0_i32_0 = arith.constant 0 : i32
    return %arg1, %arg2, %c0_i32 : i32, i32, i32
  }
  func.func @transform_2(%arg0: i32, %arg1: i32, %arg2: i32) -> (i32, i32) {
    %c0_i32 = arith.constant 0 : i32
    %c0_i32_0 = arith.constant 0 : i32
    return %c0_i32, %arg1 : i32, i32
  }
  func.func @transform_3(%arg0: i32, %arg1: i32, %arg2: i32) -> (i32, i32) {
    %c0_i32 = arith.constant 0 : i32
    return %arg0, %arg1 : i32, i32
  }
}

module attributes {stable_mosaic.version = 11 : i64} {
  func.func @kernel(%arg0: i32, %arg1: i32, %arg2: i32, %arg3: memref<64x32xbf16, #tpu.memory_space<vmem>>, %arg4: memref<32x512xbf16, #tpu.memory_space<vmem>>, %arg5: memref<1x512xf32, #tpu.memory_space<vmem>>, %arg6: memref<64x512xbf16, #tpu.memory_space<vmem>>, %arg7: memref<64x512xf32, #tpu.memory_space<vmem>>) attributes {dimension_semantics = [#tpu.dimension_semantics<parallel>, #tpu.dimension_semantics<parallel>, #tpu.dimension_semantics<arbitrary>], iteration_bounds = array<i64: 1, 2, 1>, scalar_prefetch = 0 : i64, scratch_operands = 1 : i64, tpu.core_type = #tpu.core_type<tc>, window_params = [{transform_indices = @transform_0, window_bounds = array<i64: 64, 32>}, {transform_indices = @transform_1, window_bounds = array<i64: 32, 512>}, {transform_indices = @transform_2, window_bounds = array<i64: 1, 512>}, {transform_indices = @transform_3, window_bounds = array<i64: 64, 512>}]} {
    %c0_i32 = arith.constant 0 : i32
    %0 = arith.cmpi eq, %arg2, %c0_i32 : i32
    %1 = arith.extui %0 : i1 to i32
    %c0_i32_0 = arith.constant 0 : i32
    %2 = arith.cmpi ne, %1, %c0_i32_0 : i32
    scf.if %2 {
      %cst_10 = arith.constant 0.000000e+00 : f32
      %12 = vector.broadcast %cst_10 : f32 to vector<64x512xf32>
      %c0_11 = arith.constant 0 : index
      %c0_12 = arith.constant 0 : index
      %13 = vector.load %arg7[%c0_11, %c0_12] : memref<64x512xf32, #tpu.memory_space<vmem>>, vector<64x512xf32>
      tpu.vector_store %arg7[%c0_11, %c0_12], %12 {strides = array<i32>} : memref<64x512xf32, #tpu.memory_space<vmem>>, vector<64x512xf32>,
    } else {
    }
    %c0 = arith.constant 0 : index
    %c0_1 = arith.constant 0 : index
    %3 = vector.load %arg7[%c0, %c0_1] : memref<64x512xf32, #tpu.memory_space<vmem>>, vector<64x512xf32>
    %c0_2 = arith.constant 0 : index
    %c0_3 = arith.constant 0 : index
    %4 = vector.load %arg3[%c0_2, %c0_3] : memref<64x32xbf16, #tpu.memory_space<vmem>>, vector<64x32xbf16>
    %c0_4 = arith.constant 0 : index
    %c0_5 = arith.constant 0 : index
    %5 = vector.load %arg4[%c0_4, %c0_5] : memref<32x512xbf16, #tpu.memory_space<vmem>>, vector<32x512xbf16>
    %cst = arith.constant dense<0.000000e+00> : vector<64x512xf32>
    %6 = tpu.matmul %4, %5, %cst {dimension_numbers = #tpu.dot_dimension_numbers<[1], [0], [0], [1], [0, 0, 1, 1], [], []>} : vector<64x32xbf16>, vector<32x512xbf16>, vector<64x512xf32> -> vector<64x512xf32>
    %7 = arith.addf %3, %6 : vector<64x512xf32>
    %c0_6 = arith.constant 0 : index
    %c0_7 = arith.constant 0 : index
    %8 = vector.load %arg7[%c0_6, %c0_7] : memref<64x512xf32, #tpu.memory_space<vmem>>, vector<64x512xf32>
    tpu.vector_store %arg7[%c0_6, %c0_7], %7 {strides = array<i32>} : memref<64x512xf32, #tpu.memory_space<vmem>>, vector<64x512xf32>,
    %c0_i32_8 = arith.constant 0 : i32
    %9 = arith.cmpi eq, %arg2, %c0_i32_8 : i32
    %10 = arith.extui %9 : i1 to i32
    %c0_i32_9 = arith.constant 0 : i32
    %11 = arith.cmpi ne, %10, %c0_i32_9 : i32
    scf.if %11 {
      %c0_10 = arith.constant 0 : index
      %c0_11 = arith.constant 0 : index
      %12 = vector.load %arg7[%c0_10, %c0_11] : memref<64x512xf32, #tpu.memory_space<vmem>>, vector<64x512xf32>
      %c0_12 = arith.constant 0 : index
      %c0_13 = arith.constant 0 : index
      %13 = vector.load %arg5[%c0_12, %c0_13] : memref<1x512xf32, #tpu.memory_space<vmem>>, vector<1x512xf32>
      %14 = vector.broadcast %13 : vector<1x512xf32> to vector<64x512xf32>
      %15 = arith.addf %12, %14 : vector<64x512xf32>
      %16 = arith.truncf %15 : vector<64x512xf32> to vector<64x512xbf16>
      %c0_14 = arith.constant 0 : index
      %c0_15 = arith.constant 0 : index
      %17 = vector.load %arg6[%c0_14, %c0_15] : memref<64x512xbf16, #tpu.memory_space<vmem>>, vector<64x512xbf16>
      tpu.vector_store %arg6[%c0_14, %c0_15], %16 {strides = array<i32>} : memref<64x512xbf16, #tpu.memory_space<vmem>>, vector<64x512xbf16>,
    } else {
    }
    return
  }
  func.func @transform_0(%arg0: i32, %arg1: i32, %arg2: i32) -> (i32, i32) {
    %c0_i32 = arith.constant 0 : i32
    return %arg0, %arg2 : i32, i32
  }
  func.func @transform_1(%arg0: i32, %arg1: i32, %arg2: i32) -> (i32, i32) {
    %c0_i32 = arith.constant 0 : i32
    return %arg2, %arg1 : i32, i32
  }
  func.func @transform_2(%arg0: i32, %arg1: i32, %arg2: i32) -> (i32, i32) {
    %c0_i32 = arith.constant 0 : i32
    %c0_i32_0 = arith.constant 0 : i32
    return %c0_i32, %arg1 : i32, i32
  }
  func.func @transform_3(%arg0: i32, %arg1: i32, %arg2: i32) -> (i32, i32) {
    %c0_i32 = arith.constant 0 : i32
    return %arg0, %arg1 : i32, i32
  }
}

module attributes {stable_mosaic.version = 11 : i64} {
  func.func @kernel(%arg0: i32, %arg1: i32, %arg2: i32, %arg3: memref<64x256xbf16, #tpu.memory_space<vmem>>, %arg4: memref<256x512xbf16, #tpu.memory_space<vmem>>, %arg5: memref<1x512xf32, #tpu.memory_space<vmem>>, %arg6: memref<64x512xbf16, #tpu.memory_space<vmem>>, %arg7: memref<64x512xbf16, #tpu.memory_space<vmem>>, %arg8: memref<64x512xf32, #tpu.memory_space<vmem>>) attributes {dimension_semantics = [#tpu.dimension_semantics<parallel>, #tpu.dimension_semantics<parallel>, #tpu.dimension_semantics<arbitrary>], iteration_bounds = array<i64: 1, 2, 1>, scalar_prefetch = 0 : i64, scratch_operands = 1 : i64, tpu.core_type = #tpu.core_type<tc>, window_params = [{transform_indices = @transform_0, window_bounds = array<i64: 64, 256>}, {transform_indices = @transform_1, window_bounds = array<i64: 256, 512>}, {transform_indices = @transform_2, window_bounds = array<i64: 1, 512>}, {transform_indices = @transform_3, window_bounds = array<i64: 64, 512>}, {transform_indices = @transform_4, window_bounds = array<i64: 64, 512>}]} {
    %c0_i32 = arith.constant 0 : i32
    %0 = arith.cmpi eq, %arg2, %c0_i32 : i32
    %1 = arith.extui %0 : i1 to i32
    %c0_i32_0 = arith.constant 0 : i32
    %2 = arith.cmpi ne, %1, %c0_i32_0 : i32
    scf.if %2 {
      %cst_10 = arith.constant 0.000000e+00 : f32
      %12 = vector.broadcast %cst_10 : f32 to vector<64x512xf32>
      %c0_11 = arith.constant 0 : index
      %c0_12 = arith.constant 0 : index
      %13 = vector.load %arg8[%c0_11, %c0_12] : memref<64x512xf32, #tpu.memory_space<vmem>>, vector<64x512xf32>
      tpu.vector_store %arg8[%c0_11, %c0_12], %12 {strides = array<i32>} : memref<64x512xf32, #tpu.memory_space<vmem>>, vector<64x512xf32>,
    } else {
    }
    %c0 = arith.constant 0 : index
    %c0_1 = arith.constant 0 : index
    %3 = vector.load %arg8[%c0, %c0_1] : memref<64x512xf32, #tpu.memory_space<vmem>>, vector<64x512xf32>
    %c0_2 = arith.constant 0 : index
    %c0_3 = arith.constant 0 : index
    %4 = vector.load %arg3[%c0_2, %c0_3] : memref<64x256xbf16, #tpu.memory_space<vmem>>, vector<64x256xbf16>
    %c0_4 = arith.constant 0 : index
    %c0_5 = arith.constant 0 : index
    %5 = vector.load %arg4[%c0_4, %c0_5] : memref<256x512xbf16, #tpu.memory_space<vmem>>, vector<256x512xbf16>
    %cst = arith.constant dense<0.000000e+00> : vector<64x512xf32>
    %6 = tpu.matmul %4, %5, %cst {dimension_numbers = #tpu.dot_dimension_numbers<[1], [0], [0], [1], [0, 0, 1, 1], [], []>} : vector<64x256xbf16>, vector<256x512xbf16>, vector<64x512xf32> -> vector<64x512xf32>
    %7 = arith.addf %3, %6 : vector<64x512xf32>
    %c0_6 = arith.constant 0 : index
    %c0_7 = arith.constant 0 : index
    %8 = vector.load %arg8[%c0_6, %c0_7] : memref<64x512xf32, #tpu.memory_space<vmem>>, vector<64x512xf32>
    tpu.vector_store %arg8[%c0_6, %c0_7], %7 {strides = array<i32>} : memref<64x512xf32, #tpu.memory_space<vmem>>, vector<64x512xf32>,
    %c0_i32_8 = arith.constant 0 : i32
    %9 = arith.cmpi eq, %arg2, %c0_i32_8 : i32
    %10 = arith.extui %9 : i1 to i32
    %c0_i32_9 = arith.constant 0 : i32
    %11 = arith.cmpi ne, %10, %c0_i32_9 : i32
    scf.if %11 {
      %c0_10 = arith.constant 0 : index
      %c0_11 = arith.constant 0 : index
      %12 = vector.load %arg8[%c0_10, %c0_11] : memref<64x512xf32, #tpu.memory_space<vmem>>, vector<64x512xf32>
      %c0_12 = arith.constant 0 : index
      %c0_13 = arith.constant 0 : index
      %13 = vector.load %arg5[%c0_12, %c0_13] : memref<1x512xf32, #tpu.memory_space<vmem>>, vector<1x512xf32>
      %14 = vector.broadcast %13 : vector<1x512xf32> to vector<64x512xf32>
      %15 = arith.addf %12, %14 : vector<64x512xf32>
      %c0_14 = arith.constant 0 : index
      %c0_15 = arith.constant 0 : index
      %16 = vector.load %arg6[%c0_14, %c0_15] : memref<64x512xbf16, #tpu.memory_space<vmem>>, vector<64x512xbf16>
      %17 = arith.extf %16 : vector<64x512xbf16> to vector<64x512xf32>
      %18 = arith.addf %15, %17 : vector<64x512xf32>
      %cst_16 = arith.constant 0.000000e+00 : f32
      %19 = vector.broadcast %cst_16 : f32 to vector<64x512xf32>
      %20 = arith.maximumf %18, %19 : vector<64x512xf32>
      %21 = arith.truncf %20 : vector<64x512xf32> to vector<64x512xbf16>
      %c0_17 = arith.constant 0 : index
      %c0_18 = arith.constant 0 : index
      %22 = vector.load %arg7[%c0_17, %c0_18] : memref<64x512xbf16, #tpu.memory_space<vmem>>, vector<64x512xbf16>
      tpu.vector_store %arg7[%c0_17, %c0_18], %21 {strides = array<i32>} : memref<64x512xbf16, #tpu.memory_space<vmem>>, vector<64x512xbf16>,
    } else {
    }
    return
  }
  func.func @transform_0(%arg0: i32, %arg1: i32, %arg2: i32) -> (i32, i32) {
    %c0_i32 = arith.constant 0 : i32
    return %arg0, %arg2 : i32, i32
  }
  func.func @transform_1(%arg0: i32, %arg1: i32, %arg2: i32) -> (i32, i32) {
    %c0_i32 = arith.constant 0 : i32
    return %arg2, %arg1 : i32, i32
  }
  func.func @transform_2(%arg0: i32, %arg1: i32, %arg2: i32) -> (i32, i32) {
    %c0_i32 = arith.constant 0 : i32
    %c0_i32_0 = arith.constant 0 : i32
    return %c0_i32, %arg1 : i32, i32
  }
  func.func @transform_3(%arg0: i32, %arg1: i32, %arg2: i32) -> (i32, i32) {
    %c0_i32 = arith.constant 0 : i32
    return %arg0, %arg1 : i32, i32
  }
  func.func @transform_4(%arg0: i32, %arg1: i32, %arg2: i32) -> (i32, i32) {
    %c0_i32 = arith.constant 0 : i32
    return %arg0, %arg1 : i32, i32
  }
}

module attributes {stable_mosaic.version = 11 : i64} {
  func.func @kernel(%arg0: i32, %arg1: i32, %arg2: i32, %arg3: memref<64x512xbf16, #tpu.memory_space<vmem>>, %arg4: memref<512x256xbf16, #tpu.memory_space<vmem>>, %arg5: memref<1x256xf32, #tpu.memory_space<vmem>>, %arg6: memref<64x256xbf16, #tpu.memory_space<vmem>>, %arg7: memref<64x256xf32, #tpu.memory_space<vmem>>) attributes {dimension_semantics = [#tpu.dimension_semantics<parallel>, #tpu.dimension_semantics<parallel>, #tpu.dimension_semantics<arbitrary>], iteration_bounds = array<i64: 1, 1, 2>, scalar_prefetch = 0 : i64, scratch_operands = 1 : i64, tpu.core_type = #tpu.core_type<tc>, window_params = [{transform_indices = @transform_0, window_bounds = array<i64: 64, 512>}, {transform_indices = @transform_1, window_bounds = array<i64: 512, 256>}, {transform_indices = @transform_2, window_bounds = array<i64: 1, 256>}, {transform_indices = @transform_3, window_bounds = array<i64: 64, 256>}]} {
    %c0_i32 = arith.constant 0 : i32
    %0 = arith.cmpi eq, %arg2, %c0_i32 : i32
    %1 = arith.extui %0 : i1 to i32
    %c0_i32_0 = arith.constant 0 : i32
    %2 = arith.cmpi ne, %1, %c0_i32_0 : i32
    scf.if %2 {
      %cst_9 = arith.constant 0.000000e+00 : f32
      %12 = vector.broadcast %cst_9 : f32 to vector<64x256xf32>
      %c0_10 = arith.constant 0 : index
      %c0_11 = arith.constant 0 : index
      %13 = vector.load %arg7[%c0_10, %c0_11] : memref<64x256xf32, #tpu.memory_space<vmem>>, vector<64x256xf32>
      tpu.vector_store %arg7[%c0_10, %c0_11], %12 {strides = array<i32>} : memref<64x256xf32, #tpu.memory_space<vmem>>, vector<64x256xf32>,
    } else {
    }
    %c0 = arith.constant 0 : index
    %c0_1 = arith.constant 0 : index
    %3 = vector.load %arg7[%c0, %c0_1] : memref<64x256xf32, #tpu.memory_space<vmem>>, vector<64x256xf32>
    %c0_2 = arith.constant 0 : index
    %c0_3 = arith.constant 0 : index
    %4 = vector.load %arg3[%c0_2, %c0_3] : memref<64x512xbf16, #tpu.memory_space<vmem>>, vector<64x512xbf16>
    %c0_4 = arith.constant 0 : index
    %c0_5 = arith.constant 0 : index
    %5 = vector.load %arg4[%c0_4, %c0_5] : memref<512x256xbf16, #tpu.memory_space<vmem>>, vector<512x256xbf16>
    %cst = arith.constant dense<0.000000e+00> : vector<64x256xf32>
    %6 = tpu.matmul %4, %5, %cst {dimension_numbers = #tpu.dot_dimension_numbers<[1], [0], [0], [1], [0, 0, 1, 1], [], []>} : vector<64x512xbf16>, vector<512x256xbf16>, vector<64x256xf32> -> vector<64x256xf32>
    %7 = arith.addf %3, %6 : vector<64x256xf32>
    %c0_6 = arith.constant 0 : index
    %c0_7 = arith.constant 0 : index
    %8 = vector.load %arg7[%c0_6, %c0_7] : memref<64x256xf32, #tpu.memory_space<vmem>>, vector<64x256xf32>
    tpu.vector_store %arg7[%c0_6, %c0_7], %7 {strides = array<i32>} : memref<64x256xf32, #tpu.memory_space<vmem>>, vector<64x256xf32>,
    %c1_i32 = arith.constant 1 : i32
    %9 = arith.cmpi eq, %arg2, %c1_i32 : i32
    %10 = arith.extui %9 : i1 to i32
    %c0_i32_8 = arith.constant 0 : i32
    %11 = arith.cmpi ne, %10, %c0_i32_8 : i32
    scf.if %11 {
      %c0_9 = arith.constant 0 : index
      %c0_10 = arith.constant 0 : index
      %12 = vector.load %arg7[%c0_9, %c0_10] : memref<64x256xf32, #tpu.memory_space<vmem>>, vector<64x256xf32>
      %c0_11 = arith.constant 0 : index
      %c0_12 = arith.constant 0 : index
      %13 = vector.load %arg5[%c0_11, %c0_12] : memref<1x256xf32, #tpu.memory_space<vmem>>, vector<1x256xf32>
      %14 = vector.broadcast %13 : vector<1x256xf32> to vector<64x256xf32>
      %15 = arith.addf %12, %14 : vector<64x256xf32>
      %cst_13 = arith.constant 0.000000e+00 : f32
      %16 = vector.broadcast %cst_13 : f32 to vector<64x256xf32>
      %17 = arith.maximumf %15, %16 : vector<64x256xf32>
      %18 = arith.truncf %17 : vector<64x256xf32> to vector<64x256xbf16>
      %c0_14 = arith.constant 0 : index
      %c0_15 = arith.constant 0 : index
      %19 = vector.load %arg6[%c0_14, %c0_15] : memref<64x256xbf16, #tpu.memory_space<vmem>>, vector<64x256xbf16>
      tpu.vector_store %arg6[%c0_14, %c0_15], %18 {strides = array<i32>} : memref<64x256xbf16, #tpu.memory_space<vmem>>, vector<64x256xbf16>,
    } else {
    }
    return
  }
  func.func @transform_0(%arg0: i32, %arg1: i32, %arg2: i32) -> (i32, i32) {
    %c0_i32 = arith.constant 0 : i32
    return %arg0, %arg2 : i32, i32
  }
  func.func @transform_1(%arg0: i32, %arg1: i32, %arg2: i32) -> (i32, i32) {
    %c0_i32 = arith.constant 0 : i32
    return %arg2, %arg1 : i32, i32
  }
  func.func @transform_2(%arg0: i32, %arg1: i32, %arg2: i32) -> (i32, i32) {
    %c0_i32 = arith.constant 0 : i32
    %c0_i32_0 = arith.constant 0 : i32
    return %c0_i32, %arg1 : i32, i32
  }
  func.func @transform_3(%arg0: i32, %arg1: i32, %arg2: i32) -> (i32, i32) {
    %c0_i32 = arith.constant 0 : i32
    return %arg0, %arg1 : i32, i32
  }
}

module attributes {stable_mosaic.version = 11 : i64} {
  func.func @kernel(%arg0: i32, %arg1: i32, %arg2: i32, %arg3: memref<1x8x384xbf16, #tpu.memory_space<vmem>>, %arg4: memref<1x384x128xbf16, #tpu.memory_space<vmem>>, %arg5: memref<1x128xf32, #tpu.memory_space<vmem>>, %arg6: memref<8x128xbf16, #tpu.memory_space<vmem>>, %arg7: memref<8x128xf32, #tpu.memory_space<vmem>>) attributes {dimension_semantics = [#tpu.dimension_semantics<parallel>, #tpu.dimension_semantics<parallel>, #tpu.dimension_semantics<arbitrary>], iteration_bounds = array<i64: 1, 2, 9>, scalar_prefetch = 0 : i64, scratch_operands = 1 : i64, tpu.core_type = #tpu.core_type<tc>, window_params = [{transform_indices = @transform_0, window_bounds = array<i64: 1, 8, 384>}, {transform_indices = @transform_1, window_bounds = array<i64: 1, 384, 128>}, {transform_indices = @transform_2, window_bounds = array<i64: 1, 128>}, {transform_indices = @transform_3, window_bounds = array<i64: 8, 128>}]} {
    %c0_i32 = arith.constant 0 : i32
    %0 = arith.cmpi eq, %arg2, %c0_i32 : i32
    %1 = arith.extui %0 : i1 to i32
    %c0_i32_0 = arith.constant 0 : i32
    %2 = arith.cmpi ne, %1, %c0_i32_0 : i32
    scf.if %2 {
      %cst_11 = arith.constant 0.000000e+00 : f32
      %14 = vector.broadcast %cst_11 : f32 to vector<8x128xf32>
      %c0_12 = arith.constant 0 : index
      %c0_13 = arith.constant 0 : index
      %15 = vector.load %arg7[%c0_12, %c0_13] : memref<8x128xf32, #tpu.memory_space<vmem>>, vector<8x128xf32>
      tpu.vector_store %arg7[%c0_12, %c0_13], %14 {strides = array<i32>} : memref<8x128xf32, #tpu.memory_space<vmem>>, vector<8x128xf32>,
    } else {
    }
    %c0 = arith.constant 0 : index
    %c0_1 = arith.constant 0 : index
    %3 = vector.load %arg7[%c0, %c0_1] : memref<8x128xf32, #tpu.memory_space<vmem>>, vector<8x128xf32>
    %c0_2 = arith.constant 0 : index
    %c0_3 = arith.constant 0 : index
    %c0_4 = arith.constant 0 : index
    %4 = vector.load %arg3[%c0_2, %c0_3, %c0_4] : memref<1x8x384xbf16, #tpu.memory_space<vmem>>, vector<1x8x384xbf16>
    %5 = vector.shape_cast %4 : vector<1x8x384xbf16> to vector<8x384xbf16>
    %c0_5 = arith.constant 0 : index
    %c0_6 = arith.constant 0 : index
    %c0_7 = arith.constant 0 : index
    %6 = vector.load %arg4[%c0_5, %c0_6, %c0_7] : memref<1x384x128xbf16, #tpu.memory_space<vmem>>, vector<1x384x128xbf16>
    %7 = vector.shape_cast %6 : vector<1x384x128xbf16> to vector<384x128xbf16>
    %cst = arith.constant dense<0.000000e+00> : vector<8x128xf32>
    %8 = tpu.matmul %5, %7, %cst {dimension_numbers = #tpu.dot_dimension_numbers<[1], [0], [0], [1], [0, 0, 1, 1], [], []>} : vector<8x384xbf16>, vector<384x128xbf16>, vector<8x128xf32> -> vector<8x128xf32>
    %9 = arith.addf %3, %8 : vector<8x128xf32>
    %c0_8 = arith.constant 0 : index
    %c0_9 = arith.constant 0 : index
    %10 = vector.load %arg7[%c0_8, %c0_9] : memref<8x128xf32, #tpu.memory_space<vmem>>, vector<8x128xf32>
    tpu.vector_store %arg7[%c0_8, %c0_9], %9 {strides = array<i32>} : memref<8x128xf32, #tpu.memory_space<vmem>>, vector<8x128xf32>,
    %c8_i32 = arith.constant 8 : i32
    %11 = arith.cmpi eq, %arg2, %c8_i32 : i32
    %12 = arith.extui %11 : i1 to i32
    %c0_i32_10 = arith.constant 0 : i32
    %13 = arith.cmpi ne, %12, %c0_i32_10 : i32
    scf.if %13 {
      %c0_11 = arith.constant 0 : index
      %c0_12 = arith.constant 0 : index
      %14 = vector.load %arg7[%c0_11, %c0_12] : memref<8x128xf32, #tpu.memory_space<vmem>>, vector<8x128xf32>
      %c0_13 = arith.constant 0 : index
      %c0_14 = arith.constant 0 : index
      %15 = vector.load %arg5[%c0_13, %c0_14] : memref<1x128xf32, #tpu.memory_space<vmem>>, vector<1x128xf32>
      %16 = vector.broadcast %15 : vector<1x128xf32> to vector<8x128xf32>
      %17 = arith.addf %14, %16 : vector<8x128xf32>
      %cst_15 = arith.constant 0.000000e+00 : f32
      %18 = vector.broadcast %cst_15 : f32 to vector<8x128xf32>
      %19 = arith.maximumf %17, %18 : vector<8x128xf32>
      %20 = arith.truncf %19 : vector<8x128xf32> to vector<8x128xbf16>
      %c0_16 = arith.constant 0 : index
      %c0_17 = arith.constant 0 : index
      %21 = vector.load %arg6[%c0_16, %c0_17] : memref<8x128xbf16, #tpu.memory_space<vmem>>, vector<8x128xbf16>
      tpu.vector_store %arg6[%c0_16, %c0_17], %20 {strides = array<i32>} : memref<8x128xbf16, #tpu.memory_space<vmem>>, vector<8x128xbf16>,
    } else {
    }
    return
  }
  func.func @transform_0(%arg0: i32, %arg1: i32, %arg2: i32) -> (i32, i32, i32) {
    %c0_i32 = arith.constant 0 : i32
    return %arg1, %arg0, %arg2 : i32, i32, i32
  }
  func.func @transform_1(%arg0: i32, %arg1: i32, %arg2: i32) -> (i32, i32, i32) {
    %c0_i32 = arith.constant 0 : i32
    %c0_i32_0 = arith.constant 0 : i32
    return %arg1, %arg2, %c0_i32 : i32, i32, i32
  }
  func.func @transform_2(%arg0: i32, %arg1: i32, %arg2: i32) -> (i32, i32) {
    %c0_i32 = arith.constant 0 : i32
    %c0_i32_0 = arith.constant 0 : i32
    return %c0_i32, %arg1 : i32, i32
  }
  func.func @transform_3(%arg0: i32, %arg1: i32, %arg2: i32) -> (i32, i32) {
    %c0_i32 = arith.constant 0 : i32
    return %arg0, %arg1 : i32, i32
  }
}

module attributes {stable_mosaic.version = 11 : i64} {
  func.func @kernel(%arg0: i32, %arg1: i32, %arg2: i32, %arg3: memref<8x512xbf16, #tpu.memory_space<vmem>>, %arg4: memref<512x512xbf16, #tpu.memory_space<vmem>>, %arg5: memref<1x512xf32, #tpu.memory_space<vmem>>, %arg6: memref<8x512xbf16, #tpu.memory_space<vmem>>, %arg7: memref<8x512xf32, #tpu.memory_space<vmem>>) attributes {dimension_semantics = [#tpu.dimension_semantics<parallel>, #tpu.dimension_semantics<parallel>, #tpu.dimension_semantics<arbitrary>], iteration_bounds = array<i64: 1, 2, 2>, scalar_prefetch = 0 : i64, scratch_operands = 1 : i64, tpu.core_type = #tpu.core_type<tc>, window_params = [{transform_indices = @transform_0, window_bounds = array<i64: 8, 512>}, {transform_indices = @transform_1, window_bounds = array<i64: 512, 512>}, {transform_indices = @transform_2, window_bounds = array<i64: 1, 512>}, {transform_indices = @transform_3, window_bounds = array<i64: 8, 512>}]} {
    %c0_i32 = arith.constant 0 : i32
    %0 = arith.cmpi eq, %arg2, %c0_i32 : i32
    %1 = arith.extui %0 : i1 to i32
    %c0_i32_0 = arith.constant 0 : i32
    %2 = arith.cmpi ne, %1, %c0_i32_0 : i32
    scf.if %2 {
      %cst_9 = arith.constant 0.000000e+00 : f32
      %12 = vector.broadcast %cst_9 : f32 to vector<8x512xf32>
      %c0_10 = arith.constant 0 : index
      %c0_11 = arith.constant 0 : index
      %13 = vector.load %arg7[%c0_10, %c0_11] : memref<8x512xf32, #tpu.memory_space<vmem>>, vector<8x512xf32>
      tpu.vector_store %arg7[%c0_10, %c0_11], %12 {strides = array<i32>} : memref<8x512xf32, #tpu.memory_space<vmem>>, vector<8x512xf32>,
    } else {
    }
    %c0 = arith.constant 0 : index
    %c0_1 = arith.constant 0 : index
    %3 = vector.load %arg7[%c0, %c0_1] : memref<8x512xf32, #tpu.memory_space<vmem>>, vector<8x512xf32>
    %c0_2 = arith.constant 0 : index
    %c0_3 = arith.constant 0 : index
    %4 = vector.load %arg3[%c0_2, %c0_3] : memref<8x512xbf16, #tpu.memory_space<vmem>>, vector<8x512xbf16>
    %c0_4 = arith.constant 0 : index
    %c0_5 = arith.constant 0 : index
    %5 = vector.load %arg4[%c0_4, %c0_5] : memref<512x512xbf16, #tpu.memory_space<vmem>>, vector<512x512xbf16>
    %cst = arith.constant dense<0.000000e+00> : vector<8x512xf32>
    %6 = tpu.matmul %4, %5, %cst {dimension_numbers = #tpu.dot_dimension_numbers<[1], [0], [0], [1], [0, 0, 1, 1], [], []>} : vector<8x512xbf16>, vector<512x512xbf16>, vector<8x512xf32> -> vector<8x512xf32>
    %7 = arith.addf %3, %6 : vector<8x512xf32>
    %c0_6 = arith.constant 0 : index
    %c0_7 = arith.constant 0 : index
    %8 = vector.load %arg7[%c0_6, %c0_7] : memref<8x512xf32, #tpu.memory_space<vmem>>, vector<8x512xf32>
    tpu.vector_store %arg7[%c0_6, %c0_7], %7 {strides = array<i32>} : memref<8x512xf32, #tpu.memory_space<vmem>>, vector<8x512xf32>,
    %c1_i32 = arith.constant 1 : i32
    %9 = arith.cmpi eq, %arg2, %c1_i32 : i32
    %10 = arith.extui %9 : i1 to i32
    %c0_i32_8 = arith.constant 0 : i32
    %11 = arith.cmpi ne, %10, %c0_i32_8 : i32
    scf.if %11 {
      %c0_9 = arith.constant 0 : index
      %c0_10 = arith.constant 0 : index
      %12 = vector.load %arg7[%c0_9, %c0_10] : memref<8x512xf32, #tpu.memory_space<vmem>>, vector<8x512xf32>
      %c0_11 = arith.constant 0 : index
      %c0_12 = arith.constant 0 : index
      %13 = vector.load %arg5[%c0_11, %c0_12] : memref<1x512xf32, #tpu.memory_space<vmem>>, vector<1x512xf32>
      %14 = vector.broadcast %13 : vector<1x512xf32> to vector<8x512xf32>
      %15 = arith.addf %12, %14 : vector<8x512xf32>
      %16 = arith.truncf %15 : vector<8x512xf32> to vector<8x512xbf16>
      %c0_13 = arith.constant 0 : index
      %c0_14 = arith.constant 0 : index
      %17 = vector.load %arg6[%c0_13, %c0_14] : memref<8x512xbf16, #tpu.memory_space<vmem>>, vector<8x512xbf16>
      tpu.vector_store %arg6[%c0_13, %c0_14], %16 {strides = array<i32>} : memref<8x512xbf16, #tpu.memory_space<vmem>>, vector<8x512xbf16>,
    } else {
    }
    return
  }
  func.func @transform_0(%arg0: i32, %arg1: i32, %arg2: i32) -> (i32, i32) {
    %c0_i32 = arith.constant 0 : i32
    return %arg0, %arg2 : i32, i32
  }
  func.func @transform_1(%arg0: i32, %arg1: i32, %arg2: i32) -> (i32, i32) {
    %c0_i32 = arith.constant 0 : i32
    return %arg2, %arg1 : i32, i32
  }
  func.func @transform_2(%arg0: i32, %arg1: i32, %arg2: i32) -> (i32, i32) {
    %c0_i32 = arith.constant 0 : i32
    %c0_i32_0 = arith.constant 0 : i32
    return %c0_i32, %arg1 : i32, i32
  }
  func.func @transform_3(%arg0: i32, %arg1: i32, %arg2: i32) -> (i32, i32) {
    %c0_i32 = arith.constant 0 : i32
    return %arg0, %arg1 : i32, i32
  }
}

module attributes {stable_mosaic.version = 11 : i64} {
  func.func @kernel(%arg0: i32, %arg1: i32, %arg2: i32, %arg3: memref<8x256xbf16, #tpu.memory_space<vmem>>, %arg4: memref<256x512xbf16, #tpu.memory_space<vmem>>, %arg5: memref<1x512xf32, #tpu.memory_space<vmem>>, %arg6: memref<8x512xbf16, #tpu.memory_space<vmem>>, %arg7: memref<8x512xbf16, #tpu.memory_space<vmem>>, %arg8: memref<8x512xf32, #tpu.memory_space<vmem>>) attributes {dimension_semantics = [#tpu.dimension_semantics<parallel>, #tpu.dimension_semantics<parallel>, #tpu.dimension_semantics<arbitrary>], iteration_bounds = array<i64: 1, 2, 1>, scalar_prefetch = 0 : i64, scratch_operands = 1 : i64, tpu.core_type = #tpu.core_type<tc>, window_params = [{transform_indices = @transform_0, window_bounds = array<i64: 8, 256>}, {transform_indices = @transform_1, window_bounds = array<i64: 256, 512>}, {transform_indices = @transform_2, window_bounds = array<i64: 1, 512>}, {transform_indices = @transform_3, window_bounds = array<i64: 8, 512>}, {transform_indices = @transform_4, window_bounds = array<i64: 8, 512>}]} {
    %c0_i32 = arith.constant 0 : i32
    %0 = arith.cmpi eq, %arg2, %c0_i32 : i32
    %1 = arith.extui %0 : i1 to i32
    %c0_i32_0 = arith.constant 0 : i32
    %2 = arith.cmpi ne, %1, %c0_i32_0 : i32
    scf.if %2 {
      %cst_10 = arith.constant 0.000000e+00 : f32
      %12 = vector.broadcast %cst_10 : f32 to vector<8x512xf32>
      %c0_11 = arith.constant 0 : index
      %c0_12 = arith.constant 0 : index
      %13 = vector.load %arg8[%c0_11, %c0_12] : memref<8x512xf32, #tpu.memory_space<vmem>>, vector<8x512xf32>
      tpu.vector_store %arg8[%c0_11, %c0_12], %12 {strides = array<i32>} : memref<8x512xf32, #tpu.memory_space<vmem>>, vector<8x512xf32>,
    } else {
    }
    %c0 = arith.constant 0 : index
    %c0_1 = arith.constant 0 : index
    %3 = vector.load %arg8[%c0, %c0_1] : memref<8x512xf32, #tpu.memory_space<vmem>>, vector<8x512xf32>
    %c0_2 = arith.constant 0 : index
    %c0_3 = arith.constant 0 : index
    %4 = vector.load %arg3[%c0_2, %c0_3] : memref<8x256xbf16, #tpu.memory_space<vmem>>, vector<8x256xbf16>
    %c0_4 = arith.constant 0 : index
    %c0_5 = arith.constant 0 : index
    %5 = vector.load %arg4[%c0_4, %c0_5] : memref<256x512xbf16, #tpu.memory_space<vmem>>, vector<256x512xbf16>
    %cst = arith.constant dense<0.000000e+00> : vector<8x512xf32>
    %6 = tpu.matmul %4, %5, %cst {dimension_numbers = #tpu.dot_dimension_numbers<[1], [0], [0], [1], [0, 0, 1, 1], [], []>} : vector<8x256xbf16>, vector<256x512xbf16>, vector<8x512xf32> -> vector<8x512xf32>
    %7 = arith.addf %3, %6 : vector<8x512xf32>
    %c0_6 = arith.constant 0 : index
    %c0_7 = arith.constant 0 : index
    %8 = vector.load %arg8[%c0_6, %c0_7] : memref<8x512xf32, #tpu.memory_space<vmem>>, vector<8x512xf32>
    tpu.vector_store %arg8[%c0_6, %c0_7], %7 {strides = array<i32>} : memref<8x512xf32, #tpu.memory_space<vmem>>, vector<8x512xf32>,
    %c0_i32_8 = arith.constant 0 : i32
    %9 = arith.cmpi eq, %arg2, %c0_i32_8 : i32
    %10 = arith.extui %9 : i1 to i32
    %c0_i32_9 = arith.constant 0 : i32
    %11 = arith.cmpi ne, %10, %c0_i32_9 : i32
    scf.if %11 {
      %c0_10 = arith.constant 0 : index
      %c0_11 = arith.constant 0 : index
      %12 = vector.load %arg8[%c0_10, %c0_11] : memref<8x512xf32, #tpu.memory_space<vmem>>, vector<8x512xf32>
      %c0_12 = arith.constant 0 : index
      %c0_13 = arith.constant 0 : index
      %13 = vector.load %arg5[%c0_12, %c0_13] : memref<1x512xf32, #tpu.memory_space<vmem>>, vector<1x512xf32>
      %14 = vector.broadcast %13 : vector<1x512xf32> to vector<8x512xf32>
      %15 = arith.addf %12, %14 : vector<8x512xf32>
      %c0_14 = arith.constant 0 : index
      %c0_15 = arith.constant 0 : index
      %16 = vector.load %arg6[%c0_14, %c0_15] : memref<8x512xbf16, #tpu.memory_space<vmem>>, vector<8x512xbf16>
      %17 = arith.extf %16 : vector<8x512xbf16> to vector<8x512xf32>
      %18 = arith.addf %15, %17 : vector<8x512xf32>
      %cst_16 = arith.constant 0.000000e+00 : f32
      %19 = vector.broadcast %cst_16 : f32 to vector<8x512xf32>
      %20 = arith.maximumf %18, %19 : vector<8x512xf32>
      %21 = arith.truncf %20 : vector<8x512xf32> to vector<8x512xbf16>
      %c0_17 = arith.constant 0 : index
      %c0_18 = arith.constant 0 : index
      %22 = vector.load %arg7[%c0_17, %c0_18] : memref<8x512xbf16, #tpu.memory_space<vmem>>, vector<8x512xbf16>
      tpu.vector_store %arg7[%c0_17, %c0_18], %21 {strides = array<i32>} : memref<8x512xbf16, #tpu.memory_space<vmem>>, vector<8x512xbf16>,
    } else {
    }
    return
  }
  func.func @transform_0(%arg0: i32, %arg1: i32, %arg2: i32) -> (i32, i32) {
    %c0_i32 = arith.constant 0 : i32
    return %arg0, %arg2 : i32, i32
  }
  func.func @transform_1(%arg0: i32, %arg1: i32, %arg2: i32) -> (i32, i32) {
    %c0_i32 = arith.constant 0 : i32
    return %arg2, %arg1 : i32, i32
  }
  func.func @transform_2(%arg0: i32, %arg1: i32, %arg2: i32) -> (i32, i32) {
    %c0_i32 = arith.constant 0 : i32
    %c0_i32_0 = arith.constant 0 : i32
    return %c0_i32, %arg1 : i32, i32
  }
  func.func @transform_3(%arg0: i32, %arg1: i32, %arg2: i32) -> (i32, i32) {
    %c0_i32 = arith.constant 0 : i32
    return %arg0, %arg1 : i32, i32
  }
  func.func @transform_4(%arg0: i32, %arg1: i32, %arg2: i32) -> (i32, i32) {
    %c0_i32 = arith.constant 0 : i32
    return %arg0, %arg1 : i32, i32
  }
}

</mosaic_0001>

<llo_original>
// kernel: _lambda_.8
$region0: #{_lambda_.8}
  #allocation0 [shape = 'u32[]', space=smem, size = 0x4, offset = 0x4, fixed_abs, tag = 'smem constant byte address 0x4 - core index']
  #allocation1 [shape = 'u32[144,128]{1,0:T(1,128)}', space=vmem, size = 0x12000, scoped, tag = 'internal scratch']
  #allocation2 [shape = 'f32[512,256]{1,0:T(8,128)}', space=vmem, size = 0x80000, scoped, tag = 'scratch operand']
  %s0 = inlined_call_operand.hbm [shape: bf16[512,32], index: 0, kind: input, shape index: {}]
  %s1 = inlined_call_operand.vmem [shape: bf16[32,256], index: 1, kind: input, shape index: {}]
  %s2 = inlined_call_operand.vmem [shape: f32[1,256], index: 2, kind: input, shape index: {}]
  %s3 = inlined_call_operand.vmem [shape: bf16[512,256], index: 3, kind: output, shape index: {}]
  %s4 = sld [smem:[#allocation0]]
  $region34: #{_lambda_.8} parent=0
    _
  %s6 = ssub.s32 1, %s4
  %s7 = scalar_select 0, %s6, %s4
  $region1: #{_lambda_.8} parent=0
    #allocation3 [shape = 'u8[131072]{0}', space=vmem, size = 0x20000, scoped, tag = 'input window, operand 0, single buffered']
    #allocation4 [shape = 's32[1]{0}', space=sflag, size = 0x4, scoped, tag = 'scoped memory for _lambda_.8']
    %8 = vsyncpa [#allocation4], 0
    // Predicated region
    $region2: #{_lambda_.8} parent=1 // pred_check
      _
    $region3: #{_lambda_.8} parent=1 // pred_check_branch
      %10 = sbr.rel (0) target = $region5
    $region4: #{_lambda_.8} parent=1 // pred_region
      %s12 = ssub.s32 4096, 4096
      %13 = vsyncadd [#allocation4], %s12
      %s14 = sshll.u32 [#allocation3], 4
      %s15 = int_to_ptr.vmem [resolvable:$true] %s14
      %20 = dma.hbm_to_vmem [thread:$0]  %s0, 4096, %s15, [#allocation4], 64, 64, 4
    $region5: #{_lambda_.8} parent=1 // pred_fallthru
      _
    // Predicated region
    $region6: #{_lambda_.8} parent=1 // pred_check
      _
    $region7: #{_lambda_.8} parent=1 // pred_check_branch
      %22 = sbr.rel (0) target = $region9
    $region8: #{_lambda_.8} parent=1 // pred_region
      _
    $region9: #{_lambda_.8} parent=1 // pred_fallthru
      _
    // Predicated region
    $region10: #{_lambda_.8} parent=1 // pred_check
      _
    $region11: #{_lambda_.8} parent=1 // pred_check_branch
      %24 = sbr.rel (0) target = $region13
    $region12: #{_lambda_.8} parent=1 // pred_region
      _
    $region13: #{_lambda_.8} parent=1 // pred_fallthru
      _
    // Predicated region
    $region14: #{_lambda_.8} parent=1 // pred_check
      _
    $region15: #{_lambda_.8} parent=1 // pred_check_branch
      %26 = sbr.rel (0) target = $region17
    $region16: #{_lambda_.8} parent=1 // pred_region
      %27 = dma.done [#allocation4], 4096
    $region17: #{_lambda_.8} parent=1 // pred_fallthru
      _
    %p29 = scmp.eq.s32.totalorder 0, 0
    // Predicated region
    $region18: #{_lambda_.8} parent=1 // pred_check
      %p30 = pneg %p29
    $region19: #{_lambda_.8} parent=1 // pred_check_branch
      %32 = sbr.rel (%p30) target = $region21
    $region20: #{_lambda_.8} parent=1 // pred_region
      %33 = vst [vmem:[#allocation2] sm:$0xff] 0.0
      %34 = vst [vmem:[#allocation2 + $0x8] sm:$0xff] 0.0
      %35 = vst [vmem:[#allocation2 + $0x10] sm:$0xff] 0.0
      %36 = vst [vmem:[#allocation2 + $0x18] sm:$0xff] 0.0
      %37 = vst [vmem:[#allocation2 + $0x20] sm:$0xff] 0.0
      %38 = vst [vmem:[#allocation2 + $0x28] sm:$0xff] 0.0
      %39 = vst [vmem:[#allocation2 + $0x30] sm:$0xff] 0.0
      %40 = vst [vmem:[#allocation2 + $0x38] sm:$0xff] 0.0
      %41 = vst [vmem:[#allocation2 + $0x40] sm:$0xff] 0.0
      %42 = vst [vmem:[#allocation2 + $0x48] sm:$0xff] 0.0
      %43 = vst [vmem:[#allocation2 + $0x50] sm:$0xff] 0.0
      %44 = vst [vmem:[#allocation2 + $0x58] sm:$0xff] 0.0
      %45 = vst [vmem:[#allocation2 + $0x60] sm:$0xff] 0.0
      %46 = vst [vmem:[#allocation2 + $0x68] sm:$0xff] 0.0
      %47 = vst [vmem:[#allocation2 + $0x70] sm:$0xff] 0.0
      %48 = vst [vmem:[#allocation2 + $0x78] sm:$0xff] 0.0
      %49 = vst [vmem:[#allocation2 + $0x80] sm:$0xff] 0.0
      %50 = vst [vmem:[#allocation2 + $0x88] sm:$0xff] 0.0
      %51 = vst [vmem:[#allocation2 + $0x90] sm:$0xff] 0.0
      %52 = vst [vmem:[#allocation2 + $0x98] sm:$0xff] 0.0
      %53 = vst [vmem:[#allocation2 + $0xa0] sm:$0xff] 0.0
      %54 = vst [vmem:[#allocation2 + $0xa8] sm:$0xff] 0.0
      %55 = vst [vmem:[#allocation2 + $0xb0] sm:$0xff] 0.0
      %56 = vst [vmem:[#allocation2 + $0xb8] sm:$0xff] 0.0
      %57 = vst [vmem:[#allocation2 + $0xc0] sm:$0xff] 0.0
      %58 = vst [vmem:[#allocation2 + $0xc8] sm:$0xff] 0.0
      %59 = vst [vmem:[#allocation2 + $0xd0] sm:$0xff] 0.0
      %60 = vst [vmem:[#allocation2 + $0xd8] sm:$0xff] 0.0
      %61 = vst [vmem:[#allocation2 + $0xe0] sm:$0xff] 0.0
      %62 = vst [vmem:[#allocation2 + $0xe8] sm:$0xff] 0.0
      %63 = vst [vmem:[#allocation2 + $0xf0] sm:$0xff] 0.0
      %64 = vst [vmem:[#allocation2 + $0xf8] sm:$0xff] 0.0
      %65 = vst [vmem:[#allocation2 + $0x100] sm:$0xff] 0.0
      %66 = vst [vmem:[#allocation2 + $0x108] sm:$0xff] 0.0
      %67 = vst [vmem:[#allocation2 + $0x110] sm:$0xff] 0.0
      %68 = vst [vmem:[#allocation2 + $0x118] sm:$0xff] 0.0
      %69 = vst [vmem:[#allocation2 + $0x120] sm:$0xff] 0.0
      %70 = vst [vmem:[#allocation2 + $0x128] sm:$0xff] 0.0
      %71 = vst [vmem:[#allocation2 + $0x130] sm:$0xff] 0.0
      %72 = vst [vmem:[#allocation2 + $0x138] sm:$0xff] 0.0
      %73 = vst [vmem:[#allocation2 + $0x140] sm:$0xff] 0.0
      %74 = vst [vmem:[#allocation2 + $0x148] sm:$0xff] 0.0
      %75 = vst [vmem:[#allocation2 + $0x150] sm:$0xff] 0.0
      %76 = vst [vmem:[#allocation2 + $0x158] sm:$0xff] 0.0
      %77 = vst [vmem:[#allocation2 + $0x160] sm:$0xff] 0.0
      %78 = vst [vmem:[#allocation2 + $0x168] sm:$0xff] 0.0
      %79 = vst [vmem:[#allocation2 + $0x170] sm:$0xff] 0.0
      %80 = vst [vmem:[#allocation2 + $0x178] sm:$0xff] 0.0
      %81 = vst [vmem:[#allocation2 + $0x180] sm:$0xff] 0.0
      %82 = vst [vmem:[#allocation2 + $0x188] sm:$0xff] 0.0
      %83 = vst [vmem:[#allocation2 + $0x190] sm:$0xff] 0.0
      %84 = vst [vmem:[#allocation2 + $0x198] sm:$0xff] 0.0
      %85 = vst [vmem:[#allocation2 + $0x1a0] sm:$0xff] 0.0
      %86 = vst [vmem:[#allocation2 + $0x1a8] sm:$0xff] 0.0
      %87 = vst [vmem:[#allocation2 + $0x1b0] sm:$0xff] 0.0
      %88 = vst [vmem:[#allocation2 + $0x1b8] sm:$0xff] 0.0
      %89 = vst [vmem:[#allocation2 + $0x1c0] sm:$0xff] 0.0
      %90 = vst [vmem:[#allocation2 + $0x1c8] sm:$0xff] 0.0
      %91 = vst [vmem:[#allocation2 + $0x1d0] sm:$0xff] 0.0
      %92 = vst [vmem:[#allocation2 + $0x1d8] sm:$0xff] 0.0
      %93 = vst [vmem:[#allocation2 + $0x1e0] sm:$0xff] 0.0
      %94 = vst [vmem:[#allocation2 + $0x1e8] sm:$0xff] 0.0
      %95 = vst [vmem:[#allocation2 + $0x1f0] sm:$0xff] 0.0
      %96 = vst [vmem:[#allocation2 + $0x1f8] sm:$0xff] 0.0
      %97 = vst [vmem:[#allocation2 + $0x200] sm:$0xff] 0.0
      %98 = vst [vmem:[#allocation2 + $0x208] sm:$0xff] 0.0
      %99 = vst [vmem:[#allocation2 + $0x210] sm:$0xff] 0.0
      %100 = vst [vmem:[#allocation2 + $0x218] sm:$0xff] 0.0
      %101 = vst [vmem:[#allocation2 + $0x220] sm:$0xff] 0.0
      %102 = vst [vmem:[#allocation2 + $0x228] sm:$0xff] 0.0
      %103 = vst [vmem:[#allocation2 + $0x230] sm:$0xff] 0.0
      %104 = vst [vmem:[#allocation2 + $0x238] sm:$0xff] 0.0
      %105 = vst [vmem:[#allocation2 + $0x240] sm:$0xff] 0.0
      %106 = vst [vmem:[#allocation2 + $0x248] sm:$0xff] 0.0
      %107 = vst [vmem:[#allocation2 + $0x250] sm:$0xff] 0.0
      %108 = vst [vmem:[#allocation2 + $0x258] sm:$0xff] 0.0
      %109 = vst [vmem:[#allocation2 + $0x260] sm:$0xff] 0.0
      %110 = vst [vmem:[#allocation2 + $0x268] sm:$0xff] 0.0
      %111 = vst [vmem:[#allocation2 + $0x270] sm:$0xff] 0.0
      %112 = vst [vmem:[#allocation2 + $0x278] sm:$0xff] 0.0
      %113 = vst [vmem:[#allocation2 + $0x280] sm:$0xff] 0.0
      %114 = vst [vmem:[#allocation2 + $0x288] sm:$0xff] 0.0
      %115 = vst [vmem:[#allocation2 + $0x290] sm:$0xff] 0.0
      %116 = vst [vmem:[#allocation2 + $0x298] sm:$0xff] 0.0
      %117 = vst [vmem:[#allocation2 + $0x2a0] sm:$0xff] 0.0
      %118 = vst [vmem:[#allocation2 + $0x2a8] sm:$0xff] 0.0
      %119 = vst [vmem:[#allocation2 + $0x2b0] sm:$0xff] 0.0
      %120 = vst [vmem:[#allocation2 + $0x2b8] sm:$0xff] 0.0
      %121 = vst [vmem:[#allocation2 + $0x2c0] sm:$0xff] 0.0
      %122 = vst [vmem:[#allocation2 + $0x2c8] sm:$0xff] 0.0
      %123 = vst [vmem:[#allocation2 + $0x2d0] sm:$0xff] 0.0
      %124 = vst [vmem:[#allocation2 + $0x2d8] sm:$0xff] 0.0
      %125 = vst [vmem:[#allocation2 + $0x2e0] sm:$0xff] 0.0
      %126 = vst [vmem:[#allocation2 + $0x2e8] sm:$0xff] 0.0
      %127 = vst [vmem:[#allocation2 + $0x2f0] sm:$0xff] 0.0
      %128 = vst [vmem:[#allocation2 + $0x2f8] sm:$0xff] 0.0
      %129 = vst [vmem:[#allocation2 + $0x300] sm:$0xff] 0.0
      %130 = vst [vmem:[#allocation2 + $0x308] sm:$0xff] 0.0
      %131 = vst [vmem:[#allocation2 + $0x310] sm:$0xff] 0.0
      %132 = vst [vmem:[#allocation2 + $0x318] sm:$0xff] 0.0
      %133 = vst [vmem:[#allocation2 + $0x320] sm:$0xff] 0.0
      %134 = vst [vmem:[#allocation2 + $0x328] sm:$0xff] 0.0
      %135 = vst [vmem:[#allocation2 + $0x330] sm:$0xff] 0.0
      %136 = vst [vmem:[#allocation2 + $0x338] sm:$0xff] 0.0
      %137 = vst [vmem:[#allocation2 + $0x340] sm:$0xff] 0.0
      %138 = vst [vmem:[#allocation2 + $0x348] sm:$0xff] 0.0
      %139 = vst [vmem:[#allocation2 + $0x350] sm:$0xff] 0.0
      %140 = vst [vmem:[#allocation2 + $0x358] sm:$0xff] 0.0
      %141 = vst [vmem:[#allocation2 + $0x360] sm:$0xff] 0.0
      %142 = vst [vmem:[#allocation2 + $0x368] sm:$0xff] 0.0
      %143 = vst [vmem:[#allocation2 + $0x370] sm:$0xff] 0.0
      %144 = vst [vmem:[#allocation2 + $0x378] sm:$0xff] 0.0
      %145 = vst [vmem:[#allocation2 + $0x380] sm:$0xff] 0.0
      %146 = vst [vmem:[#allocation2 + $0x388] sm:$0xff] 0.0
      %147 = vst [vmem:[#allocation2 + $0x390] sm:$0xff] 0.0
      %148 = vst [vmem:[#allocation2 + $0x398] sm:$0xff] 0.0
      %149 = vst [vmem:[#allocation2 + $0x3a0] sm:$0xff] 0.0
      %150 = vst [vmem:[#allocation2 + $0x3a8] sm:$0xff] 0.0
      %151 = vst [vmem:[#allocation2 + $0x3b0] sm:$0xff] 0.0
      %152 = vst [vmem:[#allocation2 + $0x3b8] sm:$0xff] 0.0
      %153 = vst [vmem:[#allocation2 + $0x3c0] sm:$0xff] 0.0
      %154 = vst [vmem:[#allocation2 + $0x3c8] sm:$0xff] 0.0
      %155 = vst [vmem:[#allocation2 + $0x3d0] sm:$0xff] 0.0
      %156 = vst [vmem:[#allocation2 + $0x3d8] sm:$0xff] 0.0
      %157 = vst [vmem:[#allocation2 + $0x3e0] sm:$0xff] 0.0
      %158 = vst [vmem:[#allocation2 + $0x3e8] sm:$0xff] 0.0
      %159 = vst [vmem:[#allocation2 + $0x3f0] sm:$0xff] 0.0
      %160 = vst [vmem:[#allocation2 + $0x3f8] sm:$0xff] 0.0
    $region21: #{_lambda_.8} parent=1 // pred_fallthru
      _
    %v161 = vld [vmem:[#allocation2] sm:$0xff]
    %v162 = vld [vmem:[#allocation2 + $0x8] sm:$0xff]
    %v163 = vld [vmem:[#allocation2 + $0x10] sm:$0xff]
    %v164 = vld [vmem:[#allocation2 + $0x18] sm:$0xff]
    %v165 = vld [vmem:[#allocation2 + $0x20] sm:$0xff]
    %v166 = vld [vmem:[#allocation2 + $0x28] sm:$0xff]
    %v167 = vld [vmem:[#allocation2 + $0x30] sm:$0xff]
    %v168 = vld [vmem:[#allocation2 + $0x38] sm:$0xff]
    %v169 = vld [vmem:[#allocation2 + $0x40] sm:$0xff]
    %v170 = vld [vmem:[#allocation2 + $0x48] sm:$0xff]
    %v171 = vld [vmem:[#allocation2 + $0x50] sm:$0xff]
    %v172 = vld [vmem:[#allocation2 + $0x58] sm:$0xff]
    %v173 = vld [vmem:[#allocation2 + $0x60] sm:$0xff]
    %v174 = vld [vmem:[#allocation2 + $0x68] sm:$0xff]
    %v175 = vld [vmem:[#allocation2 + $0x70] sm:$0xff]
    %v176 = vld [vmem:[#allocation2 + $0x78] sm:$0xff]
    %v177 = vld [vmem:[#allocation2 + $0x80] sm:$0xff]
    %v178 = vld [vmem:[#allocation2 + $0x88] sm:$0xff]
    %v179 = vld [vmem:[#allocation2 + $0x90] sm:$0xff]
    %v180 = vld [vmem:[#allocation2 + $0x98] sm:$0xff]
    %v181 = vld [vmem:[#allocation2 + $0xa0] sm:$0xff]
    %v182 = vld [vmem:[#allocation2 + $0xa8] sm:$0xff]
    %v183 = vld [vmem:[#allocation2 + $0xb0] sm:$0xff]
    %v184 = vld [vmem:[#allocation2 + $0xb8] sm:$0xff]
    %v185 = vld [vmem:[#allocation2 + $0xc0] sm:$0xff]
    %v186 = vld [vmem:[#allocation2 + $0xc8] sm:$0xff]
    %v187 = vld [vmem:[#allocation2 + $0xd0] sm:$0xff]
    %v188 = vld [vmem:[#allocation2 + $0xd8] sm:$0xff]
    %v189 = vld [vmem:[#allocation2 + $0xe0] sm:$0xff]
    %v190 = vld [vmem:[#allocation2 + $0xe8] sm:$0xff]
    %v191 = vld [vmem:[#allocation2 + $0xf0] sm:$0xff]
    %v192 = vld [vmem:[#allocation2 + $0xf8] sm:$0xff]
    %v193 = vld [vmem:[#allocation2 + $0x100] sm:$0xff]
    %v194 = vld [vmem:[#allocation2 + $0x108] sm:$0xff]
    %v195 = vld [vmem:[#allocation2 + $0x110] sm:$0xff]
    %v196 = vld [vmem:[#allocation2 + $0x118] sm:$0xff]
    %v197 = vld [vmem:[#allocation2 + $0x120] sm:$0xff]
    %v198 = vld [vmem:[#allocation2 + $0x128] sm:$0xff]
    %v199 = vld [vmem:[#allocation2 + $0x130] sm:$0xff]
    %v200 = vld [vmem:[#allocation2 + $0x138] sm:$0xff]
    %v201 = vld [vmem:[#allocation2 + $0x140] sm:$0xff]
    %v202 = vld [vmem:[#allocation2 + $0x148] sm:$0xff]
    %v203 = vld [vmem:[#allocation2 + $0x150] sm:$0xff]
    %v204 = vld [vmem:[#allocation2 + $0x158] sm:$0xff]
    %v205 = vld [vmem:[#allocation2 + $0x160] sm:$0xff]
    %v206 = vld [vmem:[#allocation2 + $0x168] sm:$0xff]
    %v207 = vld [vmem:[#allocation2 + $0x170] sm:$0xff]
    %v208 = vld [vmem:[#allocation2 + $0x178] sm:$0xff]
    %v209 = vld [vmem:[#allocation2 + $0x180] sm:$0xff]
    %v210 = vld [vmem:[#allocation2 + $0x188] sm:$0xff]
    %v211 = vld [vmem:[#allocation2 + $0x190] sm:$0xff]
    %v212 = vld [vmem:[#allocation2 + $0x198] sm:$0xff]
    %v213 = vld [vmem:[#allocation2 + $0x1a0] sm:$0xff]
    %v214 = vld [vmem:[#allocation2 + $0x1a8] sm:$0xff]
    %v215 = vld [vmem:[#allocation2 + $0x1b0] sm:$0xff]
    %v216 = vld [vmem:[#allocation2 + $0x1b8] sm:$0xff]
    %v217 = vld [vmem:[#allocation2 + $0x1c0] sm:$0xff]
    %v218 = vld [vmem:[#allocation2 + $0x1c8] sm:$0xff]
    %v219 = vld [vmem:[#allocation2 + $0x1d0] sm:$0xff]
    %v220 = vld [vmem:[#allocation2 + $0x1d8] sm:$0xff]
    %v221 = vld [vmem:[#allocation2 + $0x1e0] sm:$0xff]
    %v222 = vld [vmem:[#allocation2 + $0x1e8] sm:$0xff]
    %v223 = vld [vmem:[#allocation2 + $0x1f0] sm:$0xff]
    %v224 = vld [vmem:[#allocation2 + $0x1f8] sm:$0xff]
    %v225 = vld [vmem:[#allocation2 + $0x200] sm:$0xff]
    %v226 = vld [vmem:[#allocation2 + $0x208] sm:$0xff]
    %v227 = vld [vmem:[#allocation2 + $0x210] sm:$0xff]
    %v228 = vld [vmem:[#allocation2 + $0x218] sm:$0xff]
    %v229 = vld [vmem:[#allocation2 + $0x220] sm:$0xff]
    %v230 = vld [vmem:[#allocation2 + $0x228] sm:$0xff]
    %v231 = vld [vmem:[#allocation2 + $0x230] sm:$0xff]
    %v232 = vld [vmem:[#allocation2 + $0x238] sm:$0xff]
    %v233 = vld [vmem:[#allocation2 + $0x240] sm:$0xff]
    %v234 = vld [vmem:[#allocation2 + $0x248] sm:$0xff]
    %v235 = vld [vmem:[#allocation2 + $0x250] sm:$0xff]
    %v236 = vld [vmem:[#allocation2 + $0x258] sm:$0xff]
    %v237 = vld [vmem:[#allocation2 + $0x260] sm:$0xff]
    %v238 = vld [vmem:[#allocation2 + $0x268] sm:$0xff]
    %v239 = vld [vmem:[#allocation2 + $0x270] sm:$0xff]
    %v240 = vld [vmem:[#allocation2 + $0x278] sm:$0xff]
    %v241 = vld [vmem:[#allocation2 + $0x280] sm:$0xff]
    %v242 = vld [vmem:[#allocation2 + $0x288] sm:$0xff]
    %v243 = vld [vmem:[#allocation2 + $0x290] sm:$0xff]
    %v244 = vld [vmem:[#allocation2 + $0x298] sm:$0xff]
    %v245 = vld [vmem:[#allocation2 + $0x2a0] sm:$0xff]
    %v246 = vld [vmem:[#allocation2 + $0x2a8] sm:$0xff]
    %v247 = vld [vmem:[#allocation2 + $0x2b0] sm:$0xff]
    %v248 = vld [vmem:[#allocation2 + $0x2b8] sm:$0xff]
    %v249 = vld [vmem:[#allocation2 + $0x2c0] sm:$0xff]
    %v250 = vld [vmem:[#allocation2 + $0x2c8] sm:$0xff]
    %v251 = vld [vmem:[#allocation2 + $0x2d0] sm:$0xff]
    %v252 = vld [vmem:[#allocation2 + $0x2d8] sm:$0xff]
    %v253 = vld [vmem:[#allocation2 + $0x2e0] sm:$0xff]
    %v254 = vld [vmem:[#allocation2 + $0x2e8] sm:$0xff]
    %v255 = vld [vmem:[#allocation2 + $0x2f0] sm:$0xff]
    %v256 = vld [vmem:[#allocation2 + $0x2f8] sm:$0xff]
    %v257 = vld [vmem:[#allocation2 + $0x300] sm:$0xff]
    %v258 = vld [vmem:[#allocation2 + $0x308] sm:$0xff]
    %v259 = vld [vmem:[#allocation2 + $0x310] sm:$0xff]
    %v260 = vld [vmem:[#allocation2 + $0x318] sm:$0xff]
    %v261 = vld [vmem:[#allocation2 + $0x320] sm:$0xff]
    %v262 = vld [vmem:[#allocation2 + $0x328] sm:$0xff]
    %v263 = vld [vmem:[#allocation2 + $0x330] sm:$0xff]
    %v264 = vld [vmem:[#allocation2 + $0x338] sm:$0xff]
    %v265 = vld [vmem:[#allocation2 + $0x340] sm:$0xff]
    %v266 = vld [vmem:[#allocation2 + $0x348] sm:$0xff]
    %v267 = vld [vmem:[#allocation2 + $0x350] sm:$0xff]
    %v268 = vld [vmem:[#allocation2 + $0x358] sm:$0xff]
    %v269 = vld [vmem:[#allocation2 + $0x360] sm:$0xff]
    %v270 = vld [vmem:[#allocation2 + $0x368] sm:$0xff]
    %v271 = vld [vmem:[#allocation2 + $0x370] sm:$0xff]
    %v272 = vld [vmem:[#allocation2 + $0x378] sm:$0xff]
    %v273 = vld [vmem:[#allocation2 + $0x380] sm:$0xff]
    %v274 = vld [vmem:[#allocation2 + $0x388] sm:$0xff]
    %v275 = vld [vmem:[#allocation2 + $0x390] sm:$0xff]
    %v276 = vld [vmem:[#allocation2 + $0x398] sm:$0xff]
    %v277 = vld [vmem:[#allocation2 + $0x3a0] sm:$0xff]
    %v278 = vld [vmem:[#allocation2 + $0x3a8] sm:$0xff]
    %v279 = vld [vmem:[#allocation2 + $0x3b0] sm:$0xff]
    %v280 = vld [vmem:[#allocation2 + $0x3b8] sm:$0xff]
    %v281 = vld [vmem:[#allocation2 + $0x3c0] sm:$0xff]
    %v282 = vld [vmem:[#allocation2 + $0x3c8] sm:$0xff]
    %v283 = vld [vmem:[#allocation2 + $0x3d0] sm:$0xff]
    %v284 = vld [vmem:[#allocation2 + $0x3d8] sm:$0xff]
    %v285 = vld [vmem:[#allocation2 + $0x3e0] sm:$0xff]
    %v286 = vld [vmem:[#allocation2 + $0x3e8] sm:$0xff]
    %v287 = vld [vmem:[#allocation2 + $0x3f0] sm:$0xff]
    %v288 = vld [vmem:[#allocation2 + $0x3f8] sm:$0xff]
    %v289 = vld [vmem:[#allocation3] sm:$0xf]
    %v290 = vld [vmem:[#allocation3 + $0x4] sm:$0xf]
    %v291 = vld [vmem:[#allocation3 + $0x8] sm:$0xf]
    %v292 = vld [vmem:[#allocation3 + $0xc] sm:$0xf]
    %v293 = vld [vmem:[#allocation3 + $0x10] sm:$0xf]
    %v294 = vld [vmem:[#allocation3 + $0x14] sm:$0xf]
    %v295 = vld [vmem:[#allocation3 + $0x18] sm:$0xf]
    %v296 = vld [vmem:[#allocation3 + $0x1c] sm:$0xf]
    %v297 = vld [vmem:[#allocation3 + $0x20] sm:$0xf]
    %v298 = vld [vmem:[#allocation3 + $0x24] sm:$0xf]
    %v299 = vld [vmem:[#allocation3 + $0x28] sm:$0xf]
    %v300 = vld [vmem:[#allocation3 + $0x2c] sm:$0xf]
    %v301 = vld [vmem:[#allocation3 + $0x30] sm:$0xf]
    %v302 = vld [vmem:[#allocation3 + $0x34] sm:$0xf]
    %v303 = vld [vmem:[#allocation3 + $0x38] sm:$0xf]
    %v304 = vld [vmem:[#allocation3 + $0x3c] sm:$0xf]
    %v305 = vld [vmem:[#allocation3 + $0x40] sm:$0xf]
    %v306 = vld [vmem:[#allocation3 + $0x44] sm:$0xf]
    %v307 = vld [vmem:[#allocation3 + $0x48] sm:$0xf]
    %v308 = vld [vmem:[#allocation3 + $0x4c] sm:$0xf]
    %v309 = vld [vmem:[#allocation3 + $0x50] sm:$0xf]
    %v310 = vld [vmem:[#allocation3 + $0x54] sm:$0xf]
    %v311 = vld [vmem:[#allocation3 + $0x58] sm:$0xf]
    %v312 = vld [vmem:[#allocation3 + $0x5c] sm:$0xf]
    %v313 = vld [vmem:[#allocation3 + $0x60] sm:$0xf]
    %v314 = vld [vmem:[#allocation3 + $0x64] sm:$0xf]
    %v315 = vld [vmem:[#allocation3 + $0x68] sm:$0xf]
    %v316 = vld [vmem:[#allocation3 + $0x6c] sm:$0xf]
    %v317 = vld [vmem:[#allocation3 + $0x70] sm:$0xf]
    %v318 = vld [vmem:[#allocation3 + $0x74] sm:$0xf]
    %v319 = vld [vmem:[#allocation3 + $0x78] sm:$0xf]
    %v320 = vld [vmem:[#allocation3 + $0x7c] sm:$0xf]
    %v321 = vld [vmem:[#allocation3 + $0x80] sm:$0xf]
    %v322 = vld [vmem:[#allocation3 + $0x84] sm:$0xf]
    %v323 = vld [vmem:[#allocation3 + $0x88] sm:$0xf]
    %v324 = vld [vmem:[#allocation3 + $0x8c] sm:$0xf]
    %v325 = vld [vmem:[#allocation3 + $0x90] sm:$0xf]
    %v326 = vld [vmem:[#allocation3 + $0x94] sm:$0xf]
    %v327 = vld [vmem:[#allocation3 + $0x98] sm:$0xf]
    %v328 = vld [vmem:[#allocation3 + $0x9c] sm:$0xf]
    %v329 = vld [vmem:[#allocation3 + $0xa0] sm:$0xf]
    %v330 = vld [vmem:[#allocation3 + $0xa4] sm:$0xf]
    %v331 = vld [vmem:[#allocation3 + $0xa8] sm:$0xf]
    %v332 = vld [vmem:[#allocation3 + $0xac] sm:$0xf]
    %v333 = vld [vmem:[#allocation3 + $0xb0] sm:$0xf]
    %v334 = vld [vmem:[#allocation3 + $0xb4] sm:$0xf]
    %v335 = vld [vmem:[#allocation3 + $0xb8] sm:$0xf]
    %v336 = vld [vmem:[#allocation3 + $0xbc] sm:$0xf]
    %v337 = vld [vmem:[#allocation3 + $0xc0] sm:$0xf]
    %v338 = vld [vmem:[#allocation3 + $0xc4] sm:$0xf]
    %v339 = vld [vmem:[#allocation3 + $0xc8] sm:$0xf]
    %v340 = vld [vmem:[#allocation3 + $0xcc] sm:$0xf]
    %v341 = vld [vmem:[#allocation3 + $0xd0] sm:$0xf]
    %v342 = vld [vmem:[#allocation3 + $0xd4] sm:$0xf]
    %v343 = vld [vmem:[#allocation3 + $0xd8] sm:$0xf]
    %v344 = vld [vmem:[#allocation3 + $0xdc] sm:$0xf]
    %v345 = vld [vmem:[#allocation3 + $0xe0] sm:$0xf]
    %v346 = vld [vmem:[#allocation3 + $0xe4] sm:$0xf]
    %v347 = vld [vmem:[#allocation3 + $0xe8] sm:$0xf]
    %v348 = vld [vmem:[#allocation3 + $0xec] sm:$0xf]
    %v349 = vld [vmem:[#allocation3 + $0xf0] sm:$0xf]
    %v350 = vld [vmem:[#allocation3 + $0xf4] sm:$0xf]
    %v351 = vld [vmem:[#allocation3 + $0xf8] sm:$0xf]
    %v352 = vld [vmem:[#allocation3 + $0xfc] sm:$0xf]
    %v353 = vld [vmem:[%s1] sm:$0xff]
    %v354 = vld [vmem:[%s1 + $0x8] sm:$0xff]
    %v355 = vld [vmem:[%s1 + $0x10] sm:$0xff]
    %v356 = vld [vmem:[%s1 + $0x18] sm:$0xff]
    %v421 = vunpack.c.l.b16 %v289
    %v422 = vunpack.c.l.b16 %v290
    %v423 = vunpack.c.l.b16 %v291
    %v424 = vunpack.c.l.b16 %v292
    %v425 = vunpack.c.l.b16 %v293
    %v426 = vunpack.c.l.b16 %v294
    %v427 = vunpack.c.l.b16 %v295
    %v428 = vunpack.c.l.b16 %v296
    %v429 = vunpack.c.l.b16 %v297
    %v430 = vunpack.c.l.b16 %v298
    %v431 = vunpack.c.l.b16 %v299
    %v432 = vunpack.c.l.b16 %v300
    %v433 = vunpack.c.l.b16 %v301
    %v434 = vunpack.c.l.b16 %v302
    %v435 = vunpack.c.l.b16 %v303
    %v436 = vunpack.c.l.b16 %v304
    %v437 = vunpack.c.l.b16 %v305
    %v438 = vunpack.c.l.b16 %v306
    %v439 = vunpack.c.l.b16 %v307
    %v440 = vunpack.c.l.b16 %v308
    %v441 = vunpack.c.l.b16 %v309
    %v442 = vunpack.c.l.b16 %v310
    %v443 = vunpack.c.l.b16 %v311
    %v444 = vunpack.c.l.b16 %v312
    %v445 = vunpack.c.l.b16 %v313
    %v446 = vunpack.c.l.b16 %v314
    %v447 = vunpack.c.l.b16 %v315
    %v448 = vunpack.c.l.b16 %v316
    %v449 = vunpack.c.l.b16 %v317
    %v450 = vunpack.c.l.b16 %v318
    %v451 = vunpack.c.l.b16 %v319
    %v452 = vunpack.c.l.b16 %v320
    %v453 = vunpack.c.l.b16 %v321
    %v454 = vunpack.c.l.b16 %v322
    %v455 = vunpack.c.l.b16 %v323
    %v456 = vunpack.c.l.b16 %v324
    %v457 = vunpack.c.l.b16 %v325
    %v458 = vunpack.c.l.b16 %v326
    %v459 = vunpack.c.l.b16 %v327
    %v460 = vunpack.c.l.b16 %v328
    %v461 = vunpack.c.l.b16 %v329
    %v462 = vunpack.c.l.b16 %v330
    %v463 = vunpack.c.l.b16 %v331
    %v464 = vunpack.c.l.b16 %v332
    %v465 = vunpack.c.l.b16 %v333
    %v466 = vunpack.c.l.b16 %v334
    %v467 = vunpack.c.l.b16 %v335
    %v468 = vunpack.c.l.b16 %v336
    %v469 = vunpack.c.l.b16 %v337
    %v470 = vunpack.c.l.b16 %v338
    %v471 = vunpack.c.l.b16 %v339
    %v472 = vunpack.c.l.b16 %v340
    %v473 = vunpack.c.l.b16 %v341
    %v474 = vunpack.c.l.b16 %v342
    %v475 = vunpack.c.l.b16 %v343
    %v476 = vunpack.c.l.b16 %v344
    %v477 = vunpack.c.l.b16 %v345
    %v478 = vunpack.c.l.b16 %v346
    %v479 = vunpack.c.l.b16 %v347
    %v480 = vunpack.c.l.b16 %v348
    %v481 = vunpack.c.l.b16 %v349
    %v482 = vunpack.c.l.b16 %v350
    %v483 = vunpack.c.l.b16 %v351
    %v484 = vunpack.c.l.b16 %v352
    %v485 = vpack.c.b16 %v422, %v421
    %v486 = vpack.c.b16 %v424, %v423
    %v487 = vpack.c.b16 %v426, %v425
    %v488 = vpack.c.b16 %v428, %v427
    %v489 = vpack.c.b16 %v430, %v429
    %v490 = vpack.c.b16 %v432, %v431
    %v491 = vpack.c.b16 %v434, %v433
    %v492 = vpack.c.b16 %v436, %v435
    %v493 = vpack.c.b16 %v438, %v437
    %v494 = vpack.c.b16 %v440, %v439
    %v495 = vpack.c.b16 %v442, %v441
    %v496 = vpack.c.b16 %v444, %v443
    %v497 = vpack.c.b16 %v446, %v445
    %v498 = vpack.c.b16 %v448, %v447
    %v499 = vpack.c.b16 %v450, %v449
    %v500 = vpack.c.b16 %v452, %v451
    %v501 = vpack.c.b16 %v454, %v453
    %v502 = vpack.c.b16 %v456, %v455
    %v503 = vpack.c.b16 %v458, %v457
    %v504 = vpack.c.b16 %v460, %v459
    %v505 = vpack.c.b16 %v462, %v461
    %v506 = vpack.c.b16 %v464, %v463
    %v507 = vpack.c.b16 %v466, %v465
    %v508 = vpack.c.b16 %v468, %v467
    %v509 = vpack.c.b16 %v470, %v469
    %v510 = vpack.c.b16 %v472, %v471
    %v511 = vpack.c.b16 %v474, %v473
    %v512 = vpack.c.b16 %v476, %v475
    %v513 = vpack.c.b16 %v478, %v477
    %v514 = vpack.c.b16 %v480, %v479
    %v515 = vpack.c.b16 %v482, %v481
    %v516 = vpack.c.b16 %v484, %v483
    %v521 = vunpack.c.l.b16 %v353
    %v522 = vunpack.c.h.b16 %v353
    %v523 = vunpack.c.l.b16 %v354
    %v524 = vunpack.c.h.b16 %v354
    %v525 = vunpack.c.l.b16 %v355
    %v526 = vunpack.c.h.b16 %v355
    %v527 = vunpack.c.l.b16 %v356
    %v528 = vunpack.c.h.b16 %v356
    %v529 = vpack.c.b16 %v523, %v521
    %v530 = vpack.c.b16 %v524, %v522
    %v531 = vpack.c.b16 %v527, %v525
    %v532 = vpack.c.b16 %v528, %v526
    %vm537 = vcmask 261120
    %v539 = vsel %vm537, %v485, 0
    %v542 = vsel %vm537, %v486, 0
    %v545 = vsel %vm537, %v487, 0
    %v548 = vsel %vm537, %v488, 0
    %v551 = vsel %vm537, %v489, 0
    %v554 = vsel %vm537, %v490, 0
    %v557 = vsel %vm537, %v491, 0
    %v560 = vsel %vm537, %v492, 0
    %v563 = vsel %vm537, %v493, 0
    %v566 = vsel %vm537, %v494, 0
    %v569 = vsel %vm537, %v495, 0
    %v572 = vsel %vm537, %v496, 0
    %v575 = vsel %vm537, %v497, 0
    %v578 = vsel %vm537, %v498, 0
    %v581 = vsel %vm537, %v499, 0
    %v584 = vsel %vm537, %v500, 0
    %v587 = vsel %vm537, %v501, 0
    %v590 = vsel %vm537, %v502, 0
    %v593 = vsel %vm537, %v503, 0
    %v596 = vsel %vm537, %v504, 0
    %v599 = vsel %vm537, %v505, 0
    %v602 = vsel %vm537, %v506, 0
    %v605 = vsel %vm537, %v507, 0
    %v608 = vsel %vm537, %v508, 0
    %v611 = vsel %vm537, %v509, 0
    %v614 = vsel %vm537, %v510, 0
    %v617 = vsel %vm537, %v511, 0
    %v620 = vsel %vm537, %v512, 0
    %v623 = vsel %vm537, %v513, 0
    %v626 = vsel %vm537, %v514, 0
    %v629 = vsel %vm537, %v515, 0
    %v632 = vsel %vm537, %v516, 0
    %634 = vmatprep.subr.bf16.mxu0 %v530
    %635 = vmatpush1.bf16.msra.mxu0 %v529
    %636 = vmatprep.subr.bf16.mxu0 %v532
    %637 = vmatpush1.bf16.msra.mxu0 %v531
    %638 = vmatprep.subr.bf16.mxu0 0
    %639 = vmatpush1.bf16.msra.mxu0 0
    %640 = vmatprep.subr.bf16.mxu0 0
    %641 = vmatpush1.bf16.msra.mxu0 0
    %642 = vmatprep.subr.bf16.mxu0 0
    %643 = vmatpush1.bf16.msra.mxu0 0
    %644 = vmatprep.subr.bf16.mxu0 0
    %645 = vmatpush1.bf16.msra.mxu0 0
    %646 = vmatprep.subr.bf16.mxu0 0
    %647 = vmatpush1.bf16.msra.mxu0 0
    %648 = vmatprep.subr.bf16.mxu0 0
    %649 = vmatpush1.bf16.msra.mxu0 0
    %650 = vmatprep.subr.bf16.mxu0 0
    %651 = vmatpush1.bf16.msra.mxu0 0
    %652 = vmatprep.subr.bf16.mxu0 0
    %653 = vmatpush1.bf16.msra.mxu0 0
    %654 = vmatprep.subr.bf16.mxu0 0
    %655 = vmatpush1.bf16.msra.mxu0 0
    %656 = vmatprep.subr.bf16.mxu0 0
    %657 = vmatpush1.bf16.msra.mxu0 0
    %658 = vmatprep.subr.bf16.mxu0 0
    %659 = vmatpush1.bf16.msra.mxu0 0
    %660 = vmatprep.subr.bf16.mxu0 0
    %661 = vmatpush1.bf16.msra.mxu0 0
    %662 = vmatprep.subr.bf16.mxu0 0
    %663 = vmatpush1.bf16.msra.mxu0 0
    %664 = vmatprep.subr.bf16.mxu0 0
    %665 = vmatpush1.bf16.msra.mxu0 0
    %666 = vmatprep.mubr.bf16.mxu0 0
    %667 = vmatmul.mubr.bf16.gmra.mrb[0].mxu0 %v539
    %v668 = vpop.f32.mrb[0].mxu0
    %v669 = vadd.f32 0.0, %v668
    %v670 = vpop.f32.mrb[0].mxu0
    %v671 = vadd.f32 0.0, %v670
    %v672 = vpop.f32.mrb[0].mxu0
    %v673 = vadd.f32 0.0, %v672
    %v674 = vpop.f32.mrb[0].mxu0
    %v675 = vadd.f32 0.0, %v674
    %676 = vmatprep.mubr.bf16.mxu0 0
    %677 = vmatmul.mubr.bf16.gmra.mrb[0].mxu0 %v542
    %v678 = vpop.f32.mrb[0].mxu0
    %v679 = vadd.f32 0.0, %v678
    %v680 = vpop.f32.mrb[0].mxu0
    %v681 = vadd.f32 0.0, %v680
    %v682 = vpop.f32.mrb[0].mxu0
    %v683 = vadd.f32 0.0, %v682
    %v684 = vpop.f32.mrb[0].mxu0
    %v685 = vadd.f32 0.0, %v684
    %686 = vmatprep.mubr.bf16.mxu0 0
    %687 = vmatmul.mubr.bf16.gmra.mrb[0].mxu0 %v545
    %v688 = vpop.f32.mrb[0].mxu0
    %v689 = vadd.f32 0.0, %v688
    %v690 = vpop.f32.mrb[0].mxu0
    %v691 = vadd.f32 0.0, %v690
    %v692 = vpop.f32.mrb[0].mxu0
    %v693 = vadd.f32 0.0, %v692
    %v694 = vpop.f32.mrb[0].mxu0
    %v695 = vadd.f32 0.0, %v694
    %696 = vmatprep.mubr.bf16.mxu0 0
    %697 = vmatmul.mubr.bf16.gmra.mrb[0].mxu0 %v548
    %v698 = vpop.f32.mrb[0].mxu0
    %v699 = vadd.f32 0.0, %v698
    %v700 = vpop.f32.mrb[0].mxu0
    %v701 = vadd.f32 0.0, %v700
    %v702 = vpop.f32.mrb[0].mxu0
    %v703 = vadd.f32 0.0, %v702
    %v704 = vpop.f32.mrb[0].mxu0
    %v705 = vadd.f32 0.0, %v704
    %706 = vmatprep.mubr.bf16.mxu0 0
    %707 = vmatmul.mubr.bf16.gmra.mrb[0].mxu0 %v551
    %v708 = vpop.f32.mrb[0].mxu0
    %v709 = vadd.f32 0.0, %v708
    %v710 = vpop.f32.mrb[0].mxu0
    %v711 = vadd.f32 0.0, %v710
    %v712 = vpop.f32.mrb[0].mxu0
    %v713 = vadd.f32 0.0, %v712
    %v714 = vpop.f32.mrb[0].mxu0
    %v715 = vadd.f32 0.0, %v714
    %716 = vmatprep.mubr.bf16.mxu0 0
    %717 = vmatmul.mubr.bf16.gmra.mrb[0].mxu0 %v554
    %v718 = vpop.f32.mrb[0].mxu0
    %v719 = vadd.f32 0.0, %v718
    %v720 = vpop.f32.mrb[0].mxu0
    %v721 = vadd.f32 0.0, %v720
    %v722 = vpop.f32.mrb[0].mxu0
    %v723 = vadd.f32 0.0, %v722
    %v724 = vpop.f32.mrb[0].mxu0
    %v725 = vadd.f32 0.0, %v724
    %726 = vmatprep.mubr.bf16.mxu0 0
    %727 = vmatmul.mubr.bf16.gmra.mrb[0].mxu0 %v557
    %v728 = vpop.f32.mrb[0].mxu0
    %v729 = vadd.f32 0.0, %v728
    %v730 = vpop.f32.mrb[0].mxu0
    %v731 = vadd.f32 0.0, %v730
    %v732 = vpop.f32.mrb[0].mxu0
    %v733 = vadd.f32 0.0, %v732
    %v734 = vpop.f32.mrb[0].mxu0
    %v735 = vadd.f32 0.0, %v734
    %736 = vmatprep.mubr.bf16.mxu0 0
    %737 = vmatmul.mubr.bf16.gmra.mrb[0].mxu0 %v560
    %v738 = vpop.f32.mrb[0].mxu0
    %v739 = vadd.f32 0.0, %v738
    %v740 = vpop.f32.mrb[0].mxu0
    %v741 = vadd.f32 0.0, %v740
    %v742 = vpop.f32.mrb[0].mxu0
    %v743 = vadd.f32 0.0, %v742
    %v744 = vpop.f32.mrb[0].mxu0
    %v745 = vadd.f32 0.0, %v744
    %746 = vmatprep.mubr.bf16.mxu0 0
    %747 = vmatmul.mubr.bf16.gmra.mrb[0].mxu0 %v563
    %v748 = vpop.f32.mrb[0].mxu0
    %v749 = vadd.f32 0.0, %v748
    %v750 = vpop.f32.mrb[0].mxu0
    %v751 = vadd.f32 0.0, %v750
    %v752 = vpop.f32.mrb[0].mxu0
    %v753 = vadd.f32 0.0, %v752
    %v754 = vpop.f32.mrb[0].mxu0
    %v755 = vadd.f32 0.0, %v754
    %756 = vmatprep.mubr.bf16.mxu0 0
    %757 = vmatmul.mubr.bf16.gmra.mrb[0].mxu0 %v566
    %v758 = vpop.f32.mrb[0].mxu0
    %v759 = vadd.f32 0.0, %v758
    %v760 = vpop.f32.mrb[0].mxu0
    %v761 = vadd.f32 0.0, %v760
    %v762 = vpop.f32.mrb[0].mxu0
    %v763 = vadd.f32 0.0, %v762
    %v764 = vpop.f32.mrb[0].mxu0
    %v765 = vadd.f32 0.0, %v764
    %766 = vmatprep.mubr.bf16.mxu0 0
    %767 = vmatmul.mubr.bf16.gmra.mrb[0].mxu0 %v569
    %v768 = vpop.f32.mrb[0].mxu0
    %v769 = vadd.f32 0.0, %v768
    %v770 = vpop.f32.mrb[0].mxu0
    %v771 = vadd.f32 0.0, %v770
    %v772 = vpop.f32.mrb[0].mxu0
    %v773 = vadd.f32 0.0, %v772
    %v774 = vpop.f32.mrb[0].mxu0
    %v775 = vadd.f32 0.0, %v774
    %776 = vmatprep.mubr.bf16.mxu0 0
    %777 = vmatmul.mubr.bf16.gmra.mrb[0].mxu0 %v572
    %v778 = vpop.f32.mrb[0].mxu0
    %v779 = vadd.f32 0.0, %v778
    %v780 = vpop.f32.mrb[0].mxu0
    %v781 = vadd.f32 0.0, %v780
    %v782 = vpop.f32.mrb[0].mxu0
    %v783 = vadd.f32 0.0, %v782
    %v784 = vpop.f32.mrb[0].mxu0
    %v785 = vadd.f32 0.0, %v784
    %786 = vmatprep.mubr.bf16.mxu0 0
    %787 = vmatmul.mubr.bf16.gmra.mrb[0].mxu0 %v575
    %v788 = vpop.f32.mrb[0].mxu0
    %v789 = vadd.f32 0.0, %v788
    %v790 = vpop.f32.mrb[0].mxu0
    %v791 = vadd.f32 0.0, %v790
    %v792 = vpop.f32.mrb[0].mxu0
    %v793 = vadd.f32 0.0, %v792
    %v794 = vpop.f32.mrb[0].mxu0
    %v795 = vadd.f32 0.0, %v794
    %796 = vmatprep.mubr.bf16.mxu0 0
    %797 = vmatmul.mubr.bf16.gmra.mrb[0].mxu0 %v578
    %v798 = vpop.f32.mrb[0].mxu0
    %v799 = vadd.f32 0.0, %v798
    %v800 = vpop.f32.mrb[0].mxu0
    %v801 = vadd.f32 0.0, %v800
    %v802 = vpop.f32.mrb[0].mxu0
    %v803 = vadd.f32 0.0, %v802
    %v804 = vpop.f32.mrb[0].mxu0
    %v805 = vadd.f32 0.0, %v804
    %806 = vmatprep.mubr.bf16.mxu0 0
    %807 = vmatmul.mubr.bf16.gmra.mrb[0].mxu0 %v581
    %v808 = vpop.f32.mrb[0].mxu0
    %v809 = vadd.f32 0.0, %v808
    %v810 = vpop.f32.mrb[0].mxu0
    %v811 = vadd.f32 0.0, %v810
    %v812 = vpop.f32.mrb[0].mxu0
    %v813 = vadd.f32 0.0, %v812
    %v814 = vpop.f32.mrb[0].mxu0
    %v815 = vadd.f32 0.0, %v814
    %816 = vmatprep.mubr.bf16.mxu0 0
    %817 = vmatmul.mubr.bf16.gmra.mrb[0].mxu0 %v584
    %v818 = vpop.f32.mrb[0].mxu0
    %v819 = vadd.f32 0.0, %v818
    %v820 = vpop.f32.mrb[0].mxu0
    %v821 = vadd.f32 0.0, %v820
    %v822 = vpop.f32.mrb[0].mxu0
    %v823 = vadd.f32 0.0, %v822
    %v824 = vpop.f32.mrb[0].mxu0
    %v825 = vadd.f32 0.0, %v824
    %826 = vmatprep.mubr.bf16.mxu0 0
    %827 = vmatmul.mubr.bf16.gmra.mrb[0].mxu0 %v587
    %v828 = vpop.f32.mrb[0].mxu0
    %v829 = vadd.f32 0.0, %v828
    %v830 = vpop.f32.mrb[0].mxu0
    %v831 = vadd.f32 0.0, %v830
    %v832 = vpop.f32.mrb[0].mxu0
    %v833 = vadd.f32 0.0, %v832
    %v834 = vpop.f32.mrb[0].mxu0
    %v835 = vadd.f32 0.0, %v834
    %836 = vmatprep.mubr.bf16.mxu0 0
    %837 = vmatmul.mubr.bf16.gmra.mrb[0].mxu0 %v590
    %v838 = vpop.f32.mrb[0].mxu0
    %v839 = vadd.f32 0.0, %v838
    %v840 = vpop.f32.mrb[0].mxu0
    %v841 = vadd.f32 0.0, %v840
    %v842 = vpop.f32.mrb[0].mxu0
    %v843 = vadd.f32 0.0, %v842
    %v844 = vpop.f32.mrb[0].mxu0
    %v845 = vadd.f32 0.0, %v844
    %846 = vmatprep.mubr.bf16.mxu0 0
    %847 = vmatmul.mubr.bf16.gmra.mrb[0].mxu0 %v593
    %v848 = vpop.f32.mrb[0].mxu0
    %v849 = vadd.f32 0.0, %v848
    %v850 = vpop.f32.mrb[0].mxu0
    %v851 = vadd.f32 0.0, %v850
    %v852 = vpop.f32.mrb[0].mxu0
    %v853 = vadd.f32 0.0, %v852
    %v854 = vpop.f32.mrb[0].mxu0
    %v855 = vadd.f32 0.0, %v854
    %856 = vmatprep.mubr.bf16.mxu0 0
    %857 = vmatmul.mubr.bf16.gmra.mrb[0].mxu0 %v596
    %v858 = vpop.f32.mrb[0].mxu0
    %v859 = vadd.f32 0.0, %v858
    %v860 = vpop.f32.mrb[0].mxu0
    %v861 = vadd.f32 0.0, %v860
    %v862 = vpop.f32.mrb[0].mxu0
    %v863 = vadd.f32 0.0, %v862
    %v864 = vpop.f32.mrb[0].mxu0
    %v865 = vadd.f32 0.0, %v864
    %866 = vmatprep.mubr.bf16.mxu0 0
    %867 = vmatmul.mubr.bf16.gmra.mrb[0].mxu0 %v599
    %v868 = vpop.f32.mrb[0].mxu0
    %v869 = vadd.f32 0.0, %v868
    %v870 = vpop.f32.mrb[0].mxu0
    %v871 = vadd.f32 0.0, %v870
    %v872 = vpop.f32.mrb[0].mxu0
    %v873 = vadd.f32 0.0, %v872
    %v874 = vpop.f32.mrb[0].mxu0
    %v875 = vadd.f32 0.0, %v874
    %876 = vmatprep.mubr.bf16.mxu0 0
    %877 = vmatmul.mubr.bf16.gmra.mrb[0].mxu0 %v602
    %v878 = vpop.f32.mrb[0].mxu0
    %v879 = vadd.f32 0.0, %v878
    %v880 = vpop.f32.mrb[0].mxu0
    %v881 = vadd.f32 0.0, %v880
    %v882 = vpop.f32.mrb[0].mxu0
    %v883 = vadd.f32 0.0, %v882
    %v884 = vpop.f32.mrb[0].mxu0
    %v885 = vadd.f32 0.0, %v884
    %886 = vmatprep.mubr.bf16.mxu0 0
    %887 = vmatmul.mubr.bf16.gmra.mrb[0].mxu0 %v605
    %v888 = vpop.f32.mrb[0].mxu0
    %v889 = vadd.f32 0.0, %v888
    %v890 = vpop.f32.mrb[0].mxu0
    %v891 = vadd.f32 0.0, %v890
    %v892 = vpop.f32.mrb[0].mxu0
    %v893 = vadd.f32 0.0, %v892
    %v894 = vpop.f32.mrb[0].mxu0
    %v895 = vadd.f32 0.0, %v894
    %896 = vmatprep.mubr.bf16.mxu0 0
    %897 = vmatmul.mubr.bf16.gmra.mrb[0].mxu0 %v608
    %v898 = vpop.f32.mrb[0].mxu0
    %v899 = vadd.f32 0.0, %v898
    %v900 = vpop.f32.mrb[0].mxu0
    %v901 = vadd.f32 0.0, %v900
    %v902 = vpop.f32.mrb[0].mxu0
    %v903 = vadd.f32 0.0, %v902
    %v904 = vpop.f32.mrb[0].mxu0
    %v905 = vadd.f32 0.0, %v904
    %906 = vmatprep.mubr.bf16.mxu0 0
    %907 = vmatmul.mubr.bf16.gmra.mrb[0].mxu0 %v611
    %v908 = vpop.f32.mrb[0].mxu0
    %v909 = vadd.f32 0.0, %v908
    %v910 = vpop.f32.mrb[0].mxu0
    %v911 = vadd.f32 0.0, %v910
    %v912 = vpop.f32.mrb[0].mxu0
    %v913 = vadd.f32 0.0, %v912
    %v914 = vpop.f32.mrb[0].mxu0
    %v915 = vadd.f32 0.0, %v914
    %916 = vmatprep.mubr.bf16.mxu0 0
    %917 = vmatmul.mubr.bf16.gmra.mrb[0].mxu0 %v614
    %v918 = vpop.f32.mrb[0].mxu0
    %v919 = vadd.f32 0.0, %v918
    %v920 = vpop.f32.mrb[0].mxu0
    %v921 = vadd.f32 0.0, %v920
    %v922 = vpop.f32.mrb[0].mxu0
    %v923 = vadd.f32 0.0, %v922
    %v924 = vpop.f32.mrb[0].mxu0
    %v925 = vadd.f32 0.0, %v924
    %926 = vmatprep.mubr.bf16.mxu0 0
    %927 = vmatmul.mubr.bf16.gmra.mrb[0].mxu0 %v617
    %v928 = vpop.f32.mrb[0].mxu0
    %v929 = vadd.f32 0.0, %v928
    %v930 = vpop.f32.mrb[0].mxu0
    %v931 = vadd.f32 0.0, %v930
    %v932 = vpop.f32.mrb[0].mxu0
    %v933 = vadd.f32 0.0, %v932
    %v934 = vpop.f32.mrb[0].mxu0
    %v935 = vadd.f32 0.0, %v934
    %936 = vmatprep.mubr.bf16.mxu0 0
    %937 = vmatmul.mubr.bf16.gmra.mrb[0].mxu0 %v620
    %v938 = vpop.f32.mrb[0].mxu0
    %v939 = vadd.f32 0.0, %v938
    %v940 = vpop.f32.mrb[0].mxu0
    %v941 = vadd.f32 0.0, %v940
    %v942 = vpop.f32.mrb[0].mxu0
    %v943 = vadd.f32 0.0, %v942
    %v944 = vpop.f32.mrb[0].mxu0
    %v945 = vadd.f32 0.0, %v944
    %946 = vmatprep.mubr.bf16.mxu0 0
    %947 = vmatmul.mubr.bf16.gmra.mrb[0].mxu0 %v623
    %v948 = vpop.f32.mrb[0].mxu0
    %v949 = vadd.f32 0.0, %v948
    %v950 = vpop.f32.mrb[0].mxu0
    %v951 = vadd.f32 0.0, %v950
    %v952 = vpop.f32.mrb[0].mxu0
    %v953 = vadd.f32 0.0, %v952
    %v954 = vpop.f32.mrb[0].mxu0
    %v955 = vadd.f32 0.0, %v954
    %956 = vmatprep.mubr.bf16.mxu0 0
    %957 = vmatmul.mubr.bf16.gmra.mrb[0].mxu0 %v626
    %v958 = vpop.f32.mrb[0].mxu0
    %v959 = vadd.f32 0.0, %v958
    %v960 = vpop.f32.mrb[0].mxu0
    %v961 = vadd.f32 0.0, %v960
    %v962 = vpop.f32.mrb[0].mxu0
    %v963 = vadd.f32 0.0, %v962
    %v964 = vpop.f32.mrb[0].mxu0
    %v965 = vadd.f32 0.0, %v964
    %966 = vmatprep.mubr.bf16.mxu0 0
    %967 = vmatmul.mubr.bf16.gmra.mrb[0].mxu0 %v629
    %v968 = vpop.f32.mrb[0].mxu0
    %v969 = vadd.f32 0.0, %v968
    %v970 = vpop.f32.mrb[0].mxu0
    %v971 = vadd.f32 0.0, %v970
    %v972 = vpop.f32.mrb[0].mxu0
    %v973 = vadd.f32 0.0, %v972
    %v974 = vpop.f32.mrb[0].mxu0
    %v975 = vadd.f32 0.0, %v974
    %976 = vmatprep.mubr.bf16.mxu0 0
    %977 = vmatmul.mubr.bf16.gmra.mrb[0].mxu0 %v632
    %v978 = vpop.f32.mrb[0].mxu0
    %v979 = vadd.f32 0.0, %v978
    %v980 = vpop.f32.mrb[0].mxu0
    %v981 = vadd.f32 0.0, %v980
    %v982 = vpop.f32.mrb[0].mxu0
    %v983 = vadd.f32 0.0, %v982
    %v984 = vpop.f32.mrb[0].mxu0
    %v985 = vadd.f32 0.0, %v984
    %986 = vdwg.mxu0
    %v987 = vadd.f32 %v161, %v669
    %v988 = vadd.f32 %v162, %v671
    %v989 = vadd.f32 %v163, %v673
    %v990 = vadd.f32 %v164, %v675
    %v991 = vadd.f32 %v165, %v679
    %v992 = vadd.f32 %v166, %v681
    %v993 = vadd.f32 %v167, %v683
    %v994 = vadd.f32 %v168, %v685
    %v995 = vadd.f32 %v169, %v689
    %v996 = vadd.f32 %v170, %v691
    %v997 = vadd.f32 %v171, %v693
    %v998 = vadd.f32 %v172, %v695
    %v999 = vadd.f32 %v173, %v699
    %v1000 = vadd.f32 %v174, %v701
    %v1001 = vadd.f32 %v175, %v703
    %v1002 = vadd.f32 %v176, %v705
    %v1003 = vadd.f32 %v177, %v709
    %v1004 = vadd.f32 %v178, %v711
    %v1005 = vadd.f32 %v179, %v713
    %v1006 = vadd.f32 %v180, %v715
    %v1007 = vadd.f32 %v181, %v719
    %v1008 = vadd.f32 %v182, %v721
    %v1009 = vadd.f32 %v183, %v723
    %v1010 = vadd.f32 %v184, %v725
    %v1011 = vadd.f32 %v185, %v729
    %v1012 = vadd.f32 %v186, %v731
    %v1013 = vadd.f32 %v187, %v733
    %v1014 = vadd.f32 %v188, %v735
    %v1015 = vadd.f32 %v189, %v739
    %v1016 = vadd.f32 %v190, %v741
    %v1017 = vadd.f32 %v191, %v743
    %v1018 = vadd.f32 %v192, %v745
    %v1019 = vadd.f32 %v193, %v749
    %v1020 = vadd.f32 %v194, %v751
    %v1021 = vadd.f32 %v195, %v753
    %v1022 = vadd.f32 %v196, %v755
    %v1023 = vadd.f32 %v197, %v759
    %v1024 = vadd.f32 %v198, %v761
    %v1025 = vadd.f32 %v199, %v763
    %v1026 = vadd.f32 %v200, %v765
    %v1027 = vadd.f32 %v201, %v769
    %v1028 = vadd.f32 %v202, %v771
    %v1029 = vadd.f32 %v203, %v773
    %v1030 = vadd.f32 %v204, %v775
    %v1031 = vadd.f32 %v205, %v779
    %v1032 = vadd.f32 %v206, %v781
    %v1033 = vadd.f32 %v207, %v783
    %v1034 = vadd.f32 %v208, %v785
    %v1035 = vadd.f32 %v209, %v789
    %v1036 = vadd.f32 %v210, %v791
    %v1037 = vadd.f32 %v211, %v793
    %v1038 = vadd.f32 %v212, %v795
    %v1039 = vadd.f32 %v213, %v799
    %v1040 = vadd.f32 %v214, %v801
    %v1041 = vadd.f32 %v215, %v803
    %v1042 = vadd.f32 %v216, %v805
    %v1043 = vadd.f32 %v217, %v809
    %v1044 = vadd.f32 %v218, %v811
    %v1045 = vadd.f32 %v219, %v813
    %v1046 = vadd.f32 %v220, %v815
    %v1047 = vadd.f32 %v221, %v819
    %v1048 = vadd.f32 %v222, %v821
    %v1049 = vadd.f32 %v223, %v823
    %v1050 = vadd.f32 %v224, %v825
    %v1051 = vadd.f32 %v225, %v829
    %v1052 = vadd.f32 %v226, %v831
    %v1053 = vadd.f32 %v227, %v833
    %v1054 = vadd.f32 %v228, %v835
    %v1055 = vadd.f32 %v229, %v839
    %v1056 = vadd.f32 %v230, %v841
    %v1057 = vadd.f32 %v231, %v843
    %v1058 = vadd.f32 %v232, %v845
    %v1059 = vadd.f32 %v233, %v849
    %v1060 = vadd.f32 %v234, %v851
    %v1061 = vadd.f32 %v235, %v853
    %v1062 = vadd.f32 %v236, %v855
    %v1063 = vadd.f32 %v237, %v859
    %v1064 = vadd.f32 %v238, %v861
    %v1065 = vadd.f32 %v239, %v863
    %v1066 = vadd.f32 %v240, %v865
    %v1067 = vadd.f32 %v241, %v869
    %v1068 = vadd.f32 %v242, %v871
    %v1069 = vadd.f32 %v243, %v873
    %v1070 = vadd.f32 %v244, %v875
    %v1071 = vadd.f32 %v245, %v879
    %v1072 = vadd.f32 %v246, %v881
    %v1073 = vadd.f32 %v247, %v883
    %v1074 = vadd.f32 %v248, %v885
    %v1075 = vadd.f32 %v249, %v889
    %v1076 = vadd.f32 %v250, %v891
    %v1077 = vadd.f32 %v251, %v893
    %v1078 = vadd.f32 %v252, %v895
    %v1079 = vadd.f32 %v253, %v899
    %v1080 = vadd.f32 %v254, %v901
    %v1081 = vadd.f32 %v255, %v903
    %v1082 = vadd.f32 %v256, %v905
    %v1083 = vadd.f32 %v257, %v909
    %v1084 = vadd.f32 %v258, %v911
    %v1085 = vadd.f32 %v259, %v913
    %v1086 = vadd.f32 %v260, %v915
    %v1087 = vadd.f32 %v261, %v919
    %v1088 = vadd.f32 %v262, %v921
    %v1089 = vadd.f32 %v263, %v923
    %v1090 = vadd.f32 %v264, %v925
    %v1091 = vadd.f32 %v265, %v929
    %v1092 = vadd.f32 %v266, %v931
    %v1093 = vadd.f32 %v267, %v933
    %v1094 = vadd.f32 %v268, %v935
    %v1095 = vadd.f32 %v269, %v939
    %v1096 = vadd.f32 %v270, %v941
    %v1097 = vadd.f32 %v271, %v943
    %v1098 = vadd.f32 %v272, %v945
    %v1099 = vadd.f32 %v273, %v949
    %v1100 = vadd.f32 %v274, %v951
    %v1101 = vadd.f32 %v275, %v953
    %v1102 = vadd.f32 %v276, %v955
    %v1103 = vadd.f32 %v277, %v959
    %v1104 = vadd.f32 %v278, %v961
    %v1105 = vadd.f32 %v279, %v963
    %v1106 = vadd.f32 %v280, %v965
    %v1107 = vadd.f32 %v281, %v969
    %v1108 = vadd.f32 %v282, %v971
    %v1109 = vadd.f32 %v283, %v973
    %v1110 = vadd.f32 %v284, %v975
    %v1111 = vadd.f32 %v285, %v979
    %v1112 = vadd.f32 %v286, %v981
    %v1113 = vadd.f32 %v287, %v983
    %v1114 = vadd.f32 %v288, %v985
    %1115 = vst [vmem:[#allocation2] sm:$0xff] %v987
    %1116 = vst [vmem:[#allocation2 + $0x8] sm:$0xff] %v988
    %1117 = vst [vmem:[#allocation2 + $0x10] sm:$0xff] %v989
    %1118 = vst [vmem:[#allocation2 + $0x18] sm:$0xff] %v990
    %1119 = vst [vmem:[#allocation2 + $0x20] sm:$0xff] %v991
    %1120 = vst [vmem:[#allocation2 + $0x28] sm:$0xff] %v992
    %1121 = vst [vmem:[#allocation2 + $0x30] sm:$0xff] %v993
    %1122 = vst [vmem:[#allocation2 + $0x38] sm:$0xff] %v994
    %1123 = vst [vmem:[#allocation2 + $0x40] sm:$0xff] %v995
    %1124 = vst [vmem:[#allocation2 + $0x48] sm:$0xff] %v996
    %1125 = vst [vmem:[#allocation2 + $0x50] sm:$0xff] %v997
    %1126 = vst [vmem:[#allocation2 + $0x58] sm:$0xff] %v998
    %1127 = vst [vmem:[#allocation2 + $0x60] sm:$0xff] %v999
    %1128 = vst [vmem:[#allocation2 + $0x68] sm:$0xff] %v1000
    %1129 = vst [vmem:[#allocation2 + $0x70] sm:$0xff] %v1001
    %1130 = vst [vmem:[#allocation2 + $0x78] sm:$0xff] %v1002
    %1131 = vst [vmem:[#allocation2 + $0x80] sm:$0xff] %v1003
    %1132 = vst [vmem:[#allocation2 + $0x88] sm:$0xff] %v1004
    %1133 = vst [vmem:[#allocation2 + $0x90] sm:$0xff] %v1005
    %1134 = vst [vmem:[#allocation2 + $0x98] sm:$0xff] %v1006
    %1135 = vst [vmem:[#allocation2 + $0xa0] sm:$0xff] %v1007
    %1136 = vst [vmem:[#allocation2 + $0xa8] sm:$0xff] %v1008
    %1137 = vst [vmem:[#allocation2 + $0xb0] sm:$0xff] %v1009
    %1138 = vst [vmem:[#allocation2 + $0xb8] sm:$0xff] %v1010
    %1139 = vst [vmem:[#allocation2 + $0xc0] sm:$0xff] %v1011
    %1140 = vst [vmem:[#allocation2 + $0xc8] sm:$0xff] %v1012
    %1141 = vst [vmem:[#allocation2 + $0xd0] sm:$0xff] %v1013
    %1142 = vst [vmem:[#allocation2 + $0xd8] sm:$0xff] %v1014
    %1143 = vst [vmem:[#allocation2 + $0xe0] sm:$0xff] %v1015
    %1144 = vst [vmem:[#allocation2 + $0xe8] sm:$0xff] %v1016
    %1145 = vst [vmem:[#allocation2 + $0xf0] sm:$0xff] %v1017
    %1146 = vst [vmem:[#allocation2 + $0xf8] sm:$0xff] %v1018
    %1147 = vst [vmem:[#allocation2 + $0x100] sm:$0xff] %v1019
    %1148 = vst [vmem:[#allocation2 + $0x108] sm:$0xff] %v1020
    %1149 = vst [vmem:[#allocation2 + $0x110] sm:$0xff] %v1021
    %1150 = vst [vmem:[#allocation2 + $0x118] sm:$0xff] %v1022
    %1151 = vst [vmem:[#allocation2 + $0x120] sm:$0xff] %v1023
    %1152 = vst [vmem:[#allocation2 + $0x128] sm:$0xff] %v1024
    %1153 = vst [vmem:[#allocation2 + $0x130] sm:$0xff] %v1025
    %1154 = vst [vmem:[#allocation2 + $0x138] sm:$0xff] %v1026
    %1155 = vst [vmem:[#allocation2 + $0x140] sm:$0xff] %v1027
    %1156 = vst [vmem:[#allocation2 + $0x148] sm:$0xff] %v1028
    %1157 = vst [vmem:[#allocation2 + $0x150] sm:$0xff] %v1029
    %1158 = vst [vmem:[#allocation2 + $0x158] sm:$0xff] %v1030
    %1159 = vst [vmem:[#allocation2 + $0x160] sm:$0xff] %v1031
    %1160 = vst [vmem:[#allocation2 + $0x168] sm:$0xff] %v1032
    %1161 = vst [vmem:[#allocation2 + $0x170] sm:$0xff] %v1033
    %1162 = vst [vmem:[#allocation2 + $0x178] sm:$0xff] %v1034
    %1163 = vst [vmem:[#allocation2 + $0x180] sm:$0xff] %v1035
    %1164 = vst [vmem:[#allocation2 + $0x188] sm:$0xff] %v1036
    %1165 = vst [vmem:[#allocation2 + $0x190] sm:$0xff] %v1037
    %1166 = vst [vmem:[#allocation2 + $0x198] sm:$0xff] %v1038
    %1167 = vst [vmem:[#allocation2 + $0x1a0] sm:$0xff] %v1039
    %1168 = vst [vmem:[#allocation2 + $0x1a8] sm:$0xff] %v1040
    %1169 = vst [vmem:[#allocation2 + $0x1b0] sm:$0xff] %v1041
    %1170 = vst [vmem:[#allocation2 + $0x1b8] sm:$0xff] %v1042
    %1171 = vst [vmem:[#allocation2 + $0x1c0] sm:$0xff] %v1043
    %1172 = vst [vmem:[#allocation2 + $0x1c8] sm:$0xff] %v1044
    %1173 = vst [vmem:[#allocation2 + $0x1d0] sm:$0xff] %v1045
    %1174 = vst [vmem:[#allocation2 + $0x1d8] sm:$0xff] %v1046
    %1175 = vst [vmem:[#allocation2 + $0x1e0] sm:$0xff] %v1047
    %1176 = vst [vmem:[#allocation2 + $0x1e8] sm:$0xff] %v1048
    %1177 = vst [vmem:[#allocation2 + $0x1f0] sm:$0xff] %v1049
    %1178 = vst [vmem:[#allocation2 + $0x1f8] sm:$0xff] %v1050
    %1179 = vst [vmem:[#allocation2 + $0x200] sm:$0xff] %v1051
    %1180 = vst [vmem:[#allocation2 + $0x208] sm:$0xff] %v1052
    %1181 = vst [vmem:[#allocation2 + $0x210] sm:$0xff] %v1053
    %1182 = vst [vmem:[#allocation2 + $0x218] sm:$0xff] %v1054
    %1183 = vst [vmem:[#allocation2 + $0x220] sm:$0xff] %v1055
    %1184 = vst [vmem:[#allocation2 + $0x228] sm:$0xff] %v1056
    %1185 = vst [vmem:[#allocation2 + $0x230] sm:$0xff] %v1057
    %1186 = vst [vmem:[#allocation2 + $0x238] sm:$0xff] %v1058
    %1187 = vst [vmem:[#allocation2 + $0x240] sm:$0xff] %v1059
    %1188 = vst [vmem:[#allocation2 + $0x248] sm:$0xff] %v1060
    %1189 = vst [vmem:[#allocation2 + $0x250] sm:$0xff] %v1061
    %1190 = vst [vmem:[#allocation2 + $0x258] sm:$0xff] %v1062
    %1191 = vst [vmem:[#allocation2 + $0x260] sm:$0xff] %v1063
    %1192 = vst [vmem:[#allocation2 + $0x268] sm:$0xff] %v1064
    %1193 = vst [vmem:[#allocation2 + $0x270] sm:$0xff] %v1065
    %1194 = vst [vmem:[#allocation2 + $0x278] sm:$0xff] %v1066
    %1195 = vst [vmem:[#allocation2 + $0x280] sm:$0xff] %v1067
    %1196 = vst [vmem:[#allocation2 + $0x288] sm:$0xff] %v1068
    %1197 = vst [vmem:[#allocation2 + $0x290] sm:$0xff] %v1069
    %1198 = vst [vmem:[#allocation2 + $0x298] sm:$0xff] %v1070
    %1199 = vst [vmem:[#allocation2 + $0x2a0] sm:$0xff] %v1071
    %1200 = vst [vmem:[#allocation2 + $0x2a8] sm:$0xff] %v1072
    %1201 = vst [vmem:[#allocation2 + $0x2b0] sm:$0xff] %v1073
    %1202 = vst [vmem:[#allocation2 + $0x2b8] sm:$0xff] %v1074
    %1203 = vst [vmem:[#allocation2 + $0x2c0] sm:$0xff] %v1075
    %1204 = vst [vmem:[#allocation2 + $0x2c8] sm:$0xff] %v1076
    %1205 = vst [vmem:[#allocation2 + $0x2d0] sm:$0xff] %v1077
    %1206 = vst [vmem:[#allocation2 + $0x2d8] sm:$0xff] %v1078
    %1207 = vst [vmem:[#allocation2 + $0x2e0] sm:$0xff] %v1079
    %1208 = vst [vmem:[#allocation2 + $0x2e8] sm:$0xff] %v1080
    %1209 = vst [vmem:[#allocation2 + $0x2f0] sm:$0xff] %v1081
    %1210 = vst [vmem:[#allocation2 + $0x2f8] sm:$0xff] %v1082
    %1211 = vst [vmem:[#allocation2 + $0x300] sm:$0xff] %v1083
    %1212 = vst [vmem:[#allocation2 + $0x308] sm:$0xff] %v1084
    %1213 = vst [vmem:[#allocation2 + $0x310] sm:$0xff] %v1085
    %1214 = vst [vmem:[#allocation2 + $0x318] sm:$0xff] %v1086
    %1215 = vst [vmem:[#allocation2 + $0x320] sm:$0xff] %v1087
    %1216 = vst [vmem:[#allocation2 + $0x328] sm:$0xff] %v1088
    %1217 = vst [vmem:[#allocation2 + $0x330] sm:$0xff] %v1089
    %1218 = vst [vmem:[#allocation2 + $0x338] sm:$0xff] %v1090
    %1219 = vst [vmem:[#allocation2 + $0x340] sm:$0xff] %v1091
    %1220 = vst [vmem:[#allocation2 + $0x348] sm:$0xff] %v1092
    %1221 = vst [vmem:[#allocation2 + $0x350] sm:$0xff] %v1093
    %1222 = vst [vmem:[#allocation2 + $0x358] sm:$0xff] %v1094
    %1223 = vst [vmem:[#allocation2 + $0x360] sm:$0xff] %v1095
    %1224 = vst [vmem:[#allocation2 + $0x368] sm:$0xff] %v1096
    %1225 = vst [vmem:[#allocation2 + $0x370] sm:$0xff] %v1097
    %1226 = vst [vmem:[#allocation2 + $0x378] sm:$0xff] %v1098
    %1227 = vst [vmem:[#allocation2 + $0x380] sm:$0xff] %v1099
    %1228 = vst [vmem:[#allocation2 + $0x388] sm:$0xff] %v1100
    %1229 = vst [vmem:[#allocation2 + $0x390] sm:$0xff] %v1101
    %1230 = vst [vmem:[#allocation2 + $0x398] sm:$0xff] %v1102
    %1231 = vst [vmem:[#allocation2 + $0x3a0] sm:$0xff] %v1103
    %1232 = vst [vmem:[#allocation2 + $0x3a8] sm:$0xff] %v1104
    %1233 = vst [vmem:[#allocation2 + $0x3b0] sm:$0xff] %v1105
    %1234 = vst [vmem:[#allocation2 + $0x3b8] sm:$0xff] %v1106
    %1235 = vst [vmem:[#allocation2 + $0x3c0] sm:$0xff] %v1107
    %1236 = vst [vmem:[#allocation2 + $0x3c8] sm:$0xff] %v1108
    %1237 = vst [vmem:[#allocation2 + $0x3d0] sm:$0xff] %v1109
    %1238 = vst [vmem:[#allocation2 + $0x3d8] sm:$0xff] %v1110
    %1239 = vst [vmem:[#allocation2 + $0x3e0] sm:$0xff] %v1111
    %1240 = vst [vmem:[#allocation2 + $0x3e8] sm:$0xff] %v1112
    %1241 = vst [vmem:[#allocation2 + $0x3f0] sm:$0xff] %v1113
    %1242 = vst [vmem:[#allocation2 + $0x3f8] sm:$0xff] %v1114
    // Predicated region
    $region22: #{_lambda_.8} parent=1 // pred_check
      %p1243 = pneg %p29
    $region23: #{_lambda_.8} parent=1 // pred_check_branch
      %1245 = sbr.rel (%p1243) target = $region25
    $region24: #{_lambda_.8} parent=1 // pred_region
      %v1246 = vld [vmem:[#allocation2] sm:$0xff]
      %v1247 = vld [vmem:[#allocation2 + $0x8] sm:$0xff]
      %v1248 = vld [vmem:[#allocation2 + $0x10] sm:$0xff]
      %v1249 = vld [vmem:[#allocation2 + $0x18] sm:$0xff]
      %v1250 = vld [vmem:[#allocation2 + $0x20] sm:$0xff]
      %v1251 = vld [vmem:[#allocation2 + $0x28] sm:$0xff]
      %v1252 = vld [vmem:[#allocation2 + $0x30] sm:$0xff]
      %v1253 = vld [vmem:[#allocation2 + $0x38] sm:$0xff]
      %v1254 = vld [vmem:[#allocation2 + $0x40] sm:$0xff]
      %v1255 = vld [vmem:[#allocation2 + $0x48] sm:$0xff]
      %v1256 = vld [vmem:[#allocation2 + $0x50] sm:$0xff]
      %v1257 = vld [vmem:[#allocation2 + $0x58] sm:$0xff]
      %v1258 = vld [vmem:[#allocation2 + $0x60] sm:$0xff]
      %v1259 = vld [vmem:[#allocation2 + $0x68] sm:$0xff]
      %v1260 = vld [vmem:[#allocation2 + $0x70] sm:$0xff]
      %v1261 = vld [vmem:[#allocation2 + $0x78] sm:$0xff]
      %v1262 = vld [vmem:[#allocation2 + $0x80] sm:$0xff]
      %v1263 = vld [vmem:[#allocation2 + $0x88] sm:$0xff]
      %v1264 = vld [vmem:[#allocation2 + $0x90] sm:$0xff]
      %v1265 = vld [vmem:[#allocation2 + $0x98] sm:$0xff]
      %v1266 = vld [vmem:[#allocation2 + $0xa0] sm:$0xff]
      %v1267 = vld [vmem:[#allocation2 + $0xa8] sm:$0xff]
      %v1268 = vld [vmem:[#allocation2 + $0xb0] sm:$0xff]
      %v1269 = vld [vmem:[#allocation2 + $0xb8] sm:$0xff]
      %v1270 = vld [vmem:[#allocation2 + $0xc0] sm:$0xff]
      %v1271 = vld [vmem:[#allocation2 + $0xc8] sm:$0xff]
      %v1272 = vld [vmem:[#allocation2 + $0xd0] sm:$0xff]
      %v1273 = vld [vmem:[#allocation2 + $0xd8] sm:$0xff]
      %v1274 = vld [vmem:[#allocation2 + $0xe0] sm:$0xff]
      %v1275 = vld [vmem:[#allocation2 + $0xe8] sm:$0xff]
      %v1276 = vld [vmem:[#allocation2 + $0xf0] sm:$0xff]
      %v1277 = vld [vmem:[#allocation2 + $0xf8] sm:$0xff]
      %v1278 = vld [vmem:[#allocation2 + $0x100] sm:$0xff]
      %v1279 = vld [vmem:[#allocation2 + $0x108] sm:$0xff]
      %v1280 = vld [vmem:[#allocation2 + $0x110] sm:$0xff]
      %v1281 = vld [vmem:[#allocation2 + $0x118] sm:$0xff]
      %v1282 = vld [vmem:[#allocation2 + $0x120] sm:$0xff]
      %v1283 = vld [vmem:[#allocation2 + $0x128] sm:$0xff]
      %v1284 = vld [vmem:[#allocation2 + $0x130] sm:$0xff]
      %v1285 = vld [vmem:[#allocation2 + $0x138] sm:$0xff]
      %v1286 = vld [vmem:[#allocation2 + $0x140] sm:$0xff]
      %v1287 = vld [vmem:[#allocation2 + $0x148] sm:$0xff]
      %v1288 = vld [vmem:[#allocation2 + $0x150] sm:$0xff]
      %v1289 = vld [vmem:[#allocation2 + $0x158] sm:$0xff]
      %v1290 = vld [vmem:[#allocation2 + $0x160] sm:$0xff]
      %v1291 = vld [vmem:[#allocation2 + $0x168] sm:$0xff]
      %v1292 = vld [vmem:[#allocation2 + $0x170] sm:$0xff]
      %v1293 = vld [vmem:[#allocation2 + $0x178] sm:$0xff]
      %v1294 = vld [vmem:[#allocation2 + $0x180] sm:$0xff]
      %v1295 = vld [vmem:[#allocation2 + $0x188] sm:$0xff]
      %v1296 = vld [vmem:[#allocation2 + $0x190] sm:$0xff]
      %v1297 = vld [vmem:[#allocation2 + $0x198] sm:$0xff]
      %v1298 = vld [vmem:[#allocation2 + $0x1a0] sm:$0xff]
      %v1299 = vld [vmem:[#allocation2 + $0x1a8] sm:$0xff]
      %v1300 = vld [vmem:[#allocation2 + $0x1b0] sm:$0xff]
      %v1301 = vld [vmem:[#allocation2 + $0x1b8] sm:$0xff]
      %v1302 = vld [vmem:[#allocation2 + $0x1c0] sm:$0xff]
      %v1303 = vld [vmem:[#allocation2 + $0x1c8] sm:$0xff]
      %v1304 = vld [vmem:[#allocation2 + $0x1d0] sm:$0xff]
      %v1305 = vld [vmem:[#allocation2 + $0x1d8] sm:$0xff]
      %v1306 = vld [vmem:[#allocation2 + $0x1e0] sm:$0xff]
      %v1307 = vld [vmem:[#allocation2 + $0x1e8] sm:$0xff]
      %v1308 = vld [vmem:[#allocation2 + $0x1f0] sm:$0xff]
      %v1309 = vld [vmem:[#allocation2 + $0x1f8] sm:$0xff]
      %v1310 = vld [vmem:[#allocation2 + $0x200] sm:$0xff]
      %v1311 = vld [vmem:[#allocation2 + $0x208] sm:$0xff]
      %v1312 = vld [vmem:[#allocation2 + $0x210] sm:$0xff]
      %v1313 = vld [vmem:[#allocation2 + $0x218] sm:$0xff]
      %v1314 = vld [vmem:[#allocation2 + $0x220] sm:$0xff]
      %v1315 = vld [vmem:[#allocation2 + $0x228] sm:$0xff]
      %v1316 = vld [vmem:[#allocation2 + $0x230] sm:$0xff]
      %v1317 = vld [vmem:[#allocation2 + $0x238] sm:$0xff]
      %v1318 = vld [vmem:[#allocation2 + $0x240] sm:$0xff]
      %v1319 = vld [vmem:[#allocation2 + $0x248] sm:$0xff]
      %v1320 = vld [vmem:[#allocation2 + $0x250] sm:$0xff]
      %v1321 = vld [vmem:[#allocation2 + $0x258] sm:$0xff]
      %v1322 = vld [vmem:[#allocation2 + $0x260] sm:$0xff]
      %v1323 = vld [vmem:[#allocation2 + $0x268] sm:$0xff]
      %v1324 = vld [vmem:[#allocation2 + $0x270] sm:$0xff]
      %v1325 = vld [vmem:[#allocation2 + $0x278] sm:$0xff]
      %v1326 = vld [vmem:[#allocation2 + $0x280] sm:$0xff]
      %v1327 = vld [vmem:[#allocation2 + $0x288] sm:$0xff]
      %v1328 = vld [vmem:[#allocation2 + $0x290] sm:$0xff]
      %v1329 = vld [vmem:[#allocation2 + $0x298] sm:$0xff]
      %v1330 = vld [vmem:[#allocation2 + $0x2a0] sm:$0xff]
      %v1331 = vld [vmem:[#allocation2 + $0x2a8] sm:$0xff]
      %v1332 = vld [vmem:[#allocation2 + $0x2b0] sm:$0xff]
      %v1333 = vld [vmem:[#allocation2 + $0x2b8] sm:$0xff]
      %v1334 = vld [vmem:[#allocation2 + $0x2c0] sm:$0xff]
      %v1335 = vld [vmem:[#allocation2 + $0x2c8] sm:$0xff]
      %v1336 = vld [vmem:[#allocation2 + $0x2d0] sm:$0xff]
      %v1337 = vld [vmem:[#allocation2 + $0x2d8] sm:$0xff]
      %v1338 = vld [vmem:[#allocation2 + $0x2e0] sm:$0xff]
      %v1339 = vld [vmem:[#allocation2 + $0x2e8] sm:$0xff]
      %v1340 = vld [vmem:[#allocation2 + $0x2f0] sm:$0xff]
      %v1341 = vld [vmem:[#allocation2 + $0x2f8] sm:$0xff]
      %v1342 = vld [vmem:[#allocation2 + $0x300] sm:$0xff]
      %v1343 = vld [vmem:[#allocation2 + $0x308] sm:$0xff]
      %v1344 = vld [vmem:[#allocation2 + $0x310] sm:$0xff]
      %v1345 = vld [vmem:[#allocation2 + $0x318] sm:$0xff]
      %v1346 = vld [vmem:[#allocation2 + $0x320] sm:$0xff]
      %v1347 = vld [vmem:[#allocation2 + $0x328] sm:$0xff]
      %v1348 = vld [vmem:[#allocation2 + $0x330] sm:$0xff]
      %v1349 = vld [vmem:[#allocation2 + $0x338] sm:$0xff]
      %v1350 = vld [vmem:[#allocation2 + $0x340] sm:$0xff]
      %v1351 = vld [vmem:[#allocation2 + $0x348] sm:$0xff]
      %v1352 = vld [vmem:[#allocation2 + $0x350] sm:$0xff]
      %v1353 = vld [vmem:[#allocation2 + $0x358] sm:$0xff]
      %v1354 = vld [vmem:[#allocation2 + $0x360] sm:$0xff]
      %v1355 = vld [vmem:[#allocation2 + $0x368] sm:$0xff]
      %v1356 = vld [vmem:[#allocation2 + $0x370] sm:$0xff]
      %v1357 = vld [vmem:[#allocation2 + $0x378] sm:$0xff]
      %v1358 = vld [vmem:[#allocation2 + $0x380] sm:$0xff]
      %v1359 = vld [vmem:[#allocation2 + $0x388] sm:$0xff]
      %v1360 = vld [vmem:[#allocation2 + $0x390] sm:$0xff]
      %v1361 = vld [vmem:[#allocation2 + $0x398] sm:$0xff]
      %v1362 = vld [vmem:[#allocation2 + $0x3a0] sm:$0xff]
      %v1363 = vld [vmem:[#allocation2 + $0x3a8] sm:$0xff]
      %v1364 = vld [vmem:[#allocation2 + $0x3b0] sm:$0xff]
      %v1365 = vld [vmem:[#allocation2 + $0x3b8] sm:$0xff]
      %v1366 = vld [vmem:[#allocation2 + $0x3c0] sm:$0xff]
      %v1367 = vld [vmem:[#allocation2 + $0x3c8] sm:$0xff]
      %v1368 = vld [vmem:[#allocation2 + $0x3d0] sm:$0xff]
      %v1369 = vld [vmem:[#allocation2 + $0x3d8] sm:$0xff]
      %v1370 = vld [vmem:[#allocation2 + $0x3e0] sm:$0xff]
      %v1371 = vld [vmem:[#allocation2 + $0x3e8] sm:$0xff]
      %v1372 = vld [vmem:[#allocation2 + $0x3f0] sm:$0xff]
      %v1373 = vld [vmem:[#allocation2 + $0x3f8] sm:$0xff]
      %v1374 = vld [vmem:[%s2] sm:$0x3]
      %v1376 = vlaneseq
      %v1377 = vshrl.u32 %v1376, 7
      %v1378 = vsub.s32 0, %v1377
      %v1379 = vrot.slane %v1374, %v1378
      %v1380 = vlaneseq
      %v1381 = vshrl.u32 %v1380, 7
      %v1382 = vsub.s32 1, %v1381
      %v1383 = vrot.slane %v1374, %v1382
      %v1386 = vadd.f32 %v1246, %v1379
      %v1387 = vadd.f32 %v1247, %v1383
      %v1388 = vadd.f32 %v1248, %v1379
      %v1389 = vadd.f32 %v1249, %v1383
      %v1390 = vadd.f32 %v1250, %v1379
      %v1391 = vadd.f32 %v1251, %v1383
      %v1392 = vadd.f32 %v1252, %v1379
      %v1393 = vadd.f32 %v1253, %v1383
      %v1394 = vadd.f32 %v1254, %v1379
      %v1395 = vadd.f32 %v1255, %v1383
      %v1396 = vadd.f32 %v1256, %v1379
      %v1397 = vadd.f32 %v1257, %v1383
      %v1398 = vadd.f32 %v1258, %v1379
      %v1399 = vadd.f32 %v1259, %v1383
      %v1400 = vadd.f32 %v1260, %v1379
      %v1401 = vadd.f32 %v1261, %v1383
      %v1402 = vadd.f32 %v1262, %v1379
      %v1403 = vadd.f32 %v1263, %v1383
      %v1404 = vadd.f32 %v1264, %v1379
      %v1405 = vadd.f32 %v1265, %v1383
      %v1406 = vadd.f32 %v1266, %v1379
      %v1407 = vadd.f32 %v1267, %v1383
      %v1408 = vadd.f32 %v1268, %v1379
      %v1409 = vadd.f32 %v1269, %v1383
      %v1410 = vadd.f32 %v1270, %v1379
      %v1411 = vadd.f32 %v1271, %v1383
      %v1412 = vadd.f32 %v1272, %v1379
      %v1413 = vadd.f32 %v1273, %v1383
      %v1414 = vadd.f32 %v1274, %v1379
      %v1415 = vadd.f32 %v1275, %v1383
      %v1416 = vadd.f32 %v1276, %v1379
      %v1417 = vadd.f32 %v1277, %v1383
      %v1418 = vadd.f32 %v1278, %v1379
      %v1419 = vadd.f32 %v1279, %v1383
      %v1420 = vadd.f32 %v1280, %v1379
      %v1421 = vadd.f32 %v1281, %v1383
      %v1422 = vadd.f32 %v1282, %v1379
      %v1423 = vadd.f32 %v1283, %v1383
      %v1424 = vadd.f32 %v1284, %v1379
      %v1425 = vadd.f32 %v1285, %v1383
      %v1426 = vadd.f32 %v1286, %v1379
      %v1427 = vadd.f32 %v1287, %v1383
      %v1428 = vadd.f32 %v1288, %v1379
      %v1429 = vadd.f32 %v1289, %v1383
      %v1430 = vadd.f32 %v1290, %v1379
      %v1431 = vadd.f32 %v1291, %v1383
      %v1432 = vadd.f32 %v1292, %v1379
      %v1433 = vadd.f32 %v1293, %v1383
      %v1434 = vadd.f32 %v1294, %v1379
      %v1435 = vadd.f32 %v1295, %v1383
      %v1436 = vadd.f32 %v1296, %v1379
      %v1437 = vadd.f32 %v1297, %v1383
      %v1438 = vadd.f32 %v1298, %v1379
      %v1439 = vadd.f32 %v1299, %v1383
      %v1440 = vadd.f32 %v1300, %v1379
      %v1441 = vadd.f32 %v1301, %v1383
      %v1442 = vadd.f32 %v1302, %v1379
      %v1443 = vadd.f32 %v1303, %v1383
      %v1444 = vadd.f32 %v1304, %v1379
      %v1445 = vadd.f32 %v1305, %v1383
      %v1446 = vadd.f32 %v1306, %v1379
      %v1447 = vadd.f32 %v1307, %v1383
      %v1448 = vadd.f32 %v1308, %v1379
      %v1449 = vadd.f32 %v1309, %v1383
      %v1450 = vadd.f32 %v1310, %v1379
      %v1451 = vadd.f32 %v1311, %v1383
      %v1452 = vadd.f32 %v1312, %v1379
      %v1453 = vadd.f32 %v1313, %v1383
      %v1454 = vadd.f32 %v1314, %v1379
      %v1455 = vadd.f32 %v1315, %v1383
      %v1456 = vadd.f32 %v1316, %v1379
      %v1457 = vadd.f32 %v1317, %v1383
      %v1458 = vadd.f32 %v1318, %v1379
      %v1459 = vadd.f32 %v1319, %v1383
      %v1460 = vadd.f32 %v1320, %v1379
      %v1461 = vadd.f32 %v1321, %v1383
      %v1462 = vadd.f32 %v1322, %v1379
      %v1463 = vadd.f32 %v1323, %v1383
      %v1464 = vadd.f32 %v1324, %v1379
      %v1465 = vadd.f32 %v1325, %v1383
      %v1466 = vadd.f32 %v1326, %v1379
      %v1467 = vadd.f32 %v1327, %v1383
      %v1468 = vadd.f32 %v1328, %v1379
      %v1469 = vadd.f32 %v1329, %v1383
      %v1470 = vadd.f32 %v1330, %v1379
      %v1471 = vadd.f32 %v1331, %v1383
      %v1472 = vadd.f32 %v1332, %v1379
      %v1473 = vadd.f32 %v1333, %v1383
      %v1474 = vadd.f32 %v1334, %v1379
      %v1475 = vadd.f32 %v1335, %v1383
      %v1476 = vadd.f32 %v1336, %v1379
      %v1477 = vadd.f32 %v1337, %v1383
      %v1478 = vadd.f32 %v1338, %v1379
      %v1479 = vadd.f32 %v1339, %v1383
      %v1480 = vadd.f32 %v1340, %v1379
      %v1481 = vadd.f32 %v1341, %v1383
      %v1482 = vadd.f32 %v1342, %v1379
      %v1483 = vadd.f32 %v1343, %v1383
      %v1484 = vadd.f32 %v1344, %v1379
      %v1485 = vadd.f32 %v1345, %v1383
      %v1486 = vadd.f32 %v1346, %v1379
      %v1487 = vadd.f32 %v1347, %v1383
      %v1488 = vadd.f32 %v1348, %v1379
      %v1489 = vadd.f32 %v1349, %v1383
      %v1490 = vadd.f32 %v1350, %v1379
      %v1491 = vadd.f32 %v1351, %v1383
      %v1492 = vadd.f32 %v1352, %v1379
      %v1493 = vadd.f32 %v1353, %v1383
      %v1494 = vadd.f32 %v1354, %v1379
      %v1495 = vadd.f32 %v1355, %v1383
      %v1496 = vadd.f32 %v1356, %v1379
      %v1497 = vadd.f32 %v1357, %v1383
      %v1498 = vadd.f32 %v1358, %v1379
      %v1499 = vadd.f32 %v1359, %v1383
      %v1500 = vadd.f32 %v1360, %v1379
      %v1501 = vadd.f32 %v1361, %v1383
      %v1502 = vadd.f32 %v1362, %v1379
      %v1503 = vadd.f32 %v1363, %v1383
      %v1504 = vadd.f32 %v1364, %v1379
      %v1505 = vadd.f32 %v1365, %v1383
      %v1506 = vadd.f32 %v1366, %v1379
      %v1507 = vadd.f32 %v1367, %v1383
      %v1508 = vadd.f32 %v1368, %v1379
      %v1509 = vadd.f32 %v1369, %v1383
      %v1510 = vadd.f32 %v1370, %v1379
      %v1511 = vadd.f32 %v1371, %v1383
      %v1512 = vadd.f32 %v1372, %v1379
      %v1513 = vadd.f32 %v1373, %v1383
      %v1514 = vmax.f32 %v1386, 0.0
      %v1515 = vmax.f32 %v1387, 0.0
      %v1516 = vmax.f32 %v1388, 0.0
      %v1517 = vmax.f32 %v1389, 0.0
      %v1518 = vmax.f32 %v1390, 0.0
      %v1519 = vmax.f32 %v1391, 0.0
      %v1520 = vmax.f32 %v1392, 0.0
      %v1521 = vmax.f32 %v1393, 0.0
      %v1522 = vmax.f32 %v1394, 0.0
      %v1523 = vmax.f32 %v1395, 0.0
      %v1524 = vmax.f32 %v1396, 0.0
      %v1525 = vmax.f32 %v1397, 0.0
      %v1526 = vmax.f32 %v1398, 0.0
      %v1527 = vmax.f32 %v1399, 0.0
      %v1528 = vmax.f32 %v1400, 0.0
      %v1529 = vmax.f32 %v1401, 0.0
      %v1530 = vmax.f32 %v1402, 0.0
      %v1531 = vmax.f32 %v1403, 0.0
      %v1532 = vmax.f32 %v1404, 0.0
      %v1533 = vmax.f32 %v1405, 0.0
      %v1534 = vmax.f32 %v1406, 0.0
      %v1535 = vmax.f32 %v1407, 0.0
      %v1536 = vmax.f32 %v1408, 0.0
      %v1537 = vmax.f32 %v1409, 0.0
      %v1538 = vmax.f32 %v1410, 0.0
      %v1539 = vmax.f32 %v1411, 0.0
      %v1540 = vmax.f32 %v1412, 0.0
      %v1541 = vmax.f32 %v1413, 0.0
      %v1542 = vmax.f32 %v1414, 0.0
      %v1543 = vmax.f32 %v1415, 0.0
      %v1544 = vmax.f32 %v1416, 0.0
      %v1545 = vmax.f32 %v1417, 0.0
      %v1546 = vmax.f32 %v1418, 0.0
      %v1547 = vmax.f32 %v1419, 0.0
      %v1548 = vmax.f32 %v1420, 0.0
      %v1549 = vmax.f32 %v1421, 0.0
      %v1550 = vmax.f32 %v1422, 0.0
      %v1551 = vmax.f32 %v1423, 0.0
      %v1552 = vmax.f32 %v1424, 0.0
      %v1553 = vmax.f32 %v1425, 0.0
      %v1554 = vmax.f32 %v1426, 0.0
      %v1555 = vmax.f32 %v1427, 0.0
      %v1556 = vmax.f32 %v1428, 0.0
      %v1557 = vmax.f32 %v1429, 0.0
      %v1558 = vmax.f32 %v1430, 0.0
      %v1559 = vmax.f32 %v1431, 0.0
      %v1560 = vmax.f32 %v1432, 0.0
      %v1561 = vmax.f32 %v1433, 0.0
      %v1562 = vmax.f32 %v1434, 0.0
      %v1563 = vmax.f32 %v1435, 0.0
      %v1564 = vmax.f32 %v1436, 0.0
      %v1565 = vmax.f32 %v1437, 0.0
      %v1566 = vmax.f32 %v1438, 0.0
      %v1567 = vmax.f32 %v1439, 0.0
      %v1568 = vmax.f32 %v1440, 0.0
      %v1569 = vmax.f32 %v1441, 0.0
      %v1570 = vmax.f32 %v1442, 0.0
      %v1571 = vmax.f32 %v1443, 0.0
      %v1572 = vmax.f32 %v1444, 0.0
      %v1573 = vmax.f32 %v1445, 0.0
      %v1574 = vmax.f32 %v1446, 0.0
      %v1575 = vmax.f32 %v1447, 0.0
      %v1576 = vmax.f32 %v1448, 0.0
      %v1577 = vmax.f32 %v1449, 0.0
      %v1578 = vmax.f32 %v1450, 0.0
      %v1579 = vmax.f32 %v1451, 0.0
      %v1580 = vmax.f32 %v1452, 0.0
      %v1581 = vmax.f32 %v1453, 0.0
      %v1582 = vmax.f32 %v1454, 0.0
      %v1583 = vmax.f32 %v1455, 0.0
      %v1584 = vmax.f32 %v1456, 0.0
      %v1585 = vmax.f32 %v1457, 0.0
      %v1586 = vmax.f32 %v1458, 0.0
      %v1587 = vmax.f32 %v1459, 0.0
      %v1588 = vmax.f32 %v1460, 0.0
      %v1589 = vmax.f32 %v1461, 0.0
      %v1590 = vmax.f32 %v1462, 0.0
      %v1591 = vmax.f32 %v1463, 0.0
      %v1592 = vmax.f32 %v1464, 0.0
      %v1593 = vmax.f32 %v1465, 0.0
      %v1594 = vmax.f32 %v1466, 0.0
      %v1595 = vmax.f32 %v1467, 0.0
      %v1596 = vmax.f32 %v1468, 0.0
      %v1597 = vmax.f32 %v1469, 0.0
      %v1598 = vmax.f32 %v1470, 0.0
      %v1599 = vmax.f32 %v1471, 0.0
      %v1600 = vmax.f32 %v1472, 0.0
      %v1601 = vmax.f32 %v1473, 0.0
      %v1602 = vmax.f32 %v1474, 0.0
      %v1603 = vmax.f32 %v1475, 0.0
      %v1604 = vmax.f32 %v1476, 0.0
      %v1605 = vmax.f32 %v1477, 0.0
      %v1606 = vmax.f32 %v1478, 0.0
      %v1607 = vmax.f32 %v1479, 0.0
      %v1608 = vmax.f32 %v1480, 0.0
      %v1609 = vmax.f32 %v1481, 0.0
      %v1610 = vmax.f32 %v1482, 0.0
      %v1611 = vmax.f32 %v1483, 0.0
      %v1612 = vmax.f32 %v1484, 0.0
      %v1613 = vmax.f32 %v1485, 0.0
      %v1614 = vmax.f32 %v1486, 0.0
      %v1615 = vmax.f32 %v1487, 0.0
      %v1616 = vmax.f32 %v1488, 0.0
      %v1617 = vmax.f32 %v1489, 0.0
      %v1618 = vmax.f32 %v1490, 0.0
      %v1619 = vmax.f32 %v1491, 0.0
      %v1620 = vmax.f32 %v1492, 0.0
      %v1621 = vmax.f32 %v1493, 0.0
      %v1622 = vmax.f32 %v1494, 0.0
      %v1623 = vmax.f32 %v1495, 0.0
      %v1624 = vmax.f32 %v1496, 0.0
      %v1625 = vmax.f32 %v1497, 0.0
      %v1626 = vmax.f32 %v1498, 0.0
      %v1627 = vmax.f32 %v1499, 0.0
      %v1628 = vmax.f32 %v1500, 0.0
      %v1629 = vmax.f32 %v1501, 0.0
      %v1630 = vmax.f32 %v1502, 0.0
      %v1631 = vmax.f32 %v1503, 0.0
      %v1632 = vmax.f32 %v1504, 0.0
      %v1633 = vmax.f32 %v1505, 0.0
      %v1634 = vmax.f32 %v1506, 0.0
      %v1635 = vmax.f32 %v1507, 0.0
      %v1636 = vmax.f32 %v1508, 0.0
      %v1637 = vmax.f32 %v1509, 0.0
      %v1638 = vmax.f32 %v1510, 0.0
      %v1639 = vmax.f32 %v1511, 0.0
      %v1640 = vmax.f32 %v1512, 0.0
      %v1641 = vmax.f32 %v1513, 0.0
      %v1642 = vpack.c.bf16 %v1516, %v1514
      %v1643 = vpack.c.bf16 %v1517, %v1515
      %v1644 = vpack.c.bf16 %v1520, %v1518
      %v1645 = vpack.c.bf16 %v1521, %v1519
      %v1646 = vpack.c.bf16 %v1524, %v1522
      %v1647 = vpack.c.bf16 %v1525, %v1523
      %v1648 = vpack.c.bf16 %v1528, %v1526
      %v1649 = vpack.c.bf16 %v1529, %v1527
      %v1650 = vpack.c.bf16 %v1532, %v1530
      %v1651 = vpack.c.bf16 %v1533, %v1531
      %v1652 = vpack.c.bf16 %v1536, %v1534
      %v1653 = vpack.c.bf16 %v1537, %v1535
      %v1654 = vpack.c.bf16 %v1540, %v1538
      %v1655 = vpack.c.bf16 %v1541, %v1539
      %v1656 = vpack.c.bf16 %v1544, %v1542
      %v1657 = vpack.c.bf16 %v1545, %v1543
      %v1658 = vpack.c.bf16 %v1548, %v1546
      %v1659 = vpack.c.bf16 %v1549, %v1547
      %v1660 = vpack.c.bf16 %v1552, %v1550
      %v1661 = vpack.c.bf16 %v1553, %v1551
      %v1662 = vpack.c.bf16 %v1556, %v1554
      %v1663 = vpack.c.bf16 %v1557, %v1555
      %v1664 = vpack.c.bf16 %v1560, %v1558
      %v1665 = vpack.c.bf16 %v1561, %v1559
      %v1666 = vpack.c.bf16 %v1564, %v1562
      %v1667 = vpack.c.bf16 %v1565, %v1563
      %v1668 = vpack.c.bf16 %v1568, %v1566
      %v1669 = vpack.c.bf16 %v1569, %v1567
      %v1670 = vpack.c.bf16 %v1572, %v1570
      %v1671 = vpack.c.bf16 %v1573, %v1571
      %v1672 = vpack.c.bf16 %v1576, %v1574
      %v1673 = vpack.c.bf16 %v1577, %v1575
      %v1674 = vpack.c.bf16 %v1580, %v1578
      %v1675 = vpack.c.bf16 %v1581, %v1579
      %v1676 = vpack.c.bf16 %v1584, %v1582
      %v1677 = vpack.c.bf16 %v1585, %v1583
      %v1678 = vpack.c.bf16 %v1588, %v1586
      %v1679 = vpack.c.bf16 %v1589, %v1587
      %v1680 = vpack.c.bf16 %v1592, %v1590
      %v1681 = vpack.c.bf16 %v1593, %v1591
      %v1682 = vpack.c.bf16 %v1596, %v1594
      %v1683 = vpack.c.bf16 %v1597, %v1595
      %v1684 = vpack.c.bf16 %v1600, %v1598
      %v1685 = vpack.c.bf16 %v1601, %v1599
      %v1686 = vpack.c.bf16 %v1604, %v1602
      %v1687 = vpack.c.bf16 %v1605, %v1603
      %v1688 = vpack.c.bf16 %v1608, %v1606
      %v1689 = vpack.c.bf16 %v1609, %v1607
      %v1690 = vpack.c.bf16 %v1612, %v1610
      %v1691 = vpack.c.bf16 %v1613, %v1611
      %v1692 = vpack.c.bf16 %v1616, %v1614
      %v1693 = vpack.c.bf16 %v1617, %v1615
      %v1694 = vpack.c.bf16 %v1620, %v1618
      %v1695 = vpack.c.bf16 %v1621, %v1619
      %v1696 = vpack.c.bf16 %v1624, %v1622
      %v1697 = vpack.c.bf16 %v1625, %v1623
      %v1698 = vpack.c.bf16 %v1628, %v1626
      %v1699 = vpack.c.bf16 %v1629, %v1627
      %v1700 = vpack.c.bf16 %v1632, %v1630
      %v1701 = vpack.c.bf16 %v1633, %v1631
      %v1702 = vpack.c.bf16 %v1636, %v1634
      %v1703 = vpack.c.bf16 %v1637, %v1635
      %v1704 = vpack.c.bf16 %v1640, %v1638
      %v1705 = vpack.c.bf16 %v1641, %v1639
      %v1770 = vunpack.c.l.b16 %v1642
      %v1771 = vunpack.c.l.b16 %v1643
      %v1772 = vunpack.c.h.b16 %v1642
      %v1773 = vunpack.c.h.b16 %v1643
      %v1774 = vunpack.c.l.b16 %v1644
      %v1775 = vunpack.c.l.b16 %v1645
      %v1776 = vunpack.c.h.b16 %v1644
      %v1777 = vunpack.c.h.b16 %v1645
      %v1778 = vunpack.c.l.b16 %v1646
      %v1779 = vunpack.c.l.b16 %v1647
      %v1780 = vunpack.c.h.b16 %v1646
      %v1781 = vunpack.c.h.b16 %v1647
      %v1782 = vunpack.c.l.b16 %v1648
      %v1783 = vunpack.c.l.b16 %v1649
      %v1784 = vunpack.c.h.b16 %v1648
      %v1785 = vunpack.c.h.b16 %v1649
      %v1786 = vunpack.c.l.b16 %v1650
      %v1787 = vunpack.c.l.b16 %v1651
      %v1788 = vunpack.c.h.b16 %v1650
      %v1789 = vunpack.c.h.b16 %v1651
      %v1790 = vunpack.c.l.b16 %v1652
      %v1791 = vunpack.c.l.b16 %v1653
      %v1792 = vunpack.c.h.b16 %v1652
      %v1793 = vunpack.c.h.b16 %v1653
      %v1794 = vunpack.c.l.b16 %v1654
      %v1795 = vunpack.c.l.b16 %v1655
      %v1796 = vunpack.c.h.b16 %v1654
      %v1797 = vunpack.c.h.b16 %v1655
      %v1798 = vunpack.c.l.b16 %v1656
      %v1799 = vunpack.c.l.b16 %v1657
      %v1800 = vunpack.c.h.b16 %v1656
      %v1801 = vunpack.c.h.b16 %v1657
      %v1802 = vunpack.c.l.b16 %v1658
      %v1803 = vunpack.c.l.b16 %v1659
      %v1804 = vunpack.c.h.b16 %v1658
      %v1805 = vunpack.c.h.b16 %v1659
      %v1806 = vunpack.c.l.b16 %v1660
      %v1807 = vunpack.c.l.b16 %v1661
      %v1808 = vunpack.c.h.b16 %v1660
      %v1809 = vunpack.c.h.b16 %v1661
      %v1810 = vunpack.c.l.b16 %v1662
      %v1811 = vunpack.c.l.b16 %v1663
      %v1812 = vunpack.c.h.b16 %v1662
      %v1813 = vunpack.c.h.b16 %v1663
      %v1814 = vunpack.c.l.b16 %v1664
      %v1815 = vunpack.c.l.b16 %v1665
      %v1816 = vunpack.c.h.b16 %v1664
      %v1817 = vunpack.c.h.b16 %v1665
      %v1818 = vunpack.c.l.b16 %v1666
      %v1819 = vunpack.c.l.b16 %v1667
      %v1820 = vunpack.c.h.b16 %v1666
      %v1821 = vunpack.c.h.b16 %v1667
      %v1822 = vunpack.c.l.b16 %v1668
      %v1823 = vunpack.c.l.b16 %v1669
      %v1824 = vunpack.c.h.b16 %v1668
      %v1825 = vunpack.c.h.b16 %v1669
      %v1826 = vunpack.c.l.b16 %v1670
      %v1827 = vunpack.c.l.b16 %v1671
      %v1828 = vunpack.c.h.b16 %v1670
      %v1829 = vunpack.c.h.b16 %v1671
      %v1830 = vunpack.c.l.b16 %v1672
      %v1831 = vunpack.c.l.b16 %v1673
      %v1832 = vunpack.c.h.b16 %v1672
      %v1833 = vunpack.c.h.b16 %v1673
      %v1834 = vunpack.c.l.b16 %v1674
      %v1835 = vunpack.c.l.b16 %v1675
      %v1836 = vunpack.c.h.b16 %v1674
      %v1837 = vunpack.c.h.b16 %v1675
      %v1838 = vunpack.c.l.b16 %v1676
      %v1839 = vunpack.c.l.b16 %v1677
      %v1840 = vunpack.c.h.b16 %v1676
      %v1841 = vunpack.c.h.b16 %v1677
      %v1842 = vunpack.c.l.b16 %v1678
      %v1843 = vunpack.c.l.b16 %v1679
      %v1844 = vunpack.c.h.b16 %v1678
      %v1845 = vunpack.c.h.b16 %v1679
      %v1846 = vunpack.c.l.b16 %v1680
      %v1847 = vunpack.c.l.b16 %v1681
      %v1848 = vunpack.c.h.b16 %v1680
      %v1849 = vunpack.c.h.b16 %v1681
      %v1850 = vunpack.c.l.b16 %v1682
      %v1851 = vunpack.c.l.b16 %v1683
      %v1852 = vunpack.c.h.b16 %v1682
      %v1853 = vunpack.c.h.b16 %v1683
      %v1854 = vunpack.c.l.b16 %v1684
      %v1855 = vunpack.c.l.b16 %v1685
      %v1856 = vunpack.c.h.b16 %v1684
      %v1857 = vunpack.c.h.b16 %v1685
      %v1858 = vunpack.c.l.b16 %v1686
      %v1859 = vunpack.c.l.b16 %v1687
      %v1860 = vunpack.c.h.b16 %v1686
      %v1861 = vunpack.c.h.b16 %v1687
      %v1862 = vunpack.c.l.b16 %v1688
      %v1863 = vunpack.c.l.b16 %v1689
      %v1864 = vunpack.c.h.b16 %v1688
      %v1865 = vunpack.c.h.b16 %v1689
      %v1866 = vunpack.c.l.b16 %v1690
      %v1867 = vunpack.c.l.b16 %v1691
      %v1868 = vunpack.c.h.b16 %v1690
      %v1869 = vunpack.c.h.b16 %v1691
      %v1870 = vunpack.c.l.b16 %v1692
      %v1871 = vunpack.c.l.b16 %v1693
      %v1872 = vunpack.c.h.b16 %v1692
      %v1873 = vunpack.c.h.b16 %v1693
      %v1874 = vunpack.c.l.b16 %v1694
      %v1875 = vunpack.c.l.b16 %v1695
      %v1876 = vunpack.c.h.b16 %v1694
      %v1877 = vunpack.c.h.b16 %v1695
      %v1878 = vunpack.c.l.b16 %v1696
      %v1879 = vunpack.c.l.b16 %v1697
      %v1880 = vunpack.c.h.b16 %v1696
      %v1881 = vunpack.c.h.b16 %v1697
      %v1882 = vunpack.c.l.b16 %v1698
      %v1883 = vunpack.c.l.b16 %v1699
      %v1884 = vunpack.c.h.b16 %v1698
      %v1885 = vunpack.c.h.b16 %v1699
      %v1886 = vunpack.c.l.b16 %v1700
      %v1887 = vunpack.c.l.b16 %v1701
      %v1888 = vunpack.c.h.b16 %v1700
      %v1889 = vunpack.c.h.b16 %v1701
      %v1890 = vunpack.c.l.b16 %v1702
      %v1891 = vunpack.c.l.b16 %v1703
      %v1892 = vunpack.c.h.b16 %v1702
      %v1893 = vunpack.c.h.b16 %v1703
      %v1894 = vunpack.c.l.b16 %v1704
      %v1895 = vunpack.c.l.b16 %v1705
      %v1896 = vunpack.c.h.b16 %v1704
      %v1897 = vunpack.c.h.b16 %v1705
      %v1898 = vpack.c.b16 %v1771, %v1770
      %v1899 = vpack.c.b16 %v1773, %v1772
      %v1900 = vpack.c.b16 %v1775, %v1774
      %v1901 = vpack.c.b16 %v1777, %v1776
      %v1902 = vpack.c.b16 %v1779, %v1778
      %v1903 = vpack.c.b16 %v1781, %v1780
      %v1904 = vpack.c.b16 %v1783, %v1782
      %v1905 = vpack.c.b16 %v1785, %v1784
      %v1906 = vpack.c.b16 %v1787, %v1786
      %v1907 = vpack.c.b16 %v1789, %v1788
      %v1908 = vpack.c.b16 %v1791, %v1790
      %v1909 = vpack.c.b16 %v1793, %v1792
      %v1910 = vpack.c.b16 %v1795, %v1794
      %v1911 = vpack.c.b16 %v1797, %v1796
      %v1912 = vpack.c.b16 %v1799, %v1798
      %v1913 = vpack.c.b16 %v1801, %v1800
      %v1914 = vpack.c.b16 %v1803, %v1802
      %v1915 = vpack.c.b16 %v1805, %v1804
      %v1916 = vpack.c.b16 %v1807, %v1806
      %v1917 = vpack.c.b16 %v1809, %v1808
      %v1918 = vpack.c.b16 %v1811, %v1810
      %v1919 = vpack.c.b16 %v1813, %v1812
      %v1920 = vpack.c.b16 %v1815, %v1814
      %v1921 = vpack.c.b16 %v1817, %v1816
      %v1922 = vpack.c.b16 %v1819, %v1818
      %v1923 = vpack.c.b16 %v1821, %v1820
      %v1924 = vpack.c.b16 %v1823, %v1822
      %v1925 = vpack.c.b16 %v1825, %v1824
      %v1926 = vpack.c.b16 %v1827, %v1826
      %v1927 = vpack.c.b16 %v1829, %v1828
      %v1928 = vpack.c.b16 %v1831, %v1830
      %v1929 = vpack.c.b16 %v1833, %v1832
      %v1930 = vpack.c.b16 %v1835, %v1834
      %v1931 = vpack.c.b16 %v1837, %v1836
      %v1932 = vpack.c.b16 %v1839, %v1838
      %v1933 = vpack.c.b16 %v1841, %v1840
      %v1934 = vpack.c.b16 %v1843, %v1842
      %v1935 = vpack.c.b16 %v1845, %v1844
      %v1936 = vpack.c.b16 %v1847, %v1846
      %v1937 = vpack.c.b16 %v1849, %v1848
      %v1938 = vpack.c.b16 %v1851, %v1850
      %v1939 = vpack.c.b16 %v1853, %v1852
      %v1940 = vpack.c.b16 %v1855, %v1854
      %v1941 = vpack.c.b16 %v1857, %v1856
      %v1942 = vpack.c.b16 %v1859, %v1858
      %v1943 = vpack.c.b16 %v1861, %v1860
      %v1944 = vpack.c.b16 %v1863, %v1862
      %v1945 = vpack.c.b16 %v1865, %v1864
      %v1946 = vpack.c.b16 %v1867, %v1866
      %v1947 = vpack.c.b16 %v1869, %v1868
      %v1948 = vpack.c.b16 %v1871, %v1870
      %v1949 = vpack.c.b16 %v1873, %v1872
      %v1950 = vpack.c.b16 %v1875, %v1874
      %v1951 = vpack.c.b16 %v1877, %v1876
      %v1952 = vpack.c.b16 %v1879, %v1878
      %v1953 = vpack.c.b16 %v1881, %v1880
      %v1954 = vpack.c.b16 %v1883, %v1882
      %v1955 = vpack.c.b16 %v1885, %v1884
      %v1956 = vpack.c.b16 %v1887, %v1886
      %v1957 = vpack.c.b16 %v1889, %v1888
      %v1958 = vpack.c.b16 %v1891, %v1890
      %v1959 = vpack.c.b16 %v1893, %v1892
      %v1960 = vpack.c.b16 %v1895, %v1894
      %v1961 = vpack.c.b16 %v1897, %v1896
      %2026 = vst [vmem:[%s3] sm:$0xff] %v1898
      %2027 = vst [vmem:[%s3 + $0x8] sm:$0xff] %v1899
      %2028 = vst [vmem:[%s3 + $0x10] sm:$0xff] %v1900
      %2029 = vst [vmem:[%s3 + $0x18] sm:$0xff] %v1901
      %2030 = vst [vmem:[%s3 + $0x20] sm:$0xff] %v1902
      %2031 = vst [vmem:[%s3 + $0x28] sm:$0xff] %v1903
      %2032 = vst [vmem:[%s3 + $0x30] sm:$0xff] %v1904
      %2033 = vst [vmem:[%s3 + $0x38] sm:$0xff] %v1905
      %2034 = vst [vmem:[%s3 + $0x40] sm:$0xff] %v1906
      %2035 = vst [vmem:[%s3 + $0x48] sm:$0xff] %v1907
      %2036 = vst [vmem:[%s3 + $0x50] sm:$0xff] %v1908
      %2037 = vst [vmem:[%s3 + $0x58] sm:$0xff] %v1909
      %2038 = vst [vmem:[%s3 + $0x60] sm:$0xff] %v1910
      %2039 = vst [vmem:[%s3 + $0x68] sm:$0xff] %v1911
      %2040 = vst [vmem:[%s3 + $0x70] sm:$0xff] %v1912
      %2041 = vst [vmem:[%s3 + $0x78] sm:$0xff] %v1913
      %2042 = vst [vmem:[%s3 + $0x80] sm:$0xff] %v1914
      %2043 = vst [vmem:[%s3 + $0x88] sm:$0xff] %v1915
      %2044 = vst [vmem:[%s3 + $0x90] sm:$0xff] %v1916
      %2045 = vst [vmem:[%s3 + $0x98] sm:$0xff] %v1917
      %2046 = vst [vmem:[%s3 + $0xa0] sm:$0xff] %v1918
      %2047 = vst [vmem:[%s3 + $0xa8] sm:$0xff] %v1919
      %2048 = vst [vmem:[%s3 + $0xb0] sm:$0xff] %v1920
      %2049 = vst [vmem:[%s3 + $0xb8] sm:$0xff] %v1921
      %2050 = vst [vmem:[%s3 + $0xc0] sm:$0xff] %v1922
      %2051 = vst [vmem:[%s3 + $0xc8] sm:$0xff] %v1923
      %2052 = vst [vmem:[%s3 + $0xd0] sm:$0xff] %v1924
      %2053 = vst [vmem:[%s3 + $0xd8] sm:$0xff] %v1925
      %2054 = vst [vmem:[%s3 + $0xe0] sm:$0xff] %v1926
      %2055 = vst [vmem:[%s3 + $0xe8] sm:$0xff] %v1927
      %2056 = vst [vmem:[%s3 + $0xf0] sm:$0xff] %v1928
      %2057 = vst [vmem:[%s3 + $0xf8] sm:$0xff] %v1929
      %2058 = vst [vmem:[%s3 + $0x100] sm:$0xff] %v1930
      %2059 = vst [vmem:[%s3 + $0x108] sm:$0xff] %v1931
      %2060 = vst [vmem:[%s3 + $0x110] sm:$0xff] %v1932
      %2061 = vst [vmem:[%s3 + $0x118] sm:$0xff] %v1933
      %2062 = vst [vmem:[%s3 + $0x120] sm:$0xff] %v1934
      %2063 = vst [vmem:[%s3 + $0x128] sm:$0xff] %v1935
      %2064 = vst [vmem:[%s3 + $0x130] sm:$0xff] %v1936
      %2065 = vst [vmem:[%s3 + $0x138] sm:$0xff] %v1937
      %2066 = vst [vmem:[%s3 + $0x140] sm:$0xff] %v1938
      %2067 = vst [vmem:[%s3 + $0x148] sm:$0xff] %v1939
      %2068 = vst [vmem:[%s3 + $0x150] sm:$0xff] %v1940
      %2069 = vst [vmem:[%s3 + $0x158] sm:$0xff] %v1941
      %2070 = vst [vmem:[%s3 + $0x160] sm:$0xff] %v1942
      %2071 = vst [vmem:[%s3 + $0x168] sm:$0xff] %v1943
      %2072 = vst [vmem:[%s3 + $0x170] sm:$0xff] %v1944
      %2073 = vst [vmem:[%s3 + $0x178] sm:$0xff] %v1945
      %2074 = vst [vmem:[%s3 + $0x180] sm:$0xff] %v1946
      %2075 = vst [vmem:[%s3 + $0x188] sm:$0xff] %v1947
      %2076 = vst [vmem:[%s3 + $0x190] sm:$0xff] %v1948
      %2077 = vst [vmem:[%s3 + $0x198] sm:$0xff] %v1949
      %2078 = vst [vmem:[%s3 + $0x1a0] sm:$0xff] %v1950
      %2079 = vst [vmem:[%s3 + $0x1a8] sm:$0xff] %v1951
      %2080 = vst [vmem:[%s3 + $0x1b0] sm:$0xff] %v1952
      %2081 = vst [vmem:[%s3 + $0x1b8] sm:$0xff] %v1953
      %2082 = vst [vmem:[%s3 + $0x1c0] sm:$0xff] %v1954
      %2083 = vst [vmem:[%s3 + $0x1c8] sm:$0xff] %v1955
      %2084 = vst [vmem:[%s3 + $0x1d0] sm:$0xff] %v1956
      %2085 = vst [vmem:[%s3 + $0x1d8] sm:$0xff] %v1957
      %2086 = vst [vmem:[%s3 + $0x1e0] sm:$0xff] %v1958
      %2087 = vst [vmem:[%s3 + $0x1e8] sm:$0xff] %v1959
      %2088 = vst [vmem:[%s3 + $0x1f0] sm:$0xff] %v1960
      %2089 = vst [vmem:[%s3 + $0x1f8] sm:$0xff] %v1961
    $region25: #{_lambda_.8} parent=1 // pred_fallthru
      _
    // Predicated region
    $region26: #{_lambda_.8} parent=1 // pred_check
      _
    $region27: #{_lambda_.8} parent=1 // pred_check_branch
      %2091 = sbr.rel (0) target = $region29
    $region28: #{_lambda_.8} parent=1 // pred_region
      _
    $region29: #{_lambda_.8} parent=1 // pred_fallthru
      _
    // Predicated region
    $region30: #{_lambda_.8} parent=1 // pred_check
      _
    $region31: #{_lambda_.8} parent=1 // pred_check_branch
      %2093 = sbr.rel (0) target = $region33
    $region32: #{_lambda_.8} parent=1 // pred_region
      _
    $region33: #{_lambda_.8} parent=1 // pred_fallthru
      _
    %2094 = vsyncpa [#allocation4], 1

// kernel: _lambda_.9
$region0: #{_lambda_.9}
  #allocation0 [shape = 'u32[]', space=smem, size = 0x4, offset = 0x4, fixed_abs, tag = 'smem constant byte address 0x4 - core index']
  #allocation1 [shape = 'u32[144,128]{1,0:T(1,128)}', space=vmem, size = 0x12000, scoped, tag = 'internal scratch']
  #allocation2 [shape = 'f32[64,128]{1,0:T(8,128)}', space=vmem, size = 0x8000, scoped, tag = 'scratch operand']
  %s0 = inlined_call_operand.vmem [shape: bf16[2,64,3456], index: 0, kind: input, shape index: {}]
  %s1 = inlined_call_operand.vmem [shape: bf16[2,3456,128], index: 1, kind: input, shape index: {}]
  %s2 = inlined_call_operand.vmem [shape: f32[1,256], index: 2, kind: input, shape index: {}]
  %s3 = inlined_call_operand.vmem [shape: bf16[64,256], index: 3, kind: output, shape index: {}]
  %s4 = sld [smem:[#allocation0]]
  $region116: #{_lambda_.9} parent=0
    _
  %s6 = ssub.s32 1, %s4
  %s7 = scalar_select 0, %s6, %s4
  $region1: #{_lambda_.9} parent=0
    #allocation3 [shape = 'u8[98304]{0}', space=vmem, size = 0x18000, scoped, tag = 'input window, operand 0']
    #allocation4 [shape = 'u8[32768]{0}', space=vmem, size = 0x8000, scoped, tag = 'output window, operand 0']
    loop: start=0, step=1, limit=20
    $region2: #{_lambda_.9} parent=1 // loop_pre_header
      _
    $region3: #{_lambda_.9} parent=1 // loop_header
      %s9 = sphi 0, %s13
      %p10 = scmp.ge.s32.totalorder %s9, 20
      %s16 = sphi 0, %s35
      %s17 = sphi 0, %s31
      %s18 = sphi 0, %s27
      %s19 = sphi 0, %s16
      %s20 = sphi 0, %s17
      %s21 = sphi 0, %s18
      %s22 = sphi 0, %s19
      %s23 = sphi 0, %s20
      %s24 = sphi 0, %s21
      %s42 = sphi 0, %s44
      %s45 = sphi 0, %s42
      %s46 = sphi 0, %s45
      %s62 = sphi 0, %s46
      %s70 = sphi 0, %s72
      %s73 = sphi 0, %s70
      %s74 = sphi 0, %s73
      %s90 = sphi 0, %s74
      %s96 = sphi 0, %s98
      %s99 = sphi 0, %s96
      %s100 = sphi 0, %s99
      %s116 = sphi 0, %s100
      %s124 = sphi 0, %s126
      %s127 = sphi 0, %s124
      %s128 = sphi 0, %s127
      %s144 = sphi 0, %s128
    $region4: #{_lambda_.9} parent=1 // loop_header_branch
      %12 = sbr.rel (%p10) target = $region8
    $region5: #{_lambda_.9} parent=1 // loop_body
      %s14 = ssub.s32 %s9, 1
      %s15 = ssub.s32 %s9, 2
      %s25 = sadd.s32 1, %s18
      %p26 = scmp.ge.s32.totalorder %s25, 9
      %s27 = scalar_select %p26, 0, %s25
      %s28 = sadd.s32 1, %s17
      %s29 = scalar_select %p26, %s28, %s17
      %p30 = scmp.ge.s32.totalorder %s29, 2
      %s31 = scalar_select %p30, 0, %s29
      %s32 = sadd.s32 1, %s16
      %s33 = scalar_select %p30, %s32, %s16
      %p34 = scmp.ge.s32.totalorder %s33, 1
      %s35 = scalar_select %p34, 0, %s33
      %s36 = ssub.s32 %s17, %s31
      %s37 = ssub.s32 %s16, %s35
      %s38 = sor.u32 %s36, %s37
      %s39 = ssub.s32 %s18, %s27
      %s40 = sor.u32 %s38, %s39
      %p41 = scmp.eq.s32.totalorder %s40, 0
      %s43 = sadd.s32 %s42, 1
      %s44 = scalar_select %p41, %s42, %s43
      %p47 = pneg %p41
      %p48 = scmp.eq.s32.totalorder %s9, 17
      %p49 = por %p47, %p48
      %p50 = scmp.ne.s32.totalorder %s42, %s45
      %p51 = scmp.eq.s32.totalorder %s9, 0
      %p52 = por %p50, %p51
      %p53 = scmp.ne.s32.totalorder %s42, %s45
      %p54 = scmp.eq.s32.totalorder %s14, 17
      %p55 = por %p53, %p54
      %p56 = scmp.ne.s32.totalorder %s45, %s46
      %p57 = scmp.eq.s32.totalorder %s14, 0
      %p58 = por %p56, %p57
      %p59 = scmp.ne.s32.totalorder %s45, %s46
      %p60 = scmp.eq.s32.totalorder %s15, 17
      %p61 = por %p59, %p60
      %p63 = scmp.ne.s32.totalorder %s46, %s62
      %p64 = scmp.eq.s32.totalorder %s15, 0
      %p65 = por %p63, %p64
      %s66 = ssub.s32 %s17, %s31
      %s67 = ssub.s32 %s18, %s27
      %s68 = sor.u32 %s66, %s67
      %p69 = scmp.eq.s32.totalorder %s68, 0
      %s71 = sadd.s32 %s70, 1
      %s72 = scalar_select %p69, %s70, %s71
      %p75 = pneg %p69
      %p76 = scmp.eq.s32.totalorder %s9, 17
      %p77 = por %p75, %p76
      %p78 = scmp.ne.s32.totalorder %s70, %s73
      %p79 = scmp.eq.s32.totalorder %s9, 0
      %p80 = por %p78, %p79
      %p81 = scmp.ne.s32.totalorder %s70, %s73
      %p82 = scmp.eq.s32.totalorder %s14, 17
      %p83 = por %p81, %p82
      %p84 = scmp.ne.s32.totalorder %s73, %s74
      %p85 = scmp.eq.s32.totalorder %s14, 0
      %p86 = por %p84, %p85
      %p87 = scmp.ne.s32.totalorder %s73, %s74
      %p88 = scmp.eq.s32.totalorder %s15, 17
      %p89 = por %p87, %p88
      %p91 = scmp.ne.s32.totalorder %s74, %s90
      %p92 = scmp.eq.s32.totalorder %s15, 0
      %p93 = por %p91, %p92
      %s94 = ssub.s32 %s17, %s31
      %p95 = scmp.eq.s32.totalorder %s94, 0
      %s97 = sadd.s32 %s96, 1
      %s98 = scalar_select %p95, %s96, %s97
      %p101 = pneg %p95
      %p102 = scmp.eq.s32.totalorder %s9, 17
      %p103 = por %p101, %p102
      %p104 = scmp.ne.s32.totalorder %s96, %s99
      %p105 = scmp.eq.s32.totalorder %s9, 0
      %p106 = por %p104, %p105
      %p107 = scmp.ne.s32.totalorder %s96, %s99
      %p108 = scmp.eq.s32.totalorder %s14, 17
      %p109 = por %p107, %p108
      %p110 = scmp.ne.s32.totalorder %s99, %s100
      %p111 = scmp.eq.s32.totalorder %s14, 0
      %p112 = por %p110, %p111
      %p113 = scmp.ne.s32.totalorder %s99, %s100
      %p114 = scmp.eq.s32.totalorder %s15, 17
      %p115 = por %p113, %p114
      %p117 = scmp.ne.s32.totalorder %s100, %s116
      %p118 = scmp.eq.s32.totalorder %s15, 0
      %p119 = por %p117, %p118
      %s120 = ssub.s32 %s16, %s35
      %s121 = ssub.s32 %s17, %s31
      %s122 = sor.u32 %s120, %s121
      %p123 = scmp.eq.s32.totalorder %s122, 0
      %s125 = sadd.s32 %s124, 1
      %s126 = scalar_select %p123, %s124, %s125
      %p129 = pneg %p123
      %p130 = scmp.eq.s32.totalorder %s9, 17
      %p131 = por %p129, %p130
      %p132 = scmp.ne.s32.totalorder %s124, %s127
      %p133 = scmp.eq.s32.totalorder %s9, 0
      %p134 = por %p132, %p133
      %p135 = scmp.ne.s32.totalorder %s124, %s127
      %p136 = scmp.eq.s32.totalorder %s14, 17
      %p137 = por %p135, %p136
      %p138 = scmp.ne.s32.totalorder %s127, %s128
      %p139 = scmp.eq.s32.totalorder %s14, 0
      %p140 = por %p138, %p139
      %p141 = scmp.ne.s32.totalorder %s127, %s128
      %p142 = scmp.eq.s32.totalorder %s15, 17
      %p143 = por %p141, %p142
      %p145 = scmp.ne.s32.totalorder %s128, %s144
      %p146 = scmp.eq.s32.totalorder %s15, 0
      %p147 = por %p145, %p146
      %p148 = scmp.le.s32.totalorder 1, %s9
      %p149 = scmp.lt.s32.totalorder %s9, 19
      %p150 = pnand %p148, %p149
      %p151 = pneg %p150
      // Predicated region
      $region9: #{_lambda_.9} parent=5 // pred_check
        _
      $region10: #{_lambda_.9} parent=5 // pred_check_branch
        %153 = sbr.rel (%p150) target = $region12
      $region11: #{_lambda_.9} parent=5 // pred_region
        %s154 = ssub.s32 %s9, 1
      $region12: #{_lambda_.9} parent=5 // pred_fallthru
        _
      %p155 = scmp.lt.s32.totalorder %s9, 18
      // Predicated region
      $region13: #{_lambda_.9} parent=5 // pred_check
        %p156 = pneg %p155
      $region14: #{_lambda_.9} parent=5 // pred_check_branch
        %158 = sbr.rel (%p156) target = $region16
      $region15: #{_lambda_.9} parent=5 // pred_region
        // Predicated region
        $region17: #{_lambda_.9} parent=15 // pred_check
          %p159 = pneg %p52
        $region18: #{_lambda_.9} parent=15 // pred_check_branch
          %161 = sbr.rel (%p159) target = $region20
        $region19: #{_lambda_.9} parent=15 // pred_region
          %s162 = sand.u32 %s42, 1
          %s163 = sand.u32 %s42, 1
          %s164 = smul.addr %s163, 96
          %s165 = scalar_lea.vmem [#allocation3], %s164
          %s166 = smul.u32 8, %s16
          %s167 = smul.u32 3, %s18
          %s168 = smul.addr %s166, 27
          %s169 = sadd.s32 %s167, %s168
          %s170 = smul.addr %s17, 216
          %s171 = sadd.s32 %s169, %s170
          %s172 = smul.addr %s171, 4
          %s173 = scalar_lea.vmem %s0, %s172
          // Predicated region
          $region21: #{_lambda_.9} parent=19 // pred_check
            _
          $region22: #{_lambda_.9} parent=19 // pred_check_branch
            %175 = sbr.rel (0) target = $region24
          $region23: #{_lambda_.9} parent=19 // pred_region
            // Predicated region
            $region25: #{_lambda_.9} parent=23 // pred_check
              _
            $region26: #{_lambda_.9} parent=23 // pred_check_branch
              %177 = sbr.rel (0) target = $region28
            $region27: #{_lambda_.9} parent=23 // pred_region
              %s178 = scalar_lea.vmem %s173, 8
              %s179 = scalar_lea.vmem %s165, 8 [#allocation3]
              loop: start=0, step=1, limit=1
              $region29: #{_lambda_.9} parent=27 // loop_pre_header
                _
              $region30: #{_lambda_.9} parent=27 // loop_header
                %s181 = sphi 0, %s185
                %p182 = scmp.ge.s32.totalorder %s181, 1
                %s186 = sphi %s173, %s173
                %s187 = sphi %s165, %s165
              $region31: #{_lambda_.9} parent=27 // loop_header_branch
                %184 = sbr.rel (%p182) target = $region35
              $region32: #{_lambda_.9} parent=27 // loop_body
                %v188 = vld [vmem:[%s186] sm:$0xff]
                %189 = vst [vmem:[%s187] sm:$0xff] %v188
                %v190 = vld [vmem:[%s186 + $0x6c] sm:$0xff]
                %191 = vst [vmem:[%s187 + $0xc] sm:$0xff] %v190
                %v192 = vld [vmem:[%s186 + $0xd8] sm:$0xff]
                %193 = vst [vmem:[%s187 + $0x18] sm:$0xff] %v192
                %v194 = vld [vmem:[%s186 + $0x144] sm:$0xff]
                %195 = vst [vmem:[%s187 + $0x24] sm:$0xff] %v194
                %v196 = vld [vmem:[%s186 + $0x1b0] sm:$0xff]
                %197 = vst [vmem:[%s187 + $0x30] sm:$0xff] %v196
                %v198 = vld [vmem:[%s186 + $0x21c] sm:$0xff]
                %199 = vst [vmem:[%s187 + $0x3c] sm:$0xff] %v198
                %v200 = vld [vmem:[%s186 + $0x288] sm:$0xff]
                %201 = vst [vmem:[%s187 + $0x48] sm:$0xff] %v200
                %v202 = vld [vmem:[%s186 + $0x2f4] sm:$0xff]
                %203 = vst [vmem:[%s187 + $0x54] sm:$0xff] %v202
              $region33: #{_lambda_.9} parent=27 // loop_footer
                %s185 = sadd.s32 1, %s181
              $region34: #{_lambda_.9} parent=27 // loop_footer_branch
                %180 = sbr.rel target = $region30
              $region35: #{_lambda_.9} parent=27 // loop_exit
                _
              loop: start=0, step=1, limit=1
              $region36: #{_lambda_.9} parent=27 // loop_pre_header
                _
              $region37: #{_lambda_.9} parent=27 // loop_header
                %s206 = sphi 0, %s210
                %p207 = scmp.ge.s32.totalorder %s206, 1
                %s211 = sphi %s178, %s178
                %s212 = sphi %s179, %s179
              $region38: #{_lambda_.9} parent=27 // loop_header_branch
                %209 = sbr.rel (%p207) target = $region42
              $region39: #{_lambda_.9} parent=27 // loop_body
                %v213 = vld [vmem:[%s211] sm:$0xf]
                %214 = vst [vmem:[%s212] sm:$0xf] %v213
                %v215 = vld [vmem:[%s211 + $0x6c] sm:$0xf]
                %216 = vst [vmem:[%s212 + $0xc] sm:$0xf] %v215
                %v217 = vld [vmem:[%s211 + $0xd8] sm:$0xf]
                %218 = vst [vmem:[%s212 + $0x18] sm:$0xf] %v217
                %v219 = vld [vmem:[%s211 + $0x144] sm:$0xf]
                %220 = vst [vmem:[%s212 + $0x24] sm:$0xf] %v219
                %v221 = vld [vmem:[%s211 + $0x1b0] sm:$0xf]
                %222 = vst [vmem:[%s212 + $0x30] sm:$0xf] %v221
                %v223 = vld [vmem:[%s211 + $0x21c] sm:$0xf]
                %224 = vst [vmem:[%s212 + $0x3c] sm:$0xf] %v223
                %v225 = vld [vmem:[%s211 + $0x288] sm:$0xf]
                %226 = vst [vmem:[%s212 + $0x48] sm:$0xf] %v225
                %v227 = vld [vmem:[%s211 + $0x2f4] sm:$0xf]
                %228 = vst [vmem:[%s212 + $0x54] sm:$0xf] %v227
              $region40: #{_lambda_.9} parent=27 // loop_footer
                %s210 = sadd.s32 1, %s206
              $region41: #{_lambda_.9} parent=27 // loop_footer_branch
                %205 = sbr.rel target = $region37
              $region42: #{_lambda_.9} parent=27 // loop_exit
                _
            $region28: #{_lambda_.9} parent=23 // pred_fallthru
              _
          $region24: #{_lambda_.9} parent=19 // pred_fallthru
            _
          %229 = vnop
        $region20: #{_lambda_.9} parent=15 // pred_fallthru
          _
        // Predicated region
        $region43: #{_lambda_.9} parent=15 // pred_check
          %p230 = pneg %p80
        $region44: #{_lambda_.9} parent=15 // pred_check_branch
          %232 = sbr.rel (%p230) target = $region46
        $region45: #{_lambda_.9} parent=15 // pred_region
          %s233 = smul.u32 48, %s18
          %p234 = scmp.lt.s32.totalorder %s17, 1
          %s235 = scalar_select %p234, %s17, 1
          %p236 = scmp.lt.s32.totalorder %s233, 431
          %s237 = scalar_select %p236, %s233, 431
          %s238 = smul.addr %s235, 432
          %s239 = sadd.s32 %s237, %s238
          %s240 = smul.addr %s239, 4
          %s241 = scalar_lea.vmem %s1, %s240
          %s242 = smul.u32 48, %s18
        $region46: #{_lambda_.9} parent=15 // pred_fallthru
          _
        // Predicated region
        $region47: #{_lambda_.9} parent=15 // pred_check
          %p243 = pneg %p106
        $region48: #{_lambda_.9} parent=15 // pred_check_branch
          %245 = sbr.rel (%p243) target = $region50
        $region49: #{_lambda_.9} parent=15 // pred_region
          %p246 = scmp.lt.s32.totalorder %s17, 1
          %s247 = scalar_select %p246, %s17, 1
          %s248 = scalar_lea.vmem %s2, %s247
        $region50: #{_lambda_.9} parent=15 // pred_fallthru
          _
      $region16: #{_lambda_.9} parent=5 // pred_fallthru
        _
      %p249 = scmp.le.s32.totalorder 1, %s9
      %p250 = scmp.lt.s32.totalorder %s9, 19
      %p251 = pnand %p249, %p250
      %p252 = pneg %p251
      // Predicated region
      $region51: #{_lambda_.9} parent=5 // pred_check
        _
      $region52: #{_lambda_.9} parent=5 // pred_check_branch
        %254 = sbr.rel (%p251) target = $region54
      $region53: #{_lambda_.9} parent=5 // pred_region
        %s255 = ssub.s32 %s9, 1
        %s256 = sand.u32 %s45, 1
        %s257 = sand.u32 %s45, 1
        %s258 = smul.addr %s257, 96
        %s259 = scalar_lea.vmem [#allocation3], %s258
        // Predicated region
        $region55: #{_lambda_.9} parent=53 // pred_check
          %p260 = pneg %p58
        $region56: #{_lambda_.9} parent=53 // pred_check_branch
          %262 = sbr.rel (%p260) target = $region58
        $region57: #{_lambda_.9} parent=53 // pred_region
          _
        $region58: #{_lambda_.9} parent=53 // pred_fallthru
          _
        %s263 = sand.u32 %s45, 1
        %s264 = sand.u32 %s45, 1
        %s265 = smul.addr %s264, 96
        %s266 = scalar_lea.vmem [#allocation3], %s265
        %p267 = pneg %p58
        %p268 = pneg %p55
        %s269 = smul.u32 48, %s21
        %p270 = scmp.lt.s32.totalorder %s20, 1
        %s271 = scalar_select %p270, %s20, 1
        %p272 = scmp.lt.s32.totalorder %s269, 431
        %s273 = scalar_select %p272, %s269, 431
        %s274 = smul.addr %s271, 432
        %s275 = sadd.s32 %s273, %s274
        %s276 = smul.addr %s275, 4
        %s277 = scalar_lea.vmem %s1, %s276
        %p278 = pneg %p86
        %p279 = pneg %p83
        %p280 = scmp.lt.s32.totalorder %s20, 1
        %s281 = scalar_select %p280, %s20, 1
        %s282 = scalar_lea.vmem %s2, %s281
        %p283 = pneg %p112
        %p284 = pneg %p109
        %p285 = pneg %p140
        %p286 = pneg %p137
        %s287 = sand.u32 %s127, 1
        %s288 = sand.u32 %s127, 1
        %s289 = smul.addr %s288, 32
        %s290 = scalar_lea.vmem [#allocation4], %s289
        %s291 = smul.u32 8, %s19
        %s292 = smul.u32 3, %s21
        %s293 = smul.u32 48, %s21
        %p294 = scmp.lt.s32.totalorder %s20, 1
        %s295 = scalar_select %p294, %s20, 1
        %p296 = scmp.lt.s32.totalorder %s293, 431
        %s297 = scalar_select %p296, %s293, 431
        %s298 = smul.addr %s295, 432
        %s299 = sadd.s32 %s297, %s298
        %s300 = smul.addr %s299, 4
        %s301 = scalar_lea.vmem %s1, %s300
        %s302 = smul.u32 48, %s21
        %p303 = scmp.lt.s32.totalorder %s20, 1
        %s304 = scalar_select %p303, %s20, 1
        %s305 = scalar_lea.vmem %s2, %s304
        %s306 = smul.u32 8, %s19
        %p308 = scmp.eq.s32.totalorder %s21, 0
        // Predicated region
        $region59: #{_lambda_.9} parent=53 // pred_check
          %p309 = pneg %p308
        $region60: #{_lambda_.9} parent=53 // pred_check_branch
          %311 = sbr.rel (%p309) target = $region62
        $region61: #{_lambda_.9} parent=53 // pred_region
          %312 = vst [vmem:[#allocation2] sm:$0xff] 0.0
          %313 = vst [vmem:[#allocation2 + $0x8] sm:$0xff] 0.0
          %314 = vst [vmem:[#allocation2 + $0x10] sm:$0xff] 0.0
          %315 = vst [vmem:[#allocation2 + $0x18] sm:$0xff] 0.0
          %316 = vst [vmem:[#allocation2 + $0x20] sm:$0xff] 0.0
          %317 = vst [vmem:[#allocation2 + $0x28] sm:$0xff] 0.0
          %318 = vst [vmem:[#allocation2 + $0x30] sm:$0xff] 0.0
          %319 = vst [vmem:[#allocation2 + $0x38] sm:$0xff] 0.0
        $region62: #{_lambda_.9} parent=53 // pred_fallthru
          _
        %v320 = vld [vmem:[#allocation2] sm:$0xff]
        %v321 = vld [vmem:[#allocation2 + $0x8] sm:$0xff]
        %v322 = vld [vmem:[#allocation2 + $0x10] sm:$0xff]
        %v323 = vld [vmem:[#allocation2 + $0x18] sm:$0xff]
        %v324 = vld [vmem:[#allocation2 + $0x20] sm:$0xff]
        %v325 = vld [vmem:[#allocation2 + $0x28] sm:$0xff]
        %v326 = vld [vmem:[#allocation2 + $0x30] sm:$0xff]
        %v327 = vld [vmem:[#allocation2 + $0x38] sm:$0xff]
        %v328 = vld [vmem:[%s259] sm:$0xff]
        %v329 = vld [vmem:[%s259 + $0x8] sm:$0xf]
        %v330 = vld [vmem:[%s259 + $0xc] sm:$0xff]
        %v331 = vld [vmem:[%s259 + $0x14] sm:$0xf]
        %v332 = vld [vmem:[%s259 + $0x18] sm:$0xff]
        %v333 = vld [vmem:[%s259 + $0x20] sm:$0xf]
        %v334 = vld [vmem:[%s259 + $0x24] sm:$0xff]
        %v335 = vld [vmem:[%s259 + $0x2c] sm:$0xf]
        %v336 = vld [vmem:[%s259 + $0x30] sm:$0xff]
        %v337 = vld [vmem:[%s259 + $0x38] sm:$0xf]
        %v338 = vld [vmem:[%s259 + $0x3c] sm:$0xff]
        %v339 = vld [vmem:[%s259 + $0x44] sm:$0xf]
        %v340 = vld [vmem:[%s259 + $0x48] sm:$0xff]
        %v341 = vld [vmem:[%s259 + $0x50] sm:$0xf]
        %v342 = vld [vmem:[%s259 + $0x54] sm:$0xff]
        %v343 = vld [vmem:[%s259 + $0x5c] sm:$0xf]
        %v344 = vld [vmem:[%s301] sm:$0xf]
        %v345 = vld [vmem:[%s301 + $0x4] sm:$0xf]
        %v346 = vld [vmem:[%s301 + $0x8] sm:$0xf]
        %v347 = vld [vmem:[%s301 + $0xc] sm:$0xf]
        %v348 = vld [vmem:[%s301 + $0x10] sm:$0xf]
        %v349 = vld [vmem:[%s301 + $0x14] sm:$0xf]
        %v350 = vld [vmem:[%s301 + $0x18] sm:$0xf]
        %v351 = vld [vmem:[%s301 + $0x1c] sm:$0xf]
        %v352 = vld [vmem:[%s301 + $0x20] sm:$0xf]
        %v353 = vld [vmem:[%s301 + $0x24] sm:$0xf]
        %v354 = vld [vmem:[%s301 + $0x28] sm:$0xf]
        %v355 = vld [vmem:[%s301 + $0x2c] sm:$0xf]
        %v356 = vld [vmem:[%s301 + $0x30] sm:$0xf]
        %v357 = vld [vmem:[%s301 + $0x34] sm:$0xf]
        %v358 = vld [vmem:[%s301 + $0x38] sm:$0xf]
        %v359 = vld [vmem:[%s301 + $0x3c] sm:$0xf]
        %v360 = vld [vmem:[%s301 + $0x40] sm:$0xf]
        %v361 = vld [vmem:[%s301 + $0x44] sm:$0xf]
        %v362 = vld [vmem:[%s301 + $0x48] sm:$0xf]
        %v363 = vld [vmem:[%s301 + $0x4c] sm:$0xf]
        %v364 = vld [vmem:[%s301 + $0x50] sm:$0xf]
        %v365 = vld [vmem:[%s301 + $0x54] sm:$0xf]
        %v366 = vld [vmem:[%s301 + $0x58] sm:$0xf]
        %v367 = vld [vmem:[%s301 + $0x5c] sm:$0xf]
        %v368 = vld [vmem:[%s301 + $0x60] sm:$0xf]
        %v369 = vld [vmem:[%s301 + $0x64] sm:$0xf]
        %v370 = vld [vmem:[%s301 + $0x68] sm:$0xf]
        %v371 = vld [vmem:[%s301 + $0x6c] sm:$0xf]
        %v372 = vld [vmem:[%s301 + $0x70] sm:$0xf]
        %v373 = vld [vmem:[%s301 + $0x74] sm:$0xf]
        %v374 = vld [vmem:[%s301 + $0x78] sm:$0xf]
        %v375 = vld [vmem:[%s301 + $0x7c] sm:$0xf]
        %v376 = vld [vmem:[%s301 + $0x80] sm:$0xf]
        %v377 = vld [vmem:[%s301 + $0x84] sm:$0xf]
        %v378 = vld [vmem:[%s301 + $0x88] sm:$0xf]
        %v379 = vld [vmem:[%s301 + $0x8c] sm:$0xf]
        %v380 = vld [vmem:[%s301 + $0x90] sm:$0xf]
        %v381 = vld [vmem:[%s301 + $0x94] sm:$0xf]
        %v382 = vld [vmem:[%s301 + $0x98] sm:$0xf]
        %v383 = vld [vmem:[%s301 + $0x9c] sm:$0xf]
        %v384 = vld [vmem:[%s301 + $0xa0] sm:$0xf]
        %v385 = vld [vmem:[%s301 + $0xa4] sm:$0xf]
        %v386 = vld [vmem:[%s301 + $0xa8] sm:$0xf]
        %v387 = vld [vmem:[%s301 + $0xac] sm:$0xf]
        %v388 = vld [vmem:[%s301 + $0xb0] sm:$0xf]
        %v389 = vld [vmem:[%s301 + $0xb4] sm:$0xf]
        %v390 = vld [vmem:[%s301 + $0xb8] sm:$0xf]
        %v391 = vld [vmem:[%s301 + $0xbc] sm:$0xf]
        %v408 = vunpack.c.l.b16 %v328
        %v409 = vunpack.c.h.b16 %v328
        %v410 = vunpack.c.l.b16 %v329
        %v411 = vunpack.c.l.b16 %v330
        %v412 = vunpack.c.h.b16 %v330
        %v413 = vunpack.c.l.b16 %v331
        %v414 = vunpack.c.l.b16 %v332
        %v415 = vunpack.c.h.b16 %v332
        %v416 = vunpack.c.l.b16 %v333
        %v417 = vunpack.c.l.b16 %v334
        %v418 = vunpack.c.h.b16 %v334
        %v419 = vunpack.c.l.b16 %v335
        %v420 = vunpack.c.l.b16 %v336
        %v421 = vunpack.c.h.b16 %v336
        %v422 = vunpack.c.l.b16 %v337
        %v423 = vunpack.c.l.b16 %v338
        %v424 = vunpack.c.h.b16 %v338
        %v425 = vunpack.c.l.b16 %v339
        %v426 = vunpack.c.l.b16 %v340
        %v427 = vunpack.c.h.b16 %v340
        %v428 = vunpack.c.l.b16 %v341
        %v429 = vunpack.c.l.b16 %v342
        %v430 = vunpack.c.h.b16 %v342
        %v431 = vunpack.c.l.b16 %v343
        %v432 = vpack.c.b16 %v411, %v408
        %v433 = vpack.c.b16 %v412, %v409
        %v434 = vpack.c.b16 %v413, %v410
        %v435 = vpack.c.b16 %v417, %v414
        %v436 = vpack.c.b16 %v418, %v415
        %v437 = vpack.c.b16 %v419, %v416
        %v438 = vpack.c.b16 %v423, %v420
        %v439 = vpack.c.b16 %v424, %v421
        %v440 = vpack.c.b16 %v425, %v422
        %v441 = vpack.c.b16 %v429, %v426
        %v442 = vpack.c.b16 %v430, %v427
        %v443 = vpack.c.b16 %v431, %v428
        %v504 = vunpack.c.l.b16 %v344
        %v505 = vunpack.c.l.b16 %v345
        %v506 = vunpack.c.l.b16 %v346
        %v507 = vunpack.c.l.b16 %v347
        %v508 = vunpack.c.l.b16 %v348
        %v509 = vunpack.c.l.b16 %v349
        %v510 = vunpack.c.l.b16 %v350
        %v511 = vunpack.c.l.b16 %v351
        %v512 = vunpack.c.l.b16 %v352
        %v513 = vunpack.c.l.b16 %v353
        %v514 = vunpack.c.l.b16 %v354
        %v515 = vunpack.c.l.b16 %v355
        %v516 = vunpack.c.l.b16 %v356
        %v517 = vunpack.c.l.b16 %v357
        %v518 = vunpack.c.l.b16 %v358
        %v519 = vunpack.c.l.b16 %v359
        %v520 = vunpack.c.l.b16 %v360
        %v521 = vunpack.c.l.b16 %v361
        %v522 = vunpack.c.l.b16 %v362
        %v523 = vunpack.c.l.b16 %v363
        %v524 = vunpack.c.l.b16 %v364
        %v525 = vunpack.c.l.b16 %v365
        %v526 = vunpack.c.l.b16 %v366
        %v527 = vunpack.c.l.b16 %v367
        %v528 = vunpack.c.l.b16 %v368
        %v529 = vunpack.c.l.b16 %v369
        %v530 = vunpack.c.l.b16 %v370
        %v531 = vunpack.c.l.b16 %v371
        %v532 = vunpack.c.l.b16 %v372
        %v533 = vunpack.c.l.b16 %v373
        %v534 = vunpack.c.l.b16 %v374
        %v535 = vunpack.c.l.b16 %v375
        %v536 = vunpack.c.l.b16 %v376
        %v537 = vunpack.c.l.b16 %v377
        %v538 = vunpack.c.l.b16 %v378
        %v539 = vunpack.c.l.b16 %v379
        %v540 = vunpack.c.l.b16 %v380
        %v541 = vunpack.c.l.b16 %v381
        %v542 = vunpack.c.l.b16 %v382
        %v543 = vunpack.c.l.b16 %v383
        %v544 = vunpack.c.l.b16 %v384
        %v545 = vunpack.c.l.b16 %v385
        %v546 = vunpack.c.l.b16 %v386
        %v547 = vunpack.c.l.b16 %v387
        %v548 = vunpack.c.l.b16 %v388
        %v549 = vunpack.c.l.b16 %v389
        %v550 = vunpack.c.l.b16 %v390
        %v551 = vunpack.c.l.b16 %v391
        %v552 = vpack.c.b16 %v505, %v504
        %v553 = vpack.c.b16 %v507, %v506
        %v554 = vpack.c.b16 %v509, %v508
        %v555 = vpack.c.b16 %v511, %v510
        %v556 = vpack.c.b16 %v513, %v512
        %v557 = vpack.c.b16 %v515, %v514
        %v558 = vpack.c.b16 %v517, %v516
        %v559 = vpack.c.b16 %v519, %v518
        %v560 = vpack.c.b16 %v521, %v520
        %v561 = vpack.c.b16 %v523, %v522
        %v562 = vpack.c.b16 %v525, %v524
        %v563 = vpack.c.b16 %v527, %v526
        %v564 = vpack.c.b16 %v529, %v528
        %v565 = vpack.c.b16 %v531, %v530
        %v566 = vpack.c.b16 %v533, %v532
        %v567 = vpack.c.b16 %v535, %v534
        %v568 = vpack.c.b16 %v537, %v536
        %v569 = vpack.c.b16 %v539, %v538
        %v570 = vpack.c.b16 %v541, %v540
        %v571 = vpack.c.b16 %v543, %v542
        %v572 = vpack.c.b16 %v545, %v544
        %v573 = vpack.c.b16 %v547, %v546
        %v574 = vpack.c.b16 %v549, %v548
        %v575 = vpack.c.b16 %v551, %v550
        %600 = vmatprep.subr.bf16.mxu0 0
        %601 = vmatpush1.bf16.msra.mxu0 %v552
        %602 = vmatprep.subr.bf16.mxu0 0
        %603 = vmatpush1.bf16.msra.mxu0 %v553
        %604 = vmatprep.subr.bf16.mxu0 0
        %605 = vmatpush1.bf16.msra.mxu0 %v554
        %606 = vmatprep.subr.bf16.mxu0 0
        %607 = vmatpush1.bf16.msra.mxu0 %v555
        %608 = vmatprep.subr.bf16.mxu0 0
        %609 = vmatpush1.bf16.msra.mxu0 %v556
        %610 = vmatprep.subr.bf16.mxu0 0
        %611 = vmatpush1.bf16.msra.mxu0 %v557
        %612 = vmatprep.subr.bf16.mxu0 0
        %613 = vmatpush1.bf16.msra.mxu0 %v558
        %614 = vmatprep.subr.bf16.mxu0 0
        %615 = vmatpush1.bf16.msra.mxu0 %v559
        %616 = vmatprep.subr.bf16.mxu0 0
        %617 = vmatpush1.bf16.msra.mxu0 %v560
        %618 = vmatprep.subr.bf16.mxu0 0
        %619 = vmatpush1.bf16.msra.mxu0 %v561
        %620 = vmatprep.subr.bf16.mxu0 0
        %621 = vmatpush1.bf16.msra.mxu0 %v562
        %622 = vmatprep.subr.bf16.mxu0 0
        %623 = vmatpush1.bf16.msra.mxu0 %v563
        %624 = vmatprep.subr.bf16.mxu0 0
        %625 = vmatpush1.bf16.msra.mxu0 %v564
        %626 = vmatprep.subr.bf16.mxu0 0
        %627 = vmatpush1.bf16.msra.mxu0 %v565
        %628 = vmatprep.subr.bf16.mxu0 0
        %629 = vmatpush1.bf16.msra.mxu0 %v566
        %630 = vmatprep.subr.bf16.mxu0 0
        %631 = vmatpush1.bf16.msra.mxu0 %v567
        %632 = vmatprep.mubr.bf16.mxu0 %v433
        %633 = vmatmul.mubr.bf16.gmra.mrb[0].mxu0 %v432
        %v634 = vpop.f32.mrb[0].mxu0
        %v635 = vadd.f32 0.0, %v634
        %v636 = vpop.f32.mrb[0].mxu0
        %v637 = vpop.f32.mrb[0].mxu0
        %v638 = vadd.f32 0.0, %v637
        %v639 = vpop.f32.mrb[0].mxu0
        %640 = vmatprep.mubr.bf16.mxu0 %v436
        %641 = vmatmul.mubr.bf16.gmra.mrb[0].mxu0 %v435
        %v642 = vpop.f32.mrb[0].mxu0
        %v643 = vadd.f32 0.0, %v642
        %v644 = vpop.f32.mrb[0].mxu0
        %v645 = vpop.f32.mrb[0].mxu0
        %v646 = vadd.f32 0.0, %v645
        %v647 = vpop.f32.mrb[0].mxu0
        %648 = vmatprep.mubr.bf16.mxu0 %v439
        %649 = vmatmul.mubr.bf16.gmra.mrb[0].mxu0 %v438
        %v650 = vpop.f32.mrb[0].mxu0
        %v651 = vadd.f32 0.0, %v650
        %v652 = vpop.f32.mrb[0].mxu0
        %v653 = vpop.f32.mrb[0].mxu0
        %v654 = vadd.f32 0.0, %v653
        %v655 = vpop.f32.mrb[0].mxu0
        %656 = vmatprep.mubr.bf16.mxu0 %v442
        %657 = vmatmul.mubr.bf16.gmra.mrb[0].mxu0 %v441
        %v658 = vpop.f32.mrb[0].mxu0
        %v659 = vadd.f32 0.0, %v658
        %v660 = vpop.f32.mrb[0].mxu0
        %v661 = vpop.f32.mrb[0].mxu0
        %v662 = vadd.f32 0.0, %v661
        %v663 = vpop.f32.mrb[0].mxu0
        %664 = vdwg.mxu0
        %665 = vmatprep.subr.bf16.mxu0 0
        %666 = vmatpush1.bf16.msra.mxu0 %v568
        %667 = vmatprep.subr.bf16.mxu0 0
        %668 = vmatpush1.bf16.msra.mxu0 %v569
        %669 = vmatprep.subr.bf16.mxu0 0
        %670 = vmatpush1.bf16.msra.mxu0 %v570
        %671 = vmatprep.subr.bf16.mxu0 0
        %672 = vmatpush1.bf16.msra.mxu0 %v571
        %673 = vmatprep.subr.bf16.mxu0 0
        %674 = vmatpush1.bf16.msra.mxu0 %v572
        %675 = vmatprep.subr.bf16.mxu0 0
        %676 = vmatpush1.bf16.msra.mxu0 %v573
        %677 = vmatprep.subr.bf16.mxu0 0
        %678 = vmatpush1.bf16.msra.mxu0 %v574
        %679 = vmatprep.subr.bf16.mxu0 0
        %680 = vmatpush1.bf16.msra.mxu0 %v575
        %681 = vmatprep.subr.bf16.mxu0 0
        %682 = vmatpush1.bf16.msra.mxu0 0
        %683 = vmatprep.subr.bf16.mxu0 0
        %684 = vmatpush1.bf16.msra.mxu0 0
        %685 = vmatprep.subr.bf16.mxu0 0
        %686 = vmatpush1.bf16.msra.mxu0 0
        %687 = vmatprep.subr.bf16.mxu0 0
        %688 = vmatpush1.bf16.msra.mxu0 0
        %689 = vmatprep.subr.bf16.mxu0 0
        %690 = vmatpush1.bf16.msra.mxu0 0
        %691 = vmatprep.subr.bf16.mxu0 0
        %692 = vmatpush1.bf16.msra.mxu0 0
        %693 = vmatprep.subr.bf16.mxu0 0
        %694 = vmatpush1.bf16.msra.mxu0 0
        %695 = vmatprep.subr.bf16.mxu0 0
        %696 = vmatpush1.bf16.msra.mxu0 0
        %697 = vmatprep.mubr.bf16.mxu0 0
        %698 = vmatmul.mubr.bf16.gmra.mrb[0].mxu0 %v434
        %v699 = vpop.f32.mrb[0].mxu0
        %v700 = vadd.f32 %v635, %v699
        %v701 = vpop.f32.mrb[0].mxu0
        %v702 = vpop.f32.mrb[0].mxu0
        %v703 = vadd.f32 %v638, %v702
        %v704 = vpop.f32.mrb[0].mxu0
        %705 = vmatprep.mubr.bf16.mxu0 0
        %706 = vmatmul.mubr.bf16.gmra.mrb[0].mxu0 %v437
        %v707 = vpop.f32.mrb[0].mxu0
        %v708 = vadd.f32 %v643, %v707
        %v709 = vpop.f32.mrb[0].mxu0
        %v710 = vpop.f32.mrb[0].mxu0
        %v711 = vadd.f32 %v646, %v710
        %v712 = vpop.f32.mrb[0].mxu0
        %713 = vmatprep.mubr.bf16.mxu0 0
        %714 = vmatmul.mubr.bf16.gmra.mrb[0].mxu0 %v440
        %v715 = vpop.f32.mrb[0].mxu0
        %v716 = vadd.f32 %v651, %v715
        %v717 = vpop.f32.mrb[0].mxu0
        %v718 = vpop.f32.mrb[0].mxu0
        %v719 = vadd.f32 %v654, %v718
        %v720 = vpop.f32.mrb[0].mxu0
        %721 = vmatprep.mubr.bf16.mxu0 0
        %722 = vmatmul.mubr.bf16.gmra.mrb[0].mxu0 %v443
        %v723 = vpop.f32.mrb[0].mxu0
        %v724 = vadd.f32 %v659, %v723
        %v725 = vpop.f32.mrb[0].mxu0
        %v726 = vpop.f32.mrb[0].mxu0
        %v727 = vadd.f32 %v662, %v726
        %v728 = vpop.f32.mrb[0].mxu0
        %729 = vdwg.mxu0
        %v730 = vadd.f32 %v320, %v700
        %v731 = vadd.f32 %v321, %v703
        %v732 = vadd.f32 %v322, %v708
        %v733 = vadd.f32 %v323, %v711
        %v734 = vadd.f32 %v324, %v716
        %v735 = vadd.f32 %v325, %v719
        %v736 = vadd.f32 %v326, %v724
        %v737 = vadd.f32 %v327, %v727
        %738 = vst [vmem:[#allocation2] sm:$0xff] %v730
        %739 = vst [vmem:[#allocation2 + $0x8] sm:$0xff] %v731
        %740 = vst [vmem:[#allocation2 + $0x10] sm:$0xff] %v732
        %741 = vst [vmem:[#allocation2 + $0x18] sm:$0xff] %v733
        %742 = vst [vmem:[#allocation2 + $0x20] sm:$0xff] %v734
        %743 = vst [vmem:[#allocation2 + $0x28] sm:$0xff] %v735
        %744 = vst [vmem:[#allocation2 + $0x30] sm:$0xff] %v736
        %745 = vst [vmem:[#allocation2 + $0x38] sm:$0xff] %v737
        %p746 = scmp.eq.s32.totalorder %s21, 8
        // Predicated region
        $region63: #{_lambda_.9} parent=53 // pred_check
          %p747 = pneg %p746
        $region64: #{_lambda_.9} parent=53 // pred_check_branch
          %749 = sbr.rel (%p747) target = $region66
        $region65: #{_lambda_.9} parent=53 // pred_region
          %v750 = vld [vmem:[#allocation2] sm:$0xff]
          %v751 = vld [vmem:[#allocation2 + $0x8] sm:$0xff]
          %v752 = vld [vmem:[#allocation2 + $0x10] sm:$0xff]
          %v753 = vld [vmem:[#allocation2 + $0x18] sm:$0xff]
          %v754 = vld [vmem:[#allocation2 + $0x20] sm:$0xff]
          %v755 = vld [vmem:[#allocation2 + $0x28] sm:$0xff]
          %v756 = vld [vmem:[#allocation2 + $0x30] sm:$0xff]
          %v757 = vld [vmem:[#allocation2 + $0x38] sm:$0xff]
          %v758 = vld [vmem:[%s305] sm:$0x1]
          %v760 = vlaneseq
          %v761 = vshrl.u32 %v760, 7
          %v762 = vsub.s32 0, %v761
          %v763 = vrot.slane %v758, %v762
          %v765 = vadd.f32 %v750, %v763
          %v766 = vadd.f32 %v751, %v763
          %v767 = vadd.f32 %v752, %v763
          %v768 = vadd.f32 %v753, %v763
          %v769 = vadd.f32 %v754, %v763
          %v770 = vadd.f32 %v755, %v763
          %v771 = vadd.f32 %v756, %v763
          %v772 = vadd.f32 %v757, %v763
          %v773 = vmax.f32 %v765, 0.0
          %v774 = vmax.f32 %v766, 0.0
          %v775 = vmax.f32 %v767, 0.0
          %v776 = vmax.f32 %v768, 0.0
          %v777 = vmax.f32 %v769, 0.0
          %v778 = vmax.f32 %v770, 0.0
          %v779 = vmax.f32 %v771, 0.0
          %v780 = vmax.f32 %v772, 0.0
          %v781 = vpack.c.bf16 %v774, %v773
          %v782 = vpack.c.bf16 %v776, %v775
          %v783 = vpack.c.bf16 %v778, %v777
          %v784 = vpack.c.bf16 %v780, %v779
          %v789 = vunpack.c.l.b16 %v781
          %v790 = vunpack.c.h.b16 %v781
          %v791 = vunpack.c.l.b16 %v782
          %v792 = vunpack.c.h.b16 %v782
          %v793 = vunpack.c.l.b16 %v783
          %v794 = vunpack.c.h.b16 %v783
          %v795 = vunpack.c.l.b16 %v784
          %v796 = vunpack.c.h.b16 %v784
          %v797 = vpack.c.b16 %v789, %v789
          %v798 = vpack.c.b16 %v790, %v790
          %v799 = vpack.c.b16 %v791, %v791
          %v800 = vpack.c.b16 %v792, %v792
          %v801 = vpack.c.b16 %v793, %v793
          %v802 = vpack.c.b16 %v794, %v794
          %v803 = vpack.c.b16 %v795, %v795
          %v804 = vpack.c.b16 %v796, %v796
          %813 = vst [vmem:[%s290] sm:$0xf] %v797
          %814 = vst [vmem:[%s290 + $0x4] sm:$0xf] %v798
          %815 = vst [vmem:[%s290 + $0x8] sm:$0xf] %v799
          %816 = vst [vmem:[%s290 + $0xc] sm:$0xf] %v800
          %817 = vst [vmem:[%s290 + $0x10] sm:$0xf] %v801
          %818 = vst [vmem:[%s290 + $0x14] sm:$0xf] %v802
          %819 = vst [vmem:[%s290 + $0x18] sm:$0xf] %v803
          %820 = vst [vmem:[%s290 + $0x1c] sm:$0xf] %v804
        $region66: #{_lambda_.9} parent=53 // pred_fallthru
          _
        %s821 = sand.u32 %s127, 1
        %s822 = sand.u32 %s127, 1
        %s823 = smul.addr %s822, 32
        %s824 = scalar_lea.vmem [#allocation4], %s823
        // Predicated region
        $region67: #{_lambda_.9} parent=53 // pred_check
          %p825 = pneg %p137
        $region68: #{_lambda_.9} parent=53 // pred_check_branch
          %827 = sbr.rel (%p825) target = $region70
        $region69: #{_lambda_.9} parent=53 // pred_region
          %s828 = smul.u32 8, %s19
          %s829 = smul.addr %s828, 2
          %s830 = sadd.s32 %s20, %s829
          %s831 = smul.addr %s830, 4
          %s832 = scalar_lea.vmem %s3, %s831
          // Predicated region
          $region71: #{_lambda_.9} parent=69 // pred_check
            _
          $region72: #{_lambda_.9} parent=69 // pred_check_branch
            %834 = sbr.rel (0) target = $region74
          $region73: #{_lambda_.9} parent=69 // pred_region
            // Predicated region
            $region75: #{_lambda_.9} parent=73 // pred_check
              _
            $region76: #{_lambda_.9} parent=73 // pred_check_branch
              %836 = sbr.rel target = $region78
            $region77: #{_lambda_.9} parent=73 // pred_region
              // Predicated region
              $region90: #{_lambda_.9} parent=77 // pred_check
                _
              $region91: #{_lambda_.9} parent=77 // pred_check_branch
                %865 = sbr.rel (0) target = $region93
              $region92: #{_lambda_.9} parent=77 // pred_region
                loop: start=0, step=1, limit=1
                $region94: #{_lambda_.9} parent=92 // loop_pre_header
                  _
                $region95: #{_lambda_.9} parent=92 // loop_header
                  %s867 = sphi 0, %s871
                  %p868 = scmp.ge.s32.totalorder %s867, 1
                  %s872 = sphi %s824, %s824
                  %s873 = sphi %s832, %s832
                $region96: #{_lambda_.9} parent=92 // loop_header_branch
                  %870 = sbr.rel (%p868) target = $region100
                $region97: #{_lambda_.9} parent=92 // loop_body
                  _
                $region98: #{_lambda_.9} parent=92 // loop_footer
                  %s871 = sadd.s32 1, %s867
                $region99: #{_lambda_.9} parent=92 // loop_footer_branch
                  %866 = sbr.rel target = $region95
                $region100: #{_lambda_.9} parent=92 // loop_exit
                  _
                loop: start=0, step=1, limit=1
                $region101: #{_lambda_.9} parent=92 // loop_pre_header
                  _
                $region102: #{_lambda_.9} parent=92 // loop_header
                  %s876 = sphi 0, %s880
                  %p877 = scmp.ge.s32.totalorder %s876, 1
                  %s881 = sphi %s824, %s824
                  %s882 = sphi %s832, %s832
                $region103: #{_lambda_.9} parent=92 // loop_header_branch
                  %879 = sbr.rel (%p877) target = $region107
                $region104: #{_lambda_.9} parent=92 // loop_body
                  %v883 = vld [vmem:[%s881] sm:$0xf]
                  %884 = vst [vmem:[%s882] sm:$0xf] %v883
                  %v885 = vld [vmem:[%s881 + $0x4] sm:$0xf]
                  %886 = vst [vmem:[%s882 + $0x8] sm:$0xf] %v885
                  %v887 = vld [vmem:[%s881 + $0x8] sm:$0xf]
                  %888 = vst [vmem:[%s882 + $0x10] sm:$0xf] %v887
                  %v889 = vld [vmem:[%s881 + $0xc] sm:$0xf]
                  %890 = vst [vmem:[%s882 + $0x18] sm:$0xf] %v889
                  %v891 = vld [vmem:[%s881 + $0x10] sm:$0xf]
                  %892 = vst [vmem:[%s882 + $0x20] sm:$0xf] %v891
                  %v893 = vld [vmem:[%s881 + $0x14] sm:$0xf]
                  %894 = vst [vmem:[%s882 + $0x28] sm:$0xf] %v893
                  %v895 = vld [vmem:[%s881 + $0x18] sm:$0xf]
                  %896 = vst [vmem:[%s882 + $0x30] sm:$0xf] %v895
                  %v897 = vld [vmem:[%s881 + $0x1c] sm:$0xf]
                  %898 = vst [vmem:[%s882 + $0x38] sm:$0xf] %v897
                $region105: #{_lambda_.9} parent=92 // loop_footer
                  %s880 = sadd.s32 1, %s876
                $region106: #{_lambda_.9} parent=92 // loop_footer_branch
                  %875 = sbr.rel target = $region102
                $region107: #{_lambda_.9} parent=92 // loop_exit
                  _
              $region93: #{_lambda_.9} parent=77 // pred_fallthru
                _
            $region78: #{_lambda_.9} parent=73 // pred_fallthru
              _
            // Predicated region
            $region79: #{_lambda_.9} parent=73 // pred_check
              _
            $region80: #{_lambda_.9} parent=73 // pred_check_branch
              %838 = sbr.rel (0) target = $region82
            $region81: #{_lambda_.9} parent=73 // pred_region
              loop: start=0, step=1, limit=1
              $region83: #{_lambda_.9} parent=81 // loop_pre_header
                _
              $region84: #{_lambda_.9} parent=81 // loop_header
                %s841 = sphi 0, %s845
                %p842 = scmp.ge.s32.totalorder %s841, 1
                %s846 = sphi %s824, %s824
                %s847 = sphi %s832, %s832
              $region85: #{_lambda_.9} parent=81 // loop_header_branch
                %844 = sbr.rel (%p842) target = $region89
              $region86: #{_lambda_.9} parent=81 // loop_body
                %v848 = vld [vmem:[%s846] sm:$0xf]
                %849 = vst [vmem:[%s847] sm:$0xf] %v848
                %v850 = vld [vmem:[%s846 + $0x4] sm:$0xf]
                %851 = vst [vmem:[%s847 + $0x8] sm:$0xf] %v850
                %v852 = vld [vmem:[%s846 + $0x8] sm:$0xf]
                %853 = vst [vmem:[%s847 + $0x10] sm:$0xf] %v852
                %v854 = vld [vmem:[%s846 + $0xc] sm:$0xf]
                %855 = vst [vmem:[%s847 + $0x18] sm:$0xf] %v854
                %v856 = vld [vmem:[%s846 + $0x10] sm:$0xf]
                %857 = vst [vmem:[%s847 + $0x20] sm:$0xf] %v856
                %v858 = vld [vmem:[%s846 + $0x14] sm:$0xf]
                %859 = vst [vmem:[%s847 + $0x28] sm:$0xf] %v858
                %v860 = vld [vmem:[%s846 + $0x18] sm:$0xf]
                %861 = vst [vmem:[%s847 + $0x30] sm:$0xf] %v860
                %v862 = vld [vmem:[%s846 + $0x1c] sm:$0xf]
                %863 = vst [vmem:[%s847 + $0x38] sm:$0xf] %v862
              $region87: #{_lambda_.9} parent=81 // loop_footer
                %s845 = sadd.s32 1, %s841
              $region88: #{_lambda_.9} parent=81 // loop_footer_branch
                %840 = sbr.rel target = $region84
              $region89: #{_lambda_.9} parent=81 // loop_exit
                _
            $region82: #{_lambda_.9} parent=73 // pred_fallthru
              _
          $region74: #{_lambda_.9} parent=69 // pred_fallthru
            _
          %899 = vnop
        $region70: #{_lambda_.9} parent=53 // pred_fallthru
          _
      $region54: #{_lambda_.9} parent=5 // pred_fallthru
        _
      %p900 = scmp.le.s32.totalorder 2, %s9
      // Predicated region
      $region108: #{_lambda_.9} parent=5 // pred_check
        %p901 = pneg %p900
      $region109: #{_lambda_.9} parent=5 // pred_check_branch
        %903 = sbr.rel (%p901) target = $region111
      $region110: #{_lambda_.9} parent=5 // pred_region
        %s904 = ssub.s32 %s9, 2
        // Predicated region
        $region112: #{_lambda_.9} parent=110 // pred_check
          %p905 = pneg %p143
        $region113: #{_lambda_.9} parent=110 // pred_check_branch
          %907 = sbr.rel (%p905) target = $region115
        $region114: #{_lambda_.9} parent=110 // pred_region
          %s908 = sand.u32 %s128, 1
          %s909 = sand.u32 %s128, 1
          %s910 = smul.addr %s909, 32
          %s911 = scalar_lea.vmem [#allocation4], %s910
        $region115: #{_lambda_.9} parent=110 // pred_fallthru
          _
      $region111: #{_lambda_.9} parent=5 // pred_fallthru
        _
    $region6: #{_lambda_.9} parent=1 // loop_footer
      %s13 = sadd.s32 1, %s9
    $region7: #{_lambda_.9} parent=1 // loop_footer_branch
      %8 = sbr.rel target = $region3
    $region8: #{_lambda_.9} parent=1 // loop_exit
      _

// kernel: _lambda_.10
$region0: #{_lambda_.10}
  #allocation0 [shape = 'u32[]', space=smem, size = 0x4, offset = 0x4, fixed_abs, tag = 'smem constant byte address 0x4 - core index']
  #allocation1 [shape = 'u32[144,128]{1,0:T(1,128)}', space=vmem, size = 0x12000, scoped, tag = 'internal scratch']
  #allocation2 [shape = 'f32[64,512]{1,0:T(8,128)}', space=vmem, size = 0x20000, scoped, tag = 'scratch operand']
  %s0 = inlined_call_operand.vmem [shape: bf16[64,32], index: 0, kind: input, shape index: {}]
  %s1 = inlined_call_operand.vmem [shape: bf16[32,1024], index: 1, kind: input, shape index: {}]
  %s2 = inlined_call_operand.vmem [shape: f32[1,1024], index: 2, kind: input, shape index: {}]
  %s3 = inlined_call_operand.vmem [shape: bf16[64,1024], index: 3, kind: output, shape index: {}]
  %s4 = sld [smem:[#allocation0]]
  $region95: #{_lambda_.10} parent=0
    _
  %s6 = ssub.s32 1, %s4
  %s7 = scalar_select 0, %s6, %s4
  $region1: #{_lambda_.10} parent=0
    #allocation3 [shape = 'u8[65536]{0}', space=vmem, size = 0x10000, scoped, tag = 'input window, operand 1']
    #allocation4 [shape = 'u8[131072]{0}', space=vmem, size = 0x20000, scoped, tag = 'output window, operand 0']
    loop: start=0, step=1, limit=4
    $region2: #{_lambda_.10} parent=1 // loop_pre_header
      _
    $region3: #{_lambda_.10} parent=1 // loop_header
      %s9 = sphi 0, %s13
      %p10 = scmp.ge.s32.totalorder %s9, 4
      %s16 = sphi 0, %s35
      %s17 = sphi 0, %s31
      %s18 = sphi 0, %s27
      %s19 = sphi 0, %s16
      %s20 = sphi 0, %s17
      %s21 = sphi 0, %s18
      %s22 = sphi 0, %s19
      %s23 = sphi 0, %s20
      %s24 = sphi 0, %s21
      %s40 = sphi 0, %s42
      %s43 = sphi 0, %s40
      %s44 = sphi 0, %s43
      %s60 = sphi 0, %s44
      %s68 = sphi 0, %s70
      %s71 = sphi 0, %s68
      %s72 = sphi 0, %s71
      %s88 = sphi 0, %s72
      %s94 = sphi 0, %s96
      %s97 = sphi 0, %s94
      %s98 = sphi 0, %s97
      %s114 = sphi 0, %s98
      %s122 = sphi 0, %s124
      %s125 = sphi 0, %s122
      %s126 = sphi 0, %s125
      %s142 = sphi 0, %s126
    $region4: #{_lambda_.10} parent=1 // loop_header_branch
      %12 = sbr.rel (%p10) target = $region8
    $region5: #{_lambda_.10} parent=1 // loop_body
      %s14 = ssub.s32 %s9, 1
      %s15 = ssub.s32 %s9, 2
      %s25 = sadd.s32 1, %s18
      %p26 = scmp.ge.s32.totalorder %s25, 1
      %s27 = scalar_select %p26, 0, %s25
      %s28 = sadd.s32 1, %s17
      %s29 = scalar_select %p26, %s28, %s17
      %p30 = scmp.ge.s32.totalorder %s29, 2
      %s31 = scalar_select %p30, 0, %s29
      %s32 = sadd.s32 1, %s16
      %s33 = scalar_select %p30, %s32, %s16
      %p34 = scmp.ge.s32.totalorder %s33, 1
      %s35 = scalar_select %p34, 0, %s33
      %s36 = ssub.s32 %s16, %s35
      %s37 = ssub.s32 %s18, %s27
      %s38 = sor.u32 %s36, %s37
      %p39 = scmp.eq.s32.totalorder %s38, 0
      %s41 = sadd.s32 %s40, 1
      %s42 = scalar_select %p39, %s40, %s41
      %p45 = pneg %p39
      %p46 = scmp.eq.s32.totalorder %s9, 1
      %p47 = por %p45, %p46
      %p48 = scmp.ne.s32.totalorder %s40, %s43
      %p49 = scmp.eq.s32.totalorder %s9, 0
      %p50 = por %p48, %p49
      %p51 = scmp.ne.s32.totalorder %s40, %s43
      %p52 = scmp.eq.s32.totalorder %s14, 1
      %p53 = por %p51, %p52
      %p54 = scmp.ne.s32.totalorder %s43, %s44
      %p55 = scmp.eq.s32.totalorder %s14, 0
      %p56 = por %p54, %p55
      %p57 = scmp.ne.s32.totalorder %s43, %s44
      %p58 = scmp.eq.s32.totalorder %s15, 1
      %p59 = por %p57, %p58
      %p61 = scmp.ne.s32.totalorder %s44, %s60
      %p62 = scmp.eq.s32.totalorder %s15, 0
      %p63 = por %p61, %p62
      %s64 = ssub.s32 %s18, %s27
      %s65 = ssub.s32 %s17, %s31
      %s66 = sor.u32 %s64, %s65
      %p67 = scmp.eq.s32.totalorder %s66, 0
      %s69 = sadd.s32 %s68, 1
      %s70 = scalar_select %p67, %s68, %s69
      %p73 = pneg %p67
      %p74 = scmp.eq.s32.totalorder %s9, 1
      %p75 = por %p73, %p74
      %p76 = scmp.ne.s32.totalorder %s68, %s71
      %p77 = scmp.eq.s32.totalorder %s9, 0
      %p78 = por %p76, %p77
      %p79 = scmp.ne.s32.totalorder %s68, %s71
      %p80 = scmp.eq.s32.totalorder %s14, 1
      %p81 = por %p79, %p80
      %p82 = scmp.ne.s32.totalorder %s71, %s72
      %p83 = scmp.eq.s32.totalorder %s14, 0
      %p84 = por %p82, %p83
      %p85 = scmp.ne.s32.totalorder %s71, %s72
      %p86 = scmp.eq.s32.totalorder %s15, 1
      %p87 = por %p85, %p86
      %p89 = scmp.ne.s32.totalorder %s72, %s88
      %p90 = scmp.eq.s32.totalorder %s15, 0
      %p91 = por %p89, %p90
      %s92 = ssub.s32 %s17, %s31
      %p93 = scmp.eq.s32.totalorder %s92, 0
      %s95 = sadd.s32 %s94, 1
      %s96 = scalar_select %p93, %s94, %s95
      %p99 = pneg %p93
      %p100 = scmp.eq.s32.totalorder %s9, 1
      %p101 = por %p99, %p100
      %p102 = scmp.ne.s32.totalorder %s94, %s97
      %p103 = scmp.eq.s32.totalorder %s9, 0
      %p104 = por %p102, %p103
      %p105 = scmp.ne.s32.totalorder %s94, %s97
      %p106 = scmp.eq.s32.totalorder %s14, 1
      %p107 = por %p105, %p106
      %p108 = scmp.ne.s32.totalorder %s97, %s98
      %p109 = scmp.eq.s32.totalorder %s14, 0
      %p110 = por %p108, %p109
      %p111 = scmp.ne.s32.totalorder %s97, %s98
      %p112 = scmp.eq.s32.totalorder %s15, 1
      %p113 = por %p111, %p112
      %p115 = scmp.ne.s32.totalorder %s98, %s114
      %p116 = scmp.eq.s32.totalorder %s15, 0
      %p117 = por %p115, %p116
      %s118 = ssub.s32 %s16, %s35
      %s119 = ssub.s32 %s17, %s31
      %s120 = sor.u32 %s118, %s119
      %p121 = scmp.eq.s32.totalorder %s120, 0
      %s123 = sadd.s32 %s122, 1
      %s124 = scalar_select %p121, %s122, %s123
      %p127 = pneg %p121
      %p128 = scmp.eq.s32.totalorder %s9, 1
      %p129 = por %p127, %p128
      %p130 = scmp.ne.s32.totalorder %s122, %s125
      %p131 = scmp.eq.s32.totalorder %s9, 0
      %p132 = por %p130, %p131
      %p133 = scmp.ne.s32.totalorder %s122, %s125
      %p134 = scmp.eq.s32.totalorder %s14, 1
      %p135 = por %p133, %p134
      %p136 = scmp.ne.s32.totalorder %s125, %s126
      %p137 = scmp.eq.s32.totalorder %s14, 0
      %p138 = por %p136, %p137
      %p139 = scmp.ne.s32.totalorder %s125, %s126
      %p140 = scmp.eq.s32.totalorder %s15, 1
      %p141 = por %p139, %p140
      %p143 = scmp.ne.s32.totalorder %s126, %s142
      %p144 = scmp.eq.s32.totalorder %s15, 0
      %p145 = por %p143, %p144
      %p146 = scmp.le.s32.totalorder 1, %s9
      %p147 = scmp.lt.s32.totalorder %s9, 3
      %p148 = pnand %p146, %p147
      %p149 = pneg %p148
      // Predicated region
      $region9: #{_lambda_.10} parent=5 // pred_check
        _
      $region10: #{_lambda_.10} parent=5 // pred_check_branch
        %151 = sbr.rel (%p148) target = $region12
      $region11: #{_lambda_.10} parent=5 // pred_region
        %s152 = ssub.s32 %s9, 1
        // Predicated region
        $region13: #{_lambda_.10} parent=11 // pred_check
          %p153 = pneg %p56
        $region14: #{_lambda_.10} parent=11 // pred_check_branch
          %155 = sbr.rel (%p153) target = $region16
        $region15: #{_lambda_.10} parent=11 // pred_region
          %s156 = smul.u32 8, %s19
          %p157 = scmp.lt.s32.totalorder %s156, 7
          %s158 = scalar_select %p157, %s156, 7
          %p159 = scmp.lt.s32.totalorder %s21, 0
          %s160 = scalar_select %p159, %s21, 0
          %s161 = sadd.s32 %s160, %s158
          %s162 = smul.addr %s161, 4
          %s163 = scalar_lea.vmem %s0, %s162
          %s164 = smul.u32 8, %s19
        $region16: #{_lambda_.10} parent=11 // pred_fallthru
          _
      $region12: #{_lambda_.10} parent=5 // pred_fallthru
        _
      %p165 = scmp.lt.s32.totalorder %s9, 2
      // Predicated region
      $region17: #{_lambda_.10} parent=5 // pred_check
        %p166 = pneg %p165
      $region18: #{_lambda_.10} parent=5 // pred_check_branch
        %168 = sbr.rel (%p166) target = $region20
      $region19: #{_lambda_.10} parent=5 // pred_region
        // Predicated region
        $region21: #{_lambda_.10} parent=19 // pred_check
          %p169 = pneg %p78
        $region22: #{_lambda_.10} parent=19 // pred_check_branch
          %171 = sbr.rel (%p169) target = $region24
        $region23: #{_lambda_.10} parent=19 // pred_region
          %s172 = sand.u32 %s68, 1
          %s173 = sand.u32 %s68, 1
          %s174 = smul.addr %s173, 64
          %s175 = scalar_lea.vmem [#allocation3], %s174
          %s176 = smul.u32 4, %s18
          %s177 = smul.u32 4, %s17
          %s178 = smul.addr %s176, 8
          %s179 = sadd.s32 %s177, %s178
          %s180 = smul.addr %s179, 4
          %s181 = scalar_lea.vmem %s1, %s180
          // Predicated region
          $region25: #{_lambda_.10} parent=23 // pred_check
            _
          $region26: #{_lambda_.10} parent=23 // pred_check_branch
            %183 = sbr.rel (0) target = $region28
          $region27: #{_lambda_.10} parent=23 // pred_region
            // Predicated region
            $region29: #{_lambda_.10} parent=27 // pred_check
              _
            $region30: #{_lambda_.10} parent=27 // pred_check_branch
              %185 = sbr.rel (0) target = $region32
            $region31: #{_lambda_.10} parent=27 // pred_region
              loop: start=0, step=1, limit=1
              $region33: #{_lambda_.10} parent=31 // loop_pre_header
                _
              $region34: #{_lambda_.10} parent=31 // loop_header
                %s187 = sphi 0, %s191
                %p188 = scmp.ge.s32.totalorder %s187, 1
                %s192 = sphi %s181, %s181
                %s193 = sphi %s175, %s175
              $region35: #{_lambda_.10} parent=31 // loop_header_branch
                %190 = sbr.rel (%p188) target = $region39
              $region36: #{_lambda_.10} parent=31 // loop_body
                %v194 = vld [vmem:[%s192] sm:$0xff]
                %195 = vst [vmem:[%s193] sm:$0xff] %v194
                %v196 = vld [vmem:[%s192 + $0x8] sm:$0xff]
                %197 = vst [vmem:[%s193 + $0x8] sm:$0xff] %v196
                %v198 = vld [vmem:[%s192 + $0x20] sm:$0xff]
                %199 = vst [vmem:[%s193 + $0x10] sm:$0xff] %v198
                %v200 = vld [vmem:[%s192 + $0x28] sm:$0xff]
                %201 = vst [vmem:[%s193 + $0x18] sm:$0xff] %v200
                %v202 = vld [vmem:[%s192 + $0x40] sm:$0xff]
                %203 = vst [vmem:[%s193 + $0x20] sm:$0xff] %v202
                %v204 = vld [vmem:[%s192 + $0x48] sm:$0xff]
                %205 = vst [vmem:[%s193 + $0x28] sm:$0xff] %v204
                %v206 = vld [vmem:[%s192 + $0x60] sm:$0xff]
                %207 = vst [vmem:[%s193 + $0x30] sm:$0xff] %v206
                %v208 = vld [vmem:[%s192 + $0x68] sm:$0xff]
                %209 = vst [vmem:[%s193 + $0x38] sm:$0xff] %v208
              $region37: #{_lambda_.10} parent=31 // loop_footer
                %s191 = sadd.s32 1, %s187
              $region38: #{_lambda_.10} parent=31 // loop_footer_branch
                %186 = sbr.rel target = $region34
              $region39: #{_lambda_.10} parent=31 // loop_exit
                _
            $region32: #{_lambda_.10} parent=27 // pred_fallthru
              _
            // Predicated region
            $region40: #{_lambda_.10} parent=27 // pred_check
              _
            $region41: #{_lambda_.10} parent=27 // pred_check_branch
              %211 = sbr.rel target = $region43
            $region42: #{_lambda_.10} parent=27 // pred_region
              _
            $region43: #{_lambda_.10} parent=27 // pred_fallthru
              _
          $region28: #{_lambda_.10} parent=23 // pred_fallthru
            _
          %212 = vnop
        $region24: #{_lambda_.10} parent=19 // pred_fallthru
          _
        // Predicated region
        $region44: #{_lambda_.10} parent=19 // pred_check
          %p213 = pneg %p104
        $region45: #{_lambda_.10} parent=19 // pred_check_branch
          %215 = sbr.rel (%p213) target = $region47
        $region46: #{_lambda_.10} parent=19 // pred_region
          %s216 = smul.u32 4, %s17
          %p217 = scmp.lt.s32.totalorder %s216, 7
          %s218 = scalar_select %p217, %s216, 7
          %s219 = scalar_lea.vmem %s2, %s218
          %s220 = smul.u32 4, %s17
        $region47: #{_lambda_.10} parent=19 // pred_fallthru
          _
      $region20: #{_lambda_.10} parent=5 // pred_fallthru
        _
      %p221 = scmp.le.s32.totalorder 1, %s9
      %p222 = scmp.lt.s32.totalorder %s9, 3
      %p223 = pnand %p221, %p222
      %p224 = pneg %p223
      // Predicated region
      $region48: #{_lambda_.10} parent=5 // pred_check
        _
      $region49: #{_lambda_.10} parent=5 // pred_check_branch
        %226 = sbr.rel (%p223) target = $region51
      $region50: #{_lambda_.10} parent=5 // pred_region
        %s227 = ssub.s32 %s9, 1
        %s228 = sand.u32 %s71, 1
        %s229 = sand.u32 %s71, 1
        %s230 = smul.addr %s229, 64
        %s231 = scalar_lea.vmem [#allocation3], %s230
        // Predicated region
        $region52: #{_lambda_.10} parent=50 // pred_check
          %p232 = pneg %p84
        $region53: #{_lambda_.10} parent=50 // pred_check_branch
          %234 = sbr.rel (%p232) target = $region55
        $region54: #{_lambda_.10} parent=50 // pred_region
          _
        $region55: #{_lambda_.10} parent=50 // pred_fallthru
          _
        %s235 = smul.u32 8, %s19
        %p236 = scmp.lt.s32.totalorder %s235, 7
        %s237 = scalar_select %p236, %s235, 7
        %p238 = scmp.lt.s32.totalorder %s21, 0
        %s239 = scalar_select %p238, %s21, 0
        %s240 = sadd.s32 %s239, %s237
        %s241 = smul.addr %s240, 4
        %s242 = scalar_lea.vmem %s0, %s241
        %p243 = pneg %p56
        %p244 = pneg %p53
        %s245 = sand.u32 %s71, 1
        %s246 = sand.u32 %s71, 1
        %s247 = smul.addr %s246, 64
        %s248 = scalar_lea.vmem [#allocation3], %s247
        %p249 = pneg %p84
        %p250 = pneg %p81
        %s251 = smul.u32 4, %s20
        %p252 = scmp.lt.s32.totalorder %s251, 7
        %s253 = scalar_select %p252, %s251, 7
        %s254 = scalar_lea.vmem %s2, %s253
        %p255 = pneg %p110
        %p256 = pneg %p107
        %p257 = pneg %p138
        %p258 = pneg %p135
        %s259 = sand.u32 %s125, 1
        %s260 = sand.u32 %s125, 1
        %s261 = smul.addr %s260, 128
        %s262 = scalar_lea.vmem [#allocation4], %s261
        %s263 = smul.u32 8, %s19
        %p264 = scmp.lt.s32.totalorder %s263, 7
        %s265 = scalar_select %p264, %s263, 7
        %p266 = scmp.lt.s32.totalorder %s21, 0
        %s267 = scalar_select %p266, %s21, 0
        %s268 = sadd.s32 %s267, %s265
        %s269 = smul.addr %s268, 4
        %s270 = scalar_lea.vmem %s0, %s269
        %s271 = smul.u32 8, %s19
        %s272 = smul.u32 4, %s21
        %s273 = smul.u32 4, %s20
        %s274 = smul.u32 4, %s20
        %p275 = scmp.lt.s32.totalorder %s274, 7
        %s276 = scalar_select %p275, %s274, 7
        %s277 = scalar_lea.vmem %s2, %s276
        %s278 = smul.u32 4, %s20
        %s279 = smul.u32 8, %s19
        %s280 = smul.u32 4, %s20
        %p282 = scmp.eq.s32.totalorder %s21, 0
        // Predicated region
        $region56: #{_lambda_.10} parent=50 // pred_check
          %p283 = pneg %p282
        $region57: #{_lambda_.10} parent=50 // pred_check_branch
          %285 = sbr.rel (%p283) target = $region59
        $region58: #{_lambda_.10} parent=50 // pred_region
          %286 = vst [vmem:[#allocation2] sm:$0xff] 0.0
          %287 = vst [vmem:[#allocation2 + $0x8] sm:$0xff] 0.0
          %288 = vst [vmem:[#allocation2 + $0x10] sm:$0xff] 0.0
          %289 = vst [vmem:[#allocation2 + $0x18] sm:$0xff] 0.0
          %290 = vst [vmem:[#allocation2 + $0x20] sm:$0xff] 0.0
          %291 = vst [vmem:[#allocation2 + $0x28] sm:$0xff] 0.0
          %292 = vst [vmem:[#allocation2 + $0x30] sm:$0xff] 0.0
          %293 = vst [vmem:[#allocation2 + $0x38] sm:$0xff] 0.0
          %294 = vst [vmem:[#allocation2 + $0x40] sm:$0xff] 0.0
          %295 = vst [vmem:[#allocation2 + $0x48] sm:$0xff] 0.0
          %296 = vst [vmem:[#allocation2 + $0x50] sm:$0xff] 0.0
          %297 = vst [vmem:[#allocation2 + $0x58] sm:$0xff] 0.0
          %298 = vst [vmem:[#allocation2 + $0x60] sm:$0xff] 0.0
          %299 = vst [vmem:[#allocation2 + $0x68] sm:$0xff] 0.0
          %300 = vst [vmem:[#allocation2 + $0x70] sm:$0xff] 0.0
          %301 = vst [vmem:[#allocation2 + $0x78] sm:$0xff] 0.0
          %302 = vst [vmem:[#allocation2 + $0x80] sm:$0xff] 0.0
          %303 = vst [vmem:[#allocation2 + $0x88] sm:$0xff] 0.0
          %304 = vst [vmem:[#allocation2 + $0x90] sm:$0xff] 0.0
          %305 = vst [vmem:[#allocation2 + $0x98] sm:$0xff] 0.0
          %306 = vst [vmem:[#allocation2 + $0xa0] sm:$0xff] 0.0
          %307 = vst [vmem:[#allocation2 + $0xa8] sm:$0xff] 0.0
          %308 = vst [vmem:[#allocation2 + $0xb0] sm:$0xff] 0.0
          %309 = vst [vmem:[#allocation2 + $0xb8] sm:$0xff] 0.0
          %310 = vst [vmem:[#allocation2 + $0xc0] sm:$0xff] 0.0
          %311 = vst [vmem:[#allocation2 + $0xc8] sm:$0xff] 0.0
          %312 = vst [vmem:[#allocation2 + $0xd0] sm:$0xff] 0.0
          %313 = vst [vmem:[#allocation2 + $0xd8] sm:$0xff] 0.0
          %314 = vst [vmem:[#allocation2 + $0xe0] sm:$0xff] 0.0
          %315 = vst [vmem:[#allocation2 + $0xe8] sm:$0xff] 0.0
          %316 = vst [vmem:[#allocation2 + $0xf0] sm:$0xff] 0.0
          %317 = vst [vmem:[#allocation2 + $0xf8] sm:$0xff] 0.0
        $region59: #{_lambda_.10} parent=50 // pred_fallthru
          _
        %v318 = vld [vmem:[#allocation2] sm:$0xff]
        %v319 = vld [vmem:[#allocation2 + $0x8] sm:$0xff]
        %v320 = vld [vmem:[#allocation2 + $0x10] sm:$0xff]
        %v321 = vld [vmem:[#allocation2 + $0x18] sm:$0xff]
        %v322 = vld [vmem:[#allocation2 + $0x20] sm:$0xff]
        %v323 = vld [vmem:[#allocation2 + $0x28] sm:$0xff]
        %v324 = vld [vmem:[#allocation2 + $0x30] sm:$0xff]
        %v325 = vld [vmem:[#allocation2 + $0x38] sm:$0xff]
        %v326 = vld [vmem:[#allocation2 + $0x40] sm:$0xff]
        %v327 = vld [vmem:[#allocation2 + $0x48] sm:$0xff]
        %v328 = vld [vmem:[#allocation2 + $0x50] sm:$0xff]
        %v329 = vld [vmem:[#allocation2 + $0x58] sm:$0xff]
        %v330 = vld [vmem:[#allocation2 + $0x60] sm:$0xff]
        %v331 = vld [vmem:[#allocation2 + $0x68] sm:$0xff]
        %v332 = vld [vmem:[#allocation2 + $0x70] sm:$0xff]
        %v333 = vld [vmem:[#allocation2 + $0x78] sm:$0xff]
        %v334 = vld [vmem:[#allocation2 + $0x80] sm:$0xff]
        %v335 = vld [vmem:[#allocation2 + $0x88] sm:$0xff]
        %v336 = vld [vmem:[#allocation2 + $0x90] sm:$0xff]
        %v337 = vld [vmem:[#allocation2 + $0x98] sm:$0xff]
        %v338 = vld [vmem:[#allocation2 + $0xa0] sm:$0xff]
        %v339 = vld [vmem:[#allocation2 + $0xa8] sm:$0xff]
        %v340 = vld [vmem:[#allocation2 + $0xb0] sm:$0xff]
        %v341 = vld [vmem:[#allocation2 + $0xb8] sm:$0xff]
        %v342 = vld [vmem:[#allocation2 + $0xc0] sm:$0xff]
        %v343 = vld [vmem:[#allocation2 + $0xc8] sm:$0xff]
        %v344 = vld [vmem:[#allocation2 + $0xd0] sm:$0xff]
        %v345 = vld [vmem:[#allocation2 + $0xd8] sm:$0xff]
        %v346 = vld [vmem:[#allocation2 + $0xe0] sm:$0xff]
        %v347 = vld [vmem:[#allocation2 + $0xe8] sm:$0xff]
        %v348 = vld [vmem:[#allocation2 + $0xf0] sm:$0xff]
        %v349 = vld [vmem:[#allocation2 + $0xf8] sm:$0xff]
        %v350 = vld [vmem:[%s270] sm:$0xf]
        %v351 = vld [vmem:[%s270 + $0x4] sm:$0xf]
        %v352 = vld [vmem:[%s270 + $0x8] sm:$0xf]
        %v353 = vld [vmem:[%s270 + $0xc] sm:$0xf]
        %v354 = vld [vmem:[%s270 + $0x10] sm:$0xf]
        %v355 = vld [vmem:[%s270 + $0x14] sm:$0xf]
        %v356 = vld [vmem:[%s270 + $0x18] sm:$0xf]
        %v357 = vld [vmem:[%s270 + $0x1c] sm:$0xf]
        %v358 = vld [vmem:[%s231] sm:$0xff]
        %v359 = vld [vmem:[%s231 + $0x8] sm:$0xff]
        %v360 = vld [vmem:[%s231 + $0x10] sm:$0xff]
        %v361 = vld [vmem:[%s231 + $0x18] sm:$0xff]
        %v362 = vld [vmem:[%s231 + $0x20] sm:$0xff]
        %v363 = vld [vmem:[%s231 + $0x28] sm:$0xff]
        %v364 = vld [vmem:[%s231 + $0x30] sm:$0xff]
        %v365 = vld [vmem:[%s231 + $0x38] sm:$0xff]
        %v374 = vunpack.c.l.b16 %v350
        %v375 = vunpack.c.l.b16 %v351
        %v376 = vunpack.c.l.b16 %v352
        %v377 = vunpack.c.l.b16 %v353
        %v378 = vunpack.c.l.b16 %v354
        %v379 = vunpack.c.l.b16 %v355
        %v380 = vunpack.c.l.b16 %v356
        %v381 = vunpack.c.l.b16 %v357
        %v382 = vpack.c.b16 %v375, %v374
        %v383 = vpack.c.b16 %v377, %v376
        %v384 = vpack.c.b16 %v379, %v378
        %v385 = vpack.c.b16 %v381, %v380
        %v394 = vunpack.c.l.b16 %v358
        %v395 = vunpack.c.h.b16 %v358
        %v396 = vunpack.c.l.b16 %v359
        %v397 = vunpack.c.h.b16 %v359
        %v398 = vunpack.c.l.b16 %v360
        %v399 = vunpack.c.h.b16 %v360
        %v400 = vunpack.c.l.b16 %v361
        %v401 = vunpack.c.h.b16 %v361
        %v402 = vunpack.c.l.b16 %v362
        %v403 = vunpack.c.h.b16 %v362
        %v404 = vunpack.c.l.b16 %v363
        %v405 = vunpack.c.h.b16 %v363
        %v406 = vunpack.c.l.b16 %v364
        %v407 = vunpack.c.h.b16 %v364
        %v408 = vunpack.c.l.b16 %v365
        %v409 = vunpack.c.h.b16 %v365
        %v410 = vpack.c.b16 %v398, %v394
        %v411 = vpack.c.b16 %v399, %v395
        %v412 = vpack.c.b16 %v400, %v396
        %v413 = vpack.c.b16 %v401, %v397
        %v414 = vpack.c.b16 %v406, %v402
        %v415 = vpack.c.b16 %v407, %v403
        %v416 = vpack.c.b16 %v408, %v404
        %v417 = vpack.c.b16 %v409, %v405
        %vm426 = vcmask 261120
        %v428 = vsel %vm426, %v382, 0
        %v431 = vsel %vm426, %v383, 0
        %v434 = vsel %vm426, %v384, 0
        %v437 = vsel %vm426, %v385, 0
        %439 = vmatprep.subr.bf16.mxu0 %v411
        %440 = vmatpush1.bf16.msra.mxu0 %v410
        %441 = vmatprep.subr.bf16.mxu0 %v415
        %442 = vmatpush1.bf16.msra.mxu0 %v414
        %443 = vmatprep.subr.bf16.mxu0 0
        %444 = vmatpush1.bf16.msra.mxu0 0
        %445 = vmatprep.subr.bf16.mxu0 0
        %446 = vmatpush1.bf16.msra.mxu0 0
        %447 = vmatprep.subr.bf16.mxu0 0
        %448 = vmatpush1.bf16.msra.mxu0 0
        %449 = vmatprep.subr.bf16.mxu0 0
        %450 = vmatpush1.bf16.msra.mxu0 0
        %451 = vmatprep.subr.bf16.mxu0 0
        %452 = vmatpush1.bf16.msra.mxu0 0
        %453 = vmatprep.subr.bf16.mxu0 0
        %454 = vmatpush1.bf16.msra.mxu0 0
        %455 = vmatprep.subr.bf16.mxu0 0
        %456 = vmatpush1.bf16.msra.mxu0 0
        %457 = vmatprep.subr.bf16.mxu0 0
        %458 = vmatpush1.bf16.msra.mxu0 0
        %459 = vmatprep.subr.bf16.mxu0 0
        %460 = vmatpush1.bf16.msra.mxu0 0
        %461 = vmatprep.subr.bf16.mxu0 0
        %462 = vmatpush1.bf16.msra.mxu0 0
        %463 = vmatprep.subr.bf16.mxu0 0
        %464 = vmatpush1.bf16.msra.mxu0 0
        %465 = vmatprep.subr.bf16.mxu0 0
        %466 = vmatpush1.bf16.msra.mxu0 0
        %467 = vmatprep.subr.bf16.mxu0 0
        %468 = vmatpush1.bf16.msra.mxu0 0
        %469 = vmatprep.subr.bf16.mxu0 0
        %470 = vmatpush1.bf16.msra.mxu0 0
        %471 = vmatprep.mubr.bf16.mxu0 0
        %472 = vmatmul.mubr.bf16.gmra.mrb[0].mxu0 %v428
        %v473 = vpop.f32.mrb[0].mxu0
        %v474 = vadd.f32 0.0, %v473
        %v475 = vpop.f32.mrb[0].mxu0
        %v476 = vadd.f32 0.0, %v475
        %v477 = vpop.f32.mrb[0].mxu0
        %v478 = vadd.f32 0.0, %v477
        %v479 = vpop.f32.mrb[0].mxu0
        %v480 = vadd.f32 0.0, %v479
        %481 = vmatprep.mubr.bf16.mxu0 0
        %482 = vmatmul.mubr.bf16.gmra.mrb[0].mxu0 %v431
        %v483 = vpop.f32.mrb[0].mxu0
        %v484 = vadd.f32 0.0, %v483
        %v485 = vpop.f32.mrb[0].mxu0
        %v486 = vadd.f32 0.0, %v485
        %v487 = vpop.f32.mrb[0].mxu0
        %v488 = vadd.f32 0.0, %v487
        %v489 = vpop.f32.mrb[0].mxu0
        %v490 = vadd.f32 0.0, %v489
        %491 = vmatprep.mubr.bf16.mxu0 0
        %492 = vmatmul.mubr.bf16.gmra.mrb[0].mxu0 %v434
        %v493 = vpop.f32.mrb[0].mxu0
        %v494 = vadd.f32 0.0, %v493
        %v495 = vpop.f32.mrb[0].mxu0
        %v496 = vadd.f32 0.0, %v495
        %v497 = vpop.f32.mrb[0].mxu0
        %v498 = vadd.f32 0.0, %v497
        %v499 = vpop.f32.mrb[0].mxu0
        %v500 = vadd.f32 0.0, %v499
        %501 = vmatprep.mubr.bf16.mxu0 0
        %502 = vmatmul.mubr.bf16.gmra.mrb[0].mxu0 %v437
        %v503 = vpop.f32.mrb[0].mxu0
        %v504 = vadd.f32 0.0, %v503
        %v505 = vpop.f32.mrb[0].mxu0
        %v506 = vadd.f32 0.0, %v505
        %v507 = vpop.f32.mrb[0].mxu0
        %v508 = vadd.f32 0.0, %v507
        %v509 = vpop.f32.mrb[0].mxu0
        %v510 = vadd.f32 0.0, %v509
        %511 = vdwg.mxu0
        %512 = vmatprep.subr.bf16.mxu0 %v413
        %513 = vmatpush1.bf16.msra.mxu0 %v412
        %514 = vmatprep.subr.bf16.mxu0 %v417
        %515 = vmatpush1.bf16.msra.mxu0 %v416
        %516 = vmatprep.subr.bf16.mxu0 0
        %517 = vmatpush1.bf16.msra.mxu0 0
        %518 = vmatprep.subr.bf16.mxu0 0
        %519 = vmatpush1.bf16.msra.mxu0 0
        %520 = vmatprep.subr.bf16.mxu0 0
        %521 = vmatpush1.bf16.msra.mxu0 0
        %522 = vmatprep.subr.bf16.mxu0 0
        %523 = vmatpush1.bf16.msra.mxu0 0
        %524 = vmatprep.subr.bf16.mxu0 0
        %525 = vmatpush1.bf16.msra.mxu0 0
        %526 = vmatprep.subr.bf16.mxu0 0
        %527 = vmatpush1.bf16.msra.mxu0 0
        %528 = vmatprep.subr.bf16.mxu0 0
        %529 = vmatpush1.bf16.msra.mxu0 0
        %530 = vmatprep.subr.bf16.mxu0 0
        %531 = vmatpush1.bf16.msra.mxu0 0
        %532 = vmatprep.subr.bf16.mxu0 0
        %533 = vmatpush1.bf16.msra.mxu0 0
        %534 = vmatprep.subr.bf16.mxu0 0
        %535 = vmatpush1.bf16.msra.mxu0 0
        %536 = vmatprep.subr.bf16.mxu0 0
        %537 = vmatpush1.bf16.msra.mxu0 0
        %538 = vmatprep.subr.bf16.mxu0 0
        %539 = vmatpush1.bf16.msra.mxu0 0
        %540 = vmatprep.subr.bf16.mxu0 0
        %541 = vmatpush1.bf16.msra.mxu0 0
        %542 = vmatprep.subr.bf16.mxu0 0
        %543 = vmatpush1.bf16.msra.mxu0 0
        %544 = vmatprep.mubr.bf16.mxu0 0
        %545 = vmatmul.mubr.bf16.gmra.mrb[0].mxu0 %v428
        %v546 = vpop.f32.mrb[0].mxu0
        %v547 = vadd.f32 0.0, %v546
        %v548 = vpop.f32.mrb[0].mxu0
        %v549 = vadd.f32 0.0, %v548
        %v550 = vpop.f32.mrb[0].mxu0
        %v551 = vadd.f32 0.0, %v550
        %v552 = vpop.f32.mrb[0].mxu0
        %v553 = vadd.f32 0.0, %v552
        %554 = vmatprep.mubr.bf16.mxu0 0
        %555 = vmatmul.mubr.bf16.gmra.mrb[0].mxu0 %v431
        %v556 = vpop.f32.mrb[0].mxu0
        %v557 = vadd.f32 0.0, %v556
        %v558 = vpop.f32.mrb[0].mxu0
        %v559 = vadd.f32 0.0, %v558
        %v560 = vpop.f32.mrb[0].mxu0
        %v561 = vadd.f32 0.0, %v560
        %v562 = vpop.f32.mrb[0].mxu0
        %v563 = vadd.f32 0.0, %v562
        %564 = vmatprep.mubr.bf16.mxu0 0
        %565 = vmatmul.mubr.bf16.gmra.mrb[0].mxu0 %v434
        %v566 = vpop.f32.mrb[0].mxu0
        %v567 = vadd.f32 0.0, %v566
        %v568 = vpop.f32.mrb[0].mxu0
        %v569 = vadd.f32 0.0, %v568
        %v570 = vpop.f32.mrb[0].mxu0
        %v571 = vadd.f32 0.0, %v570
        %v572 = vpop.f32.mrb[0].mxu0
        %v573 = vadd.f32 0.0, %v572
        %574 = vmatprep.mubr.bf16.mxu0 0
        %575 = vmatmul.mubr.bf16.gmra.mrb[0].mxu0 %v437
        %v576 = vpop.f32.mrb[0].mxu0
        %v577 = vadd.f32 0.0, %v576
        %v578 = vpop.f32.mrb[0].mxu0
        %v579 = vadd.f32 0.0, %v578
        %v580 = vpop.f32.mrb[0].mxu0
        %v581 = vadd.f32 0.0, %v580
        %v582 = vpop.f32.mrb[0].mxu0
        %v583 = vadd.f32 0.0, %v582
        %584 = vdwg.mxu0
        %v585 = vadd.f32 %v318, %v474
        %v586 = vadd.f32 %v319, %v476
        %v587 = vadd.f32 %v320, %v547
        %v588 = vadd.f32 %v321, %v549
        %v589 = vadd.f32 %v322, %v478
        %v590 = vadd.f32 %v323, %v480
        %v591 = vadd.f32 %v324, %v551
        %v592 = vadd.f32 %v325, %v553
        %v593 = vadd.f32 %v326, %v484
        %v594 = vadd.f32 %v327, %v486
        %v595 = vadd.f32 %v328, %v557
        %v596 = vadd.f32 %v329, %v559
        %v597 = vadd.f32 %v330, %v488
        %v598 = vadd.f32 %v331, %v490
        %v599 = vadd.f32 %v332, %v561
        %v600 = vadd.f32 %v333, %v563
        %v601 = vadd.f32 %v334, %v494
        %v602 = vadd.f32 %v335, %v496
        %v603 = vadd.f32 %v336, %v567
        %v604 = vadd.f32 %v337, %v569
        %v605 = vadd.f32 %v338, %v498
        %v606 = vadd.f32 %v339, %v500
        %v607 = vadd.f32 %v340, %v571
        %v608 = vadd.f32 %v341, %v573
        %v609 = vadd.f32 %v342, %v504
        %v610 = vadd.f32 %v343, %v506
        %v611 = vadd.f32 %v344, %v577
        %v612 = vadd.f32 %v345, %v579
        %v613 = vadd.f32 %v346, %v508
        %v614 = vadd.f32 %v347, %v510
        %v615 = vadd.f32 %v348, %v581
        %v616 = vadd.f32 %v349, %v583
        %617 = vst [vmem:[#allocation2] sm:$0xff] %v585
        %618 = vst [vmem:[#allocation2 + $0x8] sm:$0xff] %v586
        %619 = vst [vmem:[#allocation2 + $0x10] sm:$0xff] %v587
        %620 = vst [vmem:[#allocation2 + $0x18] sm:$0xff] %v588
        %621 = vst [vmem:[#allocation2 + $0x20] sm:$0xff] %v589
        %622 = vst [vmem:[#allocation2 + $0x28] sm:$0xff] %v590
        %623 = vst [vmem:[#allocation2 + $0x30] sm:$0xff] %v591
        %624 = vst [vmem:[#allocation2 + $0x38] sm:$0xff] %v592
        %625 = vst [vmem:[#allocation2 + $0x40] sm:$0xff] %v593
        %626 = vst [vmem:[#allocation2 + $0x48] sm:$0xff] %v594
        %627 = vst [vmem:[#allocation2 + $0x50] sm:$0xff] %v595
        %628 = vst [vmem:[#allocation2 + $0x58] sm:$0xff] %v596
        %629 = vst [vmem:[#allocation2 + $0x60] sm:$0xff] %v597
        %630 = vst [vmem:[#allocation2 + $0x68] sm:$0xff] %v598
        %631 = vst [vmem:[#allocation2 + $0x70] sm:$0xff] %v599
        %632 = vst [vmem:[#allocation2 + $0x78] sm:$0xff] %v600
        %633 = vst [vmem:[#allocation2 + $0x80] sm:$0xff] %v601
        %634 = vst [vmem:[#allocation2 + $0x88] sm:$0xff] %v602
        %635 = vst [vmem:[#allocation2 + $0x90] sm:$0xff] %v603
        %636 = vst [vmem:[#allocation2 + $0x98] sm:$0xff] %v604
        %637 = vst [vmem:[#allocation2 + $0xa0] sm:$0xff] %v605
        %638 = vst [vmem:[#allocation2 + $0xa8] sm:$0xff] %v606
        %639 = vst [vmem:[#allocation2 + $0xb0] sm:$0xff] %v607
        %640 = vst [vmem:[#allocation2 + $0xb8] sm:$0xff] %v608
        %641 = vst [vmem:[#allocation2 + $0xc0] sm:$0xff] %v609
        %642 = vst [vmem:[#allocation2 + $0xc8] sm:$0xff] %v610
        %643 = vst [vmem:[#allocation2 + $0xd0] sm:$0xff] %v611
        %644 = vst [vmem:[#allocation2 + $0xd8] sm:$0xff] %v612
        %645 = vst [vmem:[#allocation2 + $0xe0] sm:$0xff] %v613
        %646 = vst [vmem:[#allocation2 + $0xe8] sm:$0xff] %v614
        %647 = vst [vmem:[#allocation2 + $0xf0] sm:$0xff] %v615
        %648 = vst [vmem:[#allocation2 + $0xf8] sm:$0xff] %v616
        // Predicated region
        $region60: #{_lambda_.10} parent=50 // pred_check
          %p649 = pneg %p282
        $region61: #{_lambda_.10} parent=50 // pred_check_branch
          %651 = sbr.rel (%p649) target = $region63
        $region62: #{_lambda_.10} parent=50 // pred_region
          %v652 = vld [vmem:[#allocation2] sm:$0xff]
          %v653 = vld [vmem:[#allocation2 + $0x8] sm:$0xff]
          %v654 = vld [vmem:[#allocation2 + $0x10] sm:$0xff]
          %v655 = vld [vmem:[#allocation2 + $0x18] sm:$0xff]
          %v656 = vld [vmem:[#allocation2 + $0x20] sm:$0xff]
          %v657 = vld [vmem:[#allocation2 + $0x28] sm:$0xff]
          %v658 = vld [vmem:[#allocation2 + $0x30] sm:$0xff]
          %v659 = vld [vmem:[#allocation2 + $0x38] sm:$0xff]
          %v660 = vld [vmem:[#allocation2 + $0x40] sm:$0xff]
          %v661 = vld [vmem:[#allocation2 + $0x48] sm:$0xff]
          %v662 = vld [vmem:[#allocation2 + $0x50] sm:$0xff]
          %v663 = vld [vmem:[#allocation2 + $0x58] sm:$0xff]
          %v664 = vld [vmem:[#allocation2 + $0x60] sm:$0xff]
          %v665 = vld [vmem:[#allocation2 + $0x68] sm:$0xff]
          %v666 = vld [vmem:[#allocation2 + $0x70] sm:$0xff]
          %v667 = vld [vmem:[#allocation2 + $0x78] sm:$0xff]
          %v668 = vld [vmem:[#allocation2 + $0x80] sm:$0xff]
          %v669 = vld [vmem:[#allocation2 + $0x88] sm:$0xff]
          %v670 = vld [vmem:[#allocation2 + $0x90] sm:$0xff]
          %v671 = vld [vmem:[#allocation2 + $0x98] sm:$0xff]
          %v672 = vld [vmem:[#allocation2 + $0xa0] sm:$0xff]
          %v673 = vld [vmem:[#allocation2 + $0xa8] sm:$0xff]
          %v674 = vld [vmem:[#allocation2 + $0xb0] sm:$0xff]
          %v675 = vld [vmem:[#allocation2 + $0xb8] sm:$0xff]
          %v676 = vld [vmem:[#allocation2 + $0xc0] sm:$0xff]
          %v677 = vld [vmem:[#allocation2 + $0xc8] sm:$0xff]
          %v678 = vld [vmem:[#allocation2 + $0xd0] sm:$0xff]
          %v679 = vld [vmem:[#allocation2 + $0xd8] sm:$0xff]
          %v680 = vld [vmem:[#allocation2 + $0xe0] sm:$0xff]
          %v681 = vld [vmem:[#allocation2 + $0xe8] sm:$0xff]
          %v682 = vld [vmem:[#allocation2 + $0xf0] sm:$0xff]
          %v683 = vld [vmem:[#allocation2 + $0xf8] sm:$0xff]
          %v684 = vld [vmem:[%s277] sm:$0xf]
          %v686 = vlaneseq
          %v687 = vshrl.u32 %v686, 7
          %v688 = vsub.s32 0, %v687
          %v689 = vrot.slane %v684, %v688
          %v690 = vlaneseq
          %v691 = vshrl.u32 %v690, 7
          %v692 = vsub.s32 1, %v691
          %v693 = vrot.slane %v684, %v692
          %v694 = vlaneseq
          %v695 = vshrl.u32 %v694, 7
          %v696 = vsub.s32 2, %v695
          %v697 = vrot.slane %v684, %v696
          %v698 = vlaneseq
          %v699 = vshrl.u32 %v698, 7
          %v700 = vsub.s32 3, %v699
          %v701 = vrot.slane %v684, %v700
          %v706 = vadd.f32 %v652, %v689
          %v707 = vadd.f32 %v653, %v693
          %v708 = vadd.f32 %v654, %v697
          %v709 = vadd.f32 %v655, %v701
          %v710 = vadd.f32 %v656, %v689
          %v711 = vadd.f32 %v657, %v693
          %v712 = vadd.f32 %v658, %v697
          %v713 = vadd.f32 %v659, %v701
          %v714 = vadd.f32 %v660, %v689
          %v715 = vadd.f32 %v661, %v693
          %v716 = vadd.f32 %v662, %v697
          %v717 = vadd.f32 %v663, %v701
          %v718 = vadd.f32 %v664, %v689
          %v719 = vadd.f32 %v665, %v693
          %v720 = vadd.f32 %v666, %v697
          %v721 = vadd.f32 %v667, %v701
          %v722 = vadd.f32 %v668, %v689
          %v723 = vadd.f32 %v669, %v693
          %v724 = vadd.f32 %v670, %v697
          %v725 = vadd.f32 %v671, %v701
          %v726 = vadd.f32 %v672, %v689
          %v727 = vadd.f32 %v673, %v693
          %v728 = vadd.f32 %v674, %v697
          %v729 = vadd.f32 %v675, %v701
          %v730 = vadd.f32 %v676, %v689
          %v731 = vadd.f32 %v677, %v693
          %v732 = vadd.f32 %v678, %v697
          %v733 = vadd.f32 %v679, %v701
          %v734 = vadd.f32 %v680, %v689
          %v735 = vadd.f32 %v681, %v693
          %v736 = vadd.f32 %v682, %v697
          %v737 = vadd.f32 %v683, %v701
          %v738 = vpack.c.bf16 %v710, %v706
          %v739 = vpack.c.bf16 %v711, %v707
          %v740 = vpack.c.bf16 %v712, %v708
          %v741 = vpack.c.bf16 %v713, %v709
          %v742 = vpack.c.bf16 %v718, %v714
          %v743 = vpack.c.bf16 %v719, %v715
          %v744 = vpack.c.bf16 %v720, %v716
          %v745 = vpack.c.bf16 %v721, %v717
          %v746 = vpack.c.bf16 %v726, %v722
          %v747 = vpack.c.bf16 %v727, %v723
          %v748 = vpack.c.bf16 %v728, %v724
          %v749 = vpack.c.bf16 %v729, %v725
          %v750 = vpack.c.bf16 %v734, %v730
          %v751 = vpack.c.bf16 %v735, %v731
          %v752 = vpack.c.bf16 %v736, %v732
          %v753 = vpack.c.bf16 %v737, %v733
          %v770 = vunpack.c.l.b16 %v738
          %v771 = vunpack.c.l.b16 %v739
          %v772 = vunpack.c.l.b16 %v740
          %v773 = vunpack.c.l.b16 %v741
          %v774 = vunpack.c.h.b16 %v738
          %v775 = vunpack.c.h.b16 %v739
          %v776 = vunpack.c.h.b16 %v740
          %v777 = vunpack.c.h.b16 %v741
          %v778 = vunpack.c.l.b16 %v742
          %v779 = vunpack.c.l.b16 %v743
          %v780 = vunpack.c.l.b16 %v744
          %v781 = vunpack.c.l.b16 %v745
          %v782 = vunpack.c.h.b16 %v742
          %v783 = vunpack.c.h.b16 %v743
          %v784 = vunpack.c.h.b16 %v744
          %v785 = vunpack.c.h.b16 %v745
          %v786 = vunpack.c.l.b16 %v746
          %v787 = vunpack.c.l.b16 %v747
          %v788 = vunpack.c.l.b16 %v748
          %v789 = vunpack.c.l.b16 %v749
          %v790 = vunpack.c.h.b16 %v746
          %v791 = vunpack.c.h.b16 %v747
          %v792 = vunpack.c.h.b16 %v748
          %v793 = vunpack.c.h.b16 %v749
          %v794 = vunpack.c.l.b16 %v750
          %v795 = vunpack.c.l.b16 %v751
          %v796 = vunpack.c.l.b16 %v752
          %v797 = vunpack.c.l.b16 %v753
          %v798 = vunpack.c.h.b16 %v750
          %v799 = vunpack.c.h.b16 %v751
          %v800 = vunpack.c.h.b16 %v752
          %v801 = vunpack.c.h.b16 %v753
          %v802 = vpack.c.b16 %v771, %v770
          %v803 = vpack.c.b16 %v773, %v772
          %v804 = vpack.c.b16 %v775, %v774
          %v805 = vpack.c.b16 %v777, %v776
          %v806 = vpack.c.b16 %v779, %v778
          %v807 = vpack.c.b16 %v781, %v780
          %v808 = vpack.c.b16 %v783, %v782
          %v809 = vpack.c.b16 %v785, %v784
          %v810 = vpack.c.b16 %v787, %v786
          %v811 = vpack.c.b16 %v789, %v788
          %v812 = vpack.c.b16 %v791, %v790
          %v813 = vpack.c.b16 %v793, %v792
          %v814 = vpack.c.b16 %v795, %v794
          %v815 = vpack.c.b16 %v797, %v796
          %v816 = vpack.c.b16 %v799, %v798
          %v817 = vpack.c.b16 %v801, %v800
          %834 = vst [vmem:[%s262] sm:$0xff] %v802
          %835 = vst [vmem:[%s262 + $0x8] sm:$0xff] %v803
          %836 = vst [vmem:[%s262 + $0x10] sm:$0xff] %v804
          %837 = vst [vmem:[%s262 + $0x18] sm:$0xff] %v805
          %838 = vst [vmem:[%s262 + $0x20] sm:$0xff] %v806
          %839 = vst [vmem:[%s262 + $0x28] sm:$0xff] %v807
          %840 = vst [vmem:[%s262 + $0x30] sm:$0xff] %v808
          %841 = vst [vmem:[%s262 + $0x38] sm:$0xff] %v809
          %842 = vst [vmem:[%s262 + $0x40] sm:$0xff] %v810
          %843 = vst [vmem:[%s262 + $0x48] sm:$0xff] %v811
          %844 = vst [vmem:[%s262 + $0x50] sm:$0xff] %v812
          %845 = vst [vmem:[%s262 + $0x58] sm:$0xff] %v813
          %846 = vst [vmem:[%s262 + $0x60] sm:$0xff] %v814
          %847 = vst [vmem:[%s262 + $0x68] sm:$0xff] %v815
          %848 = vst [vmem:[%s262 + $0x70] sm:$0xff] %v816
          %849 = vst [vmem:[%s262 + $0x78] sm:$0xff] %v817
        $region63: #{_lambda_.10} parent=50 // pred_fallthru
          _
        %s850 = sand.u32 %s125, 1
        %s851 = sand.u32 %s125, 1
        %s852 = smul.addr %s851, 128
        %s853 = scalar_lea.vmem [#allocation4], %s852
        // Predicated region
        $region64: #{_lambda_.10} parent=50 // pred_check
          %p854 = pneg %p135
        $region65: #{_lambda_.10} parent=50 // pred_check_branch
          %856 = sbr.rel (%p854) target = $region67
        $region66: #{_lambda_.10} parent=50 // pred_region
          %s857 = smul.u32 8, %s19
          %s858 = smul.u32 4, %s20
          %s859 = smul.addr %s857, 8
          %s860 = sadd.s32 %s858, %s859
          %s861 = smul.addr %s860, 4
          %s862 = scalar_lea.vmem %s3, %s861
          // Predicated region
          $region68: #{_lambda_.10} parent=66 // pred_check
            _
          $region69: #{_lambda_.10} parent=66 // pred_check_branch
            %864 = sbr.rel (0) target = $region71
          $region70: #{_lambda_.10} parent=66 // pred_region
            // Predicated region
            $region72: #{_lambda_.10} parent=70 // pred_check
              _
            $region73: #{_lambda_.10} parent=70 // pred_check_branch
              %866 = sbr.rel (0) target = $region75
            $region74: #{_lambda_.10} parent=70 // pred_region
              loop: start=0, step=1, limit=1
              $region76: #{_lambda_.10} parent=74 // loop_pre_header
                _
              $region77: #{_lambda_.10} parent=74 // loop_header
                %s868 = sphi 0, %s872
                %p869 = scmp.ge.s32.totalorder %s868, 1
                %s873 = sphi %s853, %s853
                %s874 = sphi %s862, %s862
              $region78: #{_lambda_.10} parent=74 // loop_header_branch
                %871 = sbr.rel (%p869) target = $region82
              $region79: #{_lambda_.10} parent=74 // loop_body
                %v875 = vld [vmem:[%s873] sm:$0xff]
                %876 = vst [vmem:[%s874] sm:$0xff] %v875
                %v877 = vld [vmem:[%s873 + $0x8] sm:$0xff]
                %878 = vst [vmem:[%s874 + $0x8] sm:$0xff] %v877
                %v879 = vld [vmem:[%s873 + $0x10] sm:$0xff]
                %880 = vst [vmem:[%s874 + $0x20] sm:$0xff] %v879
                %v881 = vld [vmem:[%s873 + $0x18] sm:$0xff]
                %882 = vst [vmem:[%s874 + $0x28] sm:$0xff] %v881
                %v883 = vld [vmem:[%s873 + $0x20] sm:$0xff]
                %884 = vst [vmem:[%s874 + $0x40] sm:$0xff] %v883
                %v885 = vld [vmem:[%s873 + $0x28] sm:$0xff]
                %886 = vst [vmem:[%s874 + $0x48] sm:$0xff] %v885
                %v887 = vld [vmem:[%s873 + $0x30] sm:$0xff]
                %888 = vst [vmem:[%s874 + $0x60] sm:$0xff] %v887
                %v889 = vld [vmem:[%s873 + $0x38] sm:$0xff]
                %890 = vst [vmem:[%s874 + $0x68] sm:$0xff] %v889
                %v891 = vld [vmem:[%s873 + $0x40] sm:$0xff]
                %892 = vst [vmem:[%s874 + $0x80] sm:$0xff] %v891
                %v893 = vld [vmem:[%s873 + $0x48] sm:$0xff]
                %894 = vst [vmem:[%s874 + $0x88] sm:$0xff] %v893
                %v895 = vld [vmem:[%s873 + $0x50] sm:$0xff]
                %896 = vst [vmem:[%s874 + $0xa0] sm:$0xff] %v895
                %v897 = vld [vmem:[%s873 + $0x58] sm:$0xff]
                %898 = vst [vmem:[%s874 + $0xa8] sm:$0xff] %v897
                %v899 = vld [vmem:[%s873 + $0x60] sm:$0xff]
                %900 = vst [vmem:[%s874 + $0xc0] sm:$0xff] %v899
                %v901 = vld [vmem:[%s873 + $0x68] sm:$0xff]
                %902 = vst [vmem:[%s874 + $0xc8] sm:$0xff] %v901
                %v903 = vld [vmem:[%s873 + $0x70] sm:$0xff]
                %904 = vst [vmem:[%s874 + $0xe0] sm:$0xff] %v903
                %v905 = vld [vmem:[%s873 + $0x78] sm:$0xff]
                %906 = vst [vmem:[%s874 + $0xe8] sm:$0xff] %v905
              $region80: #{_lambda_.10} parent=74 // loop_footer
                %s872 = sadd.s32 1, %s868
              $region81: #{_lambda_.10} parent=74 // loop_footer_branch
                %867 = sbr.rel target = $region77
              $region82: #{_lambda_.10} parent=74 // loop_exit
                _
            $region75: #{_lambda_.10} parent=70 // pred_fallthru
              _
            // Predicated region
            $region83: #{_lambda_.10} parent=70 // pred_check
              _
            $region84: #{_lambda_.10} parent=70 // pred_check_branch
              %908 = sbr.rel target = $region86
            $region85: #{_lambda_.10} parent=70 // pred_region
              _
            $region86: #{_lambda_.10} parent=70 // pred_fallthru
              _
          $region71: #{_lambda_.10} parent=66 // pred_fallthru
            _
          %909 = vnop
        $region67: #{_lambda_.10} parent=50 // pred_fallthru
          _
      $region51: #{_lambda_.10} parent=5 // pred_fallthru
        _
      %p910 = scmp.le.s32.totalorder 2, %s9
      // Predicated region
      $region87: #{_lambda_.10} parent=5 // pred_check
        %p911 = pneg %p910
      $region88: #{_lambda_.10} parent=5 // pred_check_branch
        %913 = sbr.rel (%p911) target = $region90
      $region89: #{_lambda_.10} parent=5 // pred_region
        %s914 = ssub.s32 %s9, 2
        // Predicated region
        $region91: #{_lambda_.10} parent=89 // pred_check
          %p915 = pneg %p141
        $region92: #{_lambda_.10} parent=89 // pred_check_branch
          %917 = sbr.rel (%p915) target = $region94
        $region93: #{_lambda_.10} parent=89 // pred_region
          %s918 = sand.u32 %s126, 1
          %s919 = sand.u32 %s126, 1
          %s920 = smul.addr %s919, 128
          %s921 = scalar_lea.vmem [#allocation4], %s920
        $region94: #{_lambda_.10} parent=89 // pred_fallthru
          _
      $region90: #{_lambda_.10} parent=5 // pred_fallthru
        _
    $region6: #{_lambda_.10} parent=1 // loop_footer
      %s13 = sadd.s32 1, %s9
    $region7: #{_lambda_.10} parent=1 // loop_footer_branch
      %8 = sbr.rel target = $region3
    $region8: #{_lambda_.10} parent=1 // loop_exit
      _

// kernel: _lambda_.11
$region0: #{_lambda_.11}
  #allocation0 [shape = 'u32[]', space=smem, size = 0x4, offset = 0x4, fixed_abs, tag = 'smem constant byte address 0x4 - core index']
  #allocation1 [shape = 'u32[144,128]{1,0:T(1,128)}', space=vmem, size = 0x12000, scoped, tag = 'internal scratch']
  #allocation2 [shape = 'f32[64,512]{1,0:T(8,128)}', space=vmem, size = 0x20000, scoped, tag = 'scratch operand']
  %s0 = inlined_call_operand.vmem [shape: bf16[64,256], index: 0, kind: input, shape index: {}]
  %s1 = inlined_call_operand.vmem [shape: bf16[256,1024], index: 1, kind: input, shape index: {}]
  %s2 = inlined_call_operand.vmem [shape: f32[1,1024], index: 2, kind: input, shape index: {}]
  %s3 = inlined_call_operand.vmem [shape: bf16[64,1024], index: 3, kind: input, shape index: {}]
  %s4 = inlined_call_operand.vmem [shape: bf16[64,1024], index: 4, kind: output, shape index: {}]
  %s5 = sld [smem:[#allocation0]]
  $region122: #{_lambda_.11} parent=0
    _
  %s7 = ssub.s32 1, %s5
  %s8 = scalar_select 0, %s7, %s5
  $region1: #{_lambda_.11} parent=0
    #allocation3 [shape = 'u8[524288]{0}', space=vmem, size = 0x80000, scoped, tag = 'input window, operand 1']
    #allocation4 [shape = 'u8[131072]{0}', space=vmem, size = 0x20000, scoped, tag = 'input window, operand 3']
    #allocation5 [shape = 'u8[131072]{0}', space=vmem, size = 0x20000, scoped, tag = 'output window, operand 0']
    loop: start=0, step=1, limit=4
    $region2: #{_lambda_.11} parent=1 // loop_pre_header
      _
    $region3: #{_lambda_.11} parent=1 // loop_header
      %s10 = sphi 0, %s14
      %p11 = scmp.ge.s32.totalorder %s10, 4
      %s17 = sphi 0, %s36
      %s18 = sphi 0, %s32
      %s19 = sphi 0, %s28
      %s20 = sphi 0, %s17
      %s21 = sphi 0, %s18
      %s22 = sphi 0, %s19
      %s23 = sphi 0, %s20
      %s24 = sphi 0, %s21
      %s25 = sphi 0, %s22
      %s41 = sphi 0, %s43
      %s44 = sphi 0, %s41
      %s45 = sphi 0, %s44
      %s61 = sphi 0, %s45
      %s69 = sphi 0, %s71
      %s72 = sphi 0, %s69
      %s73 = sphi 0, %s72
      %s89 = sphi 0, %s73
      %s95 = sphi 0, %s97
      %s98 = sphi 0, %s95
      %s99 = sphi 0, %s98
      %s115 = sphi 0, %s99
      %s123 = sphi 0, %s125
      %s126 = sphi 0, %s123
      %s127 = sphi 0, %s126
      %s143 = sphi 0, %s127
      %s151 = sphi 0, %s153
      %s154 = sphi 0, %s151
      %s155 = sphi 0, %s154
      %s171 = sphi 0, %s155
    $region4: #{_lambda_.11} parent=1 // loop_header_branch
      %13 = sbr.rel (%p11) target = $region8
    $region5: #{_lambda_.11} parent=1 // loop_body
      %s15 = ssub.s32 %s10, 1
      %s16 = ssub.s32 %s10, 2
      %s26 = sadd.s32 1, %s19
      %p27 = scmp.ge.s32.totalorder %s26, 1
      %s28 = scalar_select %p27, 0, %s26
      %s29 = sadd.s32 1, %s18
      %s30 = scalar_select %p27, %s29, %s18
      %p31 = scmp.ge.s32.totalorder %s30, 2
      %s32 = scalar_select %p31, 0, %s30
      %s33 = sadd.s32 1, %s17
      %s34 = scalar_select %p31, %s33, %s17
      %p35 = scmp.ge.s32.totalorder %s34, 1
      %s36 = scalar_select %p35, 0, %s34
      %s37 = ssub.s32 %s17, %s36
      %s38 = ssub.s32 %s19, %s28
      %s39 = sor.u32 %s37, %s38
      %p40 = scmp.eq.s32.totalorder %s39, 0
      %s42 = sadd.s32 %s41, 1
      %s43 = scalar_select %p40, %s41, %s42
      %p46 = pneg %p40
      %p47 = scmp.eq.s32.totalorder %s10, 1
      %p48 = por %p46, %p47
      %p49 = scmp.ne.s32.totalorder %s41, %s44
      %p50 = scmp.eq.s32.totalorder %s10, 0
      %p51 = por %p49, %p50
      %p52 = scmp.ne.s32.totalorder %s41, %s44
      %p53 = scmp.eq.s32.totalorder %s15, 1
      %p54 = por %p52, %p53
      %p55 = scmp.ne.s32.totalorder %s44, %s45
      %p56 = scmp.eq.s32.totalorder %s15, 0
      %p57 = por %p55, %p56
      %p58 = scmp.ne.s32.totalorder %s44, %s45
      %p59 = scmp.eq.s32.totalorder %s16, 1
      %p60 = por %p58, %p59
      %p62 = scmp.ne.s32.totalorder %s45, %s61
      %p63 = scmp.eq.s32.totalorder %s16, 0
      %p64 = por %p62, %p63
      %s65 = ssub.s32 %s19, %s28
      %s66 = ssub.s32 %s18, %s32
      %s67 = sor.u32 %s65, %s66
      %p68 = scmp.eq.s32.totalorder %s67, 0
      %s70 = sadd.s32 %s69, 1
      %s71 = scalar_select %p68, %s69, %s70
      %p74 = pneg %p68
      %p75 = scmp.eq.s32.totalorder %s10, 1
      %p76 = por %p74, %p75
      %p77 = scmp.ne.s32.totalorder %s69, %s72
      %p78 = scmp.eq.s32.totalorder %s10, 0
      %p79 = por %p77, %p78
      %p80 = scmp.ne.s32.totalorder %s69, %s72
      %p81 = scmp.eq.s32.totalorder %s15, 1
      %p82 = por %p80, %p81
      %p83 = scmp.ne.s32.totalorder %s72, %s73
      %p84 = scmp.eq.s32.totalorder %s15, 0
      %p85 = por %p83, %p84
      %p86 = scmp.ne.s32.totalorder %s72, %s73
      %p87 = scmp.eq.s32.totalorder %s16, 1
      %p88 = por %p86, %p87
      %p90 = scmp.ne.s32.totalorder %s73, %s89
      %p91 = scmp.eq.s32.totalorder %s16, 0
      %p92 = por %p90, %p91
      %s93 = ssub.s32 %s18, %s32
      %p94 = scmp.eq.s32.totalorder %s93, 0
      %s96 = sadd.s32 %s95, 1
      %s97 = scalar_select %p94, %s95, %s96
      %p100 = pneg %p94
      %p101 = scmp.eq.s32.totalorder %s10, 1
      %p102 = por %p100, %p101
      %p103 = scmp.ne.s32.totalorder %s95, %s98
      %p104 = scmp.eq.s32.totalorder %s10, 0
      %p105 = por %p103, %p104
      %p106 = scmp.ne.s32.totalorder %s95, %s98
      %p107 = scmp.eq.s32.totalorder %s15, 1
      %p108 = por %p106, %p107
      %p109 = scmp.ne.s32.totalorder %s98, %s99
      %p110 = scmp.eq.s32.totalorder %s15, 0
      %p111 = por %p109, %p110
      %p112 = scmp.ne.s32.totalorder %s98, %s99
      %p113 = scmp.eq.s32.totalorder %s16, 1
      %p114 = por %p112, %p113
      %p116 = scmp.ne.s32.totalorder %s99, %s115
      %p117 = scmp.eq.s32.totalorder %s16, 0
      %p118 = por %p116, %p117
      %s119 = ssub.s32 %s17, %s36
      %s120 = ssub.s32 %s18, %s32
      %s121 = sor.u32 %s119, %s120
      %p122 = scmp.eq.s32.totalorder %s121, 0
      %s124 = sadd.s32 %s123, 1
      %s125 = scalar_select %p122, %s123, %s124
      %p128 = pneg %p122
      %p129 = scmp.eq.s32.totalorder %s10, 1
      %p130 = por %p128, %p129
      %p131 = scmp.ne.s32.totalorder %s123, %s126
      %p132 = scmp.eq.s32.totalorder %s10, 0
      %p133 = por %p131, %p132
      %p134 = scmp.ne.s32.totalorder %s123, %s126
      %p135 = scmp.eq.s32.totalorder %s15, 1
      %p136 = por %p134, %p135
      %p137 = scmp.ne.s32.totalorder %s126, %s127
      %p138 = scmp.eq.s32.totalorder %s15, 0
      %p139 = por %p137, %p138
      %p140 = scmp.ne.s32.totalorder %s126, %s127
      %p141 = scmp.eq.s32.totalorder %s16, 1
      %p142 = por %p140, %p141
      %p144 = scmp.ne.s32.totalorder %s127, %s143
      %p145 = scmp.eq.s32.totalorder %s16, 0
      %p146 = por %p144, %p145
      %s147 = ssub.s32 %s17, %s36
      %s148 = ssub.s32 %s18, %s32
      %s149 = sor.u32 %s147, %s148
      %p150 = scmp.eq.s32.totalorder %s149, 0
      %s152 = sadd.s32 %s151, 1
      %s153 = scalar_select %p150, %s151, %s152
      %p156 = pneg %p150
      %p157 = scmp.eq.s32.totalorder %s10, 1
      %p158 = por %p156, %p157
      %p159 = scmp.ne.s32.totalorder %s151, %s154
      %p160 = scmp.eq.s32.totalorder %s10, 0
      %p161 = por %p159, %p160
      %p162 = scmp.ne.s32.totalorder %s151, %s154
      %p163 = scmp.eq.s32.totalorder %s15, 1
      %p164 = por %p162, %p163
      %p165 = scmp.ne.s32.totalorder %s154, %s155
      %p166 = scmp.eq.s32.totalorder %s15, 0
      %p167 = por %p165, %p166
      %p168 = scmp.ne.s32.totalorder %s154, %s155
      %p169 = scmp.eq.s32.totalorder %s16, 1
      %p170 = por %p168, %p169
      %p172 = scmp.ne.s32.totalorder %s155, %s171
      %p173 = scmp.eq.s32.totalorder %s16, 0
      %p174 = por %p172, %p173
      %p175 = scmp.le.s32.totalorder 1, %s10
      %p176 = scmp.lt.s32.totalorder %s10, 3
      %p177 = pnand %p175, %p176
      %p178 = pneg %p177
      // Predicated region
      $region9: #{_lambda_.11} parent=5 // pred_check
        _
      $region10: #{_lambda_.11} parent=5 // pred_check_branch
        %180 = sbr.rel (%p177) target = $region12
      $region11: #{_lambda_.11} parent=5 // pred_region
        %s181 = ssub.s32 %s10, 1
        // Predicated region
        $region13: #{_lambda_.11} parent=11 // pred_check
          %p182 = pneg %p57
        $region14: #{_lambda_.11} parent=11 // pred_check_branch
          %184 = sbr.rel (%p182) target = $region16
        $region15: #{_lambda_.11} parent=11 // pred_region
          %s185 = smul.u32 8, %s20
          %s186 = smul.u32 2, %s22
          %p187 = scmp.lt.s32.totalorder %s185, 7
          %s188 = scalar_select %p187, %s185, 7
          %p189 = scmp.lt.s32.totalorder %s186, 1
          %s190 = scalar_select %p189, %s186, 1
          %s191 = smul.addr %s188, 2
          %s192 = sadd.s32 %s190, %s191
          %s193 = smul.addr %s192, 4
          %s194 = scalar_lea.vmem %s0, %s193
          %s195 = smul.u32 8, %s20
          %s196 = smul.u32 2, %s22
        $region16: #{_lambda_.11} parent=11 // pred_fallthru
          _
      $region12: #{_lambda_.11} parent=5 // pred_fallthru
        _
      %p197 = scmp.lt.s32.totalorder %s10, 2
      // Predicated region
      $region17: #{_lambda_.11} parent=5 // pred_check
        %p198 = pneg %p197
      $region18: #{_lambda_.11} parent=5 // pred_check_branch
        %200 = sbr.rel (%p198) target = $region20
      $region19: #{_lambda_.11} parent=5 // pred_region
        // Predicated region
        $region21: #{_lambda_.11} parent=19 // pred_check
          %p201 = pneg %p79
        $region22: #{_lambda_.11} parent=19 // pred_check_branch
          %203 = sbr.rel (%p201) target = $region24
        $region23: #{_lambda_.11} parent=19 // pred_region
          %s204 = sand.u32 %s69, 1
          %s205 = sand.u32 %s69, 1
          %s206 = smul.addr %s205, 512
          %s207 = scalar_lea.vmem [#allocation3], %s206
          %s208 = smul.u32 32, %s19
          %s209 = smul.u32 4, %s18
          %s210 = smul.addr %s208, 8
          %s211 = sadd.s32 %s209, %s210
          %s212 = smul.addr %s211, 4
          %s213 = scalar_lea.vmem %s1, %s212
          // Predicated region
          $region25: #{_lambda_.11} parent=23 // pred_check
            _
          $region26: #{_lambda_.11} parent=23 // pred_check_branch
            %215 = sbr.rel (0) target = $region28
          $region27: #{_lambda_.11} parent=23 // pred_region
            // Predicated region
            $region29: #{_lambda_.11} parent=27 // pred_check
              _
            $region30: #{_lambda_.11} parent=27 // pred_check_branch
              %217 = sbr.rel (0) target = $region32
            $region31: #{_lambda_.11} parent=27 // pred_region
              loop: start=0, step=1, limit=1
              $region33: #{_lambda_.11} parent=31 // loop_pre_header
                _
              $region34: #{_lambda_.11} parent=31 // loop_header
                %s219 = sphi 0, %s223
                %p220 = scmp.ge.s32.totalorder %s219, 1
                %s224 = sphi %s213, %s213
                %s225 = sphi %s207, %s207
              $region35: #{_lambda_.11} parent=31 // loop_header_branch
                %222 = sbr.rel (%p220) target = $region39
              $region36: #{_lambda_.11} parent=31 // loop_body
                %v226 = vld [vmem:[%s224] sm:$0xff]
                %227 = vst [vmem:[%s225] sm:$0xff] %v226
                %v228 = vld [vmem:[%s224 + $0x8] sm:$0xff]
                %229 = vst [vmem:[%s225 + $0x8] sm:$0xff] %v228
                %v230 = vld [vmem:[%s224 + $0x20] sm:$0xff]
                %231 = vst [vmem:[%s225 + $0x10] sm:$0xff] %v230
                %v232 = vld [vmem:[%s224 + $0x28] sm:$0xff]
                %233 = vst [vmem:[%s225 + $0x18] sm:$0xff] %v232
                %v234 = vld [vmem:[%s224 + $0x40] sm:$0xff]
                %235 = vst [vmem:[%s225 + $0x20] sm:$0xff] %v234
                %v236 = vld [vmem:[%s224 + $0x48] sm:$0xff]
                %237 = vst [vmem:[%s225 + $0x28] sm:$0xff] %v236
                %v238 = vld [vmem:[%s224 + $0x60] sm:$0xff]
                %239 = vst [vmem:[%s225 + $0x30] sm:$0xff] %v238
                %v240 = vld [vmem:[%s224 + $0x68] sm:$0xff]
                %241 = vst [vmem:[%s225 + $0x38] sm:$0xff] %v240
                %v242 = vld [vmem:[%s224 + $0x80] sm:$0xff]
                %243 = vst [vmem:[%s225 + $0x40] sm:$0xff] %v242
                %v244 = vld [vmem:[%s224 + $0x88] sm:$0xff]
                %245 = vst [vmem:[%s225 + $0x48] sm:$0xff] %v244
                %v246 = vld [vmem:[%s224 + $0xa0] sm:$0xff]
                %247 = vst [vmem:[%s225 + $0x50] sm:$0xff] %v246
                %v248 = vld [vmem:[%s224 + $0xa8] sm:$0xff]
                %249 = vst [vmem:[%s225 + $0x58] sm:$0xff] %v248
                %v250 = vld [vmem:[%s224 + $0xc0] sm:$0xff]
                %251 = vst [vmem:[%s225 + $0x60] sm:$0xff] %v250
                %v252 = vld [vmem:[%s224 + $0xc8] sm:$0xff]
                %253 = vst [vmem:[%s225 + $0x68] sm:$0xff] %v252
                %v254 = vld [vmem:[%s224 + $0xe0] sm:$0xff]
                %255 = vst [vmem:[%s225 + $0x70] sm:$0xff] %v254
                %v256 = vld [vmem:[%s224 + $0xe8] sm:$0xff]
                %257 = vst [vmem:[%s225 + $0x78] sm:$0xff] %v256
                %v258 = vld [vmem:[%s224 + $0x100] sm:$0xff]
                %259 = vst [vmem:[%s225 + $0x80] sm:$0xff] %v258
                %v260 = vld [vmem:[%s224 + $0x108] sm:$0xff]
                %261 = vst [vmem:[%s225 + $0x88] sm:$0xff] %v260
                %v262 = vld [vmem:[%s224 + $0x120] sm:$0xff]
                %263 = vst [vmem:[%s225 + $0x90] sm:$0xff] %v262
                %v264 = vld [vmem:[%s224 + $0x128] sm:$0xff]
                %265 = vst [vmem:[%s225 + $0x98] sm:$0xff] %v264
                %v266 = vld [vmem:[%s224 + $0x140] sm:$0xff]
                %267 = vst [vmem:[%s225 + $0xa0] sm:$0xff] %v266
                %v268 = vld [vmem:[%s224 + $0x148] sm:$0xff]
                %269 = vst [vmem:[%s225 + $0xa8] sm:$0xff] %v268
                %v270 = vld [vmem:[%s224 + $0x160] sm:$0xff]
                %271 = vst [vmem:[%s225 + $0xb0] sm:$0xff] %v270
                %v272 = vld [vmem:[%s224 + $0x168] sm:$0xff]
                %273 = vst [vmem:[%s225 + $0xb8] sm:$0xff] %v272
                %v274 = vld [vmem:[%s224 + $0x180] sm:$0xff]
                %275 = vst [vmem:[%s225 + $0xc0] sm:$0xff] %v274
                %v276 = vld [vmem:[%s224 + $0x188] sm:$0xff]
                %277 = vst [vmem:[%s225 + $0xc8] sm:$0xff] %v276
                %v278 = vld [vmem:[%s224 + $0x1a0] sm:$0xff]
                %279 = vst [vmem:[%s225 + $0xd0] sm:$0xff] %v278
                %v280 = vld [vmem:[%s224 + $0x1a8] sm:$0xff]
                %281 = vst [vmem:[%s225 + $0xd8] sm:$0xff] %v280
                %v282 = vld [vmem:[%s224 + $0x1c0] sm:$0xff]
                %283 = vst [vmem:[%s225 + $0xe0] sm:$0xff] %v282
                %v284 = vld [vmem:[%s224 + $0x1c8] sm:$0xff]
                %285 = vst [vmem:[%s225 + $0xe8] sm:$0xff] %v284
                %v286 = vld [vmem:[%s224 + $0x1e0] sm:$0xff]
                %287 = vst [vmem:[%s225 + $0xf0] sm:$0xff] %v286
                %v288 = vld [vmem:[%s224 + $0x1e8] sm:$0xff]
                %289 = vst [vmem:[%s225 + $0xf8] sm:$0xff] %v288
                %v290 = vld [vmem:[%s224 + $0x200] sm:$0xff]
                %291 = vst [vmem:[%s225 + $0x100] sm:$0xff] %v290
                %v292 = vld [vmem:[%s224 + $0x208] sm:$0xff]
                %293 = vst [vmem:[%s225 + $0x108] sm:$0xff] %v292
                %v294 = vld [vmem:[%s224 + $0x220] sm:$0xff]
                %295 = vst [vmem:[%s225 + $0x110] sm:$0xff] %v294
                %v296 = vld [vmem:[%s224 + $0x228] sm:$0xff]
                %297 = vst [vmem:[%s225 + $0x118] sm:$0xff] %v296
                %v298 = vld [vmem:[%s224 + $0x240] sm:$0xff]
                %299 = vst [vmem:[%s225 + $0x120] sm:$0xff] %v298
                %v300 = vld [vmem:[%s224 + $0x248] sm:$0xff]
                %301 = vst [vmem:[%s225 + $0x128] sm:$0xff] %v300
                %v302 = vld [vmem:[%s224 + $0x260] sm:$0xff]
                %303 = vst [vmem:[%s225 + $0x130] sm:$0xff] %v302
                %v304 = vld [vmem:[%s224 + $0x268] sm:$0xff]
                %305 = vst [vmem:[%s225 + $0x138] sm:$0xff] %v304
                %v306 = vld [vmem:[%s224 + $0x280] sm:$0xff]
                %307 = vst [vmem:[%s225 + $0x140] sm:$0xff] %v306
                %v308 = vld [vmem:[%s224 + $0x288] sm:$0xff]
                %309 = vst [vmem:[%s225 + $0x148] sm:$0xff] %v308
                %v310 = vld [vmem:[%s224 + $0x2a0] sm:$0xff]
                %311 = vst [vmem:[%s225 + $0x150] sm:$0xff] %v310
                %v312 = vld [vmem:[%s224 + $0x2a8] sm:$0xff]
                %313 = vst [vmem:[%s225 + $0x158] sm:$0xff] %v312
                %v314 = vld [vmem:[%s224 + $0x2c0] sm:$0xff]
                %315 = vst [vmem:[%s225 + $0x160] sm:$0xff] %v314
                %v316 = vld [vmem:[%s224 + $0x2c8] sm:$0xff]
                %317 = vst [vmem:[%s225 + $0x168] sm:$0xff] %v316
                %v318 = vld [vmem:[%s224 + $0x2e0] sm:$0xff]
                %319 = vst [vmem:[%s225 + $0x170] sm:$0xff] %v318
                %v320 = vld [vmem:[%s224 + $0x2e8] sm:$0xff]
                %321 = vst [vmem:[%s225 + $0x178] sm:$0xff] %v320
                %v322 = vld [vmem:[%s224 + $0x300] sm:$0xff]
                %323 = vst [vmem:[%s225 + $0x180] sm:$0xff] %v322
                %v324 = vld [vmem:[%s224 + $0x308] sm:$0xff]
                %325 = vst [vmem:[%s225 + $0x188] sm:$0xff] %v324
                %v326 = vld [vmem:[%s224 + $0x320] sm:$0xff]
                %327 = vst [vmem:[%s225 + $0x190] sm:$0xff] %v326
                %v328 = vld [vmem:[%s224 + $0x328] sm:$0xff]
                %329 = vst [vmem:[%s225 + $0x198] sm:$0xff] %v328
                %v330 = vld [vmem:[%s224 + $0x340] sm:$0xff]
                %331 = vst [vmem:[%s225 + $0x1a0] sm:$0xff] %v330
                %v332 = vld [vmem:[%s224 + $0x348] sm:$0xff]
                %333 = vst [vmem:[%s225 + $0x1a8] sm:$0xff] %v332
                %v334 = vld [vmem:[%s224 + $0x360] sm:$0xff]
                %335 = vst [vmem:[%s225 + $0x1b0] sm:$0xff] %v334
                %v336 = vld [vmem:[%s224 + $0x368] sm:$0xff]
                %337 = vst [vmem:[%s225 + $0x1b8] sm:$0xff] %v336
                %v338 = vld [vmem:[%s224 + $0x380] sm:$0xff]
                %339 = vst [vmem:[%s225 + $0x1c0] sm:$0xff] %v338
                %v340 = vld [vmem:[%s224 + $0x388] sm:$0xff]
                %341 = vst [vmem:[%s225 + $0x1c8] sm:$0xff] %v340
                %v342 = vld [vmem:[%s224 + $0x3a0] sm:$0xff]
                %343 = vst [vmem:[%s225 + $0x1d0] sm:$0xff] %v342
                %v344 = vld [vmem:[%s224 + $0x3a8] sm:$0xff]
                %345 = vst [vmem:[%s225 + $0x1d8] sm:$0xff] %v344
                %v346 = vld [vmem:[%s224 + $0x3c0] sm:$0xff]
                %347 = vst [vmem:[%s225 + $0x1e0] sm:$0xff] %v346
                %v348 = vld [vmem:[%s224 + $0x3c8] sm:$0xff]
                %349 = vst [vmem:[%s225 + $0x1e8] sm:$0xff] %v348
                %v350 = vld [vmem:[%s224 + $0x3e0] sm:$0xff]
                %351 = vst [vmem:[%s225 + $0x1f0] sm:$0xff] %v350
                %v352 = vld [vmem:[%s224 + $0x3e8] sm:$0xff]
                %353 = vst [vmem:[%s225 + $0x1f8] sm:$0xff] %v352
              $region37: #{_lambda_.11} parent=31 // loop_footer
                %s223 = sadd.s32 1, %s219
              $region38: #{_lambda_.11} parent=31 // loop_footer_branch
                %218 = sbr.rel target = $region34
              $region39: #{_lambda_.11} parent=31 // loop_exit
                _
            $region32: #{_lambda_.11} parent=27 // pred_fallthru
              _
            // Predicated region
            $region40: #{_lambda_.11} parent=27 // pred_check
              _
            $region41: #{_lambda_.11} parent=27 // pred_check_branch
              %355 = sbr.rel target = $region43
            $region42: #{_lambda_.11} parent=27 // pred_region
              _
            $region43: #{_lambda_.11} parent=27 // pred_fallthru
              _
          $region28: #{_lambda_.11} parent=23 // pred_fallthru
            _
          %356 = vnop
        $region24: #{_lambda_.11} parent=19 // pred_fallthru
          _
        // Predicated region
        $region44: #{_lambda_.11} parent=19 // pred_check
          %p357 = pneg %p105
        $region45: #{_lambda_.11} parent=19 // pred_check_branch
          %359 = sbr.rel (%p357) target = $region47
        $region46: #{_lambda_.11} parent=19 // pred_region
          %s360 = smul.u32 4, %s18
          %p361 = scmp.lt.s32.totalorder %s360, 7
          %s362 = scalar_select %p361, %s360, 7
          %s363 = scalar_lea.vmem %s2, %s362
          %s364 = smul.u32 4, %s18
        $region47: #{_lambda_.11} parent=19 // pred_fallthru
          _
        // Predicated region
        $region48: #{_lambda_.11} parent=19 // pred_check
          %p365 = pneg %p133
        $region49: #{_lambda_.11} parent=19 // pred_check_branch
          %367 = sbr.rel (%p365) target = $region51
        $region50: #{_lambda_.11} parent=19 // pred_region
          %s368 = sand.u32 %s123, 1
          %s369 = sand.u32 %s123, 1
          %s370 = smul.addr %s369, 128
          %s371 = scalar_lea.vmem [#allocation4], %s370
          %s372 = smul.u32 8, %s17
          %s373 = smul.u32 4, %s18
          %s374 = smul.addr %s372, 8
          %s375 = sadd.s32 %s373, %s374
          %s376 = smul.addr %s375, 4
          %s377 = scalar_lea.vmem %s3, %s376
          // Predicated region
          $region52: #{_lambda_.11} parent=50 // pred_check
            _
          $region53: #{_lambda_.11} parent=50 // pred_check_branch
            %379 = sbr.rel (0) target = $region55
          $region54: #{_lambda_.11} parent=50 // pred_region
            // Predicated region
            $region56: #{_lambda_.11} parent=54 // pred_check
              _
            $region57: #{_lambda_.11} parent=54 // pred_check_branch
              %381 = sbr.rel (0) target = $region59
            $region58: #{_lambda_.11} parent=54 // pred_region
              loop: start=0, step=1, limit=1
              $region60: #{_lambda_.11} parent=58 // loop_pre_header
                _
              $region61: #{_lambda_.11} parent=58 // loop_header
                %s383 = sphi 0, %s387
                %p384 = scmp.ge.s32.totalorder %s383, 1
                %s388 = sphi %s377, %s377
                %s389 = sphi %s371, %s371
              $region62: #{_lambda_.11} parent=58 // loop_header_branch
                %386 = sbr.rel (%p384) target = $region66
              $region63: #{_lambda_.11} parent=58 // loop_body
                %v390 = vld [vmem:[%s388] sm:$0xff]
                %391 = vst [vmem:[%s389] sm:$0xff] %v390
                %v392 = vld [vmem:[%s388 + $0x8] sm:$0xff]
                %393 = vst [vmem:[%s389 + $0x8] sm:$0xff] %v392
                %v394 = vld [vmem:[%s388 + $0x20] sm:$0xff]
                %395 = vst [vmem:[%s389 + $0x10] sm:$0xff] %v394
                %v396 = vld [vmem:[%s388 + $0x28] sm:$0xff]
                %397 = vst [vmem:[%s389 + $0x18] sm:$0xff] %v396
                %v398 = vld [vmem:[%s388 + $0x40] sm:$0xff]
                %399 = vst [vmem:[%s389 + $0x20] sm:$0xff] %v398
                %v400 = vld [vmem:[%s388 + $0x48] sm:$0xff]
                %401 = vst [vmem:[%s389 + $0x28] sm:$0xff] %v400
                %v402 = vld [vmem:[%s388 + $0x60] sm:$0xff]
                %403 = vst [vmem:[%s389 + $0x30] sm:$0xff] %v402
                %v404 = vld [vmem:[%s388 + $0x68] sm:$0xff]
                %405 = vst [vmem:[%s389 + $0x38] sm:$0xff] %v404
                %v406 = vld [vmem:[%s388 + $0x80] sm:$0xff]
                %407 = vst [vmem:[%s389 + $0x40] sm:$0xff] %v406
                %v408 = vld [vmem:[%s388 + $0x88] sm:$0xff]
                %409 = vst [vmem:[%s389 + $0x48] sm:$0xff] %v408
                %v410 = vld [vmem:[%s388 + $0xa0] sm:$0xff]
                %411 = vst [vmem:[%s389 + $0x50] sm:$0xff] %v410
                %v412 = vld [vmem:[%s388 + $0xa8] sm:$0xff]
                %413 = vst [vmem:[%s389 + $0x58] sm:$0xff] %v412
                %v414 = vld [vmem:[%s388 + $0xc0] sm:$0xff]
                %415 = vst [vmem:[%s389 + $0x60] sm:$0xff] %v414
                %v416 = vld [vmem:[%s388 + $0xc8] sm:$0xff]
                %417 = vst [vmem:[%s389 + $0x68] sm:$0xff] %v416
                %v418 = vld [vmem:[%s388 + $0xe0] sm:$0xff]
                %419 = vst [vmem:[%s389 + $0x70] sm:$0xff] %v418
                %v420 = vld [vmem:[%s388 + $0xe8] sm:$0xff]
                %421 = vst [vmem:[%s389 + $0x78] sm:$0xff] %v420
              $region64: #{_lambda_.11} parent=58 // loop_footer
                %s387 = sadd.s32 1, %s383
              $region65: #{_lambda_.11} parent=58 // loop_footer_branch
                %382 = sbr.rel target = $region61
              $region66: #{_lambda_.11} parent=58 // loop_exit
                _
            $region59: #{_lambda_.11} parent=54 // pred_fallthru
              _
            // Predicated region
            $region67: #{_lambda_.11} parent=54 // pred_check
              _
            $region68: #{_lambda_.11} parent=54 // pred_check_branch
              %423 = sbr.rel target = $region70
            $region69: #{_lambda_.11} parent=54 // pred_region
              _
            $region70: #{_lambda_.11} parent=54 // pred_fallthru
              _
          $region55: #{_lambda_.11} parent=50 // pred_fallthru
            _
          %424 = vnop
        $region51: #{_lambda_.11} parent=19 // pred_fallthru
          _
      $region20: #{_lambda_.11} parent=5 // pred_fallthru
        _
      %p425 = scmp.le.s32.totalorder 1, %s10
      %p426 = scmp.lt.s32.totalorder %s10, 3
      %p427 = pnand %p425, %p426
      %p428 = pneg %p427
      // Predicated region
      $region71: #{_lambda_.11} parent=5 // pred_check
        _
      $region72: #{_lambda_.11} parent=5 // pred_check_branch
        %430 = sbr.rel (%p427) target = $region74
      $region73: #{_lambda_.11} parent=5 // pred_region
        %s431 = ssub.s32 %s10, 1
        %s432 = sand.u32 %s72, 1
        %s433 = sand.u32 %s72, 1
        %s434 = smul.addr %s433, 512
        %s435 = scalar_lea.vmem [#allocation3], %s434
        // Predicated region
        $region75: #{_lambda_.11} parent=73 // pred_check
          %p436 = pneg %p85
        $region76: #{_lambda_.11} parent=73 // pred_check_branch
          %438 = sbr.rel (%p436) target = $region78
        $region77: #{_lambda_.11} parent=73 // pred_region
          _
        $region78: #{_lambda_.11} parent=73 // pred_fallthru
          _
        %s439 = sand.u32 %s126, 1
        %s440 = sand.u32 %s126, 1
        %s441 = smul.addr %s440, 128
        %s442 = scalar_lea.vmem [#allocation4], %s441
        // Predicated region
        $region79: #{_lambda_.11} parent=73 // pred_check
          %p443 = pneg %p139
        $region80: #{_lambda_.11} parent=73 // pred_check_branch
          %445 = sbr.rel (%p443) target = $region82
        $region81: #{_lambda_.11} parent=73 // pred_region
          _
        $region82: #{_lambda_.11} parent=73 // pred_fallthru
          _
        %s446 = smul.u32 8, %s20
        %s447 = smul.u32 2, %s22
        %p448 = scmp.lt.s32.totalorder %s446, 7
        %s449 = scalar_select %p448, %s446, 7
        %p450 = scmp.lt.s32.totalorder %s447, 1
        %s451 = scalar_select %p450, %s447, 1
        %s452 = smul.addr %s449, 2
        %s453 = sadd.s32 %s451, %s452
        %s454 = smul.addr %s453, 4
        %s455 = scalar_lea.vmem %s0, %s454
        %p456 = pneg %p57
        %p457 = pneg %p54
        %s458 = sand.u32 %s72, 1
        %s459 = sand.u32 %s72, 1
        %s460 = smul.addr %s459, 512
        %s461 = scalar_lea.vmem [#allocation3], %s460
        %p462 = pneg %p85
        %p463 = pneg %p82
        %s464 = smul.u32 4, %s21
        %p465 = scmp.lt.s32.totalorder %s464, 7
        %s466 = scalar_select %p465, %s464, 7
        %s467 = scalar_lea.vmem %s2, %s466
        %p468 = pneg %p111
        %p469 = pneg %p108
        %s470 = sand.u32 %s126, 1
        %s471 = sand.u32 %s126, 1
        %s472 = smul.addr %s471, 128
        %s473 = scalar_lea.vmem [#allocation4], %s472
        %p474 = pneg %p139
        %p475 = pneg %p136
        %p476 = pneg %p167
        %p477 = pneg %p164
        %s478 = sand.u32 %s154, 1
        %s479 = sand.u32 %s154, 1
        %s480 = smul.addr %s479, 128
        %s481 = scalar_lea.vmem [#allocation5], %s480
        %s482 = smul.u32 8, %s20
        %s483 = smul.u32 2, %s22
        %p484 = scmp.lt.s32.totalorder %s482, 7
        %s485 = scalar_select %p484, %s482, 7
        %p486 = scmp.lt.s32.totalorder %s483, 1
        %s487 = scalar_select %p486, %s483, 1
        %s488 = smul.addr %s485, 2
        %s489 = sadd.s32 %s487, %s488
        %s490 = smul.addr %s489, 4
        %s491 = scalar_lea.vmem %s0, %s490
        %s492 = smul.u32 8, %s20
        %s493 = smul.u32 2, %s22
        %s494 = smul.u32 32, %s22
        %s495 = smul.u32 4, %s21
        %s496 = smul.u32 4, %s21
        %p497 = scmp.lt.s32.totalorder %s496, 7
        %s498 = scalar_select %p497, %s496, 7
        %s499 = scalar_lea.vmem %s2, %s498
        %s500 = smul.u32 4, %s21
        %s501 = smul.u32 8, %s20
        %s502 = smul.u32 4, %s21
        %s503 = smul.u32 8, %s20
        %s504 = smul.u32 4, %s21
        %p505 = scmp.eq.s32.totalorder %s22, 0
        // Predicated region
        $region83: #{_lambda_.11} parent=73 // pred_check
          %p506 = pneg %p505
        $region84: #{_lambda_.11} parent=73 // pred_check_branch
          %508 = sbr.rel (%p506) target = $region86
        $region85: #{_lambda_.11} parent=73 // pred_region
          %509 = vst [vmem:[#allocation2] sm:$0xff] 0.0
          %510 = vst [vmem:[#allocation2 + $0x8] sm:$0xff] 0.0
          %511 = vst [vmem:[#allocation2 + $0x10] sm:$0xff] 0.0
          %512 = vst [vmem:[#allocation2 + $0x18] sm:$0xff] 0.0
          %513 = vst [vmem:[#allocation2 + $0x20] sm:$0xff] 0.0
          %514 = vst [vmem:[#allocation2 + $0x28] sm:$0xff] 0.0
          %515 = vst [vmem:[#allocation2 + $0x30] sm:$0xff] 0.0
          %516 = vst [vmem:[#allocation2 + $0x38] sm:$0xff] 0.0
          %517 = vst [vmem:[#allocation2 + $0x40] sm:$0xff] 0.0
          %518 = vst [vmem:[#allocation2 + $0x48] sm:$0xff] 0.0
          %519 = vst [vmem:[#allocation2 + $0x50] sm:$0xff] 0.0
          %520 = vst [vmem:[#allocation2 + $0x58] sm:$0xff] 0.0
          %521 = vst [vmem:[#allocation2 + $0x60] sm:$0xff] 0.0
          %522 = vst [vmem:[#allocation2 + $0x68] sm:$0xff] 0.0
          %523 = vst [vmem:[#allocation2 + $0x70] sm:$0xff] 0.0
          %524 = vst [vmem:[#allocation2 + $0x78] sm:$0xff] 0.0
          %525 = vst [vmem:[#allocation2 + $0x80] sm:$0xff] 0.0
          %526 = vst [vmem:[#allocation2 + $0x88] sm:$0xff] 0.0
          %527 = vst [vmem:[#allocation2 + $0x90] sm:$0xff] 0.0
          %528 = vst [vmem:[#allocation2 + $0x98] sm:$0xff] 0.0
          %529 = vst [vmem:[#allocation2 + $0xa0] sm:$0xff] 0.0
          %530 = vst [vmem:[#allocation2 + $0xa8] sm:$0xff] 0.0
          %531 = vst [vmem:[#allocation2 + $0xb0] sm:$0xff] 0.0
          %532 = vst [vmem:[#allocation2 + $0xb8] sm:$0xff] 0.0
          %533 = vst [vmem:[#allocation2 + $0xc0] sm:$0xff] 0.0
          %534 = vst [vmem:[#allocation2 + $0xc8] sm:$0xff] 0.0
          %535 = vst [vmem:[#allocation2 + $0xd0] sm:$0xff] 0.0
          %536 = vst [vmem:[#allocation2 + $0xd8] sm:$0xff] 0.0
          %537 = vst [vmem:[#allocation2 + $0xe0] sm:$0xff] 0.0
          %538 = vst [vmem:[#allocation2 + $0xe8] sm:$0xff] 0.0
          %539 = vst [vmem:[#allocation2 + $0xf0] sm:$0xff] 0.0
          %540 = vst [vmem:[#allocation2 + $0xf8] sm:$0xff] 0.0
        $region86: #{_lambda_.11} parent=73 // pred_fallthru
          _
        %v541 = vld [vmem:[#allocation2] sm:$0xff]
        %v542 = vld [vmem:[#allocation2 + $0x8] sm:$0xff]
        %v543 = vld [vmem:[#allocation2 + $0x10] sm:$0xff]
        %v544 = vld [vmem:[#allocation2 + $0x18] sm:$0xff]
        %v545 = vld [vmem:[#allocation2 + $0x20] sm:$0xff]
        %v546 = vld [vmem:[#allocation2 + $0x28] sm:$0xff]
        %v547 = vld [vmem:[#allocation2 + $0x30] sm:$0xff]
        %v548 = vld [vmem:[#allocation2 + $0x38] sm:$0xff]
        %v549 = vld [vmem:[#allocation2 + $0x40] sm:$0xff]
        %v550 = vld [vmem:[#allocation2 + $0x48] sm:$0xff]
        %v551 = vld [vmem:[#allocation2 + $0x50] sm:$0xff]
        %v552 = vld [vmem:[#allocation2 + $0x58] sm:$0xff]
        %v553 = vld [vmem:[#allocation2 + $0x60] sm:$0xff]
        %v554 = vld [vmem:[#allocation2 + $0x68] sm:$0xff]
        %v555 = vld [vmem:[#allocation2 + $0x70] sm:$0xff]
        %v556 = vld [vmem:[#allocation2 + $0x78] sm:$0xff]
        %v557 = vld [vmem:[#allocation2 + $0x80] sm:$0xff]
        %v558 = vld [vmem:[#allocation2 + $0x88] sm:$0xff]
        %v559 = vld [vmem:[#allocation2 + $0x90] sm:$0xff]
        %v560 = vld [vmem:[#allocation2 + $0x98] sm:$0xff]
        %v561 = vld [vmem:[#allocation2 + $0xa0] sm:$0xff]
        %v562 = vld [vmem:[#allocation2 + $0xa8] sm:$0xff]
        %v563 = vld [vmem:[#allocation2 + $0xb0] sm:$0xff]
        %v564 = vld [vmem:[#allocation2 + $0xb8] sm:$0xff]
        %v565 = vld [vmem:[#allocation2 + $0xc0] sm:$0xff]
        %v566 = vld [vmem:[#allocation2 + $0xc8] sm:$0xff]
        %v567 = vld [vmem:[#allocation2 + $0xd0] sm:$0xff]
        %v568 = vld [vmem:[#allocation2 + $0xd8] sm:$0xff]
        %v569 = vld [vmem:[#allocation2 + $0xe0] sm:$0xff]
        %v570 = vld [vmem:[#allocation2 + $0xe8] sm:$0xff]
        %v571 = vld [vmem:[#allocation2 + $0xf0] sm:$0xff]
        %v572 = vld [vmem:[#allocation2 + $0xf8] sm:$0xff]
        %v573 = vld [vmem:[%s491] sm:$0xff]
        %v574 = vld [vmem:[%s491 + $0x8] sm:$0xff]
        %v575 = vld [vmem:[%s491 + $0x10] sm:$0xff]
        %v576 = vld [vmem:[%s491 + $0x18] sm:$0xff]
        %v577 = vld [vmem:[%s491 + $0x20] sm:$0xff]
        %v578 = vld [vmem:[%s491 + $0x28] sm:$0xff]
        %v579 = vld [vmem:[%s491 + $0x30] sm:$0xff]
        %v580 = vld [vmem:[%s491 + $0x38] sm:$0xff]
        %v581 = vld [vmem:[%s435] sm:$0xff]
        %v582 = vld [vmem:[%s435 + $0x8] sm:$0xff]
        %v583 = vld [vmem:[%s435 + $0x10] sm:$0xff]
        %v584 = vld [vmem:[%s435 + $0x18] sm:$0xff]
        %v585 = vld [vmem:[%s435 + $0x20] sm:$0xff]
        %v586 = vld [vmem:[%s435 + $0x28] sm:$0xff]
        %v587 = vld [vmem:[%s435 + $0x30] sm:$0xff]
        %v588 = vld [vmem:[%s435 + $0x38] sm:$0xff]
        %v589 = vld [vmem:[%s435 + $0x40] sm:$0xff]
        %v590 = vld [vmem:[%s435 + $0x48] sm:$0xff]
        %v591 = vld [vmem:[%s435 + $0x50] sm:$0xff]
        %v592 = vld [vmem:[%s435 + $0x58] sm:$0xff]
        %v593 = vld [vmem:[%s435 + $0x60] sm:$0xff]
        %v594 = vld [vmem:[%s435 + $0x68] sm:$0xff]
        %v595 = vld [vmem:[%s435 + $0x70] sm:$0xff]
        %v596 = vld [vmem:[%s435 + $0x78] sm:$0xff]
        %v597 = vld [vmem:[%s435 + $0x80] sm:$0xff]
        %v598 = vld [vmem:[%s435 + $0x88] sm:$0xff]
        %v599 = vld [vmem:[%s435 + $0x90] sm:$0xff]
        %v600 = vld [vmem:[%s435 + $0x98] sm:$0xff]
        %v601 = vld [vmem:[%s435 + $0xa0] sm:$0xff]
        %v602 = vld [vmem:[%s435 + $0xa8] sm:$0xff]
        %v603 = vld [vmem:[%s435 + $0xb0] sm:$0xff]
        %v604 = vld [vmem:[%s435 + $0xb8] sm:$0xff]
        %v605 = vld [vmem:[%s435 + $0xc0] sm:$0xff]
        %v606 = vld [vmem:[%s435 + $0xc8] sm:$0xff]
        %v607 = vld [vmem:[%s435 + $0xd0] sm:$0xff]
        %v608 = vld [vmem:[%s435 + $0xd8] sm:$0xff]
        %v609 = vld [vmem:[%s435 + $0xe0] sm:$0xff]
        %v610 = vld [vmem:[%s435 + $0xe8] sm:$0xff]
        %v611 = vld [vmem:[%s435 + $0xf0] sm:$0xff]
        %v612 = vld [vmem:[%s435 + $0xf8] sm:$0xff]
        %v613 = vld [vmem:[%s435 + $0x100] sm:$0xff]
        %v614 = vld [vmem:[%s435 + $0x108] sm:$0xff]
        %v615 = vld [vmem:[%s435 + $0x110] sm:$0xff]
        %v616 = vld [vmem:[%s435 + $0x118] sm:$0xff]
        %v617 = vld [vmem:[%s435 + $0x120] sm:$0xff]
        %v618 = vld [vmem:[%s435 + $0x128] sm:$0xff]
        %v619 = vld [vmem:[%s435 + $0x130] sm:$0xff]
        %v620 = vld [vmem:[%s435 + $0x138] sm:$0xff]
        %v621 = vld [vmem:[%s435 + $0x140] sm:$0xff]
        %v622 = vld [vmem:[%s435 + $0x148] sm:$0xff]
        %v623 = vld [vmem:[%s435 + $0x150] sm:$0xff]
        %v624 = vld [vmem:[%s435 + $0x158] sm:$0xff]
        %v625 = vld [vmem:[%s435 + $0x160] sm:$0xff]
        %v626 = vld [vmem:[%s435 + $0x168] sm:$0xff]
        %v627 = vld [vmem:[%s435 + $0x170] sm:$0xff]
        %v628 = vld [vmem:[%s435 + $0x178] sm:$0xff]
        %v629 = vld [vmem:[%s435 + $0x180] sm:$0xff]
        %v630 = vld [vmem:[%s435 + $0x188] sm:$0xff]
        %v631 = vld [vmem:[%s435 + $0x190] sm:$0xff]
        %v632 = vld [vmem:[%s435 + $0x198] sm:$0xff]
        %v633 = vld [vmem:[%s435 + $0x1a0] sm:$0xff]
        %v634 = vld [vmem:[%s435 + $0x1a8] sm:$0xff]
        %v635 = vld [vmem:[%s435 + $0x1b0] sm:$0xff]
        %v636 = vld [vmem:[%s435 + $0x1b8] sm:$0xff]
        %v637 = vld [vmem:[%s435 + $0x1c0] sm:$0xff]
        %v638 = vld [vmem:[%s435 + $0x1c8] sm:$0xff]
        %v639 = vld [vmem:[%s435 + $0x1d0] sm:$0xff]
        %v640 = vld [vmem:[%s435 + $0x1d8] sm:$0xff]
        %v641 = vld [vmem:[%s435 + $0x1e0] sm:$0xff]
        %v642 = vld [vmem:[%s435 + $0x1e8] sm:$0xff]
        %v643 = vld [vmem:[%s435 + $0x1f0] sm:$0xff]
        %v644 = vld [vmem:[%s435 + $0x1f8] sm:$0xff]
        %v653 = vunpack.c.l.b16 %v573
        %v654 = vunpack.c.h.b16 %v573
        %v655 = vunpack.c.l.b16 %v574
        %v656 = vunpack.c.h.b16 %v574
        %v657 = vunpack.c.l.b16 %v575
        %v658 = vunpack.c.h.b16 %v575
        %v659 = vunpack.c.l.b16 %v576
        %v660 = vunpack.c.h.b16 %v576
        %v661 = vunpack.c.l.b16 %v577
        %v662 = vunpack.c.h.b16 %v577
        %v663 = vunpack.c.l.b16 %v578
        %v664 = vunpack.c.h.b16 %v578
        %v665 = vunpack.c.l.b16 %v579
        %v666 = vunpack.c.h.b16 %v579
        %v667 = vunpack.c.l.b16 %v580
        %v668 = vunpack.c.h.b16 %v580
        %v669 = vpack.c.b16 %v655, %v653
        %v670 = vpack.c.b16 %v656, %v654
        %v671 = vpack.c.b16 %v659, %v657
        %v672 = vpack.c.b16 %v660, %v658
        %v673 = vpack.c.b16 %v663, %v661
        %v674 = vpack.c.b16 %v664, %v662
        %v675 = vpack.c.b16 %v667, %v665
        %v676 = vpack.c.b16 %v668, %v666
        %v749 = vunpack.c.l.b16 %v581
        %v750 = vunpack.c.h.b16 %v581
        %v751 = vunpack.c.l.b16 %v582
        %v752 = vunpack.c.h.b16 %v582
        %v753 = vunpack.c.l.b16 %v583
        %v754 = vunpack.c.h.b16 %v583
        %v755 = vunpack.c.l.b16 %v584
        %v756 = vunpack.c.h.b16 %v584
        %v757 = vunpack.c.l.b16 %v585
        %v758 = vunpack.c.h.b16 %v585
        %v759 = vunpack.c.l.b16 %v586
        %v760 = vunpack.c.h.b16 %v586
        %v761 = vunpack.c.l.b16 %v587
        %v762 = vunpack.c.h.b16 %v587
        %v763 = vunpack.c.l.b16 %v588
        %v764 = vunpack.c.h.b16 %v588
        %v765 = vunpack.c.l.b16 %v589
        %v766 = vunpack.c.h.b16 %v589
        %v767 = vunpack.c.l.b16 %v590
        %v768 = vunpack.c.h.b16 %v590
        %v769 = vunpack.c.l.b16 %v591
        %v770 = vunpack.c.h.b16 %v591
        %v771 = vunpack.c.l.b16 %v592
        %v772 = vunpack.c.h.b16 %v592
        %v773 = vunpack.c.l.b16 %v593
        %v774 = vunpack.c.h.b16 %v593
        %v775 = vunpack.c.l.b16 %v594
        %v776 = vunpack.c.h.b16 %v594
        %v777 = vunpack.c.l.b16 %v595
        %v778 = vunpack.c.h.b16 %v595
        %v779 = vunpack.c.l.b16 %v596
        %v780 = vunpack.c.h.b16 %v596
        %v781 = vunpack.c.l.b16 %v597
        %v782 = vunpack.c.h.b16 %v597
        %v783 = vunpack.c.l.b16 %v598
        %v784 = vunpack.c.h.b16 %v598
        %v785 = vunpack.c.l.b16 %v599
        %v786 = vunpack.c.h.b16 %v599
        %v787 = vunpack.c.l.b16 %v600
        %v788 = vunpack.c.h.b16 %v600
        %v789 = vunpack.c.l.b16 %v601
        %v790 = vunpack.c.h.b16 %v601
        %v791 = vunpack.c.l.b16 %v602
        %v792 = vunpack.c.h.b16 %v602
        %v793 = vunpack.c.l.b16 %v603
        %v794 = vunpack.c.h.b16 %v603
        %v795 = vunpack.c.l.b16 %v604
        %v796 = vunpack.c.h.b16 %v604
        %v797 = vunpack.c.l.b16 %v605
        %v798 = vunpack.c.h.b16 %v605
        %v799 = vunpack.c.l.b16 %v606
        %v800 = vunpack.c.h.b16 %v606
        %v801 = vunpack.c.l.b16 %v607
        %v802 = vunpack.c.h.b16 %v607
        %v803 = vunpack.c.l.b16 %v608
        %v804 = vunpack.c.h.b16 %v608
        %v805 = vunpack.c.l.b16 %v609
        %v806 = vunpack.c.h.b16 %v609
        %v807 = vunpack.c.l.b16 %v610
        %v808 = vunpack.c.h.b16 %v610
        %v809 = vunpack.c.l.b16 %v611
        %v810 = vunpack.c.h.b16 %v611
        %v811 = vunpack.c.l.b16 %v612
        %v812 = vunpack.c.h.b16 %v612
        %v813 = vunpack.c.l.b16 %v613
        %v814 = vunpack.c.h.b16 %v613
        %v815 = vunpack.c.l.b16 %v614
        %v816 = vunpack.c.h.b16 %v614
        %v817 = vunpack.c.l.b16 %v615
        %v818 = vunpack.c.h.b16 %v615
        %v819 = vunpack.c.l.b16 %v616
        %v820 = vunpack.c.h.b16 %v616
        %v821 = vunpack.c.l.b16 %v617
        %v822 = vunpack.c.h.b16 %v617
        %v823 = vunpack.c.l.b16 %v618
        %v824 = vunpack.c.h.b16 %v618
        %v825 = vunpack.c.l.b16 %v619
        %v826 = vunpack.c.h.b16 %v619
        %v827 = vunpack.c.l.b16 %v620
        %v828 = vunpack.c.h.b16 %v620
        %v829 = vunpack.c.l.b16 %v621
        %v830 = vunpack.c.h.b16 %v621
        %v831 = vunpack.c.l.b16 %v622
        %v832 = vunpack.c.h.b16 %v622
        %v833 = vunpack.c.l.b16 %v623
        %v834 = vunpack.c.h.b16 %v623
        %v835 = vunpack.c.l.b16 %v624
        %v836 = vunpack.c.h.b16 %v624
        %v837 = vunpack.c.l.b16 %v625
        %v838 = vunpack.c.h.b16 %v625
        %v839 = vunpack.c.l.b16 %v626
        %v840 = vunpack.c.h.b16 %v626
        %v841 = vunpack.c.l.b16 %v627
        %v842 = vunpack.c.h.b16 %v627
        %v843 = vunpack.c.l.b16 %v628
        %v844 = vunpack.c.h.b16 %v628
        %v845 = vunpack.c.l.b16 %v629
        %v846 = vunpack.c.h.b16 %v629
        %v847 = vunpack.c.l.b16 %v630
        %v848 = vunpack.c.h.b16 %v630
        %v849 = vunpack.c.l.b16 %v631
        %v850 = vunpack.c.h.b16 %v631
        %v851 = vunpack.c.l.b16 %v632
        %v852 = vunpack.c.h.b16 %v632
        %v853 = vunpack.c.l.b16 %v633
        %v854 = vunpack.c.h.b16 %v633
        %v855 = vunpack.c.l.b16 %v634
        %v856 = vunpack.c.h.b16 %v634
        %v857 = vunpack.c.l.b16 %v635
        %v858 = vunpack.c.h.b16 %v635
        %v859 = vunpack.c.l.b16 %v636
        %v860 = vunpack.c.h.b16 %v636
        %v861 = vunpack.c.l.b16 %v637
        %v862 = vunpack.c.h.b16 %v637
        %v863 = vunpack.c.l.b16 %v638
        %v864 = vunpack.c.h.b16 %v638
        %v865 = vunpack.c.l.b16 %v639
        %v866 = vunpack.c.h.b16 %v639
        %v867 = vunpack.c.l.b16 %v640
        %v868 = vunpack.c.h.b16 %v640
        %v869 = vunpack.c.l.b16 %v641
        %v870 = vunpack.c.h.b16 %v641
        %v871 = vunpack.c.l.b16 %v642
        %v872 = vunpack.c.h.b16 %v642
        %v873 = vunpack.c.l.b16 %v643
        %v874 = vunpack.c.h.b16 %v643
        %v875 = vunpack.c.l.b16 %v644
        %v876 = vunpack.c.h.b16 %v644
        %v877 = vpack.c.b16 %v753, %v749
        %v878 = vpack.c.b16 %v754, %v750
        %v879 = vpack.c.b16 %v755, %v751
        %v880 = vpack.c.b16 %v756, %v752
        %v881 = vpack.c.b16 %v761, %v757
        %v882 = vpack.c.b16 %v762, %v758
        %v883 = vpack.c.b16 %v763, %v759
        %v884 = vpack.c.b16 %v764, %v760
        %v885 = vpack.c.b16 %v769, %v765
        %v886 = vpack.c.b16 %v770, %v766
        %v887 = vpack.c.b16 %v771, %v767
        %v888 = vpack.c.b16 %v772, %v768
        %v889 = vpack.c.b16 %v777, %v773
        %v890 = vpack.c.b16 %v778, %v774
        %v891 = vpack.c.b16 %v779, %v775
        %v892 = vpack.c.b16 %v780, %v776
        %v893 = vpack.c.b16 %v785, %v781
        %v894 = vpack.c.b16 %v786, %v782
        %v895 = vpack.c.b16 %v787, %v783
        %v896 = vpack.c.b16 %v788, %v784
        %v897 = vpack.c.b16 %v793, %v789
        %v898 = vpack.c.b16 %v794, %v790
        %v899 = vpack.c.b16 %v795, %v791
        %v900 = vpack.c.b16 %v796, %v792
        %v901 = vpack.c.b16 %v801, %v797
        %v902 = vpack.c.b16 %v802, %v798
        %v903 = vpack.c.b16 %v803, %v799
        %v904 = vpack.c.b16 %v804, %v800
        %v905 = vpack.c.b16 %v809, %v805
        %v906 = vpack.c.b16 %v810, %v806
        %v907 = vpack.c.b16 %v811, %v807
        %v908 = vpack.c.b16 %v812, %v808
        %v909 = vpack.c.b16 %v817, %v813
        %v910 = vpack.c.b16 %v818, %v814
        %v911 = vpack.c.b16 %v819, %v815
        %v912 = vpack.c.b16 %v820, %v816
        %v913 = vpack.c.b16 %v825, %v821
        %v914 = vpack.c.b16 %v826, %v822
        %v915 = vpack.c.b16 %v827, %v823
        %v916 = vpack.c.b16 %v828, %v824
        %v917 = vpack.c.b16 %v833, %v829
        %v918 = vpack.c.b16 %v834, %v830
        %v919 = vpack.c.b16 %v835, %v831
        %v920 = vpack.c.b16 %v836, %v832
        %v921 = vpack.c.b16 %v841, %v837
        %v922 = vpack.c.b16 %v842, %v838
        %v923 = vpack.c.b16 %v843, %v839
        %v924 = vpack.c.b16 %v844, %v840
        %v925 = vpack.c.b16 %v849, %v845
        %v926 = vpack.c.b16 %v850, %v846
        %v927 = vpack.c.b16 %v851, %v847
        %v928 = vpack.c.b16 %v852, %v848
        %v929 = vpack.c.b16 %v857, %v853
        %v930 = vpack.c.b16 %v858, %v854
        %v931 = vpack.c.b16 %v859, %v855
        %v932 = vpack.c.b16 %v860, %v856
        %v933 = vpack.c.b16 %v865, %v861
        %v934 = vpack.c.b16 %v866, %v862
        %v935 = vpack.c.b16 %v867, %v863
        %v936 = vpack.c.b16 %v868, %v864
        %v937 = vpack.c.b16 %v873, %v869
        %v938 = vpack.c.b16 %v874, %v870
        %v939 = vpack.c.b16 %v875, %v871
        %v940 = vpack.c.b16 %v876, %v872
        %1005 = vmatprep.subr.bf16.mxu0 %v878
        %1006 = vmatpush1.bf16.msra.mxu0 %v877
        %1007 = vmatprep.subr.bf16.mxu0 %v882
        %1008 = vmatpush1.bf16.msra.mxu0 %v881
        %1009 = vmatprep.subr.bf16.mxu0 %v886
        %1010 = vmatpush1.bf16.msra.mxu0 %v885
        %1011 = vmatprep.subr.bf16.mxu0 %v890
        %1012 = vmatpush1.bf16.msra.mxu0 %v889
        %1013 = vmatprep.subr.bf16.mxu0 %v894
        %1014 = vmatpush1.bf16.msra.mxu0 %v893
        %1015 = vmatprep.subr.bf16.mxu0 %v898
        %1016 = vmatpush1.bf16.msra.mxu0 %v897
        %1017 = vmatprep.subr.bf16.mxu0 %v902
        %1018 = vmatpush1.bf16.msra.mxu0 %v901
        %1019 = vmatprep.subr.bf16.mxu0 %v906
        %1020 = vmatpush1.bf16.msra.mxu0 %v905
        %1021 = vmatprep.subr.bf16.mxu0 %v910
        %1022 = vmatpush1.bf16.msra.mxu0 %v909
        %1023 = vmatprep.subr.bf16.mxu0 %v914
        %1024 = vmatpush1.bf16.msra.mxu0 %v913
        %1025 = vmatprep.subr.bf16.mxu0 %v918
        %1026 = vmatpush1.bf16.msra.mxu0 %v917
        %1027 = vmatprep.subr.bf16.mxu0 %v922
        %1028 = vmatpush1.bf16.msra.mxu0 %v921
        %1029 = vmatprep.subr.bf16.mxu0 %v926
        %1030 = vmatpush1.bf16.msra.mxu0 %v925
        %1031 = vmatprep.subr.bf16.mxu0 %v930
        %1032 = vmatpush1.bf16.msra.mxu0 %v929
        %1033 = vmatprep.subr.bf16.mxu0 %v934
        %1034 = vmatpush1.bf16.msra.mxu0 %v933
        %1035 = vmatprep.subr.bf16.mxu0 %v938
        %1036 = vmatpush1.bf16.msra.mxu0 %v937
        %1037 = vmatprep.mubr.bf16.mxu0 %v670
        %1038 = vmatmul.mubr.bf16.gmra.mrb[0].mxu0 %v669
        %v1039 = vpop.f32.mrb[0].mxu0
        %v1040 = vadd.f32 0.0, %v1039
        %v1041 = vpop.f32.mrb[0].mxu0
        %v1042 = vadd.f32 0.0, %v1041
        %v1043 = vpop.f32.mrb[0].mxu0
        %v1044 = vadd.f32 0.0, %v1043
        %v1045 = vpop.f32.mrb[0].mxu0
        %v1046 = vadd.f32 0.0, %v1045
        %1047 = vmatprep.mubr.bf16.mxu0 %v672
        %1048 = vmatmul.mubr.bf16.gmra.mrb[0].mxu0 %v671
        %v1049 = vpop.f32.mrb[0].mxu0
        %v1050 = vadd.f32 0.0, %v1049
        %v1051 = vpop.f32.mrb[0].mxu0
        %v1052 = vadd.f32 0.0, %v1051
        %v1053 = vpop.f32.mrb[0].mxu0
        %v1054 = vadd.f32 0.0, %v1053
        %v1055 = vpop.f32.mrb[0].mxu0
        %v1056 = vadd.f32 0.0, %v1055
        %1057 = vmatprep.mubr.bf16.mxu0 %v674
        %1058 = vmatmul.mubr.bf16.gmra.mrb[0].mxu0 %v673
        %v1059 = vpop.f32.mrb[0].mxu0
        %v1060 = vadd.f32 0.0, %v1059
        %v1061 = vpop.f32.mrb[0].mxu0
        %v1062 = vadd.f32 0.0, %v1061
        %v1063 = vpop.f32.mrb[0].mxu0
        %v1064 = vadd.f32 0.0, %v1063
        %v1065 = vpop.f32.mrb[0].mxu0
        %v1066 = vadd.f32 0.0, %v1065
        %1067 = vmatprep.mubr.bf16.mxu0 %v676
        %1068 = vmatmul.mubr.bf16.gmra.mrb[0].mxu0 %v675
        %v1069 = vpop.f32.mrb[0].mxu0
        %v1070 = vadd.f32 0.0, %v1069
        %v1071 = vpop.f32.mrb[0].mxu0
        %v1072 = vadd.f32 0.0, %v1071
        %v1073 = vpop.f32.mrb[0].mxu0
        %v1074 = vadd.f32 0.0, %v1073
        %v1075 = vpop.f32.mrb[0].mxu0
        %v1076 = vadd.f32 0.0, %v1075
        %1077 = vdwg.mxu0
        %1078 = vmatprep.subr.bf16.mxu0 %v880
        %1079 = vmatpush1.bf16.msra.mxu0 %v879
        %1080 = vmatprep.subr.bf16.mxu0 %v884
        %1081 = vmatpush1.bf16.msra.mxu0 %v883
        %1082 = vmatprep.subr.bf16.mxu0 %v888
        %1083 = vmatpush1.bf16.msra.mxu0 %v887
        %1084 = vmatprep.subr.bf16.mxu0 %v892
        %1085 = vmatpush1.bf16.msra.mxu0 %v891
        %1086 = vmatprep.subr.bf16.mxu0 %v896
        %1087 = vmatpush1.bf16.msra.mxu0 %v895
        %1088 = vmatprep.subr.bf16.mxu0 %v900
        %1089 = vmatpush1.bf16.msra.mxu0 %v899
        %1090 = vmatprep.subr.bf16.mxu0 %v904
        %1091 = vmatpush1.bf16.msra.mxu0 %v903
        %1092 = vmatprep.subr.bf16.mxu0 %v908
        %1093 = vmatpush1.bf16.msra.mxu0 %v907
        %1094 = vmatprep.subr.bf16.mxu0 %v912
        %1095 = vmatpush1.bf16.msra.mxu0 %v911
        %1096 = vmatprep.subr.bf16.mxu0 %v916
        %1097 = vmatpush1.bf16.msra.mxu0 %v915
        %1098 = vmatprep.subr.bf16.mxu0 %v920
        %1099 = vmatpush1.bf16.msra.mxu0 %v919
        %1100 = vmatprep.subr.bf16.mxu0 %v924
        %1101 = vmatpush1.bf16.msra.mxu0 %v923
        %1102 = vmatprep.subr.bf16.mxu0 %v928
        %1103 = vmatpush1.bf16.msra.mxu0 %v927
        %1104 = vmatprep.subr.bf16.mxu0 %v932
        %1105 = vmatpush1.bf16.msra.mxu0 %v931
        %1106 = vmatprep.subr.bf16.mxu0 %v936
        %1107 = vmatpush1.bf16.msra.mxu0 %v935
        %1108 = vmatprep.subr.bf16.mxu0 %v940
        %1109 = vmatpush1.bf16.msra.mxu0 %v939
        %1110 = vmatprep.mubr.bf16.mxu0 %v670
        %1111 = vmatmul.mubr.bf16.gmra.mrb[0].mxu0 %v669
        %v1112 = vpop.f32.mrb[0].mxu0
        %v1113 = vadd.f32 0.0, %v1112
        %v1114 = vpop.f32.mrb[0].mxu0
        %v1115 = vadd.f32 0.0, %v1114
        %v1116 = vpop.f32.mrb[0].mxu0
        %v1117 = vadd.f32 0.0, %v1116
        %v1118 = vpop.f32.mrb[0].mxu0
        %v1119 = vadd.f32 0.0, %v1118
        %1120 = vmatprep.mubr.bf16.mxu0 %v672
        %1121 = vmatmul.mubr.bf16.gmra.mrb[0].mxu0 %v671
        %v1122 = vpop.f32.mrb[0].mxu0
        %v1123 = vadd.f32 0.0, %v1122
        %v1124 = vpop.f32.mrb[0].mxu0
        %v1125 = vadd.f32 0.0, %v1124
        %v1126 = vpop.f32.mrb[0].mxu0
        %v1127 = vadd.f32 0.0, %v1126
        %v1128 = vpop.f32.mrb[0].mxu0
        %v1129 = vadd.f32 0.0, %v1128
        %1130 = vmatprep.mubr.bf16.mxu0 %v674
        %1131 = vmatmul.mubr.bf16.gmra.mrb[0].mxu0 %v673
        %v1132 = vpop.f32.mrb[0].mxu0
        %v1133 = vadd.f32 0.0, %v1132
        %v1134 = vpop.f32.mrb[0].mxu0
        %v1135 = vadd.f32 0.0, %v1134
        %v1136 = vpop.f32.mrb[0].mxu0
        %v1137 = vadd.f32 0.0, %v1136
        %v1138 = vpop.f32.mrb[0].mxu0
        %v1139 = vadd.f32 0.0, %v1138
        %1140 = vmatprep.mubr.bf16.mxu0 %v676
        %1141 = vmatmul.mubr.bf16.gmra.mrb[0].mxu0 %v675
        %v1142 = vpop.f32.mrb[0].mxu0
        %v1143 = vadd.f32 0.0, %v1142
        %v1144 = vpop.f32.mrb[0].mxu0
        %v1145 = vadd.f32 0.0, %v1144
        %v1146 = vpop.f32.mrb[0].mxu0
        %v1147 = vadd.f32 0.0, %v1146
        %v1148 = vpop.f32.mrb[0].mxu0
        %v1149 = vadd.f32 0.0, %v1148
        %1150 = vdwg.mxu0
        %v1151 = vadd.f32 %v541, %v1040
        %v1152 = vadd.f32 %v542, %v1042
        %v1153 = vadd.f32 %v543, %v1113
        %v1154 = vadd.f32 %v544, %v1115
        %v1155 = vadd.f32 %v545, %v1044
        %v1156 = vadd.f32 %v546, %v1046
        %v1157 = vadd.f32 %v547, %v1117
        %v1158 = vadd.f32 %v548, %v1119
        %v1159 = vadd.f32 %v549, %v1050
        %v1160 = vadd.f32 %v550, %v1052
        %v1161 = vadd.f32 %v551, %v1123
        %v1162 = vadd.f32 %v552, %v1125
        %v1163 = vadd.f32 %v553, %v1054
        %v1164 = vadd.f32 %v554, %v1056
        %v1165 = vadd.f32 %v555, %v1127
        %v1166 = vadd.f32 %v556, %v1129
        %v1167 = vadd.f32 %v557, %v1060
        %v1168 = vadd.f32 %v558, %v1062
        %v1169 = vadd.f32 %v559, %v1133
        %v1170 = vadd.f32 %v560, %v1135
        %v1171 = vadd.f32 %v561, %v1064
        %v1172 = vadd.f32 %v562, %v1066
        %v1173 = vadd.f32 %v563, %v1137
        %v1174 = vadd.f32 %v564, %v1139
        %v1175 = vadd.f32 %v565, %v1070
        %v1176 = vadd.f32 %v566, %v1072
        %v1177 = vadd.f32 %v567, %v1143
        %v1178 = vadd.f32 %v568, %v1145
        %v1179 = vadd.f32 %v569, %v1074
        %v1180 = vadd.f32 %v570, %v1076
        %v1181 = vadd.f32 %v571, %v1147
        %v1182 = vadd.f32 %v572, %v1149
        %1183 = vst [vmem:[#allocation2] sm:$0xff] %v1151
        %1184 = vst [vmem:[#allocation2 + $0x8] sm:$0xff] %v1152
        %1185 = vst [vmem:[#allocation2 + $0x10] sm:$0xff] %v1153
        %1186 = vst [vmem:[#allocation2 + $0x18] sm:$0xff] %v1154
        %1187 = vst [vmem:[#allocation2 + $0x20] sm:$0xff] %v1155
        %1188 = vst [vmem:[#allocation2 + $0x28] sm:$0xff] %v1156
        %1189 = vst [vmem:[#allocation2 + $0x30] sm:$0xff] %v1157
        %1190 = vst [vmem:[#allocation2 + $0x38] sm:$0xff] %v1158
        %1191 = vst [vmem:[#allocation2 + $0x40] sm:$0xff] %v1159
        %1192 = vst [vmem:[#allocation2 + $0x48] sm:$0xff] %v1160
        %1193 = vst [vmem:[#allocation2 + $0x50] sm:$0xff] %v1161
        %1194 = vst [vmem:[#allocation2 + $0x58] sm:$0xff] %v1162
        %1195 = vst [vmem:[#allocation2 + $0x60] sm:$0xff] %v1163
        %1196 = vst [vmem:[#allocation2 + $0x68] sm:$0xff] %v1164
        %1197 = vst [vmem:[#allocation2 + $0x70] sm:$0xff] %v1165
        %1198 = vst [vmem:[#allocation2 + $0x78] sm:$0xff] %v1166
        %1199 = vst [vmem:[#allocation2 + $0x80] sm:$0xff] %v1167
        %1200 = vst [vmem:[#allocation2 + $0x88] sm:$0xff] %v1168
        %1201 = vst [vmem:[#allocation2 + $0x90] sm:$0xff] %v1169
        %1202 = vst [vmem:[#allocation2 + $0x98] sm:$0xff] %v1170
        %1203 = vst [vmem:[#allocation2 + $0xa0] sm:$0xff] %v1171
        %1204 = vst [vmem:[#allocation2 + $0xa8] sm:$0xff] %v1172
        %1205 = vst [vmem:[#allocation2 + $0xb0] sm:$0xff] %v1173
        %1206 = vst [vmem:[#allocation2 + $0xb8] sm:$0xff] %v1174
        %1207 = vst [vmem:[#allocation2 + $0xc0] sm:$0xff] %v1175
        %1208 = vst [vmem:[#allocation2 + $0xc8] sm:$0xff] %v1176
        %1209 = vst [vmem:[#allocation2 + $0xd0] sm:$0xff] %v1177
        %1210 = vst [vmem:[#allocation2 + $0xd8] sm:$0xff] %v1178
        %1211 = vst [vmem:[#allocation2 + $0xe0] sm:$0xff] %v1179
        %1212 = vst [vmem:[#allocation2 + $0xe8] sm:$0xff] %v1180
        %1213 = vst [vmem:[#allocation2 + $0xf0] sm:$0xff] %v1181
        %1214 = vst [vmem:[#allocation2 + $0xf8] sm:$0xff] %v1182
        // Predicated region
        $region87: #{_lambda_.11} parent=73 // pred_check
          %p1215 = pneg %p505
        $region88: #{_lambda_.11} parent=73 // pred_check_branch
          %1217 = sbr.rel (%p1215) target = $region90
        $region89: #{_lambda_.11} parent=73 // pred_region
          %v1218 = vld [vmem:[#allocation2] sm:$0xff]
          %v1219 = vld [vmem:[#allocation2 + $0x8] sm:$0xff]
          %v1220 = vld [vmem:[#allocation2 + $0x10] sm:$0xff]
          %v1221 = vld [vmem:[#allocation2 + $0x18] sm:$0xff]
          %v1222 = vld [vmem:[#allocation2 + $0x20] sm:$0xff]
          %v1223 = vld [vmem:[#allocation2 + $0x28] sm:$0xff]
          %v1224 = vld [vmem:[#allocation2 + $0x30] sm:$0xff]
          %v1225 = vld [vmem:[#allocation2 + $0x38] sm:$0xff]
          %v1226 = vld [vmem:[#allocation2 + $0x40] sm:$0xff]
          %v1227 = vld [vmem:[#allocation2 + $0x48] sm:$0xff]
          %v1228 = vld [vmem:[#allocation2 + $0x50] sm:$0xff]
          %v1229 = vld [vmem:[#allocation2 + $0x58] sm:$0xff]
          %v1230 = vld [vmem:[#allocation2 + $0x60] sm:$0xff]
          %v1231 = vld [vmem:[#allocation2 + $0x68] sm:$0xff]
          %v1232 = vld [vmem:[#allocation2 + $0x70] sm:$0xff]
          %v1233 = vld [vmem:[#allocation2 + $0x78] sm:$0xff]
          %v1234 = vld [vmem:[#allocation2 + $0x80] sm:$0xff]
          %v1235 = vld [vmem:[#allocation2 + $0x88] sm:$0xff]
          %v1236 = vld [vmem:[#allocation2 + $0x90] sm:$0xff]
          %v1237 = vld [vmem:[#allocation2 + $0x98] sm:$0xff]
          %v1238 = vld [vmem:[#allocation2 + $0xa0] sm:$0xff]
          %v1239 = vld [vmem:[#allocation2 + $0xa8] sm:$0xff]
          %v1240 = vld [vmem:[#allocation2 + $0xb0] sm:$0xff]
          %v1241 = vld [vmem:[#allocation2 + $0xb8] sm:$0xff]
          %v1242 = vld [vmem:[#allocation2 + $0xc0] sm:$0xff]
          %v1243 = vld [vmem:[#allocation2 + $0xc8] sm:$0xff]
          %v1244 = vld [vmem:[#allocation2 + $0xd0] sm:$0xff]
          %v1245 = vld [vmem:[#allocation2 + $0xd8] sm:$0xff]
          %v1246 = vld [vmem:[#allocation2 + $0xe0] sm:$0xff]
          %v1247 = vld [vmem:[#allocation2 + $0xe8] sm:$0xff]
          %v1248 = vld [vmem:[#allocation2 + $0xf0] sm:$0xff]
          %v1249 = vld [vmem:[#allocation2 + $0xf8] sm:$0xff]
          %v1250 = vld [vmem:[%s499] sm:$0xf]
          %v1252 = vlaneseq
          %v1253 = vshrl.u32 %v1252, 7
          %v1254 = vsub.s32 0, %v1253
          %v1255 = vrot.slane %v1250, %v1254
          %v1256 = vlaneseq
          %v1257 = vshrl.u32 %v1256, 7
          %v1258 = vsub.s32 1, %v1257
          %v1259 = vrot.slane %v1250, %v1258
          %v1260 = vlaneseq
          %v1261 = vshrl.u32 %v1260, 7
          %v1262 = vsub.s32 2, %v1261
          %v1263 = vrot.slane %v1250, %v1262
          %v1264 = vlaneseq
          %v1265 = vshrl.u32 %v1264, 7
          %v1266 = vsub.s32 3, %v1265
          %v1267 = vrot.slane %v1250, %v1266
          %v1272 = vadd.f32 %v1218, %v1255
          %v1273 = vadd.f32 %v1219, %v1259
          %v1274 = vadd.f32 %v1220, %v1263
          %v1275 = vadd.f32 %v1221, %v1267
          %v1276 = vadd.f32 %v1222, %v1255
          %v1277 = vadd.f32 %v1223, %v1259
          %v1278 = vadd.f32 %v1224, %v1263
          %v1279 = vadd.f32 %v1225, %v1267
          %v1280 = vadd.f32 %v1226, %v1255
          %v1281 = vadd.f32 %v1227, %v1259
          %v1282 = vadd.f32 %v1228, %v1263
          %v1283 = vadd.f32 %v1229, %v1267
          %v1284 = vadd.f32 %v1230, %v1255
          %v1285 = vadd.f32 %v1231, %v1259
          %v1286 = vadd.f32 %v1232, %v1263
          %v1287 = vadd.f32 %v1233, %v1267
          %v1288 = vadd.f32 %v1234, %v1255
          %v1289 = vadd.f32 %v1235, %v1259
          %v1290 = vadd.f32 %v1236, %v1263
          %v1291 = vadd.f32 %v1237, %v1267
          %v1292 = vadd.f32 %v1238, %v1255
          %v1293 = vadd.f32 %v1239, %v1259
          %v1294 = vadd.f32 %v1240, %v1263
          %v1295 = vadd.f32 %v1241, %v1267
          %v1296 = vadd.f32 %v1242, %v1255
          %v1297 = vadd.f32 %v1243, %v1259
          %v1298 = vadd.f32 %v1244, %v1263
          %v1299 = vadd.f32 %v1245, %v1267
          %v1300 = vadd.f32 %v1246, %v1255
          %v1301 = vadd.f32 %v1247, %v1259
          %v1302 = vadd.f32 %v1248, %v1263
          %v1303 = vadd.f32 %v1249, %v1267
          %v1304 = vld [vmem:[%s442] sm:$0xff]
          %v1305 = vld [vmem:[%s442 + $0x8] sm:$0xff]
          %v1306 = vld [vmem:[%s442 + $0x10] sm:$0xff]
          %v1307 = vld [vmem:[%s442 + $0x18] sm:$0xff]
          %v1308 = vld [vmem:[%s442 + $0x20] sm:$0xff]
          %v1309 = vld [vmem:[%s442 + $0x28] sm:$0xff]
          %v1310 = vld [vmem:[%s442 + $0x30] sm:$0xff]
          %v1311 = vld [vmem:[%s442 + $0x38] sm:$0xff]
          %v1312 = vld [vmem:[%s442 + $0x40] sm:$0xff]
          %v1313 = vld [vmem:[%s442 + $0x48] sm:$0xff]
          %v1314 = vld [vmem:[%s442 + $0x50] sm:$0xff]
          %v1315 = vld [vmem:[%s442 + $0x58] sm:$0xff]
          %v1316 = vld [vmem:[%s442 + $0x60] sm:$0xff]
          %v1317 = vld [vmem:[%s442 + $0x68] sm:$0xff]
          %v1318 = vld [vmem:[%s442 + $0x70] sm:$0xff]
          %v1319 = vld [vmem:[%s442 + $0x78] sm:$0xff]
          %v1320 = vunpack.c.l.bf16 %v1304
          %v1321 = vunpack.c.h.bf16 %v1304
          %v1322 = vunpack.c.l.bf16 %v1305
          %v1323 = vunpack.c.h.bf16 %v1305
          %v1324 = vunpack.c.l.bf16 %v1306
          %v1325 = vunpack.c.h.bf16 %v1306
          %v1326 = vunpack.c.l.bf16 %v1307
          %v1327 = vunpack.c.h.bf16 %v1307
          %v1328 = vunpack.c.l.bf16 %v1308
          %v1329 = vunpack.c.h.bf16 %v1308
          %v1330 = vunpack.c.l.bf16 %v1309
          %v1331 = vunpack.c.h.bf16 %v1309
          %v1332 = vunpack.c.l.bf16 %v1310
          %v1333 = vunpack.c.h.bf16 %v1310
          %v1334 = vunpack.c.l.bf16 %v1311
          %v1335 = vunpack.c.h.bf16 %v1311
          %v1336 = vunpack.c.l.bf16 %v1312
          %v1337 = vunpack.c.h.bf16 %v1312
          %v1338 = vunpack.c.l.bf16 %v1313
          %v1339 = vunpack.c.h.bf16 %v1313
          %v1340 = vunpack.c.l.bf16 %v1314
          %v1341 = vunpack.c.h.bf16 %v1314
          %v1342 = vunpack.c.l.bf16 %v1315
          %v1343 = vunpack.c.h.bf16 %v1315
          %v1344 = vunpack.c.l.bf16 %v1316
          %v1345 = vunpack.c.h.bf16 %v1316
          %v1346 = vunpack.c.l.bf16 %v1317
          %v1347 = vunpack.c.h.bf16 %v1317
          %v1348 = vunpack.c.l.bf16 %v1318
          %v1349 = vunpack.c.h.bf16 %v1318
          %v1350 = vunpack.c.l.bf16 %v1319
          %v1351 = vunpack.c.h.bf16 %v1319
          %v1352 = vadd.f32 %v1272, %v1320
          %v1353 = vadd.f32 %v1273, %v1321
          %v1354 = vadd.f32 %v1274, %v1322
          %v1355 = vadd.f32 %v1275, %v1323
          %v1356 = vadd.f32 %v1276, %v1324
          %v1357 = vadd.f32 %v1277, %v1325
          %v1358 = vadd.f32 %v1278, %v1326
          %v1359 = vadd.f32 %v1279, %v1327
          %v1360 = vadd.f32 %v1280, %v1328
          %v1361 = vadd.f32 %v1281, %v1329
          %v1362 = vadd.f32 %v1282, %v1330
          %v1363 = vadd.f32 %v1283, %v1331
          %v1364 = vadd.f32 %v1284, %v1332
          %v1365 = vadd.f32 %v1285, %v1333
          %v1366 = vadd.f32 %v1286, %v1334
          %v1367 = vadd.f32 %v1287, %v1335
          %v1368 = vadd.f32 %v1288, %v1336
          %v1369 = vadd.f32 %v1289, %v1337
          %v1370 = vadd.f32 %v1290, %v1338
          %v1371 = vadd.f32 %v1291, %v1339
          %v1372 = vadd.f32 %v1292, %v1340
          %v1373 = vadd.f32 %v1293, %v1341
          %v1374 = vadd.f32 %v1294, %v1342
          %v1375 = vadd.f32 %v1295, %v1343
          %v1376 = vadd.f32 %v1296, %v1344
          %v1377 = vadd.f32 %v1297, %v1345
          %v1378 = vadd.f32 %v1298, %v1346
          %v1379 = vadd.f32 %v1299, %v1347
          %v1380 = vadd.f32 %v1300, %v1348
          %v1381 = vadd.f32 %v1301, %v1349
          %v1382 = vadd.f32 %v1302, %v1350
          %v1383 = vadd.f32 %v1303, %v1351
          %v1384 = vmax.f32 %v1352, 0.0
          %v1385 = vmax.f32 %v1353, 0.0
          %v1386 = vmax.f32 %v1354, 0.0
          %v1387 = vmax.f32 %v1355, 0.0
          %v1388 = vmax.f32 %v1356, 0.0
          %v1389 = vmax.f32 %v1357, 0.0
          %v1390 = vmax.f32 %v1358, 0.0
          %v1391 = vmax.f32 %v1359, 0.0
          %v1392 = vmax.f32 %v1360, 0.0
          %v1393 = vmax.f32 %v1361, 0.0
          %v1394 = vmax.f32 %v1362, 0.0
          %v1395 = vmax.f32 %v1363, 0.0
          %v1396 = vmax.f32 %v1364, 0.0
          %v1397 = vmax.f32 %v1365, 0.0
          %v1398 = vmax.f32 %v1366, 0.0
          %v1399 = vmax.f32 %v1367, 0.0
          %v1400 = vmax.f32 %v1368, 0.0
          %v1401 = vmax.f32 %v1369, 0.0
          %v1402 = vmax.f32 %v1370, 0.0
          %v1403 = vmax.f32 %v1371, 0.0
          %v1404 = vmax.f32 %v1372, 0.0
          %v1405 = vmax.f32 %v1373, 0.0
          %v1406 = vmax.f32 %v1374, 0.0
          %v1407 = vmax.f32 %v1375, 0.0
          %v1408 = vmax.f32 %v1376, 0.0
          %v1409 = vmax.f32 %v1377, 0.0
          %v1410 = vmax.f32 %v1378, 0.0
          %v1411 = vmax.f32 %v1379, 0.0
          %v1412 = vmax.f32 %v1380, 0.0
          %v1413 = vmax.f32 %v1381, 0.0
          %v1414 = vmax.f32 %v1382, 0.0
          %v1415 = vmax.f32 %v1383, 0.0
          %v1416 = vpack.c.bf16 %v1388, %v1384
          %v1417 = vpack.c.bf16 %v1389, %v1385
          %v1418 = vpack.c.bf16 %v1390, %v1386
          %v1419 = vpack.c.bf16 %v1391, %v1387
          %v1420 = vpack.c.bf16 %v1396, %v1392
          %v1421 = vpack.c.bf16 %v1397, %v1393
          %v1422 = vpack.c.bf16 %v1398, %v1394
          %v1423 = vpack.c.bf16 %v1399, %v1395
          %v1424 = vpack.c.bf16 %v1404, %v1400
          %v1425 = vpack.c.bf16 %v1405, %v1401
          %v1426 = vpack.c.bf16 %v1406, %v1402
          %v1427 = vpack.c.bf16 %v1407, %v1403
          %v1428 = vpack.c.bf16 %v1412, %v1408
          %v1429 = vpack.c.bf16 %v1413, %v1409
          %v1430 = vpack.c.bf16 %v1414, %v1410
          %v1431 = vpack.c.bf16 %v1415, %v1411
          %v1448 = vunpack.c.l.b16 %v1416
          %v1449 = vunpack.c.l.b16 %v1417
          %v1450 = vunpack.c.l.b16 %v1418
          %v1451 = vunpack.c.l.b16 %v1419
          %v1452 = vunpack.c.h.b16 %v1416
          %v1453 = vunpack.c.h.b16 %v1417
          %v1454 = vunpack.c.h.b16 %v1418
          %v1455 = vunpack.c.h.b16 %v1419
          %v1456 = vunpack.c.l.b16 %v1420
          %v1457 = vunpack.c.l.b16 %v1421
          %v1458 = vunpack.c.l.b16 %v1422
          %v1459 = vunpack.c.l.b16 %v1423
          %v1460 = vunpack.c.h.b16 %v1420
          %v1461 = vunpack.c.h.b16 %v1421
          %v1462 = vunpack.c.h.b16 %v1422
          %v1463 = vunpack.c.h.b16 %v1423
          %v1464 = vunpack.c.l.b16 %v1424
          %v1465 = vunpack.c.l.b16 %v1425
          %v1466 = vunpack.c.l.b16 %v1426
          %v1467 = vunpack.c.l.b16 %v1427
          %v1468 = vunpack.c.h.b16 %v1424
          %v1469 = vunpack.c.h.b16 %v1425
          %v1470 = vunpack.c.h.b16 %v1426
          %v1471 = vunpack.c.h.b16 %v1427
          %v1472 = vunpack.c.l.b16 %v1428
          %v1473 = vunpack.c.l.b16 %v1429
          %v1474 = vunpack.c.l.b16 %v1430
          %v1475 = vunpack.c.l.b16 %v1431
          %v1476 = vunpack.c.h.b16 %v1428
          %v1477 = vunpack.c.h.b16 %v1429
          %v1478 = vunpack.c.h.b16 %v1430
          %v1479 = vunpack.c.h.b16 %v1431
          %v1480 = vpack.c.b16 %v1449, %v1448
          %v1481 = vpack.c.b16 %v1451, %v1450
          %v1482 = vpack.c.b16 %v1453, %v1452
          %v1483 = vpack.c.b16 %v1455, %v1454
          %v1484 = vpack.c.b16 %v1457, %v1456
          %v1485 = vpack.c.b16 %v1459, %v1458
          %v1486 = vpack.c.b16 %v1461, %v1460
          %v1487 = vpack.c.b16 %v1463, %v1462
          %v1488 = vpack.c.b16 %v1465, %v1464
          %v1489 = vpack.c.b16 %v1467, %v1466
          %v1490 = vpack.c.b16 %v1469, %v1468
          %v1491 = vpack.c.b16 %v1471, %v1470
          %v1492 = vpack.c.b16 %v1473, %v1472
          %v1493 = vpack.c.b16 %v1475, %v1474
          %v1494 = vpack.c.b16 %v1477, %v1476
          %v1495 = vpack.c.b16 %v1479, %v1478
          %1512 = vst [vmem:[%s481] sm:$0xff] %v1480
          %1513 = vst [vmem:[%s481 + $0x8] sm:$0xff] %v1481
          %1514 = vst [vmem:[%s481 + $0x10] sm:$0xff] %v1482
          %1515 = vst [vmem:[%s481 + $0x18] sm:$0xff] %v1483
          %1516 = vst [vmem:[%s481 + $0x20] sm:$0xff] %v1484
          %1517 = vst [vmem:[%s481 + $0x28] sm:$0xff] %v1485
          %1518 = vst [vmem:[%s481 + $0x30] sm:$0xff] %v1486
          %1519 = vst [vmem:[%s481 + $0x38] sm:$0xff] %v1487
          %1520 = vst [vmem:[%s481 + $0x40] sm:$0xff] %v1488
          %1521 = vst [vmem:[%s481 + $0x48] sm:$0xff] %v1489
          %1522 = vst [vmem:[%s481 + $0x50] sm:$0xff] %v1490
          %1523 = vst [vmem:[%s481 + $0x58] sm:$0xff] %v1491
          %1524 = vst [vmem:[%s481 + $0x60] sm:$0xff] %v1492
          %1525 = vst [vmem:[%s481 + $0x68] sm:$0xff] %v1493
          %1526 = vst [vmem:[%s481 + $0x70] sm:$0xff] %v1494
          %1527 = vst [vmem:[%s481 + $0x78] sm:$0xff] %v1495
        $region90: #{_lambda_.11} parent=73 // pred_fallthru
          _
        %s1528 = sand.u32 %s154, 1
        %s1529 = sand.u32 %s154, 1
        %s1530 = smul.addr %s1529, 128
        %s1531 = scalar_lea.vmem [#allocation5], %s1530
        // Predicated region
        $region91: #{_lambda_.11} parent=73 // pred_check
          %p1532 = pneg %p164
        $region92: #{_lambda_.11} parent=73 // pred_check_branch
          %1534 = sbr.rel (%p1532) target = $region94
        $region93: #{_lambda_.11} parent=73 // pred_region
          %s1535 = smul.u32 8, %s20
          %s1536 = smul.u32 4, %s21
          %s1537 = smul.addr %s1535, 8
          %s1538 = sadd.s32 %s1536, %s1537
          %s1539 = smul.addr %s1538, 4
          %s1540 = scalar_lea.vmem %s4, %s1539
          // Predicated region
          $region95: #{_lambda_.11} parent=93 // pred_check
            _
          $region96: #{_lambda_.11} parent=93 // pred_check_branch
            %1542 = sbr.rel (0) target = $region98
          $region97: #{_lambda_.11} parent=93 // pred_region
            // Predicated region
            $region99: #{_lambda_.11} parent=97 // pred_check
              _
            $region100: #{_lambda_.11} parent=97 // pred_check_branch
              %1544 = sbr.rel (0) target = $region102
            $region101: #{_lambda_.11} parent=97 // pred_region
              loop: start=0, step=1, limit=1
              $region103: #{_lambda_.11} parent=101 // loop_pre_header
                _
              $region104: #{_lambda_.11} parent=101 // loop_header
                %s1546 = sphi 0, %s1550
                %p1547 = scmp.ge.s32.totalorder %s1546, 1
                %s1551 = sphi %s1531, %s1531
                %s1552 = sphi %s1540, %s1540
              $region105: #{_lambda_.11} parent=101 // loop_header_branch
                %1549 = sbr.rel (%p1547) target = $region109
              $region106: #{_lambda_.11} parent=101 // loop_body
                %v1553 = vld [vmem:[%s1551] sm:$0xff]
                %1554 = vst [vmem:[%s1552] sm:$0xff] %v1553
                %v1555 = vld [vmem:[%s1551 + $0x8] sm:$0xff]
                %1556 = vst [vmem:[%s1552 + $0x8] sm:$0xff] %v1555
                %v1557 = vld [vmem:[%s1551 + $0x10] sm:$0xff]
                %1558 = vst [vmem:[%s1552 + $0x20] sm:$0xff] %v1557
                %v1559 = vld [vmem:[%s1551 + $0x18] sm:$0xff]
                %1560 = vst [vmem:[%s1552 + $0x28] sm:$0xff] %v1559
                %v1561 = vld [vmem:[%s1551 + $0x20] sm:$0xff]
                %1562 = vst [vmem:[%s1552 + $0x40] sm:$0xff] %v1561
                %v1563 = vld [vmem:[%s1551 + $0x28] sm:$0xff]
                %1564 = vst [vmem:[%s1552 + $0x48] sm:$0xff] %v1563
                %v1565 = vld [vmem:[%s1551 + $0x30] sm:$0xff]
                %1566 = vst [vmem:[%s1552 + $0x60] sm:$0xff] %v1565
                %v1567 = vld [vmem:[%s1551 + $0x38] sm:$0xff]
                %1568 = vst [vmem:[%s1552 + $0x68] sm:$0xff] %v1567
                %v1569 = vld [vmem:[%s1551 + $0x40] sm:$0xff]
                %1570 = vst [vmem:[%s1552 + $0x80] sm:$0xff] %v1569
                %v1571 = vld [vmem:[%s1551 + $0x48] sm:$0xff]
                %1572 = vst [vmem:[%s1552 + $0x88] sm:$0xff] %v1571
                %v1573 = vld [vmem:[%s1551 + $0x50] sm:$0xff]
                %1574 = vst [vmem:[%s1552 + $0xa0] sm:$0xff] %v1573
                %v1575 = vld [vmem:[%s1551 + $0x58] sm:$0xff]
                %1576 = vst [vmem:[%s1552 + $0xa8] sm:$0xff] %v1575
                %v1577 = vld [vmem:[%s1551 + $0x60] sm:$0xff]
                %1578 = vst [vmem:[%s1552 + $0xc0] sm:$0xff] %v1577
                %v1579 = vld [vmem:[%s1551 + $0x68] sm:$0xff]
                %1580 = vst [vmem:[%s1552 + $0xc8] sm:$0xff] %v1579
                %v1581 = vld [vmem:[%s1551 + $0x70] sm:$0xff]
                %1582 = vst [vmem:[%s1552 + $0xe0] sm:$0xff] %v1581
                %v1583 = vld [vmem:[%s1551 + $0x78] sm:$0xff]
                %1584 = vst [vmem:[%s1552 + $0xe8] sm:$0xff] %v1583
              $region107: #{_lambda_.11} parent=101 // loop_footer
                %s1550 = sadd.s32 1, %s1546
              $region108: #{_lambda_.11} parent=101 // loop_footer_branch
                %1545 = sbr.rel target = $region104
              $region109: #{_lambda_.11} parent=101 // loop_exit
                _
            $region102: #{_lambda_.11} parent=97 // pred_fallthru
              _
            // Predicated region
            $region110: #{_lambda_.11} parent=97 // pred_check
              _
            $region111: #{_lambda_.11} parent=97 // pred_check_branch
              %1586 = sbr.rel target = $region113
            $region112: #{_lambda_.11} parent=97 // pred_region
              _
            $region113: #{_lambda_.11} parent=97 // pred_fallthru
              _
          $region98: #{_lambda_.11} parent=93 // pred_fallthru
            _
          %1587 = vnop
        $region94: #{_lambda_.11} parent=73 // pred_fallthru
          _
      $region74: #{_lambda_.11} parent=5 // pred_fallthru
        _
      %p1588 = scmp.le.s32.totalorder 2, %s10
      // Predicated region
      $region114: #{_lambda_.11} parent=5 // pred_check
        %p1589 = pneg %p1588
      $region115: #{_lambda_.11} parent=5 // pred_check_branch
        %1591 = sbr.rel (%p1589) target = $region117
      $region116: #{_lambda_.11} parent=5 // pred_region
        %s1592 = ssub.s32 %s10, 2
        // Predicated region
        $region118: #{_lambda_.11} parent=116 // pred_check
          %p1593 = pneg %p170
        $region119: #{_lambda_.11} parent=116 // pred_check_branch
          %1595 = sbr.rel (%p1593) target = $region121
        $region120: #{_lambda_.11} parent=116 // pred_region
          %s1596 = sand.u32 %s155, 1
          %s1597 = sand.u32 %s155, 1
          %s1598 = smul.addr %s1597, 128
          %s1599 = scalar_lea.vmem [#allocation5], %s1598
        $region121: #{_lambda_.11} parent=116 // pred_fallthru
          _
      $region117: #{_lambda_.11} parent=5 // pred_fallthru
        _
    $region6: #{_lambda_.11} parent=1 // loop_footer
      %s14 = sadd.s32 1, %s10
    $region7: #{_lambda_.11} parent=1 // loop_footer_branch
      %9 = sbr.rel target = $region3
    $region8: #{_lambda_.11} parent=1 // loop_exit
      _

// kernel: _lambda_.12
$region0: #{_lambda_.12}
  #allocation0 [shape = 'u32[]', space=smem, size = 0x4, offset = 0x4, fixed_abs, tag = 'smem constant byte address 0x4 - core index']
  #allocation1 [shape = 'u32[144,128]{1,0:T(1,128)}', space=vmem, size = 0x12000, scoped, tag = 'internal scratch']
  #allocation2 [shape = 'f32[64,256]{1,0:T(8,128)}', space=vmem, size = 0x10000, scoped, tag = 'scratch operand']
  %s0 = inlined_call_operand.vmem [shape: bf16[64,1024], index: 0, kind: input, shape index: {}]
  %s1 = inlined_call_operand.vmem [shape: bf16[1024,256], index: 1, kind: input, shape index: {}]
  %s2 = inlined_call_operand.vmem [shape: f32[1,256], index: 2, kind: input, shape index: {}]
  %s3 = inlined_call_operand.vmem [shape: bf16[64,256], index: 3, kind: output, shape index: {}]
  %s4 = sld [smem:[#allocation0]]
  $region76: #{_lambda_.12} parent=0
    _
  %s6 = ssub.s32 1, %s4
  %s7 = scalar_select 0, %s6, %s4
  $region1: #{_lambda_.12} parent=0
    #allocation3 [shape = 'u8[131072]{0}', space=vmem, size = 0x20000, scoped, tag = 'input window, operand 0']
    loop: start=0, step=1, limit=4
    $region2: #{_lambda_.12} parent=1 // loop_pre_header
      _
    $region3: #{_lambda_.12} parent=1 // loop_header
      %s9 = sphi 0, %s13
      %p10 = scmp.ge.s32.totalorder %s9, 4
      %s16 = sphi 0, %s35
      %s17 = sphi 0, %s31
      %s18 = sphi 0, %s27
      %s19 = sphi 0, %s16
      %s20 = sphi 0, %s17
      %s21 = sphi 0, %s18
      %s22 = sphi 0, %s19
      %s23 = sphi 0, %s20
      %s24 = sphi 0, %s21
      %s40 = sphi 0, %s42
      %s43 = sphi 0, %s40
      %s44 = sphi 0, %s43
      %s60 = sphi 0, %s44
      %s68 = sphi 0, %s70
      %s71 = sphi 0, %s68
      %s72 = sphi 0, %s71
      %s88 = sphi 0, %s72
      %s94 = sphi 0, %s96
      %s97 = sphi 0, %s94
      %s98 = sphi 0, %s97
      %s114 = sphi 0, %s98
      %s122 = sphi 0, %s124
      %s125 = sphi 0, %s122
      %s126 = sphi 0, %s125
      %s142 = sphi 0, %s126
    $region4: #{_lambda_.12} parent=1 // loop_header_branch
      %12 = sbr.rel (%p10) target = $region8
    $region5: #{_lambda_.12} parent=1 // loop_body
      %s14 = ssub.s32 %s9, 1
      %s15 = ssub.s32 %s9, 2
      %s25 = sadd.s32 1, %s18
      %p26 = scmp.ge.s32.totalorder %s25, 2
      %s27 = scalar_select %p26, 0, %s25
      %s28 = sadd.s32 1, %s17
      %s29 = scalar_select %p26, %s28, %s17
      %p30 = scmp.ge.s32.totalorder %s29, 1
      %s31 = scalar_select %p30, 0, %s29
      %s32 = sadd.s32 1, %s16
      %s33 = scalar_select %p30, %s32, %s16
      %p34 = scmp.ge.s32.totalorder %s33, 1
      %s35 = scalar_select %p34, 0, %s33
      %s36 = ssub.s32 %s16, %s35
      %s37 = ssub.s32 %s18, %s27
      %s38 = sor.u32 %s36, %s37
      %p39 = scmp.eq.s32.totalorder %s38, 0
      %s41 = sadd.s32 %s40, 1
      %s42 = scalar_select %p39, %s40, %s41
      %p45 = pneg %p39
      %p46 = scmp.eq.s32.totalorder %s9, 1
      %p47 = por %p45, %p46
      %p48 = scmp.ne.s32.totalorder %s40, %s43
      %p49 = scmp.eq.s32.totalorder %s9, 0
      %p50 = por %p48, %p49
      %p51 = scmp.ne.s32.totalorder %s40, %s43
      %p52 = scmp.eq.s32.totalorder %s14, 1
      %p53 = por %p51, %p52
      %p54 = scmp.ne.s32.totalorder %s43, %s44
      %p55 = scmp.eq.s32.totalorder %s14, 0
      %p56 = por %p54, %p55
      %p57 = scmp.ne.s32.totalorder %s43, %s44
      %p58 = scmp.eq.s32.totalorder %s15, 1
      %p59 = por %p57, %p58
      %p61 = scmp.ne.s32.totalorder %s44, %s60
      %p62 = scmp.eq.s32.totalorder %s15, 0
      %p63 = por %p61, %p62
      %s64 = ssub.s32 %s18, %s27
      %s65 = ssub.s32 %s17, %s31
      %s66 = sor.u32 %s64, %s65
      %p67 = scmp.eq.s32.totalorder %s66, 0
      %s69 = sadd.s32 %s68, 1
      %s70 = scalar_select %p67, %s68, %s69
      %p73 = pneg %p67
      %p74 = scmp.eq.s32.totalorder %s9, 1
      %p75 = por %p73, %p74
      %p76 = scmp.ne.s32.totalorder %s68, %s71
      %p77 = scmp.eq.s32.totalorder %s9, 0
      %p78 = por %p76, %p77
      %p79 = scmp.ne.s32.totalorder %s68, %s71
      %p80 = scmp.eq.s32.totalorder %s14, 1
      %p81 = por %p79, %p80
      %p82 = scmp.ne.s32.totalorder %s71, %s72
      %p83 = scmp.eq.s32.totalorder %s14, 0
      %p84 = por %p82, %p83
      %p85 = scmp.ne.s32.totalorder %s71, %s72
      %p86 = scmp.eq.s32.totalorder %s15, 1
      %p87 = por %p85, %p86
      %p89 = scmp.ne.s32.totalorder %s72, %s88
      %p90 = scmp.eq.s32.totalorder %s15, 0
      %p91 = por %p89, %p90
      %s92 = ssub.s32 %s17, %s31
      %p93 = scmp.eq.s32.totalorder %s92, 0
      %s95 = sadd.s32 %s94, 1
      %s96 = scalar_select %p93, %s94, %s95
      %p99 = pneg %p93
      %p100 = scmp.eq.s32.totalorder %s9, 1
      %p101 = por %p99, %p100
      %p102 = scmp.ne.s32.totalorder %s94, %s97
      %p103 = scmp.eq.s32.totalorder %s9, 0
      %p104 = por %p102, %p103
      %p105 = scmp.ne.s32.totalorder %s94, %s97
      %p106 = scmp.eq.s32.totalorder %s14, 1
      %p107 = por %p105, %p106
      %p108 = scmp.ne.s32.totalorder %s97, %s98
      %p109 = scmp.eq.s32.totalorder %s14, 0
      %p110 = por %p108, %p109
      %p111 = scmp.ne.s32.totalorder %s97, %s98
      %p112 = scmp.eq.s32.totalorder %s15, 1
      %p113 = por %p111, %p112
      %p115 = scmp.ne.s32.totalorder %s98, %s114
      %p116 = scmp.eq.s32.totalorder %s15, 0
      %p117 = por %p115, %p116
      %s118 = ssub.s32 %s16, %s35
      %s119 = ssub.s32 %s17, %s31
      %s120 = sor.u32 %s118, %s119
      %p121 = scmp.eq.s32.totalorder %s120, 0
      %s123 = sadd.s32 %s122, 1
      %s124 = scalar_select %p121, %s122, %s123
      %p127 = pneg %p121
      %p128 = scmp.eq.s32.totalorder %s9, 1
      %p129 = por %p127, %p128
      %p130 = scmp.ne.s32.totalorder %s122, %s125
      %p131 = scmp.eq.s32.totalorder %s9, 0
      %p132 = por %p130, %p131
      %p133 = scmp.ne.s32.totalorder %s122, %s125
      %p134 = scmp.eq.s32.totalorder %s14, 1
      %p135 = por %p133, %p134
      %p136 = scmp.ne.s32.totalorder %s125, %s126
      %p137 = scmp.eq.s32.totalorder %s14, 0
      %p138 = por %p136, %p137
      %p139 = scmp.ne.s32.totalorder %s125, %s126
      %p140 = scmp.eq.s32.totalorder %s15, 1
      %p141 = por %p139, %p140
      %p143 = scmp.ne.s32.totalorder %s126, %s142
      %p144 = scmp.eq.s32.totalorder %s15, 0
      %p145 = por %p143, %p144
      %p146 = scmp.le.s32.totalorder 1, %s9
      %p147 = scmp.lt.s32.totalorder %s9, 3
      %p148 = pnand %p146, %p147
      %p149 = pneg %p148
      // Predicated region
      $region9: #{_lambda_.12} parent=5 // pred_check
        _
      $region10: #{_lambda_.12} parent=5 // pred_check_branch
        %151 = sbr.rel (%p148) target = $region12
      $region11: #{_lambda_.12} parent=5 // pred_region
        %s152 = ssub.s32 %s9, 1
        // Predicated region
        $region13: #{_lambda_.12} parent=11 // pred_check
          %p153 = pneg %p110
        $region14: #{_lambda_.12} parent=11 // pred_check_branch
          %155 = sbr.rel (%p153) target = $region16
        $region15: #{_lambda_.12} parent=11 // pred_region
          %s156 = smul.u32 2, %s20
          %p157 = scmp.lt.s32.totalorder %s156, 1
          %s158 = scalar_select %p157, %s156, 1
          %s159 = scalar_lea.vmem %s2, %s158
          %s160 = smul.u32 2, %s20
        $region16: #{_lambda_.12} parent=11 // pred_fallthru
          _
      $region12: #{_lambda_.12} parent=5 // pred_fallthru
        _
      %p161 = scmp.lt.s32.totalorder %s9, 2
      // Predicated region
      $region17: #{_lambda_.12} parent=5 // pred_check
        %p162 = pneg %p161
      $region18: #{_lambda_.12} parent=5 // pred_check_branch
        %164 = sbr.rel (%p162) target = $region20
      $region19: #{_lambda_.12} parent=5 // pred_region
        // Predicated region
        $region21: #{_lambda_.12} parent=19 // pred_check
          %p165 = pneg %p50
        $region22: #{_lambda_.12} parent=19 // pred_check_branch
          %167 = sbr.rel (%p165) target = $region24
        $region23: #{_lambda_.12} parent=19 // pred_region
          %s168 = sand.u32 %s40, 1
          %s169 = sand.u32 %s40, 1
          %s170 = smul.addr %s169, 128
          %s171 = scalar_lea.vmem [#allocation3], %s170
          %s172 = smul.u32 8, %s16
          %s173 = smul.u32 4, %s18
          %s174 = smul.addr %s172, 8
          %s175 = sadd.s32 %s173, %s174
          %s176 = smul.addr %s175, 4
          %s177 = scalar_lea.vmem %s0, %s176
          // Predicated region
          $region25: #{_lambda_.12} parent=23 // pred_check
            _
          $region26: #{_lambda_.12} parent=23 // pred_check_branch
            %179 = sbr.rel (0) target = $region28
          $region27: #{_lambda_.12} parent=23 // pred_region
            // Predicated region
            $region29: #{_lambda_.12} parent=27 // pred_check
              _
            $region30: #{_lambda_.12} parent=27 // pred_check_branch
              %181 = sbr.rel (0) target = $region32
            $region31: #{_lambda_.12} parent=27 // pred_region
              loop: start=0, step=1, limit=1
              $region33: #{_lambda_.12} parent=31 // loop_pre_header
                _
              $region34: #{_lambda_.12} parent=31 // loop_header
                %s183 = sphi 0, %s187
                %p184 = scmp.ge.s32.totalorder %s183, 1
                %s188 = sphi %s177, %s177
                %s189 = sphi %s171, %s171
              $region35: #{_lambda_.12} parent=31 // loop_header_branch
                %186 = sbr.rel (%p184) target = $region39
              $region36: #{_lambda_.12} parent=31 // loop_body
                %v190 = vld [vmem:[%s188] sm:$0xff]
                %191 = vst [vmem:[%s189] sm:$0xff] %v190
                %v192 = vld [vmem:[%s188 + $0x8] sm:$0xff]
                %193 = vst [vmem:[%s189 + $0x8] sm:$0xff] %v192
                %v194 = vld [vmem:[%s188 + $0x20] sm:$0xff]
                %195 = vst [vmem:[%s189 + $0x10] sm:$0xff] %v194
                %v196 = vld [vmem:[%s188 + $0x28] sm:$0xff]
                %197 = vst [vmem:[%s189 + $0x18] sm:$0xff] %v196
                %v198 = vld [vmem:[%s188 + $0x40] sm:$0xff]
                %199 = vst [vmem:[%s189 + $0x20] sm:$0xff] %v198
                %v200 = vld [vmem:[%s188 + $0x48] sm:$0xff]
                %201 = vst [vmem:[%s189 + $0x28] sm:$0xff] %v200
                %v202 = vld [vmem:[%s188 + $0x60] sm:$0xff]
                %203 = vst [vmem:[%s189 + $0x30] sm:$0xff] %v202
                %v204 = vld [vmem:[%s188 + $0x68] sm:$0xff]
                %205 = vst [vmem:[%s189 + $0x38] sm:$0xff] %v204
                %v206 = vld [vmem:[%s188 + $0x80] sm:$0xff]
                %207 = vst [vmem:[%s189 + $0x40] sm:$0xff] %v206
                %v208 = vld [vmem:[%s188 + $0x88] sm:$0xff]
                %209 = vst [vmem:[%s189 + $0x48] sm:$0xff] %v208
                %v210 = vld [vmem:[%s188 + $0xa0] sm:$0xff]
                %211 = vst [vmem:[%s189 + $0x50] sm:$0xff] %v210
                %v212 = vld [vmem:[%s188 + $0xa8] sm:$0xff]
                %213 = vst [vmem:[%s189 + $0x58] sm:$0xff] %v212
                %v214 = vld [vmem:[%s188 + $0xc0] sm:$0xff]
                %215 = vst [vmem:[%s189 + $0x60] sm:$0xff] %v214
                %v216 = vld [vmem:[%s188 + $0xc8] sm:$0xff]
                %217 = vst [vmem:[%s189 + $0x68] sm:$0xff] %v216
                %v218 = vld [vmem:[%s188 + $0xe0] sm:$0xff]
                %219 = vst [vmem:[%s189 + $0x70] sm:$0xff] %v218
                %v220 = vld [vmem:[%s188 + $0xe8] sm:$0xff]
                %221 = vst [vmem:[%s189 + $0x78] sm:$0xff] %v220
              $region37: #{_lambda_.12} parent=31 // loop_footer
                %s187 = sadd.s32 1, %s183
              $region38: #{_lambda_.12} parent=31 // loop_footer_branch
                %182 = sbr.rel target = $region34
              $region39: #{_lambda_.12} parent=31 // loop_exit
                _
            $region32: #{_lambda_.12} parent=27 // pred_fallthru
              _
            // Predicated region
            $region40: #{_lambda_.12} parent=27 // pred_check
              _
            $region41: #{_lambda_.12} parent=27 // pred_check_branch
              %223 = sbr.rel target = $region43
            $region42: #{_lambda_.12} parent=27 // pred_region
              _
            $region43: #{_lambda_.12} parent=27 // pred_fallthru
              _
          $region28: #{_lambda_.12} parent=23 // pred_fallthru
            _
          %224 = vnop
        $region24: #{_lambda_.12} parent=19 // pred_fallthru
          _
        // Predicated region
        $region44: #{_lambda_.12} parent=19 // pred_check
          %p225 = pneg %p78
        $region45: #{_lambda_.12} parent=19 // pred_check_branch
          %227 = sbr.rel (%p225) target = $region47
        $region46: #{_lambda_.12} parent=19 // pred_region
          %s228 = smul.u32 64, %s18
          %s229 = smul.u32 2, %s17
          %p230 = scmp.lt.s32.totalorder %s228, 127
          %s231 = scalar_select %p230, %s228, 127
          %p232 = scmp.lt.s32.totalorder %s229, 1
          %s233 = scalar_select %p232, %s229, 1
          %s234 = smul.addr %s231, 2
          %s235 = sadd.s32 %s233, %s234
          %s236 = smul.addr %s235, 4
          %s237 = scalar_lea.vmem %s1, %s236
          %s238 = smul.u32 64, %s18
          %s239 = smul.u32 2, %s17
        $region47: #{_lambda_.12} parent=19 // pred_fallthru
          _
      $region20: #{_lambda_.12} parent=5 // pred_fallthru
        _
      %p240 = scmp.le.s32.totalorder 1, %s9
      %p241 = scmp.lt.s32.totalorder %s9, 3
      %p242 = pnand %p240, %p241
      %p243 = pneg %p242
      // Predicated region
      $region48: #{_lambda_.12} parent=5 // pred_check
        _
      $region49: #{_lambda_.12} parent=5 // pred_check_branch
        %245 = sbr.rel (%p242) target = $region51
      $region50: #{_lambda_.12} parent=5 // pred_region
        %s246 = ssub.s32 %s9, 1
        %s247 = sand.u32 %s43, 1
        %s248 = sand.u32 %s43, 1
        %s249 = smul.addr %s248, 128
        %s250 = scalar_lea.vmem [#allocation3], %s249
        // Predicated region
        $region52: #{_lambda_.12} parent=50 // pred_check
          %p251 = pneg %p56
        $region53: #{_lambda_.12} parent=50 // pred_check_branch
          %253 = sbr.rel (%p251) target = $region55
        $region54: #{_lambda_.12} parent=50 // pred_region
          _
        $region55: #{_lambda_.12} parent=50 // pred_fallthru
          _
        %s254 = sand.u32 %s43, 1
        %s255 = sand.u32 %s43, 1
        %s256 = smul.addr %s255, 128
        %s257 = scalar_lea.vmem [#allocation3], %s256
        %p258 = pneg %p56
        %p259 = pneg %p53
        %s260 = smul.u32 64, %s21
        %s261 = smul.u32 2, %s20
        %p262 = scmp.lt.s32.totalorder %s260, 127
        %s263 = scalar_select %p262, %s260, 127
        %p264 = scmp.lt.s32.totalorder %s261, 1
        %s265 = scalar_select %p264, %s261, 1
        %s266 = smul.addr %s263, 2
        %s267 = sadd.s32 %s265, %s266
        %s268 = smul.addr %s267, 4
        %s269 = scalar_lea.vmem %s1, %s268
        %p270 = pneg %p84
        %p271 = pneg %p81
        %s272 = smul.u32 2, %s20
        %p273 = scmp.lt.s32.totalorder %s272, 1
        %s274 = scalar_select %p273, %s272, 1
        %s275 = scalar_lea.vmem %s2, %s274
        %p276 = pneg %p110
        %p277 = pneg %p107
        %p278 = pneg %p138
        %p279 = pneg %p135
        %s280 = smul.u32 8, %s19
        %s281 = smul.u32 2, %s20
        %p282 = scmp.lt.s32.totalorder %s280, 7
        %s283 = scalar_select %p282, %s280, 7
        %p284 = scmp.lt.s32.totalorder %s281, 1
        %s285 = scalar_select %p284, %s281, 1
        %s286 = smul.addr %s283, 2
        %s287 = sadd.s32 %s285, %s286
        %s288 = smul.addr %s287, 4
        %s289 = scalar_lea.vmem %s3, %s288
        %s290 = smul.u32 8, %s19
        %s291 = smul.u32 4, %s21
        %s292 = smul.u32 64, %s21
        %s293 = smul.u32 2, %s20
        %p294 = scmp.lt.s32.totalorder %s292, 127
        %s295 = scalar_select %p294, %s292, 127
        %p296 = scmp.lt.s32.totalorder %s293, 1
        %s297 = scalar_select %p296, %s293, 1
        %s298 = smul.addr %s295, 2
        %s299 = sadd.s32 %s297, %s298
        %s300 = smul.addr %s299, 4
        %s301 = scalar_lea.vmem %s1, %s300
        %s302 = smul.u32 64, %s21
        %s303 = smul.u32 2, %s20
        %s304 = smul.u32 2, %s20
        %p305 = scmp.lt.s32.totalorder %s304, 1
        %s306 = scalar_select %p305, %s304, 1
        %s307 = scalar_lea.vmem %s2, %s306
        %s308 = smul.u32 2, %s20
        %s309 = smul.u32 8, %s19
        %s310 = smul.u32 2, %s20
        %p311 = scmp.lt.s32.totalorder %s309, 7
        %s312 = scalar_select %p311, %s309, 7
        %p313 = scmp.lt.s32.totalorder %s310, 1
        %s314 = scalar_select %p313, %s310, 1
        %s315 = smul.addr %s312, 2
        %s316 = sadd.s32 %s314, %s315
        %s317 = smul.addr %s316, 4
        %s318 = scalar_lea.vmem %s3, %s317
        %s319 = smul.u32 8, %s19
        %s320 = smul.u32 2, %s20
        %p321 = scmp.eq.s32.totalorder %s21, 0
        // Predicated region
        $region56: #{_lambda_.12} parent=50 // pred_check
          %p322 = pneg %p321
        $region57: #{_lambda_.12} parent=50 // pred_check_branch
          %324 = sbr.rel (%p322) target = $region59
        $region58: #{_lambda_.12} parent=50 // pred_region
          %325 = vst [vmem:[#allocation2] sm:$0xff] 0.0
          %326 = vst [vmem:[#allocation2 + $0x8] sm:$0xff] 0.0
          %327 = vst [vmem:[#allocation2 + $0x10] sm:$0xff] 0.0
          %328 = vst [vmem:[#allocation2 + $0x18] sm:$0xff] 0.0
          %329 = vst [vmem:[#allocation2 + $0x20] sm:$0xff] 0.0
          %330 = vst [vmem:[#allocation2 + $0x28] sm:$0xff] 0.0
          %331 = vst [vmem:[#allocation2 + $0x30] sm:$0xff] 0.0
          %332 = vst [vmem:[#allocation2 + $0x38] sm:$0xff] 0.0
          %333 = vst [vmem:[#allocation2 + $0x40] sm:$0xff] 0.0
          %334 = vst [vmem:[#allocation2 + $0x48] sm:$0xff] 0.0
          %335 = vst [vmem:[#allocation2 + $0x50] sm:$0xff] 0.0
          %336 = vst [vmem:[#allocation2 + $0x58] sm:$0xff] 0.0
          %337 = vst [vmem:[#allocation2 + $0x60] sm:$0xff] 0.0
          %338 = vst [vmem:[#allocation2 + $0x68] sm:$0xff] 0.0
          %339 = vst [vmem:[#allocation2 + $0x70] sm:$0xff] 0.0
          %340 = vst [vmem:[#allocation2 + $0x78] sm:$0xff] 0.0
        $region59: #{_lambda_.12} parent=50 // pred_fallthru
          _
        %v341 = vld [vmem:[#allocation2] sm:$0xff]
        %v342 = vld [vmem:[#allocation2 + $0x8] sm:$0xff]
        %v343 = vld [vmem:[#allocation2 + $0x10] sm:$0xff]
        %v344 = vld [vmem:[#allocation2 + $0x18] sm:$0xff]
        %v345 = vld [vmem:[#allocation2 + $0x20] sm:$0xff]
        %v346 = vld [vmem:[#allocation2 + $0x28] sm:$0xff]
        %v347 = vld [vmem:[#allocation2 + $0x30] sm:$0xff]
        %v348 = vld [vmem:[#allocation2 + $0x38] sm:$0xff]
        %v349 = vld [vmem:[#allocation2 + $0x40] sm:$0xff]
        %v350 = vld [vmem:[#allocation2 + $0x48] sm:$0xff]
        %v351 = vld [vmem:[#allocation2 + $0x50] sm:$0xff]
        %v352 = vld [vmem:[#allocation2 + $0x58] sm:$0xff]
        %v353 = vld [vmem:[#allocation2 + $0x60] sm:$0xff]
        %v354 = vld [vmem:[#allocation2 + $0x68] sm:$0xff]
        %v355 = vld [vmem:[#allocation2 + $0x70] sm:$0xff]
        %v356 = vld [vmem:[#allocation2 + $0x78] sm:$0xff]
        %v357 = vld [vmem:[%s250] sm:$0xff]
        %v358 = vld [vmem:[%s250 + $0x8] sm:$0xff]
        %v359 = vld [vmem:[%s250 + $0x10] sm:$0xff]
        %v360 = vld [vmem:[%s250 + $0x18] sm:$0xff]
        %v361 = vld [vmem:[%s250 + $0x20] sm:$0xff]
        %v362 = vld [vmem:[%s250 + $0x28] sm:$0xff]
        %v363 = vld [vmem:[%s250 + $0x30] sm:$0xff]
        %v364 = vld [vmem:[%s250 + $0x38] sm:$0xff]
        %v365 = vld [vmem:[%s250 + $0x40] sm:$0xff]
        %v366 = vld [vmem:[%s250 + $0x48] sm:$0xff]
        %v367 = vld [vmem:[%s250 + $0x50] sm:$0xff]
        %v368 = vld [vmem:[%s250 + $0x58] sm:$0xff]
        %v369 = vld [vmem:[%s250 + $0x60] sm:$0xff]
        %v370 = vld [vmem:[%s250 + $0x68] sm:$0xff]
        %v371 = vld [vmem:[%s250 + $0x70] sm:$0xff]
        %v372 = vld [vmem:[%s250 + $0x78] sm:$0xff]
        %v373 = vld [vmem:[%s301] sm:$0xff]
        %v374 = vld [vmem:[%s301 + $0x8] sm:$0xff]
        %v375 = vld [vmem:[%s301 + $0x10] sm:$0xff]
        %v376 = vld [vmem:[%s301 + $0x18] sm:$0xff]
        %v377 = vld [vmem:[%s301 + $0x20] sm:$0xff]
        %v378 = vld [vmem:[%s301 + $0x28] sm:$0xff]
        %v379 = vld [vmem:[%s301 + $0x30] sm:$0xff]
        %v380 = vld [vmem:[%s301 + $0x38] sm:$0xff]
        %v381 = vld [vmem:[%s301 + $0x40] sm:$0xff]
        %v382 = vld [vmem:[%s301 + $0x48] sm:$0xff]
        %v383 = vld [vmem:[%s301 + $0x50] sm:$0xff]
        %v384 = vld [vmem:[%s301 + $0x58] sm:$0xff]
        %v385 = vld [vmem:[%s301 + $0x60] sm:$0xff]
        %v386 = vld [vmem:[%s301 + $0x68] sm:$0xff]
        %v387 = vld [vmem:[%s301 + $0x70] sm:$0xff]
        %v388 = vld [vmem:[%s301 + $0x78] sm:$0xff]
        %v389 = vld [vmem:[%s301 + $0x80] sm:$0xff]
        %v390 = vld [vmem:[%s301 + $0x88] sm:$0xff]
        %v391 = vld [vmem:[%s301 + $0x90] sm:$0xff]
        %v392 = vld [vmem:[%s301 + $0x98] sm:$0xff]
        %v393 = vld [vmem:[%s301 + $0xa0] sm:$0xff]
        %v394 = vld [vmem:[%s301 + $0xa8] sm:$0xff]
        %v395 = vld [vmem:[%s301 + $0xb0] sm:$0xff]
        %v396 = vld [vmem:[%s301 + $0xb8] sm:$0xff]
        %v397 = vld [vmem:[%s301 + $0xc0] sm:$0xff]
        %v398 = vld [vmem:[%s301 + $0xc8] sm:$0xff]
        %v399 = vld [vmem:[%s301 + $0xd0] sm:$0xff]
        %v400 = vld [vmem:[%s301 + $0xd8] sm:$0xff]
        %v401 = vld [vmem:[%s301 + $0xe0] sm:$0xff]
        %v402 = vld [vmem:[%s301 + $0xe8] sm:$0xff]
        %v403 = vld [vmem:[%s301 + $0xf0] sm:$0xff]
        %v404 = vld [vmem:[%s301 + $0xf8] sm:$0xff]
        %v405 = vld [vmem:[%s301 + $0x100] sm:$0xff]
        %v406 = vld [vmem:[%s301 + $0x108] sm:$0xff]
        %v407 = vld [vmem:[%s301 + $0x110] sm:$0xff]
        %v408 = vld [vmem:[%s301 + $0x118] sm:$0xff]
        %v409 = vld [vmem:[%s301 + $0x120] sm:$0xff]
        %v410 = vld [vmem:[%s301 + $0x128] sm:$0xff]
        %v411 = vld [vmem:[%s301 + $0x130] sm:$0xff]
        %v412 = vld [vmem:[%s301 + $0x138] sm:$0xff]
        %v413 = vld [vmem:[%s301 + $0x140] sm:$0xff]
        %v414 = vld [vmem:[%s301 + $0x148] sm:$0xff]
        %v415 = vld [vmem:[%s301 + $0x150] sm:$0xff]
        %v416 = vld [vmem:[%s301 + $0x158] sm:$0xff]
        %v417 = vld [vmem:[%s301 + $0x160] sm:$0xff]
        %v418 = vld [vmem:[%s301 + $0x168] sm:$0xff]
        %v419 = vld [vmem:[%s301 + $0x170] sm:$0xff]
        %v420 = vld [vmem:[%s301 + $0x178] sm:$0xff]
        %v421 = vld [vmem:[%s301 + $0x180] sm:$0xff]
        %v422 = vld [vmem:[%s301 + $0x188] sm:$0xff]
        %v423 = vld [vmem:[%s301 + $0x190] sm:$0xff]
        %v424 = vld [vmem:[%s301 + $0x198] sm:$0xff]
        %v425 = vld [vmem:[%s301 + $0x1a0] sm:$0xff]
        %v426 = vld [vmem:[%s301 + $0x1a8] sm:$0xff]
        %v427 = vld [vmem:[%s301 + $0x1b0] sm:$0xff]
        %v428 = vld [vmem:[%s301 + $0x1b8] sm:$0xff]
        %v429 = vld [vmem:[%s301 + $0x1c0] sm:$0xff]
        %v430 = vld [vmem:[%s301 + $0x1c8] sm:$0xff]
        %v431 = vld [vmem:[%s301 + $0x1d0] sm:$0xff]
        %v432 = vld [vmem:[%s301 + $0x1d8] sm:$0xff]
        %v433 = vld [vmem:[%s301 + $0x1e0] sm:$0xff]
        %v434 = vld [vmem:[%s301 + $0x1e8] sm:$0xff]
        %v435 = vld [vmem:[%s301 + $0x1f0] sm:$0xff]
        %v436 = vld [vmem:[%s301 + $0x1f8] sm:$0xff]
        %v453 = vunpack.c.l.b16 %v357
        %v454 = vunpack.c.h.b16 %v357
        %v455 = vunpack.c.l.b16 %v358
        %v456 = vunpack.c.h.b16 %v358
        %v457 = vunpack.c.l.b16 %v359
        %v458 = vunpack.c.h.b16 %v359
        %v459 = vunpack.c.l.b16 %v360
        %v460 = vunpack.c.h.b16 %v360
        %v461 = vunpack.c.l.b16 %v361
        %v462 = vunpack.c.h.b16 %v361
        %v463 = vunpack.c.l.b16 %v362
        %v464 = vunpack.c.h.b16 %v362
        %v465 = vunpack.c.l.b16 %v363
        %v466 = vunpack.c.h.b16 %v363
        %v467 = vunpack.c.l.b16 %v364
        %v468 = vunpack.c.h.b16 %v364
        %v469 = vunpack.c.l.b16 %v365
        %v470 = vunpack.c.h.b16 %v365
        %v471 = vunpack.c.l.b16 %v366
        %v472 = vunpack.c.h.b16 %v366
        %v473 = vunpack.c.l.b16 %v367
        %v474 = vunpack.c.h.b16 %v367
        %v475 = vunpack.c.l.b16 %v368
        %v476 = vunpack.c.h.b16 %v368
        %v477 = vunpack.c.l.b16 %v369
        %v478 = vunpack.c.h.b16 %v369
        %v479 = vunpack.c.l.b16 %v370
        %v480 = vunpack.c.h.b16 %v370
        %v481 = vunpack.c.l.b16 %v371
        %v482 = vunpack.c.h.b16 %v371
        %v483 = vunpack.c.l.b16 %v372
        %v484 = vunpack.c.h.b16 %v372
        %v485 = vpack.c.b16 %v457, %v453
        %v486 = vpack.c.b16 %v458, %v454
        %v487 = vpack.c.b16 %v459, %v455
        %v488 = vpack.c.b16 %v460, %v456
        %v489 = vpack.c.b16 %v465, %v461
        %v490 = vpack.c.b16 %v466, %v462
        %v491 = vpack.c.b16 %v467, %v463
        %v492 = vpack.c.b16 %v468, %v464
        %v493 = vpack.c.b16 %v473, %v469
        %v494 = vpack.c.b16 %v474, %v470
        %v495 = vpack.c.b16 %v475, %v471
        %v496 = vpack.c.b16 %v476, %v472
        %v497 = vpack.c.b16 %v481, %v477
        %v498 = vpack.c.b16 %v482, %v478
        %v499 = vpack.c.b16 %v483, %v479
        %v500 = vpack.c.b16 %v484, %v480
        %v581 = vunpack.c.l.b16 %v373
        %v582 = vunpack.c.h.b16 %v373
        %v583 = vunpack.c.l.b16 %v374
        %v584 = vunpack.c.h.b16 %v374
        %v585 = vunpack.c.l.b16 %v375
        %v586 = vunpack.c.h.b16 %v375
        %v587 = vunpack.c.l.b16 %v376
        %v588 = vunpack.c.h.b16 %v376
        %v589 = vunpack.c.l.b16 %v377
        %v590 = vunpack.c.h.b16 %v377
        %v591 = vunpack.c.l.b16 %v378
        %v592 = vunpack.c.h.b16 %v378
        %v593 = vunpack.c.l.b16 %v379
        %v594 = vunpack.c.h.b16 %v379
        %v595 = vunpack.c.l.b16 %v380
        %v596 = vunpack.c.h.b16 %v380
        %v597 = vunpack.c.l.b16 %v381
        %v598 = vunpack.c.h.b16 %v381
        %v599 = vunpack.c.l.b16 %v382
        %v600 = vunpack.c.h.b16 %v382
        %v601 = vunpack.c.l.b16 %v383
        %v602 = vunpack.c.h.b16 %v383
        %v603 = vunpack.c.l.b16 %v384
        %v604 = vunpack.c.h.b16 %v384
        %v605 = vunpack.c.l.b16 %v385
        %v606 = vunpack.c.h.b16 %v385
        %v607 = vunpack.c.l.b16 %v386
        %v608 = vunpack.c.h.b16 %v386
        %v609 = vunpack.c.l.b16 %v387
        %v610 = vunpack.c.h.b16 %v387
        %v611 = vunpack.c.l.b16 %v388
        %v612 = vunpack.c.h.b16 %v388
        %v613 = vunpack.c.l.b16 %v389
        %v614 = vunpack.c.h.b16 %v389
        %v615 = vunpack.c.l.b16 %v390
        %v616 = vunpack.c.h.b16 %v390
        %v617 = vunpack.c.l.b16 %v391
        %v618 = vunpack.c.h.b16 %v391
        %v619 = vunpack.c.l.b16 %v392
        %v620 = vunpack.c.h.b16 %v392
        %v621 = vunpack.c.l.b16 %v393
        %v622 = vunpack.c.h.b16 %v393
        %v623 = vunpack.c.l.b16 %v394
        %v624 = vunpack.c.h.b16 %v394
        %v625 = vunpack.c.l.b16 %v395
        %v626 = vunpack.c.h.b16 %v395
        %v627 = vunpack.c.l.b16 %v396
        %v628 = vunpack.c.h.b16 %v396
        %v629 = vunpack.c.l.b16 %v397
        %v630 = vunpack.c.h.b16 %v397
        %v631 = vunpack.c.l.b16 %v398
        %v632 = vunpack.c.h.b16 %v398
        %v633 = vunpack.c.l.b16 %v399
        %v634 = vunpack.c.h.b16 %v399
        %v635 = vunpack.c.l.b16 %v400
        %v636 = vunpack.c.h.b16 %v400
        %v637 = vunpack.c.l.b16 %v401
        %v638 = vunpack.c.h.b16 %v401
        %v639 = vunpack.c.l.b16 %v402
        %v640 = vunpack.c.h.b16 %v402
        %v641 = vunpack.c.l.b16 %v403
        %v642 = vunpack.c.h.b16 %v403
        %v643 = vunpack.c.l.b16 %v404
        %v644 = vunpack.c.h.b16 %v404
        %v645 = vunpack.c.l.b16 %v405
        %v646 = vunpack.c.h.b16 %v405
        %v647 = vunpack.c.l.b16 %v406
        %v648 = vunpack.c.h.b16 %v406
        %v649 = vunpack.c.l.b16 %v407
        %v650 = vunpack.c.h.b16 %v407
        %v651 = vunpack.c.l.b16 %v408
        %v652 = vunpack.c.h.b16 %v408
        %v653 = vunpack.c.l.b16 %v409
        %v654 = vunpack.c.h.b16 %v409
        %v655 = vunpack.c.l.b16 %v410
        %v656 = vunpack.c.h.b16 %v410
        %v657 = vunpack.c.l.b16 %v411
        %v658 = vunpack.c.h.b16 %v411
        %v659 = vunpack.c.l.b16 %v412
        %v660 = vunpack.c.h.b16 %v412
        %v661 = vunpack.c.l.b16 %v413
        %v662 = vunpack.c.h.b16 %v413
        %v663 = vunpack.c.l.b16 %v414
        %v664 = vunpack.c.h.b16 %v414
        %v665 = vunpack.c.l.b16 %v415
        %v666 = vunpack.c.h.b16 %v415
        %v667 = vunpack.c.l.b16 %v416
        %v668 = vunpack.c.h.b16 %v416
        %v669 = vunpack.c.l.b16 %v417
        %v670 = vunpack.c.h.b16 %v417
        %v671 = vunpack.c.l.b16 %v418
        %v672 = vunpack.c.h.b16 %v418
        %v673 = vunpack.c.l.b16 %v419
        %v674 = vunpack.c.h.b16 %v419
        %v675 = vunpack.c.l.b16 %v420
        %v676 = vunpack.c.h.b16 %v420
        %v677 = vunpack.c.l.b16 %v421
        %v678 = vunpack.c.h.b16 %v421
        %v679 = vunpack.c.l.b16 %v422
        %v680 = vunpack.c.h.b16 %v422
        %v681 = vunpack.c.l.b16 %v423
        %v682 = vunpack.c.h.b16 %v423
        %v683 = vunpack.c.l.b16 %v424
        %v684 = vunpack.c.h.b16 %v424
        %v685 = vunpack.c.l.b16 %v425
        %v686 = vunpack.c.h.b16 %v425
        %v687 = vunpack.c.l.b16 %v426
        %v688 = vunpack.c.h.b16 %v426
        %v689 = vunpack.c.l.b16 %v427
        %v690 = vunpack.c.h.b16 %v427
        %v691 = vunpack.c.l.b16 %v428
        %v692 = vunpack.c.h.b16 %v428
        %v693 = vunpack.c.l.b16 %v429
        %v694 = vunpack.c.h.b16 %v429
        %v695 = vunpack.c.l.b16 %v430
        %v696 = vunpack.c.h.b16 %v430
        %v697 = vunpack.c.l.b16 %v431
        %v698 = vunpack.c.h.b16 %v431
        %v699 = vunpack.c.l.b16 %v432
        %v700 = vunpack.c.h.b16 %v432
        %v701 = vunpack.c.l.b16 %v433
        %v702 = vunpack.c.h.b16 %v433
        %v703 = vunpack.c.l.b16 %v434
        %v704 = vunpack.c.h.b16 %v434
        %v705 = vunpack.c.l.b16 %v435
        %v706 = vunpack.c.h.b16 %v435
        %v707 = vunpack.c.l.b16 %v436
        %v708 = vunpack.c.h.b16 %v436
        %v709 = vpack.c.b16 %v583, %v581
        %v710 = vpack.c.b16 %v584, %v582
        %v711 = vpack.c.b16 %v587, %v585
        %v712 = vpack.c.b16 %v588, %v586
        %v713 = vpack.c.b16 %v591, %v589
        %v714 = vpack.c.b16 %v592, %v590
        %v715 = vpack.c.b16 %v595, %v593
        %v716 = vpack.c.b16 %v596, %v594
        %v717 = vpack.c.b16 %v599, %v597
        %v718 = vpack.c.b16 %v600, %v598
        %v719 = vpack.c.b16 %v603, %v601
        %v720 = vpack.c.b16 %v604, %v602
        %v721 = vpack.c.b16 %v607, %v605
        %v722 = vpack.c.b16 %v608, %v606
        %v723 = vpack.c.b16 %v611, %v609
        %v724 = vpack.c.b16 %v612, %v610
        %v725 = vpack.c.b16 %v615, %v613
        %v726 = vpack.c.b16 %v616, %v614
        %v727 = vpack.c.b16 %v619, %v617
        %v728 = vpack.c.b16 %v620, %v618
        %v729 = vpack.c.b16 %v623, %v621
        %v730 = vpack.c.b16 %v624, %v622
        %v731 = vpack.c.b16 %v627, %v625
        %v732 = vpack.c.b16 %v628, %v626
        %v733 = vpack.c.b16 %v631, %v629
        %v734 = vpack.c.b16 %v632, %v630
        %v735 = vpack.c.b16 %v635, %v633
        %v736 = vpack.c.b16 %v636, %v634
        %v737 = vpack.c.b16 %v639, %v637
        %v738 = vpack.c.b16 %v640, %v638
        %v739 = vpack.c.b16 %v643, %v641
        %v740 = vpack.c.b16 %v644, %v642
        %v741 = vpack.c.b16 %v647, %v645
        %v742 = vpack.c.b16 %v648, %v646
        %v743 = vpack.c.b16 %v651, %v649
        %v744 = vpack.c.b16 %v652, %v650
        %v745 = vpack.c.b16 %v655, %v653
        %v746 = vpack.c.b16 %v656, %v654
        %v747 = vpack.c.b16 %v659, %v657
        %v748 = vpack.c.b16 %v660, %v658
        %v749 = vpack.c.b16 %v663, %v661
        %v750 = vpack.c.b16 %v664, %v662
        %v751 = vpack.c.b16 %v667, %v665
        %v752 = vpack.c.b16 %v668, %v666
        %v753 = vpack.c.b16 %v671, %v669
        %v754 = vpack.c.b16 %v672, %v670
        %v755 = vpack.c.b16 %v675, %v673
        %v756 = vpack.c.b16 %v676, %v674
        %v757 = vpack.c.b16 %v679, %v677
        %v758 = vpack.c.b16 %v680, %v678
        %v759 = vpack.c.b16 %v683, %v681
        %v760 = vpack.c.b16 %v684, %v682
        %v761 = vpack.c.b16 %v687, %v685
        %v762 = vpack.c.b16 %v688, %v686
        %v763 = vpack.c.b16 %v691, %v689
        %v764 = vpack.c.b16 %v692, %v690
        %v765 = vpack.c.b16 %v695, %v693
        %v766 = vpack.c.b16 %v696, %v694
        %v767 = vpack.c.b16 %v699, %v697
        %v768 = vpack.c.b16 %v700, %v698
        %v769 = vpack.c.b16 %v703, %v701
        %v770 = vpack.c.b16 %v704, %v702
        %v771 = vpack.c.b16 %v707, %v705
        %v772 = vpack.c.b16 %v708, %v706
        %837 = vmatprep.subr.bf16.mxu0 %v710
        %838 = vmatpush1.bf16.msra.mxu0 %v709
        %839 = vmatprep.subr.bf16.mxu0 %v712
        %840 = vmatpush1.bf16.msra.mxu0 %v711
        %841 = vmatprep.subr.bf16.mxu0 %v714
        %842 = vmatpush1.bf16.msra.mxu0 %v713
        %843 = vmatprep.subr.bf16.mxu0 %v716
        %844 = vmatpush1.bf16.msra.mxu0 %v715
        %845 = vmatprep.subr.bf16.mxu0 %v718
        %846 = vmatpush1.bf16.msra.mxu0 %v717
        %847 = vmatprep.subr.bf16.mxu0 %v720
        %848 = vmatpush1.bf16.msra.mxu0 %v719
        %849 = vmatprep.subr.bf16.mxu0 %v722
        %850 = vmatpush1.bf16.msra.mxu0 %v721
        %851 = vmatprep.subr.bf16.mxu0 %v724
        %852 = vmatpush1.bf16.msra.mxu0 %v723
        %853 = vmatprep.subr.bf16.mxu0 %v726
        %854 = vmatpush1.bf16.msra.mxu0 %v725
        %855 = vmatprep.subr.bf16.mxu0 %v728
        %856 = vmatpush1.bf16.msra.mxu0 %v727
        %857 = vmatprep.subr.bf16.mxu0 %v730
        %858 = vmatpush1.bf16.msra.mxu0 %v729
        %859 = vmatprep.subr.bf16.mxu0 %v732
        %860 = vmatpush1.bf16.msra.mxu0 %v731
        %861 = vmatprep.subr.bf16.mxu0 %v734
        %862 = vmatpush1.bf16.msra.mxu0 %v733
        %863 = vmatprep.subr.bf16.mxu0 %v736
        %864 = vmatpush1.bf16.msra.mxu0 %v735
        %865 = vmatprep.subr.bf16.mxu0 %v738
        %866 = vmatpush1.bf16.msra.mxu0 %v737
        %867 = vmatprep.subr.bf16.mxu0 %v740
        %868 = vmatpush1.bf16.msra.mxu0 %v739
        %869 = vmatprep.mubr.bf16.mxu0 %v486
        %870 = vmatmul.mubr.bf16.gmra.mrb[0].mxu0 %v485
        %v871 = vpop.f32.mrb[0].mxu0
        %v872 = vadd.f32 0.0, %v871
        %v873 = vpop.f32.mrb[0].mxu0
        %v874 = vadd.f32 0.0, %v873
        %v875 = vpop.f32.mrb[0].mxu0
        %v876 = vadd.f32 0.0, %v875
        %v877 = vpop.f32.mrb[0].mxu0
        %v878 = vadd.f32 0.0, %v877
        %879 = vmatprep.mubr.bf16.mxu0 %v490
        %880 = vmatmul.mubr.bf16.gmra.mrb[0].mxu0 %v489
        %v881 = vpop.f32.mrb[0].mxu0
        %v882 = vadd.f32 0.0, %v881
        %v883 = vpop.f32.mrb[0].mxu0
        %v884 = vadd.f32 0.0, %v883
        %v885 = vpop.f32.mrb[0].mxu0
        %v886 = vadd.f32 0.0, %v885
        %v887 = vpop.f32.mrb[0].mxu0
        %v888 = vadd.f32 0.0, %v887
        %889 = vmatprep.mubr.bf16.mxu0 %v494
        %890 = vmatmul.mubr.bf16.gmra.mrb[0].mxu0 %v493
        %v891 = vpop.f32.mrb[0].mxu0
        %v892 = vadd.f32 0.0, %v891
        %v893 = vpop.f32.mrb[0].mxu0
        %v894 = vadd.f32 0.0, %v893
        %v895 = vpop.f32.mrb[0].mxu0
        %v896 = vadd.f32 0.0, %v895
        %v897 = vpop.f32.mrb[0].mxu0
        %v898 = vadd.f32 0.0, %v897
        %899 = vmatprep.mubr.bf16.mxu0 %v498
        %900 = vmatmul.mubr.bf16.gmra.mrb[0].mxu0 %v497
        %v901 = vpop.f32.mrb[0].mxu0
        %v902 = vadd.f32 0.0, %v901
        %v903 = vpop.f32.mrb[0].mxu0
        %v904 = vadd.f32 0.0, %v903
        %v905 = vpop.f32.mrb[0].mxu0
        %v906 = vadd.f32 0.0, %v905
        %v907 = vpop.f32.mrb[0].mxu0
        %v908 = vadd.f32 0.0, %v907
        %909 = vdwg.mxu0
        %910 = vmatprep.subr.bf16.mxu0 %v742
        %911 = vmatpush1.bf16.msra.mxu0 %v741
        %912 = vmatprep.subr.bf16.mxu0 %v744
        %913 = vmatpush1.bf16.msra.mxu0 %v743
        %914 = vmatprep.subr.bf16.mxu0 %v746
        %915 = vmatpush1.bf16.msra.mxu0 %v745
        %916 = vmatprep.subr.bf16.mxu0 %v748
        %917 = vmatpush1.bf16.msra.mxu0 %v747
        %918 = vmatprep.subr.bf16.mxu0 %v750
        %919 = vmatpush1.bf16.msra.mxu0 %v749
        %920 = vmatprep.subr.bf16.mxu0 %v752
        %921 = vmatpush1.bf16.msra.mxu0 %v751
        %922 = vmatprep.subr.bf16.mxu0 %v754
        %923 = vmatpush1.bf16.msra.mxu0 %v753
        %924 = vmatprep.subr.bf16.mxu0 %v756
        %925 = vmatpush1.bf16.msra.mxu0 %v755
        %926 = vmatprep.subr.bf16.mxu0 %v758
        %927 = vmatpush1.bf16.msra.mxu0 %v757
        %928 = vmatprep.subr.bf16.mxu0 %v760
        %929 = vmatpush1.bf16.msra.mxu0 %v759
        %930 = vmatprep.subr.bf16.mxu0 %v762
        %931 = vmatpush1.bf16.msra.mxu0 %v761
        %932 = vmatprep.subr.bf16.mxu0 %v764
        %933 = vmatpush1.bf16.msra.mxu0 %v763
        %934 = vmatprep.subr.bf16.mxu0 %v766
        %935 = vmatpush1.bf16.msra.mxu0 %v765
        %936 = vmatprep.subr.bf16.mxu0 %v768
        %937 = vmatpush1.bf16.msra.mxu0 %v767
        %938 = vmatprep.subr.bf16.mxu0 %v770
        %939 = vmatpush1.bf16.msra.mxu0 %v769
        %940 = vmatprep.subr.bf16.mxu0 %v772
        %941 = vmatpush1.bf16.msra.mxu0 %v771
        %942 = vmatprep.mubr.bf16.mxu0 %v488
        %943 = vmatmul.mubr.bf16.gmra.mrb[0].mxu0 %v487
        %v944 = vpop.f32.mrb[0].mxu0
        %v945 = vadd.f32 %v872, %v944
        %v946 = vpop.f32.mrb[0].mxu0
        %v947 = vadd.f32 %v874, %v946
        %v948 = vpop.f32.mrb[0].mxu0
        %v949 = vadd.f32 %v876, %v948
        %v950 = vpop.f32.mrb[0].mxu0
        %v951 = vadd.f32 %v878, %v950
        %952 = vmatprep.mubr.bf16.mxu0 %v492
        %953 = vmatmul.mubr.bf16.gmra.mrb[0].mxu0 %v491
        %v954 = vpop.f32.mrb[0].mxu0
        %v955 = vadd.f32 %v882, %v954
        %v956 = vpop.f32.mrb[0].mxu0
        %v957 = vadd.f32 %v884, %v956
        %v958 = vpop.f32.mrb[0].mxu0
        %v959 = vadd.f32 %v886, %v958
        %v960 = vpop.f32.mrb[0].mxu0
        %v961 = vadd.f32 %v888, %v960
        %962 = vmatprep.mubr.bf16.mxu0 %v496
        %963 = vmatmul.mubr.bf16.gmra.mrb[0].mxu0 %v495
        %v964 = vpop.f32.mrb[0].mxu0
        %v965 = vadd.f32 %v892, %v964
        %v966 = vpop.f32.mrb[0].mxu0
        %v967 = vadd.f32 %v894, %v966
        %v968 = vpop.f32.mrb[0].mxu0
        %v969 = vadd.f32 %v896, %v968
        %v970 = vpop.f32.mrb[0].mxu0
        %v971 = vadd.f32 %v898, %v970
        %972 = vmatprep.mubr.bf16.mxu0 %v500
        %973 = vmatmul.mubr.bf16.gmra.mrb[0].mxu0 %v499
        %v974 = vpop.f32.mrb[0].mxu0
        %v975 = vadd.f32 %v902, %v974
        %v976 = vpop.f32.mrb[0].mxu0
        %v977 = vadd.f32 %v904, %v976
        %v978 = vpop.f32.mrb[0].mxu0
        %v979 = vadd.f32 %v906, %v978
        %v980 = vpop.f32.mrb[0].mxu0
        %v981 = vadd.f32 %v908, %v980
        %982 = vdwg.mxu0
        %v983 = vadd.f32 %v341, %v945
        %v984 = vadd.f32 %v342, %v947
        %v985 = vadd.f32 %v343, %v949
        %v986 = vadd.f32 %v344, %v951
        %v987 = vadd.f32 %v345, %v955
        %v988 = vadd.f32 %v346, %v957
        %v989 = vadd.f32 %v347, %v959
        %v990 = vadd.f32 %v348, %v961
        %v991 = vadd.f32 %v349, %v965
        %v992 = vadd.f32 %v350, %v967
        %v993 = vadd.f32 %v351, %v969
        %v994 = vadd.f32 %v352, %v971
        %v995 = vadd.f32 %v353, %v975
        %v996 = vadd.f32 %v354, %v977
        %v997 = vadd.f32 %v355, %v979
        %v998 = vadd.f32 %v356, %v981
        %999 = vst [vmem:[#allocation2] sm:$0xff] %v983
        %1000 = vst [vmem:[#allocation2 + $0x8] sm:$0xff] %v984
        %1001 = vst [vmem:[#allocation2 + $0x10] sm:$0xff] %v985
        %1002 = vst [vmem:[#allocation2 + $0x18] sm:$0xff] %v986
        %1003 = vst [vmem:[#allocation2 + $0x20] sm:$0xff] %v987
        %1004 = vst [vmem:[#allocation2 + $0x28] sm:$0xff] %v988
        %1005 = vst [vmem:[#allocation2 + $0x30] sm:$0xff] %v989
        %1006 = vst [vmem:[#allocation2 + $0x38] sm:$0xff] %v990
        %1007 = vst [vmem:[#allocation2 + $0x40] sm:$0xff] %v991
        %1008 = vst [vmem:[#allocation2 + $0x48] sm:$0xff] %v992
        %1009 = vst [vmem:[#allocation2 + $0x50] sm:$0xff] %v993
        %1010 = vst [vmem:[#allocation2 + $0x58] sm:$0xff] %v994
        %1011 = vst [vmem:[#allocation2 + $0x60] sm:$0xff] %v995
        %1012 = vst [vmem:[#allocation2 + $0x68] sm:$0xff] %v996
        %1013 = vst [vmem:[#allocation2 + $0x70] sm:$0xff] %v997
        %1014 = vst [vmem:[#allocation2 + $0x78] sm:$0xff] %v998
        %p1015 = scmp.eq.s32.totalorder %s21, 1
        // Predicated region
        $region60: #{_lambda_.12} parent=50 // pred_check
          %p1016 = pneg %p1015
        $region61: #{_lambda_.12} parent=50 // pred_check_branch
          %1018 = sbr.rel (%p1016) target = $region63
        $region62: #{_lambda_.12} parent=50 // pred_region
          %v1019 = vld [vmem:[#allocation2] sm:$0xff]
          %v1020 = vld [vmem:[#allocation2 + $0x8] sm:$0xff]
          %v1021 = vld [vmem:[#allocation2 + $0x10] sm:$0xff]
          %v1022 = vld [vmem:[#allocation2 + $0x18] sm:$0xff]
          %v1023 = vld [vmem:[#allocation2 + $0x20] sm:$0xff]
          %v1024 = vld [vmem:[#allocation2 + $0x28] sm:$0xff]
          %v1025 = vld [vmem:[#allocation2 + $0x30] sm:$0xff]
          %v1026 = vld [vmem:[#allocation2 + $0x38] sm:$0xff]
          %v1027 = vld [vmem:[#allocation2 + $0x40] sm:$0xff]
          %v1028 = vld [vmem:[#allocation2 + $0x48] sm:$0xff]
          %v1029 = vld [vmem:[#allocation2 + $0x50] sm:$0xff]
          %v1030 = vld [vmem:[#allocation2 + $0x58] sm:$0xff]
          %v1031 = vld [vmem:[#allocation2 + $0x60] sm:$0xff]
          %v1032 = vld [vmem:[#allocation2 + $0x68] sm:$0xff]
          %v1033 = vld [vmem:[#allocation2 + $0x70] sm:$0xff]
          %v1034 = vld [vmem:[#allocation2 + $0x78] sm:$0xff]
          %v1035 = vld [vmem:[%s307] sm:$0x3]
          %v1037 = vlaneseq
          %v1038 = vshrl.u32 %v1037, 7
          %v1039 = vsub.s32 0, %v1038
          %v1040 = vrot.slane %v1035, %v1039
          %v1041 = vlaneseq
          %v1042 = vshrl.u32 %v1041, 7
          %v1043 = vsub.s32 1, %v1042
          %v1044 = vrot.slane %v1035, %v1043
          %v1047 = vadd.f32 %v1019, %v1040
          %v1048 = vadd.f32 %v1020, %v1044
          %v1049 = vadd.f32 %v1021, %v1040
          %v1050 = vadd.f32 %v1022, %v1044
          %v1051 = vadd.f32 %v1023, %v1040
          %v1052 = vadd.f32 %v1024, %v1044
          %v1053 = vadd.f32 %v1025, %v1040
          %v1054 = vadd.f32 %v1026, %v1044
          %v1055 = vadd.f32 %v1027, %v1040
          %v1056 = vadd.f32 %v1028, %v1044
          %v1057 = vadd.f32 %v1029, %v1040
          %v1058 = vadd.f32 %v1030, %v1044
          %v1059 = vadd.f32 %v1031, %v1040
          %v1060 = vadd.f32 %v1032, %v1044
          %v1061 = vadd.f32 %v1033, %v1040
          %v1062 = vadd.f32 %v1034, %v1044
          %v1063 = vmax.f32 %v1047, 0.0
          %v1064 = vmax.f32 %v1048, 0.0
          %v1065 = vmax.f32 %v1049, 0.0
          %v1066 = vmax.f32 %v1050, 0.0
          %v1067 = vmax.f32 %v1051, 0.0
          %v1068 = vmax.f32 %v1052, 0.0
          %v1069 = vmax.f32 %v1053, 0.0
          %v1070 = vmax.f32 %v1054, 0.0
          %v1071 = vmax.f32 %v1055, 0.0
          %v1072 = vmax.f32 %v1056, 0.0
          %v1073 = vmax.f32 %v1057, 0.0
          %v1074 = vmax.f32 %v1058, 0.0
          %v1075 = vmax.f32 %v1059, 0.0
          %v1076 = vmax.f32 %v1060, 0.0
          %v1077 = vmax.f32 %v1061, 0.0
          %v1078 = vmax.f32 %v1062, 0.0
          %v1079 = vpack.c.bf16 %v1065, %v1063
          %v1080 = vpack.c.bf16 %v1066, %v1064
          %v1081 = vpack.c.bf16 %v1069, %v1067
          %v1082 = vpack.c.bf16 %v1070, %v1068
          %v1083 = vpack.c.bf16 %v1073, %v1071
          %v1084 = vpack.c.bf16 %v1074, %v1072
          %v1085 = vpack.c.bf16 %v1077, %v1075
          %v1086 = vpack.c.bf16 %v1078, %v1076
          %v1095 = vunpack.c.l.b16 %v1079
          %v1096 = vunpack.c.l.b16 %v1080
          %v1097 = vunpack.c.h.b16 %v1079
          %v1098 = vunpack.c.h.b16 %v1080
          %v1099 = vunpack.c.l.b16 %v1081
          %v1100 = vunpack.c.l.b16 %v1082
          %v1101 = vunpack.c.h.b16 %v1081
          %v1102 = vunpack.c.h.b16 %v1082
          %v1103 = vunpack.c.l.b16 %v1083
          %v1104 = vunpack.c.l.b16 %v1084
          %v1105 = vunpack.c.h.b16 %v1083
          %v1106 = vunpack.c.h.b16 %v1084
          %v1107 = vunpack.c.l.b16 %v1085
          %v1108 = vunpack.c.l.b16 %v1086
          %v1109 = vunpack.c.h.b16 %v1085
          %v1110 = vunpack.c.h.b16 %v1086
          %v1111 = vpack.c.b16 %v1096, %v1095
          %v1112 = vpack.c.b16 %v1098, %v1097
          %v1113 = vpack.c.b16 %v1100, %v1099
          %v1114 = vpack.c.b16 %v1102, %v1101
          %v1115 = vpack.c.b16 %v1104, %v1103
          %v1116 = vpack.c.b16 %v1106, %v1105
          %v1117 = vpack.c.b16 %v1108, %v1107
          %v1118 = vpack.c.b16 %v1110, %v1109
          %1127 = vst [vmem:[%s318] sm:$0xff] %v1111
          %1128 = vst [vmem:[%s318 + $0x8] sm:$0xff] %v1112
          %1129 = vst [vmem:[%s318 + $0x10] sm:$0xff] %v1113
          %1130 = vst [vmem:[%s318 + $0x18] sm:$0xff] %v1114
          %1131 = vst [vmem:[%s318 + $0x20] sm:$0xff] %v1115
          %1132 = vst [vmem:[%s318 + $0x28] sm:$0xff] %v1116
          %1133 = vst [vmem:[%s318 + $0x30] sm:$0xff] %v1117
          %1134 = vst [vmem:[%s318 + $0x38] sm:$0xff] %v1118
        $region63: #{_lambda_.12} parent=50 // pred_fallthru
          _
        %s1135 = smul.u32 8, %s19
        %s1136 = smul.u32 2, %s20
        %p1137 = scmp.lt.s32.totalorder %s1135, 7
        %s1138 = scalar_select %p1137, %s1135, 7
        %p1139 = scmp.lt.s32.totalorder %s1136, 1
        %s1140 = scalar_select %p1139, %s1136, 1
        %s1141 = smul.addr %s1138, 2
        %s1142 = sadd.s32 %s1140, %s1141
        %s1143 = smul.addr %s1142, 4
        %s1144 = scalar_lea.vmem %s3, %s1143
        // Predicated region
        $region64: #{_lambda_.12} parent=50 // pred_check
          %p1145 = pneg %p135
        $region65: #{_lambda_.12} parent=50 // pred_check_branch
          %1147 = sbr.rel (%p1145) target = $region67
        $region66: #{_lambda_.12} parent=50 // pred_region
          %s1148 = smul.u32 8, %s19
          %s1149 = smul.u32 2, %s20
        $region67: #{_lambda_.12} parent=50 // pred_fallthru
          _
        // Predicated region
        $region68: #{_lambda_.12} parent=50 // pred_check
          %p1150 = pneg %p135
        $region69: #{_lambda_.12} parent=50 // pred_check_branch
          %1152 = sbr.rel (%p1150) target = $region71
        $region70: #{_lambda_.12} parent=50 // pred_region
          %s1153 = smul.u32 8, %s19
          %s1154 = smul.u32 2, %s20
          %p1155 = scmp.lt.s32.totalorder %s1153, 7
          %s1156 = scalar_select %p1155, %s1153, 7
          %p1157 = scmp.lt.s32.totalorder %s1154, 1
          %s1158 = scalar_select %p1157, %s1154, 1
          %s1159 = smul.addr %s1156, 2
          %s1160 = sadd.s32 %s1158, %s1159
          %s1161 = smul.addr %s1160, 4
          %s1162 = scalar_lea.vmem %s3, %s1161
        $region71: #{_lambda_.12} parent=50 // pred_fallthru
          _
      $region51: #{_lambda_.12} parent=5 // pred_fallthru
        _
      %p1163 = scmp.le.s32.totalorder 2, %s9
      // Predicated region
      $region72: #{_lambda_.12} parent=5 // pred_check
        %p1164 = pneg %p1163
      $region73: #{_lambda_.12} parent=5 // pred_check_branch
        %1166 = sbr.rel (%p1164) target = $region75
      $region74: #{_lambda_.12} parent=5 // pred_region
        %s1167 = ssub.s32 %s9, 2
      $region75: #{_lambda_.12} parent=5 // pred_fallthru
        _
    $region6: #{_lambda_.12} parent=1 // loop_footer
      %s13 = sadd.s32 1, %s9
    $region7: #{_lambda_.12} parent=1 // loop_footer_branch
      %8 = sbr.rel target = $region3
    $region8: #{_lambda_.12} parent=1 // loop_exit
      _

// kernel: _lambda_.13
$region0: #{_lambda_.13}
  #allocation0 [shape = 'u32[]', space=smem, size = 0x4, offset = 0x4, fixed_abs, tag = 'smem constant byte address 0x4 - core index']
  #allocation1 [shape = 'u32[144,128]{1,0:T(1,128)}', space=vmem, size = 0x12000, scoped, tag = 'internal scratch']
  #allocation2 [shape = 'f32[8,128]{1,0:T(8,128)}', space=vmem, size = 0x1000, scoped, tag = 'scratch operand']
  %s0 = inlined_call_operand.vmem [shape: bf16[2,8,3456], index: 0, kind: input, shape index: {}]
  %s1 = inlined_call_operand.vmem [shape: bf16[2,3456,128], index: 1, kind: input, shape index: {}]
  %s2 = inlined_call_operand.vmem [shape: f32[1,256], index: 2, kind: input, shape index: {}]
  %s3 = inlined_call_operand.vmem [shape: bf16[8,256], index: 3, kind: output, shape index: {}]
  %s4 = sld [smem:[#allocation0]]
  $region53: #{_lambda_.13} parent=0
    _
  %s6 = ssub.s32 1, %s4
  %s7 = scalar_select 0, %s6, %s4
  loop: start=0, step=1, limit=20
  $region2: #{_lambda_.13} parent=0 // loop_pre_header
    _
  $region3: #{_lambda_.13} parent=0 // loop_header
    %s9 = sphi 0, %s13
    %p10 = scmp.ge.s32.totalorder %s9, 20
    %s16 = sphi 0, %s35
    %s17 = sphi 0, %s31
    %s18 = sphi 0, %s27
    %s19 = sphi 0, %s16
    %s20 = sphi 0, %s17
    %s21 = sphi 0, %s18
    %s22 = sphi 0, %s19
    %s23 = sphi 0, %s20
    %s24 = sphi 0, %s21
    %s42 = sphi 0, %s44
    %s45 = sphi 0, %s42
    %s46 = sphi 0, %s45
    %s62 = sphi 0, %s46
    %s70 = sphi 0, %s72
    %s73 = sphi 0, %s70
    %s74 = sphi 0, %s73
    %s90 = sphi 0, %s74
    %s96 = sphi 0, %s98
    %s99 = sphi 0, %s96
    %s100 = sphi 0, %s99
    %s116 = sphi 0, %s100
    %s124 = sphi 0, %s126
    %s127 = sphi 0, %s124
    %s128 = sphi 0, %s127
    %s144 = sphi 0, %s128
  $region4: #{_lambda_.13} parent=0 // loop_header_branch
    %12 = sbr.rel (%p10) target = $region8
  $region5: #{_lambda_.13} parent=0 // loop_body
    %s14 = ssub.s32 %s9, 1
    %s15 = ssub.s32 %s9, 2
    %s25 = sadd.s32 1, %s18
    %p26 = scmp.ge.s32.totalorder %s25, 9
    %s27 = scalar_select %p26, 0, %s25
    %s28 = sadd.s32 1, %s17
    %s29 = scalar_select %p26, %s28, %s17
    %p30 = scmp.ge.s32.totalorder %s29, 2
    %s31 = scalar_select %p30, 0, %s29
    %s32 = sadd.s32 1, %s16
    %s33 = scalar_select %p30, %s32, %s16
    %p34 = scmp.ge.s32.totalorder %s33, 1
    %s35 = scalar_select %p34, 0, %s33
    %s36 = ssub.s32 %s17, %s31
    %s37 = ssub.s32 %s16, %s35
    %s38 = sor.u32 %s36, %s37
    %s39 = ssub.s32 %s18, %s27
    %s40 = sor.u32 %s38, %s39
    %p41 = scmp.eq.s32.totalorder %s40, 0
    %s43 = sadd.s32 %s42, 1
    %s44 = scalar_select %p41, %s42, %s43
    %p47 = pneg %p41
    %p48 = scmp.eq.s32.totalorder %s9, 17
    %p49 = por %p47, %p48
    %p50 = scmp.ne.s32.totalorder %s42, %s45
    %p51 = scmp.eq.s32.totalorder %s9, 0
    %p52 = por %p50, %p51
    %p53 = scmp.ne.s32.totalorder %s42, %s45
    %p54 = scmp.eq.s32.totalorder %s14, 17
    %p55 = por %p53, %p54
    %p56 = scmp.ne.s32.totalorder %s45, %s46
    %p57 = scmp.eq.s32.totalorder %s14, 0
    %p58 = por %p56, %p57
    %p59 = scmp.ne.s32.totalorder %s45, %s46
    %p60 = scmp.eq.s32.totalorder %s15, 17
    %p61 = por %p59, %p60
    %p63 = scmp.ne.s32.totalorder %s46, %s62
    %p64 = scmp.eq.s32.totalorder %s15, 0
    %p65 = por %p63, %p64
    %s66 = ssub.s32 %s17, %s31
    %s67 = ssub.s32 %s18, %s27
    %s68 = sor.u32 %s66, %s67
    %p69 = scmp.eq.s32.totalorder %s68, 0
    %s71 = sadd.s32 %s70, 1
    %s72 = scalar_select %p69, %s70, %s71
    %p75 = pneg %p69
    %p76 = scmp.eq.s32.totalorder %s9, 17
    %p77 = por %p75, %p76
    %p78 = scmp.ne.s32.totalorder %s70, %s73
    %p79 = scmp.eq.s32.totalorder %s9, 0
    %p80 = por %p78, %p79
    %p81 = scmp.ne.s32.totalorder %s70, %s73
    %p82 = scmp.eq.s32.totalorder %s14, 17
    %p83 = por %p81, %p82
    %p84 = scmp.ne.s32.totalorder %s73, %s74
    %p85 = scmp.eq.s32.totalorder %s14, 0
    %p86 = por %p84, %p85
    %p87 = scmp.ne.s32.totalorder %s73, %s74
    %p88 = scmp.eq.s32.totalorder %s15, 17
    %p89 = por %p87, %p88
    %p91 = scmp.ne.s32.totalorder %s74, %s90
    %p92 = scmp.eq.s32.totalorder %s15, 0
    %p93 = por %p91, %p92
    %s94 = ssub.s32 %s17, %s31
    %p95 = scmp.eq.s32.totalorder %s94, 0
    %s97 = sadd.s32 %s96, 1
    %s98 = scalar_select %p95, %s96, %s97
    %p101 = pneg %p95
    %p102 = scmp.eq.s32.totalorder %s9, 17
    %p103 = por %p101, %p102
    %p104 = scmp.ne.s32.totalorder %s96, %s99
    %p105 = scmp.eq.s32.totalorder %s9, 0
    %p106 = por %p104, %p105
    %p107 = scmp.ne.s32.totalorder %s96, %s99
    %p108 = scmp.eq.s32.totalorder %s14, 17
    %p109 = por %p107, %p108
    %p110 = scmp.ne.s32.totalorder %s99, %s100
    %p111 = scmp.eq.s32.totalorder %s14, 0
    %p112 = por %p110, %p111
    %p113 = scmp.ne.s32.totalorder %s99, %s100
    %p114 = scmp.eq.s32.totalorder %s15, 17
    %p115 = por %p113, %p114
    %p117 = scmp.ne.s32.totalorder %s100, %s116
    %p118 = scmp.eq.s32.totalorder %s15, 0
    %p119 = por %p117, %p118
    %s120 = ssub.s32 %s16, %s35
    %s121 = ssub.s32 %s17, %s31
    %s122 = sor.u32 %s120, %s121
    %p123 = scmp.eq.s32.totalorder %s122, 0
    %s125 = sadd.s32 %s124, 1
    %s126 = scalar_select %p123, %s124, %s125
    %p129 = pneg %p123
    %p130 = scmp.eq.s32.totalorder %s9, 17
    %p131 = por %p129, %p130
    %p132 = scmp.ne.s32.totalorder %s124, %s127
    %p133 = scmp.eq.s32.totalorder %s9, 0
    %p134 = por %p132, %p133
    %p135 = scmp.ne.s32.totalorder %s124, %s127
    %p136 = scmp.eq.s32.totalorder %s14, 17
    %p137 = por %p135, %p136
    %p138 = scmp.ne.s32.totalorder %s127, %s128
    %p139 = scmp.eq.s32.totalorder %s14, 0
    %p140 = por %p138, %p139
    %p141 = scmp.ne.s32.totalorder %s127, %s128
    %p142 = scmp.eq.s32.totalorder %s15, 17
    %p143 = por %p141, %p142
    %p145 = scmp.ne.s32.totalorder %s128, %s144
    %p146 = scmp.eq.s32.totalorder %s15, 0
    %p147 = por %p145, %p146
    %p148 = scmp.le.s32.totalorder 1, %s9
    %p149 = scmp.lt.s32.totalorder %s9, 19
    %p150 = pnand %p148, %p149
    %p151 = pneg %p150
    // Predicated region
    $region9: #{_lambda_.13} parent=5 // pred_check
      _
    $region10: #{_lambda_.13} parent=5 // pred_check_branch
      %153 = sbr.rel (%p150) target = $region12
    $region11: #{_lambda_.13} parent=5 // pred_region
      %s154 = ssub.s32 %s9, 1
    $region12: #{_lambda_.13} parent=5 // pred_fallthru
      _
    %p155 = scmp.lt.s32.totalorder %s9, 18
    // Predicated region
    $region13: #{_lambda_.13} parent=5 // pred_check
      %p156 = pneg %p155
    $region14: #{_lambda_.13} parent=5 // pred_check_branch
      %158 = sbr.rel (%p156) target = $region16
    $region15: #{_lambda_.13} parent=5 // pred_region
      // Predicated region
      $region17: #{_lambda_.13} parent=15 // pred_check
        %p159 = pneg %p52
      $region18: #{_lambda_.13} parent=15 // pred_check_branch
        %161 = sbr.rel (%p159) target = $region20
      $region19: #{_lambda_.13} parent=15 // pred_region
        %s162 = smul.u32 3, %s18
        %p163 = scmp.lt.s32.totalorder %s17, 1
        %s164 = scalar_select %p163, %s17, 1
        %p165 = scmp.lt.s32.totalorder %s16, 0
        %s166 = scalar_select %p165, %s16, 0
        %p167 = scmp.lt.s32.totalorder %s162, 26
        %s168 = scalar_select %p167, %s162, 26
        %s169 = smul.addr %s166, 27
        %s170 = sadd.s32 %s168, %s169
        %s171 = smul.addr %s164, 27
        %s172 = sadd.s32 %s170, %s171
        %s173 = smul.addr %s172, 4
        %s174 = scalar_lea.vmem %s0, %s173
        %s175 = smul.u32 3, %s18
      $region20: #{_lambda_.13} parent=15 // pred_fallthru
        _
      // Predicated region
      $region21: #{_lambda_.13} parent=15 // pred_check
        %p176 = pneg %p80
      $region22: #{_lambda_.13} parent=15 // pred_check_branch
        %178 = sbr.rel (%p176) target = $region24
      $region23: #{_lambda_.13} parent=15 // pred_region
        %s179 = smul.u32 48, %s18
        %p180 = scmp.lt.s32.totalorder %s17, 1
        %s181 = scalar_select %p180, %s17, 1
        %p182 = scmp.lt.s32.totalorder %s179, 431
        %s183 = scalar_select %p182, %s179, 431
        %s184 = smul.addr %s181, 432
        %s185 = sadd.s32 %s183, %s184
        %s186 = smul.addr %s185, 4
        %s187 = scalar_lea.vmem %s1, %s186
        %s188 = smul.u32 48, %s18
      $region24: #{_lambda_.13} parent=15 // pred_fallthru
        _
      // Predicated region
      $region25: #{_lambda_.13} parent=15 // pred_check
        %p189 = pneg %p106
      $region26: #{_lambda_.13} parent=15 // pred_check_branch
        %191 = sbr.rel (%p189) target = $region28
      $region27: #{_lambda_.13} parent=15 // pred_region
        %p192 = scmp.lt.s32.totalorder %s17, 1
        %s193 = scalar_select %p192, %s17, 1
        %s194 = scalar_lea.vmem %s2, %s193
      $region28: #{_lambda_.13} parent=15 // pred_fallthru
        _
    $region16: #{_lambda_.13} parent=5 // pred_fallthru
      _
    %p195 = scmp.le.s32.totalorder 1, %s9
    %p196 = scmp.lt.s32.totalorder %s9, 19
    %p197 = pnand %p195, %p196
    %p198 = pneg %p197
    // Predicated region
    $region29: #{_lambda_.13} parent=5 // pred_check
      _
    $region30: #{_lambda_.13} parent=5 // pred_check_branch
      %200 = sbr.rel (%p197) target = $region32
    $region31: #{_lambda_.13} parent=5 // pred_region
      %s201 = ssub.s32 %s9, 1
      %s202 = smul.u32 3, %s21
      %p203 = scmp.lt.s32.totalorder %s20, 1
      %s204 = scalar_select %p203, %s20, 1
      %p205 = scmp.lt.s32.totalorder %s19, 0
      %s206 = scalar_select %p205, %s19, 0
      %p207 = scmp.lt.s32.totalorder %s202, 26
      %s208 = scalar_select %p207, %s202, 26
      %s209 = smul.addr %s206, 27
      %s210 = sadd.s32 %s208, %s209
      %s211 = smul.addr %s204, 27
      %s212 = sadd.s32 %s210, %s211
      %s213 = smul.addr %s212, 4
      %s214 = scalar_lea.vmem %s0, %s213
      %p215 = pneg %p58
      %p216 = pneg %p55
      %s217 = smul.u32 48, %s21
      %p218 = scmp.lt.s32.totalorder %s20, 1
      %s219 = scalar_select %p218, %s20, 1
      %p220 = scmp.lt.s32.totalorder %s217, 431
      %s221 = scalar_select %p220, %s217, 431
      %s222 = smul.addr %s219, 432
      %s223 = sadd.s32 %s221, %s222
      %s224 = smul.addr %s223, 4
      %s225 = scalar_lea.vmem %s1, %s224
      %p226 = pneg %p86
      %p227 = pneg %p83
      %p228 = scmp.lt.s32.totalorder %s20, 1
      %s229 = scalar_select %p228, %s20, 1
      %s230 = scalar_lea.vmem %s2, %s229
      %p231 = pneg %p112
      %p232 = pneg %p109
      %p233 = pneg %p140
      %p234 = pneg %p137
      %p235 = scmp.lt.s32.totalorder %s19, 0
      %s236 = scalar_select %p235, %s19, 0
      %p237 = scmp.lt.s32.totalorder %s20, 1
      %s238 = scalar_select %p237, %s20, 1
      %s239 = smul.addr %s236, 2
      %s240 = sadd.s32 %s238, %s239
      %s241 = smul.addr %s240, 4
      %s242 = scalar_lea.vmem %s3, %s241
      %s243 = smul.u32 3, %s21
      %p244 = scmp.lt.s32.totalorder %s20, 1
      %s245 = scalar_select %p244, %s20, 1
      %p246 = scmp.lt.s32.totalorder %s19, 0
      %s247 = scalar_select %p246, %s19, 0
      %p248 = scmp.lt.s32.totalorder %s243, 26
      %s249 = scalar_select %p248, %s243, 26
      %s250 = smul.addr %s247, 27
      %s251 = sadd.s32 %s249, %s250
      %s252 = smul.addr %s245, 27
      %s253 = sadd.s32 %s251, %s252
      %s254 = smul.addr %s253, 4
      %s255 = scalar_lea.vmem %s0, %s254
      %s256 = smul.u32 3, %s21
      %s257 = smul.u32 48, %s21
      %p258 = scmp.lt.s32.totalorder %s20, 1
      %s259 = scalar_select %p258, %s20, 1
      %p260 = scmp.lt.s32.totalorder %s257, 431
      %s261 = scalar_select %p260, %s257, 431
      %s262 = smul.addr %s259, 432
      %s263 = sadd.s32 %s261, %s262
      %s264 = smul.addr %s263, 4
      %s265 = scalar_lea.vmem %s1, %s264
      %s266 = smul.u32 48, %s21
      %p267 = scmp.lt.s32.totalorder %s20, 1
      %s268 = scalar_select %p267, %s20, 1
      %s269 = scalar_lea.vmem %s2, %s268
      %p270 = scmp.lt.s32.totalorder %s19, 0
      %s271 = scalar_select %p270, %s19, 0
      %p272 = scmp.lt.s32.totalorder %s20, 1
      %s273 = scalar_select %p272, %s20, 1
      %s274 = smul.addr %s271, 2
      %s275 = sadd.s32 %s273, %s274
      %s276 = smul.addr %s275, 4
      %s277 = scalar_lea.vmem %s3, %s276
      %p279 = scmp.eq.s32.totalorder %s21, 0
      // Predicated region
      $region33: #{_lambda_.13} parent=31 // pred_check
        %p280 = pneg %p279
      $region34: #{_lambda_.13} parent=31 // pred_check_branch
        %282 = sbr.rel (%p280) target = $region36
      $region35: #{_lambda_.13} parent=31 // pred_region
        %283 = vst [vmem:[#allocation2] sm:$0xff] 0.0
      $region36: #{_lambda_.13} parent=31 // pred_fallthru
        _
      %v284 = vld [vmem:[#allocation2] sm:$0xff]
      %v285 = vld [vmem:[%s255] sm:$0xff]
      %v286 = vld [vmem:[%s255 + $0x8] sm:$0xf]
      %v287 = vld [vmem:[%s265] sm:$0xf]
      %v288 = vld [vmem:[%s265 + $0x4] sm:$0xf]
      %v289 = vld [vmem:[%s265 + $0x8] sm:$0xf]
      %v290 = vld [vmem:[%s265 + $0xc] sm:$0xf]
      %v291 = vld [vmem:[%s265 + $0x10] sm:$0xf]
      %v292 = vld [vmem:[%s265 + $0x14] sm:$0xf]
      %v293 = vld [vmem:[%s265 + $0x18] sm:$0xf]
      %v294 = vld [vmem:[%s265 + $0x1c] sm:$0xf]
      %v295 = vld [vmem:[%s265 + $0x20] sm:$0xf]
      %v296 = vld [vmem:[%s265 + $0x24] sm:$0xf]
      %v297 = vld [vmem:[%s265 + $0x28] sm:$0xf]
      %v298 = vld [vmem:[%s265 + $0x2c] sm:$0xf]
      %v299 = vld [vmem:[%s265 + $0x30] sm:$0xf]
      %v300 = vld [vmem:[%s265 + $0x34] sm:$0xf]
      %v301 = vld [vmem:[%s265 + $0x38] sm:$0xf]
      %v302 = vld [vmem:[%s265 + $0x3c] sm:$0xf]
      %v303 = vld [vmem:[%s265 + $0x40] sm:$0xf]
      %v304 = vld [vmem:[%s265 + $0x44] sm:$0xf]
      %v305 = vld [vmem:[%s265 + $0x48] sm:$0xf]
      %v306 = vld [vmem:[%s265 + $0x4c] sm:$0xf]
      %v307 = vld [vmem:[%s265 + $0x50] sm:$0xf]
      %v308 = vld [vmem:[%s265 + $0x54] sm:$0xf]
      %v309 = vld [vmem:[%s265 + $0x58] sm:$0xf]
      %v310 = vld [vmem:[%s265 + $0x5c] sm:$0xf]
      %v311 = vld [vmem:[%s265 + $0x60] sm:$0xf]
      %v312 = vld [vmem:[%s265 + $0x64] sm:$0xf]
      %v313 = vld [vmem:[%s265 + $0x68] sm:$0xf]
      %v314 = vld [vmem:[%s265 + $0x6c] sm:$0xf]
      %v315 = vld [vmem:[%s265 + $0x70] sm:$0xf]
      %v316 = vld [vmem:[%s265 + $0x74] sm:$0xf]
      %v317 = vld [vmem:[%s265 + $0x78] sm:$0xf]
      %v318 = vld [vmem:[%s265 + $0x7c] sm:$0xf]
      %v319 = vld [vmem:[%s265 + $0x80] sm:$0xf]
      %v320 = vld [vmem:[%s265 + $0x84] sm:$0xf]
      %v321 = vld [vmem:[%s265 + $0x88] sm:$0xf]
      %v322 = vld [vmem:[%s265 + $0x8c] sm:$0xf]
      %v323 = vld [vmem:[%s265 + $0x90] sm:$0xf]
      %v324 = vld [vmem:[%s265 + $0x94] sm:$0xf]
      %v325 = vld [vmem:[%s265 + $0x98] sm:$0xf]
      %v326 = vld [vmem:[%s265 + $0x9c] sm:$0xf]
      %v327 = vld [vmem:[%s265 + $0xa0] sm:$0xf]
      %v328 = vld [vmem:[%s265 + $0xa4] sm:$0xf]
      %v329 = vld [vmem:[%s265 + $0xa8] sm:$0xf]
      %v330 = vld [vmem:[%s265 + $0xac] sm:$0xf]
      %v331 = vld [vmem:[%s265 + $0xb0] sm:$0xf]
      %v332 = vld [vmem:[%s265 + $0xb4] sm:$0xf]
      %v333 = vld [vmem:[%s265 + $0xb8] sm:$0xf]
      %v334 = vld [vmem:[%s265 + $0xbc] sm:$0xf]
      %v337 = vunpack.c.l.b16 %v285
      %v338 = vunpack.c.h.b16 %v285
      %v339 = vunpack.c.l.b16 %v286
      %v340 = vpack.c.b16 %v337, %v337
      %v341 = vpack.c.b16 %v338, %v338
      %v342 = vpack.c.b16 %v339, %v339
      %v394 = vunpack.c.l.b16 %v287
      %v395 = vunpack.c.l.b16 %v288
      %v396 = vunpack.c.l.b16 %v289
      %v397 = vunpack.c.l.b16 %v290
      %v398 = vunpack.c.l.b16 %v291
      %v399 = vunpack.c.l.b16 %v292
      %v400 = vunpack.c.l.b16 %v293
      %v401 = vunpack.c.l.b16 %v294
      %v402 = vunpack.c.l.b16 %v295
      %v403 = vunpack.c.l.b16 %v296
      %v404 = vunpack.c.l.b16 %v297
      %v405 = vunpack.c.l.b16 %v298
      %v406 = vunpack.c.l.b16 %v299
      %v407 = vunpack.c.l.b16 %v300
      %v408 = vunpack.c.l.b16 %v301
      %v409 = vunpack.c.l.b16 %v302
      %v410 = vunpack.c.l.b16 %v303
      %v411 = vunpack.c.l.b16 %v304
      %v412 = vunpack.c.l.b16 %v305
      %v413 = vunpack.c.l.b16 %v306
      %v414 = vunpack.c.l.b16 %v307
      %v415 = vunpack.c.l.b16 %v308
      %v416 = vunpack.c.l.b16 %v309
      %v417 = vunpack.c.l.b16 %v310
      %v418 = vunpack.c.l.b16 %v311
      %v419 = vunpack.c.l.b16 %v312
      %v420 = vunpack.c.l.b16 %v313
      %v421 = vunpack.c.l.b16 %v314
      %v422 = vunpack.c.l.b16 %v315
      %v423 = vunpack.c.l.b16 %v316
      %v424 = vunpack.c.l.b16 %v317
      %v425 = vunpack.c.l.b16 %v318
      %v426 = vunpack.c.l.b16 %v319
      %v427 = vunpack.c.l.b16 %v320
      %v428 = vunpack.c.l.b16 %v321
      %v429 = vunpack.c.l.b16 %v322
      %v430 = vunpack.c.l.b16 %v323
      %v431 = vunpack.c.l.b16 %v324
      %v432 = vunpack.c.l.b16 %v325
      %v433 = vunpack.c.l.b16 %v326
      %v434 = vunpack.c.l.b16 %v327
      %v435 = vunpack.c.l.b16 %v328
      %v436 = vunpack.c.l.b16 %v329
      %v437 = vunpack.c.l.b16 %v330
      %v438 = vunpack.c.l.b16 %v331
      %v439 = vunpack.c.l.b16 %v332
      %v440 = vunpack.c.l.b16 %v333
      %v441 = vunpack.c.l.b16 %v334
      %v442 = vpack.c.b16 %v395, %v394
      %v443 = vpack.c.b16 %v397, %v396
      %v444 = vpack.c.b16 %v399, %v398
      %v445 = vpack.c.b16 %v401, %v400
      %v446 = vpack.c.b16 %v403, %v402
      %v447 = vpack.c.b16 %v405, %v404
      %v448 = vpack.c.b16 %v407, %v406
      %v449 = vpack.c.b16 %v409, %v408
      %v450 = vpack.c.b16 %v411, %v410
      %v451 = vpack.c.b16 %v413, %v412
      %v452 = vpack.c.b16 %v415, %v414
      %v453 = vpack.c.b16 %v417, %v416
      %v454 = vpack.c.b16 %v419, %v418
      %v455 = vpack.c.b16 %v421, %v420
      %v456 = vpack.c.b16 %v423, %v422
      %v457 = vpack.c.b16 %v425, %v424
      %v458 = vpack.c.b16 %v427, %v426
      %v459 = vpack.c.b16 %v429, %v428
      %v460 = vpack.c.b16 %v431, %v430
      %v461 = vpack.c.b16 %v433, %v432
      %v462 = vpack.c.b16 %v435, %v434
      %v463 = vpack.c.b16 %v437, %v436
      %v464 = vpack.c.b16 %v439, %v438
      %v465 = vpack.c.b16 %v441, %v440
      %490 = vmatprep.subr.bf16.mxu0 0
      %491 = vmatpush1.bf16.msra.mxu0 %v442
      %492 = vmatprep.subr.bf16.mxu0 0
      %493 = vmatpush1.bf16.msra.mxu0 %v443
      %494 = vmatprep.subr.bf16.mxu0 0
      %495 = vmatpush1.bf16.msra.mxu0 %v444
      %496 = vmatprep.subr.bf16.mxu0 0
      %497 = vmatpush1.bf16.msra.mxu0 %v445
      %498 = vmatprep.subr.bf16.mxu0 0
      %499 = vmatpush1.bf16.msra.mxu0 %v446
      %500 = vmatprep.subr.bf16.mxu0 0
      %501 = vmatpush1.bf16.msra.mxu0 %v447
      %502 = vmatprep.subr.bf16.mxu0 0
      %503 = vmatpush1.bf16.msra.mxu0 %v448
      %504 = vmatprep.subr.bf16.mxu0 0
      %505 = vmatpush1.bf16.msra.mxu0 %v449
      %506 = vmatprep.subr.bf16.mxu0 0
      %507 = vmatpush1.bf16.msra.mxu0 %v450
      %508 = vmatprep.subr.bf16.mxu0 0
      %509 = vmatpush1.bf16.msra.mxu0 %v451
      %510 = vmatprep.subr.bf16.mxu0 0
      %511 = vmatpush1.bf16.msra.mxu0 %v452
      %512 = vmatprep.subr.bf16.mxu0 0
      %513 = vmatpush1.bf16.msra.mxu0 %v453
      %514 = vmatprep.subr.bf16.mxu0 0
      %515 = vmatpush1.bf16.msra.mxu0 %v454
      %516 = vmatprep.subr.bf16.mxu0 0
      %517 = vmatpush1.bf16.msra.mxu0 %v455
      %518 = vmatprep.subr.bf16.mxu0 0
      %519 = vmatpush1.bf16.msra.mxu0 %v456
      %520 = vmatprep.subr.bf16.mxu0 0
      %521 = vmatpush1.bf16.msra.mxu0 %v457
      %522 = vmatprep.mubr.bf16.mxu0 %v341
      %523 = vmatmul.mubr.bf16.gmra.mrb[0].mxu0 %v340
      %v524 = vpop.f32.mrb[0].mxu0
      %v525 = vadd.f32 0.0, %v524
      %v526 = vpop.f32.mrb[0].mxu0
      %v527 = vpop.f32.mrb[0].mxu0
      %v528 = vpop.f32.mrb[0].mxu0
      %529 = vdwg.mxu0
      %530 = vmatprep.subr.bf16.mxu0 0
      %531 = vmatpush1.bf16.msra.mxu0 %v458
      %532 = vmatprep.subr.bf16.mxu0 0
      %533 = vmatpush1.bf16.msra.mxu0 %v459
      %534 = vmatprep.subr.bf16.mxu0 0
      %535 = vmatpush1.bf16.msra.mxu0 %v460
      %536 = vmatprep.subr.bf16.mxu0 0
      %537 = vmatpush1.bf16.msra.mxu0 %v461
      %538 = vmatprep.subr.bf16.mxu0 0
      %539 = vmatpush1.bf16.msra.mxu0 %v462
      %540 = vmatprep.subr.bf16.mxu0 0
      %541 = vmatpush1.bf16.msra.mxu0 %v463
      %542 = vmatprep.subr.bf16.mxu0 0
      %543 = vmatpush1.bf16.msra.mxu0 %v464
      %544 = vmatprep.subr.bf16.mxu0 0
      %545 = vmatpush1.bf16.msra.mxu0 %v465
      %546 = vmatprep.subr.bf16.mxu0 0
      %547 = vmatpush1.bf16.msra.mxu0 0
      %548 = vmatprep.subr.bf16.mxu0 0
      %549 = vmatpush1.bf16.msra.mxu0 0
      %550 = vmatprep.subr.bf16.mxu0 0
      %551 = vmatpush1.bf16.msra.mxu0 0
      %552 = vmatprep.subr.bf16.mxu0 0
      %553 = vmatpush1.bf16.msra.mxu0 0
      %554 = vmatprep.subr.bf16.mxu0 0
      %555 = vmatpush1.bf16.msra.mxu0 0
      %556 = vmatprep.subr.bf16.mxu0 0
      %557 = vmatpush1.bf16.msra.mxu0 0
      %558 = vmatprep.subr.bf16.mxu0 0
      %559 = vmatpush1.bf16.msra.mxu0 0
      %560 = vmatprep.subr.bf16.mxu0 0
      %561 = vmatpush1.bf16.msra.mxu0 0
      %562 = vmatprep.mubr.bf16.mxu0 0
      %563 = vmatmul.mubr.bf16.gmra.mrb[0].mxu0 %v342
      %v564 = vpop.f32.mrb[0].mxu0
      %v565 = vadd.f32 %v525, %v564
      %v566 = vpop.f32.mrb[0].mxu0
      %v567 = vpop.f32.mrb[0].mxu0
      %v568 = vpop.f32.mrb[0].mxu0
      %569 = vdwg.mxu0
      %v570 = vadd.f32 %v284, %v565
      %571 = vst [vmem:[#allocation2] sm:$0xff] %v570
      %p572 = scmp.eq.s32.totalorder %s21, 8
      // Predicated region
      $region37: #{_lambda_.13} parent=31 // pred_check
        %p573 = pneg %p572
      $region38: #{_lambda_.13} parent=31 // pred_check_branch
        %575 = sbr.rel (%p573) target = $region40
      $region39: #{_lambda_.13} parent=31 // pred_region
        %v576 = vld [vmem:[#allocation2] sm:$0xff]
        %v577 = vld [vmem:[%s269] sm:$0x1]
        %v579 = vlaneseq
        %v580 = vshrl.u32 %v579, 7
        %v581 = vsub.s32 0, %v580
        %v582 = vrot.slane %v577, %v581
        %v584 = vadd.f32 %v576, %v582
        %v585 = vmax.f32 %v584, 0.0
        %v586 = vpack.c.bf16 %v585, %v585
        %587 = vst [vmem:[%s277] sm:$0xf] %v586
      $region40: #{_lambda_.13} parent=31 // pred_fallthru
        _
      %p588 = scmp.lt.s32.totalorder %s19, 0
      %s589 = scalar_select %p588, %s19, 0
      %p590 = scmp.lt.s32.totalorder %s20, 1
      %s591 = scalar_select %p590, %s20, 1
      %s592 = smul.addr %s589, 2
      %s593 = sadd.s32 %s591, %s592
      %s594 = smul.addr %s593, 4
      %s595 = scalar_lea.vmem %s3, %s594
      // Predicated region
      $region41: #{_lambda_.13} parent=31 // pred_check
        %p596 = pneg %p137
      $region42: #{_lambda_.13} parent=31 // pred_check_branch
        %598 = sbr.rel (%p596) target = $region44
      $region43: #{_lambda_.13} parent=31 // pred_region
        _
      $region44: #{_lambda_.13} parent=31 // pred_fallthru
        _
    $region32: #{_lambda_.13} parent=5 // pred_fallthru
      _
    %p599 = scmp.le.s32.totalorder 2, %s9
    // Predicated region
    $region45: #{_lambda_.13} parent=5 // pred_check
      %p600 = pneg %p599
    $region46: #{_lambda_.13} parent=5 // pred_check_branch
      %602 = sbr.rel (%p600) target = $region48
    $region47: #{_lambda_.13} parent=5 // pred_region
      %s603 = ssub.s32 %s9, 2
      // Predicated region
      $region49: #{_lambda_.13} parent=47 // pred_check
        %p604 = pneg %p143
      $region50: #{_lambda_.13} parent=47 // pred_check_branch
        %606 = sbr.rel (%p604) target = $region52
      $region51: #{_lambda_.13} parent=47 // pred_region
        %p607 = scmp.lt.s32.totalorder %s22, 0
        %s608 = scalar_select %p607, %s22, 0
        %p609 = scmp.lt.s32.totalorder %s23, 1
        %s610 = scalar_select %p609, %s23, 1
        %s611 = smul.addr %s608, 2
        %s612 = sadd.s32 %s610, %s611
        %s613 = smul.addr %s612, 4
        %s614 = scalar_lea.vmem %s3, %s613
      $region52: #{_lambda_.13} parent=47 // pred_fallthru
        _
    $region48: #{_lambda_.13} parent=5 // pred_fallthru
      _
  $region6: #{_lambda_.13} parent=0 // loop_footer
    %s13 = sadd.s32 1, %s9
  $region7: #{_lambda_.13} parent=0 // loop_footer_branch
    %8 = sbr.rel target = $region3
  $region8: #{_lambda_.13} parent=0 // loop_exit
    _

// kernel: _lambda_.15
$region0: #{_lambda_.15}
  #allocation0 [shape = 'u32[]', space=smem, size = 0x4, offset = 0x4, fixed_abs, tag = 'smem constant byte address 0x4 - core index']
  #allocation1 [shape = 'u32[144,128]{1,0:T(1,128)}', space=vmem, size = 0x12000, scoped, tag = 'internal scratch']
  #allocation2 [shape = 'f32[8,512]{1,0:T(8,128)}', space=vmem, size = 0x4000, scoped, tag = 'scratch operand']
  %s0 = inlined_call_operand.vmem [shape: bf16[8,256], index: 0, kind: input, shape index: {}]
  %s1 = inlined_call_operand.vmem [shape: bf16[256,1024], index: 1, kind: input, shape index: {}]
  %s2 = inlined_call_operand.vmem [shape: f32[1,1024], index: 2, kind: input, shape index: {}]
  %s3 = inlined_call_operand.vmem [shape: bf16[8,1024], index: 3, kind: input, shape index: {}]
  %s4 = inlined_call_operand.vmem [shape: bf16[8,1024], index: 4, kind: output, shape index: {}]
  %s5 = sld [smem:[#allocation0]]
  $region80: #{_lambda_.15} parent=0
    _
  %s7 = ssub.s32 1, %s5
  %s8 = scalar_select 0, %s7, %s5
  $region1: #{_lambda_.15} parent=0
    #allocation3 [shape = 'u8[524288]{0}', space=vmem, size = 0x80000, scoped, tag = 'input window, operand 1']
    loop: start=0, step=1, limit=4
    $region2: #{_lambda_.15} parent=1 // loop_pre_header
      _
    $region3: #{_lambda_.15} parent=1 // loop_header
      %s10 = sphi 0, %s14
      %p11 = scmp.ge.s32.totalorder %s10, 4
      %s17 = sphi 0, %s36
      %s18 = sphi 0, %s32
      %s19 = sphi 0, %s28
      %s20 = sphi 0, %s17
      %s21 = sphi 0, %s18
      %s22 = sphi 0, %s19
      %s23 = sphi 0, %s20
      %s24 = sphi 0, %s21
      %s25 = sphi 0, %s22
      %s41 = sphi 0, %s43
      %s44 = sphi 0, %s41
      %s45 = sphi 0, %s44
      %s61 = sphi 0, %s45
      %s69 = sphi 0, %s71
      %s72 = sphi 0, %s69
      %s73 = sphi 0, %s72
      %s89 = sphi 0, %s73
      %s95 = sphi 0, %s97
      %s98 = sphi 0, %s95
      %s99 = sphi 0, %s98
      %s115 = sphi 0, %s99
      %s123 = sphi 0, %s125
      %s126 = sphi 0, %s123
      %s127 = sphi 0, %s126
      %s143 = sphi 0, %s127
      %s151 = sphi 0, %s153
      %s154 = sphi 0, %s151
      %s155 = sphi 0, %s154
      %s171 = sphi 0, %s155
    $region4: #{_lambda_.15} parent=1 // loop_header_branch
      %13 = sbr.rel (%p11) target = $region8
    $region5: #{_lambda_.15} parent=1 // loop_body
      %s15 = ssub.s32 %s10, 1
      %s16 = ssub.s32 %s10, 2
      %s26 = sadd.s32 1, %s19
      %p27 = scmp.ge.s32.totalorder %s26, 1
      %s28 = scalar_select %p27, 0, %s26
      %s29 = sadd.s32 1, %s18
      %s30 = scalar_select %p27, %s29, %s18
      %p31 = scmp.ge.s32.totalorder %s30, 2
      %s32 = scalar_select %p31, 0, %s30
      %s33 = sadd.s32 1, %s17
      %s34 = scalar_select %p31, %s33, %s17
      %p35 = scmp.ge.s32.totalorder %s34, 1
      %s36 = scalar_select %p35, 0, %s34
      %s37 = ssub.s32 %s17, %s36
      %s38 = ssub.s32 %s19, %s28
      %s39 = sor.u32 %s37, %s38
      %p40 = scmp.eq.s32.totalorder %s39, 0
      %s42 = sadd.s32 %s41, 1
      %s43 = scalar_select %p40, %s41, %s42
      %p46 = pneg %p40
      %p47 = scmp.eq.s32.totalorder %s10, 1
      %p48 = por %p46, %p47
      %p49 = scmp.ne.s32.totalorder %s41, %s44
      %p50 = scmp.eq.s32.totalorder %s10, 0
      %p51 = por %p49, %p50
      %p52 = scmp.ne.s32.totalorder %s41, %s44
      %p53 = scmp.eq.s32.totalorder %s15, 1
      %p54 = por %p52, %p53
      %p55 = scmp.ne.s32.totalorder %s44, %s45
      %p56 = scmp.eq.s32.totalorder %s15, 0
      %p57 = por %p55, %p56
      %p58 = scmp.ne.s32.totalorder %s44, %s45
      %p59 = scmp.eq.s32.totalorder %s16, 1
      %p60 = por %p58, %p59
      %p62 = scmp.ne.s32.totalorder %s45, %s61
      %p63 = scmp.eq.s32.totalorder %s16, 0
      %p64 = por %p62, %p63
      %s65 = ssub.s32 %s19, %s28
      %s66 = ssub.s32 %s18, %s32
      %s67 = sor.u32 %s65, %s66
      %p68 = scmp.eq.s32.totalorder %s67, 0
      %s70 = sadd.s32 %s69, 1
      %s71 = scalar_select %p68, %s69, %s70
      %p74 = pneg %p68
      %p75 = scmp.eq.s32.totalorder %s10, 1
      %p76 = por %p74, %p75
      %p77 = scmp.ne.s32.totalorder %s69, %s72
      %p78 = scmp.eq.s32.totalorder %s10, 0
      %p79 = por %p77, %p78
      %p80 = scmp.ne.s32.totalorder %s69, %s72
      %p81 = scmp.eq.s32.totalorder %s15, 1
      %p82 = por %p80, %p81
      %p83 = scmp.ne.s32.totalorder %s72, %s73
      %p84 = scmp.eq.s32.totalorder %s15, 0
      %p85 = por %p83, %p84
      %p86 = scmp.ne.s32.totalorder %s72, %s73
      %p87 = scmp.eq.s32.totalorder %s16, 1
      %p88 = por %p86, %p87
      %p90 = scmp.ne.s32.totalorder %s73, %s89
      %p91 = scmp.eq.s32.totalorder %s16, 0
      %p92 = por %p90, %p91
      %s93 = ssub.s32 %s18, %s32
      %p94 = scmp.eq.s32.totalorder %s93, 0
      %s96 = sadd.s32 %s95, 1
      %s97 = scalar_select %p94, %s95, %s96
      %p100 = pneg %p94
      %p101 = scmp.eq.s32.totalorder %s10, 1
      %p102 = por %p100, %p101
      %p103 = scmp.ne.s32.totalorder %s95, %s98
      %p104 = scmp.eq.s32.totalorder %s10, 0
      %p105 = por %p103, %p104
      %p106 = scmp.ne.s32.totalorder %s95, %s98
      %p107 = scmp.eq.s32.totalorder %s15, 1
      %p108 = por %p106, %p107
      %p109 = scmp.ne.s32.totalorder %s98, %s99
      %p110 = scmp.eq.s32.totalorder %s15, 0
      %p111 = por %p109, %p110
      %p112 = scmp.ne.s32.totalorder %s98, %s99
      %p113 = scmp.eq.s32.totalorder %s16, 1
      %p114 = por %p112, %p113
      %p116 = scmp.ne.s32.totalorder %s99, %s115
      %p117 = scmp.eq.s32.totalorder %s16, 0
      %p118 = por %p116, %p117
      %s119 = ssub.s32 %s17, %s36
      %s120 = ssub.s32 %s18, %s32
      %s121 = sor.u32 %s119, %s120
      %p122 = scmp.eq.s32.totalorder %s121, 0
      %s124 = sadd.s32 %s123, 1
      %s125 = scalar_select %p122, %s123, %s124
      %p128 = pneg %p122
      %p129 = scmp.eq.s32.totalorder %s10, 1
      %p130 = por %p128, %p129
      %p131 = scmp.ne.s32.totalorder %s123, %s126
      %p132 = scmp.eq.s32.totalorder %s10, 0
      %p133 = por %p131, %p132
      %p134 = scmp.ne.s32.totalorder %s123, %s126
      %p135 = scmp.eq.s32.totalorder %s15, 1
      %p136 = por %p134, %p135
      %p137 = scmp.ne.s32.totalorder %s126, %s127
      %p138 = scmp.eq.s32.totalorder %s15, 0
      %p139 = por %p137, %p138
      %p140 = scmp.ne.s32.totalorder %s126, %s127
      %p141 = scmp.eq.s32.totalorder %s16, 1
      %p142 = por %p140, %p141
      %p144 = scmp.ne.s32.totalorder %s127, %s143
      %p145 = scmp.eq.s32.totalorder %s16, 0
      %p146 = por %p144, %p145
      %s147 = ssub.s32 %s17, %s36
      %s148 = ssub.s32 %s18, %s32
      %s149 = sor.u32 %s147, %s148
      %p150 = scmp.eq.s32.totalorder %s149, 0
      %s152 = sadd.s32 %s151, 1
      %s153 = scalar_select %p150, %s151, %s152
      %p156 = pneg %p150
      %p157 = scmp.eq.s32.totalorder %s10, 1
      %p158 = por %p156, %p157
      %p159 = scmp.ne.s32.totalorder %s151, %s154
      %p160 = scmp.eq.s32.totalorder %s10, 0
      %p161 = por %p159, %p160
      %p162 = scmp.ne.s32.totalorder %s151, %s154
      %p163 = scmp.eq.s32.totalorder %s15, 1
      %p164 = por %p162, %p163
      %p165 = scmp.ne.s32.totalorder %s154, %s155
      %p166 = scmp.eq.s32.totalorder %s15, 0
      %p167 = por %p165, %p166
      %p168 = scmp.ne.s32.totalorder %s154, %s155
      %p169 = scmp.eq.s32.totalorder %s16, 1
      %p170 = por %p168, %p169
      %p172 = scmp.ne.s32.totalorder %s155, %s171
      %p173 = scmp.eq.s32.totalorder %s16, 0
      %p174 = por %p172, %p173
      %p175 = scmp.le.s32.totalorder 1, %s10
      %p176 = scmp.lt.s32.totalorder %s10, 3
      %p177 = pnand %p175, %p176
      %p178 = pneg %p177
      // Predicated region
      $region9: #{_lambda_.15} parent=5 // pred_check
        _
      $region10: #{_lambda_.15} parent=5 // pred_check_branch
        %180 = sbr.rel (%p177) target = $region12
      $region11: #{_lambda_.15} parent=5 // pred_region
        %s181 = ssub.s32 %s10, 1
        // Predicated region
        $region13: #{_lambda_.15} parent=11 // pred_check
          %p182 = pneg %p57
        $region14: #{_lambda_.15} parent=11 // pred_check_branch
          %184 = sbr.rel (%p182) target = $region16
        $region15: #{_lambda_.15} parent=11 // pred_region
          %s185 = smul.u32 2, %s22
          %p186 = scmp.lt.s32.totalorder %s20, 0
          %s187 = scalar_select %p186, %s20, 0
          %p188 = scmp.lt.s32.totalorder %s185, 1
          %s189 = scalar_select %p188, %s185, 1
          %s190 = smul.addr %s187, 2
          %s191 = sadd.s32 %s189, %s190
          %s192 = smul.addr %s191, 4
          %s193 = scalar_lea.vmem %s0, %s192
          %s194 = smul.u32 2, %s22
        $region16: #{_lambda_.15} parent=11 // pred_fallthru
          _
      $region12: #{_lambda_.15} parent=5 // pred_fallthru
        _
      %p195 = scmp.lt.s32.totalorder %s10, 2
      // Predicated region
      $region17: #{_lambda_.15} parent=5 // pred_check
        %p196 = pneg %p195
      $region18: #{_lambda_.15} parent=5 // pred_check_branch
        %198 = sbr.rel (%p196) target = $region20
      $region19: #{_lambda_.15} parent=5 // pred_region
        // Predicated region
        $region21: #{_lambda_.15} parent=19 // pred_check
          %p199 = pneg %p79
        $region22: #{_lambda_.15} parent=19 // pred_check_branch
          %201 = sbr.rel (%p199) target = $region24
        $region23: #{_lambda_.15} parent=19 // pred_region
          %s202 = sand.u32 %s69, 1
          %s203 = sand.u32 %s69, 1
          %s204 = smul.addr %s203, 512
          %s205 = scalar_lea.vmem [#allocation3], %s204
          %s206 = smul.u32 32, %s19
          %s207 = smul.u32 4, %s18
          %s208 = smul.addr %s206, 8
          %s209 = sadd.s32 %s207, %s208
          %s210 = smul.addr %s209, 4
          %s211 = scalar_lea.vmem %s1, %s210
          // Predicated region
          $region25: #{_lambda_.15} parent=23 // pred_check
            _
          $region26: #{_lambda_.15} parent=23 // pred_check_branch
            %213 = sbr.rel (0) target = $region28
          $region27: #{_lambda_.15} parent=23 // pred_region
            // Predicated region
            $region29: #{_lambda_.15} parent=27 // pred_check
              _
            $region30: #{_lambda_.15} parent=27 // pred_check_branch
              %215 = sbr.rel (0) target = $region32
            $region31: #{_lambda_.15} parent=27 // pred_region
              loop: start=0, step=1, limit=1
              $region33: #{_lambda_.15} parent=31 // loop_pre_header
                _
              $region34: #{_lambda_.15} parent=31 // loop_header
                %s217 = sphi 0, %s221
                %p218 = scmp.ge.s32.totalorder %s217, 1
                %s222 = sphi %s211, %s211
                %s223 = sphi %s205, %s205
              $region35: #{_lambda_.15} parent=31 // loop_header_branch
                %220 = sbr.rel (%p218) target = $region39
              $region36: #{_lambda_.15} parent=31 // loop_body
                %v224 = vld [vmem:[%s222] sm:$0xff]
                %225 = vst [vmem:[%s223] sm:$0xff] %v224
                %v226 = vld [vmem:[%s222 + $0x8] sm:$0xff]
                %227 = vst [vmem:[%s223 + $0x8] sm:$0xff] %v226
                %v228 = vld [vmem:[%s222 + $0x20] sm:$0xff]
                %229 = vst [vmem:[%s223 + $0x10] sm:$0xff] %v228
                %v230 = vld [vmem:[%s222 + $0x28] sm:$0xff]
                %231 = vst [vmem:[%s223 + $0x18] sm:$0xff] %v230
                %v232 = vld [vmem:[%s222 + $0x40] sm:$0xff]
                %233 = vst [vmem:[%s223 + $0x20] sm:$0xff] %v232
                %v234 = vld [vmem:[%s222 + $0x48] sm:$0xff]
                %235 = vst [vmem:[%s223 + $0x28] sm:$0xff] %v234
                %v236 = vld [vmem:[%s222 + $0x60] sm:$0xff]
                %237 = vst [vmem:[%s223 + $0x30] sm:$0xff] %v236
                %v238 = vld [vmem:[%s222 + $0x68] sm:$0xff]
                %239 = vst [vmem:[%s223 + $0x38] sm:$0xff] %v238
                %v240 = vld [vmem:[%s222 + $0x80] sm:$0xff]
                %241 = vst [vmem:[%s223 + $0x40] sm:$0xff] %v240
                %v242 = vld [vmem:[%s222 + $0x88] sm:$0xff]
                %243 = vst [vmem:[%s223 + $0x48] sm:$0xff] %v242
                %v244 = vld [vmem:[%s222 + $0xa0] sm:$0xff]
                %245 = vst [vmem:[%s223 + $0x50] sm:$0xff] %v244
                %v246 = vld [vmem:[%s222 + $0xa8] sm:$0xff]
                %247 = vst [vmem:[%s223 + $0x58] sm:$0xff] %v246
                %v248 = vld [vmem:[%s222 + $0xc0] sm:$0xff]
                %249 = vst [vmem:[%s223 + $0x60] sm:$0xff] %v248
                %v250 = vld [vmem:[%s222 + $0xc8] sm:$0xff]
                %251 = vst [vmem:[%s223 + $0x68] sm:$0xff] %v250
                %v252 = vld [vmem:[%s222 + $0xe0] sm:$0xff]
                %253 = vst [vmem:[%s223 + $0x70] sm:$0xff] %v252
                %v254 = vld [vmem:[%s222 + $0xe8] sm:$0xff]
                %255 = vst [vmem:[%s223 + $0x78] sm:$0xff] %v254
                %v256 = vld [vmem:[%s222 + $0x100] sm:$0xff]
                %257 = vst [vmem:[%s223 + $0x80] sm:$0xff] %v256
                %v258 = vld [vmem:[%s222 + $0x108] sm:$0xff]
                %259 = vst [vmem:[%s223 + $0x88] sm:$0xff] %v258
                %v260 = vld [vmem:[%s222 + $0x120] sm:$0xff]
                %261 = vst [vmem:[%s223 + $0x90] sm:$0xff] %v260
                %v262 = vld [vmem:[%s222 + $0x128] sm:$0xff]
                %263 = vst [vmem:[%s223 + $0x98] sm:$0xff] %v262
                %v264 = vld [vmem:[%s222 + $0x140] sm:$0xff]
                %265 = vst [vmem:[%s223 + $0xa0] sm:$0xff] %v264
                %v266 = vld [vmem:[%s222 + $0x148] sm:$0xff]
                %267 = vst [vmem:[%s223 + $0xa8] sm:$0xff] %v266
                %v268 = vld [vmem:[%s222 + $0x160] sm:$0xff]
                %269 = vst [vmem:[%s223 + $0xb0] sm:$0xff] %v268
                %v270 = vld [vmem:[%s222 + $0x168] sm:$0xff]
                %271 = vst [vmem:[%s223 + $0xb8] sm:$0xff] %v270
                %v272 = vld [vmem:[%s222 + $0x180] sm:$0xff]
                %273 = vst [vmem:[%s223 + $0xc0] sm:$0xff] %v272
                %v274 = vld [vmem:[%s222 + $0x188] sm:$0xff]
                %275 = vst [vmem:[%s223 + $0xc8] sm:$0xff] %v274
                %v276 = vld [vmem:[%s222 + $0x1a0] sm:$0xff]
                %277 = vst [vmem:[%s223 + $0xd0] sm:$0xff] %v276
                %v278 = vld [vmem:[%s222 + $0x1a8] sm:$0xff]
                %279 = vst [vmem:[%s223 + $0xd8] sm:$0xff] %v278
                %v280 = vld [vmem:[%s222 + $0x1c0] sm:$0xff]
                %281 = vst [vmem:[%s223 + $0xe0] sm:$0xff] %v280
                %v282 = vld [vmem:[%s222 + $0x1c8] sm:$0xff]
                %283 = vst [vmem:[%s223 + $0xe8] sm:$0xff] %v282
                %v284 = vld [vmem:[%s222 + $0x1e0] sm:$0xff]
                %285 = vst [vmem:[%s223 + $0xf0] sm:$0xff] %v284
                %v286 = vld [vmem:[%s222 + $0x1e8] sm:$0xff]
                %287 = vst [vmem:[%s223 + $0xf8] sm:$0xff] %v286
                %v288 = vld [vmem:[%s222 + $0x200] sm:$0xff]
                %289 = vst [vmem:[%s223 + $0x100] sm:$0xff] %v288
                %v290 = vld [vmem:[%s222 + $0x208] sm:$0xff]
                %291 = vst [vmem:[%s223 + $0x108] sm:$0xff] %v290
                %v292 = vld [vmem:[%s222 + $0x220] sm:$0xff]
                %293 = vst [vmem:[%s223 + $0x110] sm:$0xff] %v292
                %v294 = vld [vmem:[%s222 + $0x228] sm:$0xff]
                %295 = vst [vmem:[%s223 + $0x118] sm:$0xff] %v294
                %v296 = vld [vmem:[%s222 + $0x240] sm:$0xff]
                %297 = vst [vmem:[%s223 + $0x120] sm:$0xff] %v296
                %v298 = vld [vmem:[%s222 + $0x248] sm:$0xff]
                %299 = vst [vmem:[%s223 + $0x128] sm:$0xff] %v298
                %v300 = vld [vmem:[%s222 + $0x260] sm:$0xff]
                %301 = vst [vmem:[%s223 + $0x130] sm:$0xff] %v300
                %v302 = vld [vmem:[%s222 + $0x268] sm:$0xff]
                %303 = vst [vmem:[%s223 + $0x138] sm:$0xff] %v302
                %v304 = vld [vmem:[%s222 + $0x280] sm:$0xff]
                %305 = vst [vmem:[%s223 + $0x140] sm:$0xff] %v304
                %v306 = vld [vmem:[%s222 + $0x288] sm:$0xff]
                %307 = vst [vmem:[%s223 + $0x148] sm:$0xff] %v306
                %v308 = vld [vmem:[%s222 + $0x2a0] sm:$0xff]
                %309 = vst [vmem:[%s223 + $0x150] sm:$0xff] %v308
                %v310 = vld [vmem:[%s222 + $0x2a8] sm:$0xff]
                %311 = vst [vmem:[%s223 + $0x158] sm:$0xff] %v310
                %v312 = vld [vmem:[%s222 + $0x2c0] sm:$0xff]
                %313 = vst [vmem:[%s223 + $0x160] sm:$0xff] %v312
                %v314 = vld [vmem:[%s222 + $0x2c8] sm:$0xff]
                %315 = vst [vmem:[%s223 + $0x168] sm:$0xff] %v314
                %v316 = vld [vmem:[%s222 + $0x2e0] sm:$0xff]
                %317 = vst [vmem:[%s223 + $0x170] sm:$0xff] %v316
                %v318 = vld [vmem:[%s222 + $0x2e8] sm:$0xff]
                %319 = vst [vmem:[%s223 + $0x178] sm:$0xff] %v318
                %v320 = vld [vmem:[%s222 + $0x300] sm:$0xff]
                %321 = vst [vmem:[%s223 + $0x180] sm:$0xff] %v320
                %v322 = vld [vmem:[%s222 + $0x308] sm:$0xff]
                %323 = vst [vmem:[%s223 + $0x188] sm:$0xff] %v322
                %v324 = vld [vmem:[%s222 + $0x320] sm:$0xff]
                %325 = vst [vmem:[%s223 + $0x190] sm:$0xff] %v324
                %v326 = vld [vmem:[%s222 + $0x328] sm:$0xff]
                %327 = vst [vmem:[%s223 + $0x198] sm:$0xff] %v326
                %v328 = vld [vmem:[%s222 + $0x340] sm:$0xff]
                %329 = vst [vmem:[%s223 + $0x1a0] sm:$0xff] %v328
                %v330 = vld [vmem:[%s222 + $0x348] sm:$0xff]
                %331 = vst [vmem:[%s223 + $0x1a8] sm:$0xff] %v330
                %v332 = vld [vmem:[%s222 + $0x360] sm:$0xff]
                %333 = vst [vmem:[%s223 + $0x1b0] sm:$0xff] %v332
                %v334 = vld [vmem:[%s222 + $0x368] sm:$0xff]
                %335 = vst [vmem:[%s223 + $0x1b8] sm:$0xff] %v334
                %v336 = vld [vmem:[%s222 + $0x380] sm:$0xff]
                %337 = vst [vmem:[%s223 + $0x1c0] sm:$0xff] %v336
                %v338 = vld [vmem:[%s222 + $0x388] sm:$0xff]
                %339 = vst [vmem:[%s223 + $0x1c8] sm:$0xff] %v338
                %v340 = vld [vmem:[%s222 + $0x3a0] sm:$0xff]
                %341 = vst [vmem:[%s223 + $0x1d0] sm:$0xff] %v340
                %v342 = vld [vmem:[%s222 + $0x3a8] sm:$0xff]
                %343 = vst [vmem:[%s223 + $0x1d8] sm:$0xff] %v342
                %v344 = vld [vmem:[%s222 + $0x3c0] sm:$0xff]
                %345 = vst [vmem:[%s223 + $0x1e0] sm:$0xff] %v344
                %v346 = vld [vmem:[%s222 + $0x3c8] sm:$0xff]
                %347 = vst [vmem:[%s223 + $0x1e8] sm:$0xff] %v346
                %v348 = vld [vmem:[%s222 + $0x3e0] sm:$0xff]
                %349 = vst [vmem:[%s223 + $0x1f0] sm:$0xff] %v348
                %v350 = vld [vmem:[%s222 + $0x3e8] sm:$0xff]
                %351 = vst [vmem:[%s223 + $0x1f8] sm:$0xff] %v350
              $region37: #{_lambda_.15} parent=31 // loop_footer
                %s221 = sadd.s32 1, %s217
              $region38: #{_lambda_.15} parent=31 // loop_footer_branch
                %216 = sbr.rel target = $region34
              $region39: #{_lambda_.15} parent=31 // loop_exit
                _
            $region32: #{_lambda_.15} parent=27 // pred_fallthru
              _
            // Predicated region
            $region40: #{_lambda_.15} parent=27 // pred_check
              _
            $region41: #{_lambda_.15} parent=27 // pred_check_branch
              %353 = sbr.rel target = $region43
            $region42: #{_lambda_.15} parent=27 // pred_region
              _
            $region43: #{_lambda_.15} parent=27 // pred_fallthru
              _
          $region28: #{_lambda_.15} parent=23 // pred_fallthru
            _
          %354 = vnop
        $region24: #{_lambda_.15} parent=19 // pred_fallthru
          _
        // Predicated region
        $region44: #{_lambda_.15} parent=19 // pred_check
          %p355 = pneg %p105
        $region45: #{_lambda_.15} parent=19 // pred_check_branch
          %357 = sbr.rel (%p355) target = $region47
        $region46: #{_lambda_.15} parent=19 // pred_region
          %s358 = smul.u32 4, %s18
          %p359 = scmp.lt.s32.totalorder %s358, 7
          %s360 = scalar_select %p359, %s358, 7
          %s361 = scalar_lea.vmem %s2, %s360
          %s362 = smul.u32 4, %s18
        $region47: #{_lambda_.15} parent=19 // pred_fallthru
          _
        // Predicated region
        $region48: #{_lambda_.15} parent=19 // pred_check
          %p363 = pneg %p133
        $region49: #{_lambda_.15} parent=19 // pred_check_branch
          %365 = sbr.rel (%p363) target = $region51
        $region50: #{_lambda_.15} parent=19 // pred_region
          %s366 = smul.u32 4, %s18
          %p367 = scmp.lt.s32.totalorder %s17, 0
          %s368 = scalar_select %p367, %s17, 0
          %p369 = scmp.lt.s32.totalorder %s366, 7
          %s370 = scalar_select %p369, %s366, 7
          %s371 = smul.addr %s368, 8
          %s372 = sadd.s32 %s370, %s371
          %s373 = smul.addr %s372, 4
          %s374 = scalar_lea.vmem %s3, %s373
          %s375 = smul.u32 4, %s18
        $region51: #{_lambda_.15} parent=19 // pred_fallthru
          _
      $region20: #{_lambda_.15} parent=5 // pred_fallthru
        _
      %p376 = scmp.le.s32.totalorder 1, %s10
      %p377 = scmp.lt.s32.totalorder %s10, 3
      %p378 = pnand %p376, %p377
      %p379 = pneg %p378
      // Predicated region
      $region52: #{_lambda_.15} parent=5 // pred_check
        _
      $region53: #{_lambda_.15} parent=5 // pred_check_branch
        %381 = sbr.rel (%p378) target = $region55
      $region54: #{_lambda_.15} parent=5 // pred_region
        %s382 = ssub.s32 %s10, 1
        %s383 = sand.u32 %s72, 1
        %s384 = sand.u32 %s72, 1
        %s385 = smul.addr %s384, 512
        %s386 = scalar_lea.vmem [#allocation3], %s385
        // Predicated region
        $region56: #{_lambda_.15} parent=54 // pred_check
          %p387 = pneg %p85
        $region57: #{_lambda_.15} parent=54 // pred_check_branch
          %389 = sbr.rel (%p387) target = $region59
        $region58: #{_lambda_.15} parent=54 // pred_region
          _
        $region59: #{_lambda_.15} parent=54 // pred_fallthru
          _
        %s390 = smul.u32 2, %s22
        %p391 = scmp.lt.s32.totalorder %s20, 0
        %s392 = scalar_select %p391, %s20, 0
        %p393 = scmp.lt.s32.totalorder %s390, 1
        %s394 = scalar_select %p393, %s390, 1
        %s395 = smul.addr %s392, 2
        %s396 = sadd.s32 %s394, %s395
        %s397 = smul.addr %s396, 4
        %s398 = scalar_lea.vmem %s0, %s397
        %p399 = pneg %p57
        %p400 = pneg %p54
        %s401 = sand.u32 %s72, 1
        %s402 = sand.u32 %s72, 1
        %s403 = smul.addr %s402, 512
        %s404 = scalar_lea.vmem [#allocation3], %s403
        %p405 = pneg %p85
        %p406 = pneg %p82
        %s407 = smul.u32 4, %s21
        %p408 = scmp.lt.s32.totalorder %s407, 7
        %s409 = scalar_select %p408, %s407, 7
        %s410 = scalar_lea.vmem %s2, %s409
        %p411 = pneg %p111
        %p412 = pneg %p108
        %s413 = smul.u32 4, %s21
        %p414 = scmp.lt.s32.totalorder %s20, 0
        %s415 = scalar_select %p414, %s20, 0
        %p416 = scmp.lt.s32.totalorder %s413, 7
        %s417 = scalar_select %p416, %s413, 7
        %s418 = smul.addr %s415, 8
        %s419 = sadd.s32 %s417, %s418
        %s420 = smul.addr %s419, 4
        %s421 = scalar_lea.vmem %s3, %s420
        %p422 = pneg %p139
        %p423 = pneg %p136
        %p424 = pneg %p167
        %p425 = pneg %p164
        %s426 = smul.u32 4, %s21
        %p427 = scmp.lt.s32.totalorder %s20, 0
        %s428 = scalar_select %p427, %s20, 0
        %p429 = scmp.lt.s32.totalorder %s426, 7
        %s430 = scalar_select %p429, %s426, 7
        %s431 = smul.addr %s428, 8
        %s432 = sadd.s32 %s430, %s431
        %s433 = smul.addr %s432, 4
        %s434 = scalar_lea.vmem %s4, %s433
        %s435 = smul.u32 2, %s22
        %p436 = scmp.lt.s32.totalorder %s20, 0
        %s437 = scalar_select %p436, %s20, 0
        %p438 = scmp.lt.s32.totalorder %s435, 1
        %s439 = scalar_select %p438, %s435, 1
        %s440 = smul.addr %s437, 2
        %s441 = sadd.s32 %s439, %s440
        %s442 = smul.addr %s441, 4
        %s443 = scalar_lea.vmem %s0, %s442
        %s444 = smul.u32 2, %s22
        %s445 = smul.u32 32, %s22
        %s446 = smul.u32 4, %s21
        %s447 = smul.u32 4, %s21
        %p448 = scmp.lt.s32.totalorder %s447, 7
        %s449 = scalar_select %p448, %s447, 7
        %s450 = scalar_lea.vmem %s2, %s449
        %s451 = smul.u32 4, %s21
        %s452 = smul.u32 4, %s21
        %p453 = scmp.lt.s32.totalorder %s20, 0
        %s454 = scalar_select %p453, %s20, 0
        %p455 = scmp.lt.s32.totalorder %s452, 7
        %s456 = scalar_select %p455, %s452, 7
        %s457 = smul.addr %s454, 8
        %s458 = sadd.s32 %s456, %s457
        %s459 = smul.addr %s458, 4
        %s460 = scalar_lea.vmem %s3, %s459
        %s461 = smul.u32 4, %s21
        %s462 = smul.u32 4, %s21
        %p463 = scmp.lt.s32.totalorder %s20, 0
        %s464 = scalar_select %p463, %s20, 0
        %p465 = scmp.lt.s32.totalorder %s462, 7
        %s466 = scalar_select %p465, %s462, 7
        %s467 = smul.addr %s464, 8
        %s468 = sadd.s32 %s466, %s467
        %s469 = smul.addr %s468, 4
        %s470 = scalar_lea.vmem %s4, %s469
        %s471 = smul.u32 4, %s21
        %p472 = scmp.eq.s32.totalorder %s22, 0
        // Predicated region
        $region60: #{_lambda_.15} parent=54 // pred_check
          %p473 = pneg %p472
        $region61: #{_lambda_.15} parent=54 // pred_check_branch
          %475 = sbr.rel (%p473) target = $region63
        $region62: #{_lambda_.15} parent=54 // pred_region
          %476 = vst [vmem:[#allocation2] sm:$0xff] 0.0
          %477 = vst [vmem:[#allocation2 + $0x8] sm:$0xff] 0.0
          %478 = vst [vmem:[#allocation2 + $0x10] sm:$0xff] 0.0
          %479 = vst [vmem:[#allocation2 + $0x18] sm:$0xff] 0.0
        $region63: #{_lambda_.15} parent=54 // pred_fallthru
          _
        %v480 = vld [vmem:[#allocation2] sm:$0xff]
        %v481 = vld [vmem:[#allocation2 + $0x8] sm:$0xff]
        %v482 = vld [vmem:[#allocation2 + $0x10] sm:$0xff]
        %v483 = vld [vmem:[#allocation2 + $0x18] sm:$0xff]
        %v484 = vld [vmem:[%s443] sm:$0xff]
        %v485 = vld [vmem:[%s386] sm:$0xff]
        %v486 = vld [vmem:[%s386 + $0x8] sm:$0xff]
        %v487 = vld [vmem:[%s386 + $0x10] sm:$0xff]
        %v488 = vld [vmem:[%s386 + $0x18] sm:$0xff]
        %v489 = vld [vmem:[%s386 + $0x20] sm:$0xff]
        %v490 = vld [vmem:[%s386 + $0x28] sm:$0xff]
        %v491 = vld [vmem:[%s386 + $0x30] sm:$0xff]
        %v492 = vld [vmem:[%s386 + $0x38] sm:$0xff]
        %v493 = vld [vmem:[%s386 + $0x40] sm:$0xff]
        %v494 = vld [vmem:[%s386 + $0x48] sm:$0xff]
        %v495 = vld [vmem:[%s386 + $0x50] sm:$0xff]
        %v496 = vld [vmem:[%s386 + $0x58] sm:$0xff]
        %v497 = vld [vmem:[%s386 + $0x60] sm:$0xff]
        %v498 = vld [vmem:[%s386 + $0x68] sm:$0xff]
        %v499 = vld [vmem:[%s386 + $0x70] sm:$0xff]
        %v500 = vld [vmem:[%s386 + $0x78] sm:$0xff]
        %v501 = vld [vmem:[%s386 + $0x80] sm:$0xff]
        %v502 = vld [vmem:[%s386 + $0x88] sm:$0xff]
        %v503 = vld [vmem:[%s386 + $0x90] sm:$0xff]
        %v504 = vld [vmem:[%s386 + $0x98] sm:$0xff]
        %v505 = vld [vmem:[%s386 + $0xa0] sm:$0xff]
        %v506 = vld [vmem:[%s386 + $0xa8] sm:$0xff]
        %v507 = vld [vmem:[%s386 + $0xb0] sm:$0xff]
        %v508 = vld [vmem:[%s386 + $0xb8] sm:$0xff]
        %v509 = vld [vmem:[%s386 + $0xc0] sm:$0xff]
        %v510 = vld [vmem:[%s386 + $0xc8] sm:$0xff]
        %v511 = vld [vmem:[%s386 + $0xd0] sm:$0xff]
        %v512 = vld [vmem:[%s386 + $0xd8] sm:$0xff]
        %v513 = vld [vmem:[%s386 + $0xe0] sm:$0xff]
        %v514 = vld [vmem:[%s386 + $0xe8] sm:$0xff]
        %v515 = vld [vmem:[%s386 + $0xf0] sm:$0xff]
        %v516 = vld [vmem:[%s386 + $0xf8] sm:$0xff]
        %v517 = vld [vmem:[%s386 + $0x100] sm:$0xff]
        %v518 = vld [vmem:[%s386 + $0x108] sm:$0xff]
        %v519 = vld [vmem:[%s386 + $0x110] sm:$0xff]
        %v520 = vld [vmem:[%s386 + $0x118] sm:$0xff]
        %v521 = vld [vmem:[%s386 + $0x120] sm:$0xff]
        %v522 = vld [vmem:[%s386 + $0x128] sm:$0xff]
        %v523 = vld [vmem:[%s386 + $0x130] sm:$0xff]
        %v524 = vld [vmem:[%s386 + $0x138] sm:$0xff]
        %v525 = vld [vmem:[%s386 + $0x140] sm:$0xff]
        %v526 = vld [vmem:[%s386 + $0x148] sm:$0xff]
        %v527 = vld [vmem:[%s386 + $0x150] sm:$0xff]
        %v528 = vld [vmem:[%s386 + $0x158] sm:$0xff]
        %v529 = vld [vmem:[%s386 + $0x160] sm:$0xff]
        %v530 = vld [vmem:[%s386 + $0x168] sm:$0xff]
        %v531 = vld [vmem:[%s386 + $0x170] sm:$0xff]
        %v532 = vld [vmem:[%s386 + $0x178] sm:$0xff]
        %v533 = vld [vmem:[%s386 + $0x180] sm:$0xff]
        %v534 = vld [vmem:[%s386 + $0x188] sm:$0xff]
        %v535 = vld [vmem:[%s386 + $0x190] sm:$0xff]
        %v536 = vld [vmem:[%s386 + $0x198] sm:$0xff]
        %v537 = vld [vmem:[%s386 + $0x1a0] sm:$0xff]
        %v538 = vld [vmem:[%s386 + $0x1a8] sm:$0xff]
        %v539 = vld [vmem:[%s386 + $0x1b0] sm:$0xff]
        %v540 = vld [vmem:[%s386 + $0x1b8] sm:$0xff]
        %v541 = vld [vmem:[%s386 + $0x1c0] sm:$0xff]
        %v542 = vld [vmem:[%s386 + $0x1c8] sm:$0xff]
        %v543 = vld [vmem:[%s386 + $0x1d0] sm:$0xff]
        %v544 = vld [vmem:[%s386 + $0x1d8] sm:$0xff]
        %v545 = vld [vmem:[%s386 + $0x1e0] sm:$0xff]
        %v546 = vld [vmem:[%s386 + $0x1e8] sm:$0xff]
        %v547 = vld [vmem:[%s386 + $0x1f0] sm:$0xff]
        %v548 = vld [vmem:[%s386 + $0x1f8] sm:$0xff]
        %v550 = vunpack.c.l.b16 %v484
        %v551 = vunpack.c.h.b16 %v484
        %v552 = vpack.c.b16 %v550, %v550
        %v553 = vpack.c.b16 %v551, %v551
        %v620 = vunpack.c.l.b16 %v485
        %v621 = vunpack.c.h.b16 %v485
        %v622 = vunpack.c.l.b16 %v486
        %v623 = vunpack.c.h.b16 %v486
        %v624 = vunpack.c.l.b16 %v487
        %v625 = vunpack.c.h.b16 %v487
        %v626 = vunpack.c.l.b16 %v488
        %v627 = vunpack.c.h.b16 %v488
        %v628 = vunpack.c.l.b16 %v489
        %v629 = vunpack.c.h.b16 %v489
        %v630 = vunpack.c.l.b16 %v490
        %v631 = vunpack.c.h.b16 %v490
        %v632 = vunpack.c.l.b16 %v491
        %v633 = vunpack.c.h.b16 %v491
        %v634 = vunpack.c.l.b16 %v492
        %v635 = vunpack.c.h.b16 %v492
        %v636 = vunpack.c.l.b16 %v493
        %v637 = vunpack.c.h.b16 %v493
        %v638 = vunpack.c.l.b16 %v494
        %v639 = vunpack.c.h.b16 %v494
        %v640 = vunpack.c.l.b16 %v495
        %v641 = vunpack.c.h.b16 %v495
        %v642 = vunpack.c.l.b16 %v496
        %v643 = vunpack.c.h.b16 %v496
        %v644 = vunpack.c.l.b16 %v497
        %v645 = vunpack.c.h.b16 %v497
        %v646 = vunpack.c.l.b16 %v498
        %v647 = vunpack.c.h.b16 %v498
        %v648 = vunpack.c.l.b16 %v499
        %v649 = vunpack.c.h.b16 %v499
        %v650 = vunpack.c.l.b16 %v500
        %v651 = vunpack.c.h.b16 %v500
        %v652 = vunpack.c.l.b16 %v501
        %v653 = vunpack.c.h.b16 %v501
        %v654 = vunpack.c.l.b16 %v502
        %v655 = vunpack.c.h.b16 %v502
        %v656 = vunpack.c.l.b16 %v503
        %v657 = vunpack.c.h.b16 %v503
        %v658 = vunpack.c.l.b16 %v504
        %v659 = vunpack.c.h.b16 %v504
        %v660 = vunpack.c.l.b16 %v505
        %v661 = vunpack.c.h.b16 %v505
        %v662 = vunpack.c.l.b16 %v506
        %v663 = vunpack.c.h.b16 %v506
        %v664 = vunpack.c.l.b16 %v507
        %v665 = vunpack.c.h.b16 %v507
        %v666 = vunpack.c.l.b16 %v508
        %v667 = vunpack.c.h.b16 %v508
        %v668 = vunpack.c.l.b16 %v509
        %v669 = vunpack.c.h.b16 %v509
        %v670 = vunpack.c.l.b16 %v510
        %v671 = vunpack.c.h.b16 %v510
        %v672 = vunpack.c.l.b16 %v511
        %v673 = vunpack.c.h.b16 %v511
        %v674 = vunpack.c.l.b16 %v512
        %v675 = vunpack.c.h.b16 %v512
        %v676 = vunpack.c.l.b16 %v513
        %v677 = vunpack.c.h.b16 %v513
        %v678 = vunpack.c.l.b16 %v514
        %v679 = vunpack.c.h.b16 %v514
        %v680 = vunpack.c.l.b16 %v515
        %v681 = vunpack.c.h.b16 %v515
        %v682 = vunpack.c.l.b16 %v516
        %v683 = vunpack.c.h.b16 %v516
        %v684 = vunpack.c.l.b16 %v517
        %v685 = vunpack.c.h.b16 %v517
        %v686 = vunpack.c.l.b16 %v518
        %v687 = vunpack.c.h.b16 %v518
        %v688 = vunpack.c.l.b16 %v519
        %v689 = vunpack.c.h.b16 %v519
        %v690 = vunpack.c.l.b16 %v520
        %v691 = vunpack.c.h.b16 %v520
        %v692 = vunpack.c.l.b16 %v521
        %v693 = vunpack.c.h.b16 %v521
        %v694 = vunpack.c.l.b16 %v522
        %v695 = vunpack.c.h.b16 %v522
        %v696 = vunpack.c.l.b16 %v523
        %v697 = vunpack.c.h.b16 %v523
        %v698 = vunpack.c.l.b16 %v524
        %v699 = vunpack.c.h.b16 %v524
        %v700 = vunpack.c.l.b16 %v525
        %v701 = vunpack.c.h.b16 %v525
        %v702 = vunpack.c.l.b16 %v526
        %v703 = vunpack.c.h.b16 %v526
        %v704 = vunpack.c.l.b16 %v527
        %v705 = vunpack.c.h.b16 %v527
        %v706 = vunpack.c.l.b16 %v528
        %v707 = vunpack.c.h.b16 %v528
        %v708 = vunpack.c.l.b16 %v529
        %v709 = vunpack.c.h.b16 %v529
        %v710 = vunpack.c.l.b16 %v530
        %v711 = vunpack.c.h.b16 %v530
        %v712 = vunpack.c.l.b16 %v531
        %v713 = vunpack.c.h.b16 %v531
        %v714 = vunpack.c.l.b16 %v532
        %v715 = vunpack.c.h.b16 %v532
        %v716 = vunpack.c.l.b16 %v533
        %v717 = vunpack.c.h.b16 %v533
        %v718 = vunpack.c.l.b16 %v534
        %v719 = vunpack.c.h.b16 %v534
        %v720 = vunpack.c.l.b16 %v535
        %v721 = vunpack.c.h.b16 %v535
        %v722 = vunpack.c.l.b16 %v536
        %v723 = vunpack.c.h.b16 %v536
        %v724 = vunpack.c.l.b16 %v537
        %v725 = vunpack.c.h.b16 %v537
        %v726 = vunpack.c.l.b16 %v538
        %v727 = vunpack.c.h.b16 %v538
        %v728 = vunpack.c.l.b16 %v539
        %v729 = vunpack.c.h.b16 %v539
        %v730 = vunpack.c.l.b16 %v540
        %v731 = vunpack.c.h.b16 %v540
        %v732 = vunpack.c.l.b16 %v541
        %v733 = vunpack.c.h.b16 %v541
        %v734 = vunpack.c.l.b16 %v542
        %v735 = vunpack.c.h.b16 %v542
        %v736 = vunpack.c.l.b16 %v543
        %v737 = vunpack.c.h.b16 %v543
        %v738 = vunpack.c.l.b16 %v544
        %v739 = vunpack.c.h.b16 %v544
        %v740 = vunpack.c.l.b16 %v545
        %v741 = vunpack.c.h.b16 %v545
        %v742 = vunpack.c.l.b16 %v546
        %v743 = vunpack.c.h.b16 %v546
        %v744 = vunpack.c.l.b16 %v547
        %v745 = vunpack.c.h.b16 %v547
        %v746 = vunpack.c.l.b16 %v548
        %v747 = vunpack.c.h.b16 %v548
        %v748 = vpack.c.b16 %v624, %v620
        %v749 = vpack.c.b16 %v625, %v621
        %v750 = vpack.c.b16 %v626, %v622
        %v751 = vpack.c.b16 %v627, %v623
        %v752 = vpack.c.b16 %v632, %v628
        %v753 = vpack.c.b16 %v633, %v629
        %v754 = vpack.c.b16 %v634, %v630
        %v755 = vpack.c.b16 %v635, %v631
        %v756 = vpack.c.b16 %v640, %v636
        %v757 = vpack.c.b16 %v641, %v637
        %v758 = vpack.c.b16 %v642, %v638
        %v759 = vpack.c.b16 %v643, %v639
        %v760 = vpack.c.b16 %v648, %v644
        %v761 = vpack.c.b16 %v649, %v645
        %v762 = vpack.c.b16 %v650, %v646
        %v763 = vpack.c.b16 %v651, %v647
        %v764 = vpack.c.b16 %v656, %v652
        %v765 = vpack.c.b16 %v657, %v653
        %v766 = vpack.c.b16 %v658, %v654
        %v767 = vpack.c.b16 %v659, %v655
        %v768 = vpack.c.b16 %v664, %v660
        %v769 = vpack.c.b16 %v665, %v661
        %v770 = vpack.c.b16 %v666, %v662
        %v771 = vpack.c.b16 %v667, %v663
        %v772 = vpack.c.b16 %v672, %v668
        %v773 = vpack.c.b16 %v673, %v669
        %v774 = vpack.c.b16 %v674, %v670
        %v775 = vpack.c.b16 %v675, %v671
        %v776 = vpack.c.b16 %v680, %v676
        %v777 = vpack.c.b16 %v681, %v677
        %v778 = vpack.c.b16 %v682, %v678
        %v779 = vpack.c.b16 %v683, %v679
        %v780 = vpack.c.b16 %v688, %v684
        %v781 = vpack.c.b16 %v689, %v685
        %v782 = vpack.c.b16 %v690, %v686
        %v783 = vpack.c.b16 %v691, %v687
        %v784 = vpack.c.b16 %v696, %v692
        %v785 = vpack.c.b16 %v697, %v693
        %v786 = vpack.c.b16 %v698, %v694
        %v787 = vpack.c.b16 %v699, %v695
        %v788 = vpack.c.b16 %v704, %v700
        %v789 = vpack.c.b16 %v705, %v701
        %v790 = vpack.c.b16 %v706, %v702
        %v791 = vpack.c.b16 %v707, %v703
        %v792 = vpack.c.b16 %v712, %v708
        %v793 = vpack.c.b16 %v713, %v709
        %v794 = vpack.c.b16 %v714, %v710
        %v795 = vpack.c.b16 %v715, %v711
        %v796 = vpack.c.b16 %v720, %v716
        %v797 = vpack.c.b16 %v721, %v717
        %v798 = vpack.c.b16 %v722, %v718
        %v799 = vpack.c.b16 %v723, %v719
        %v800 = vpack.c.b16 %v728, %v724
        %v801 = vpack.c.b16 %v729, %v725
        %v802 = vpack.c.b16 %v730, %v726
        %v803 = vpack.c.b16 %v731, %v727
        %v804 = vpack.c.b16 %v736, %v732
        %v805 = vpack.c.b16 %v737, %v733
        %v806 = vpack.c.b16 %v738, %v734
        %v807 = vpack.c.b16 %v739, %v735
        %v808 = vpack.c.b16 %v744, %v740
        %v809 = vpack.c.b16 %v745, %v741
        %v810 = vpack.c.b16 %v746, %v742
        %v811 = vpack.c.b16 %v747, %v743
        %876 = vmatprep.subr.bf16.mxu0 %v749
        %877 = vmatpush1.bf16.msra.mxu0 %v748
        %878 = vmatprep.subr.bf16.mxu0 %v753
        %879 = vmatpush1.bf16.msra.mxu0 %v752
        %880 = vmatprep.subr.bf16.mxu0 %v757
        %881 = vmatpush1.bf16.msra.mxu0 %v756
        %882 = vmatprep.subr.bf16.mxu0 %v761
        %883 = vmatpush1.bf16.msra.mxu0 %v760
        %884 = vmatprep.subr.bf16.mxu0 %v765
        %885 = vmatpush1.bf16.msra.mxu0 %v764
        %886 = vmatprep.subr.bf16.mxu0 %v769
        %887 = vmatpush1.bf16.msra.mxu0 %v768
        %888 = vmatprep.subr.bf16.mxu0 %v773
        %889 = vmatpush1.bf16.msra.mxu0 %v772
        %890 = vmatprep.subr.bf16.mxu0 %v777
        %891 = vmatpush1.bf16.msra.mxu0 %v776
        %892 = vmatprep.subr.bf16.mxu0 %v781
        %893 = vmatpush1.bf16.msra.mxu0 %v780
        %894 = vmatprep.subr.bf16.mxu0 %v785
        %895 = vmatpush1.bf16.msra.mxu0 %v784
        %896 = vmatprep.subr.bf16.mxu0 %v789
        %897 = vmatpush1.bf16.msra.mxu0 %v788
        %898 = vmatprep.subr.bf16.mxu0 %v793
        %899 = vmatpush1.bf16.msra.mxu0 %v792
        %900 = vmatprep.subr.bf16.mxu0 %v797
        %901 = vmatpush1.bf16.msra.mxu0 %v796
        %902 = vmatprep.subr.bf16.mxu0 %v801
        %903 = vmatpush1.bf16.msra.mxu0 %v800
        %904 = vmatprep.subr.bf16.mxu0 %v805
        %905 = vmatpush1.bf16.msra.mxu0 %v804
        %906 = vmatprep.subr.bf16.mxu0 %v809
        %907 = vmatpush1.bf16.msra.mxu0 %v808
        %908 = vmatprep.mubr.bf16.mxu0 %v553
        %909 = vmatmul.mubr.bf16.gmra.mrb[0].mxu0 %v552
        %v910 = vpop.f32.mrb[0].mxu0
        %v911 = vadd.f32 0.0, %v910
        %v912 = vpop.f32.mrb[0].mxu0
        %v913 = vadd.f32 0.0, %v912
        %v914 = vpop.f32.mrb[0].mxu0
        %v915 = vpop.f32.mrb[0].mxu0
        %916 = vdwg.mxu0
        %917 = vmatprep.subr.bf16.mxu0 %v751
        %918 = vmatpush1.bf16.msra.mxu0 %v750
        %919 = vmatprep.subr.bf16.mxu0 %v755
        %920 = vmatpush1.bf16.msra.mxu0 %v754
        %921 = vmatprep.subr.bf16.mxu0 %v759
        %922 = vmatpush1.bf16.msra.mxu0 %v758
        %923 = vmatprep.subr.bf16.mxu0 %v763
        %924 = vmatpush1.bf16.msra.mxu0 %v762
        %925 = vmatprep.subr.bf16.mxu0 %v767
        %926 = vmatpush1.bf16.msra.mxu0 %v766
        %927 = vmatprep.subr.bf16.mxu0 %v771
        %928 = vmatpush1.bf16.msra.mxu0 %v770
        %929 = vmatprep.subr.bf16.mxu0 %v775
        %930 = vmatpush1.bf16.msra.mxu0 %v774
        %931 = vmatprep.subr.bf16.mxu0 %v779
        %932 = vmatpush1.bf16.msra.mxu0 %v778
        %933 = vmatprep.subr.bf16.mxu0 %v783
        %934 = vmatpush1.bf16.msra.mxu0 %v782
        %935 = vmatprep.subr.bf16.mxu0 %v787
        %936 = vmatpush1.bf16.msra.mxu0 %v786
        %937 = vmatprep.subr.bf16.mxu0 %v791
        %938 = vmatpush1.bf16.msra.mxu0 %v790
        %939 = vmatprep.subr.bf16.mxu0 %v795
        %940 = vmatpush1.bf16.msra.mxu0 %v794
        %941 = vmatprep.subr.bf16.mxu0 %v799
        %942 = vmatpush1.bf16.msra.mxu0 %v798
        %943 = vmatprep.subr.bf16.mxu0 %v803
        %944 = vmatpush1.bf16.msra.mxu0 %v802
        %945 = vmatprep.subr.bf16.mxu0 %v807
        %946 = vmatpush1.bf16.msra.mxu0 %v806
        %947 = vmatprep.subr.bf16.mxu0 %v811
        %948 = vmatpush1.bf16.msra.mxu0 %v810
        %949 = vmatprep.mubr.bf16.mxu0 %v553
        %950 = vmatmul.mubr.bf16.gmra.mrb[0].mxu0 %v552
        %v951 = vpop.f32.mrb[0].mxu0
        %v952 = vadd.f32 0.0, %v951
        %v953 = vpop.f32.mrb[0].mxu0
        %v954 = vadd.f32 0.0, %v953
        %v955 = vpop.f32.mrb[0].mxu0
        %v956 = vpop.f32.mrb[0].mxu0
        %957 = vdwg.mxu0
        %v958 = vadd.f32 %v480, %v911
        %v959 = vadd.f32 %v481, %v913
        %v960 = vadd.f32 %v482, %v952
        %v961 = vadd.f32 %v483, %v954
        %962 = vst [vmem:[#allocation2] sm:$0xff] %v958
        %963 = vst [vmem:[#allocation2 + $0x8] sm:$0xff] %v959
        %964 = vst [vmem:[#allocation2 + $0x10] sm:$0xff] %v960
        %965 = vst [vmem:[#allocation2 + $0x18] sm:$0xff] %v961
        // Predicated region
        $region64: #{_lambda_.15} parent=54 // pred_check
          %p966 = pneg %p472
        $region65: #{_lambda_.15} parent=54 // pred_check_branch
          %968 = sbr.rel (%p966) target = $region67
        $region66: #{_lambda_.15} parent=54 // pred_region
          %v969 = vld [vmem:[#allocation2] sm:$0xff]
          %v970 = vld [vmem:[#allocation2 + $0x8] sm:$0xff]
          %v971 = vld [vmem:[#allocation2 + $0x10] sm:$0xff]
          %v972 = vld [vmem:[#allocation2 + $0x18] sm:$0xff]
          %v973 = vld [vmem:[%s450] sm:$0xf]
          %v975 = vlaneseq
          %v976 = vshrl.u32 %v975, 7
          %v977 = vsub.s32 0, %v976
          %v978 = vrot.slane %v973, %v977
          %v979 = vlaneseq
          %v980 = vshrl.u32 %v979, 7
          %v981 = vsub.s32 1, %v980
          %v982 = vrot.slane %v973, %v981
          %v983 = vlaneseq
          %v984 = vshrl.u32 %v983, 7
          %v985 = vsub.s32 2, %v984
          %v986 = vrot.slane %v973, %v985
          %v987 = vlaneseq
          %v988 = vshrl.u32 %v987, 7
          %v989 = vsub.s32 3, %v988
          %v990 = vrot.slane %v973, %v989
          %v995 = vadd.f32 %v969, %v978
          %v996 = vadd.f32 %v970, %v982
          %v997 = vadd.f32 %v971, %v986
          %v998 = vadd.f32 %v972, %v990
          %v999 = vld [vmem:[%s460] sm:$0xff]
          %v1000 = vld [vmem:[%s460 + $0x8] sm:$0xff]
          %v1001 = vunpack.c.l.bf16 %v999
          %v1002 = vunpack.c.h.bf16 %v999
          %v1003 = vunpack.c.l.bf16 %v1000
          %v1004 = vunpack.c.h.bf16 %v1000
          %v1005 = vadd.f32 %v995, %v1001
          %v1006 = vadd.f32 %v996, %v1002
          %v1007 = vadd.f32 %v997, %v1003
          %v1008 = vadd.f32 %v998, %v1004
          %v1009 = vmax.f32 %v1005, 0.0
          %v1010 = vmax.f32 %v1006, 0.0
          %v1011 = vmax.f32 %v1007, 0.0
          %v1012 = vmax.f32 %v1008, 0.0
          %v1013 = vpack.c.bf16 %v1009, %v1009
          %v1014 = vpack.c.bf16 %v1010, %v1010
          %v1015 = vpack.c.bf16 %v1011, %v1011
          %v1016 = vpack.c.bf16 %v1012, %v1012
          %v1021 = vunpack.c.l.b16 %v1013
          %v1022 = vunpack.c.l.b16 %v1014
          %v1023 = vunpack.c.l.b16 %v1015
          %v1024 = vunpack.c.l.b16 %v1016
          %v1025 = vpack.c.b16 %v1022, %v1021
          %v1026 = vpack.c.b16 %v1024, %v1023
          %1029 = vst [vmem:[%s470] sm:$0xff] %v1025
          %1030 = vst [vmem:[%s470 + $0x8] sm:$0xff] %v1026
        $region67: #{_lambda_.15} parent=54 // pred_fallthru
          _
        %s1031 = smul.u32 4, %s21
        %p1032 = scmp.lt.s32.totalorder %s20, 0
        %s1033 = scalar_select %p1032, %s20, 0
        %p1034 = scmp.lt.s32.totalorder %s1031, 7
        %s1035 = scalar_select %p1034, %s1031, 7
        %s1036 = smul.addr %s1033, 8
        %s1037 = sadd.s32 %s1035, %s1036
        %s1038 = smul.addr %s1037, 4
        %s1039 = scalar_lea.vmem %s4, %s1038
        // Predicated region
        $region68: #{_lambda_.15} parent=54 // pred_check
          %p1040 = pneg %p164
        $region69: #{_lambda_.15} parent=54 // pred_check_branch
          %1042 = sbr.rel (%p1040) target = $region71
        $region70: #{_lambda_.15} parent=54 // pred_region
          %s1043 = smul.u32 4, %s21
        $region71: #{_lambda_.15} parent=54 // pred_fallthru
          _
      $region55: #{_lambda_.15} parent=5 // pred_fallthru
        _
      %p1044 = scmp.le.s32.totalorder 2, %s10
      // Predicated region
      $region72: #{_lambda_.15} parent=5 // pred_check
        %p1045 = pneg %p1044
      $region73: #{_lambda_.15} parent=5 // pred_check_branch
        %1047 = sbr.rel (%p1045) target = $region75
      $region74: #{_lambda_.15} parent=5 // pred_region
        %s1048 = ssub.s32 %s10, 2
        // Predicated region
        $region76: #{_lambda_.15} parent=74 // pred_check
          %p1049 = pneg %p170
        $region77: #{_lambda_.15} parent=74 // pred_check_branch
          %1051 = sbr.rel (%p1049) target = $region79
        $region78: #{_lambda_.15} parent=74 // pred_region
          %s1052 = smul.u32 4, %s24
          %p1053 = scmp.lt.s32.totalorder %s23, 0
          %s1054 = scalar_select %p1053, %s23, 0
          %p1055 = scmp.lt.s32.totalorder %s1052, 7
          %s1056 = scalar_select %p1055, %s1052, 7
          %s1057 = smul.addr %s1054, 8
          %s1058 = sadd.s32 %s1056, %s1057
          %s1059 = smul.addr %s1058, 4
          %s1060 = scalar_lea.vmem %s4, %s1059
        $region79: #{_lambda_.15} parent=74 // pred_fallthru
          _
      $region75: #{_lambda_.15} parent=5 // pred_fallthru
        _
    $region6: #{_lambda_.15} parent=1 // loop_footer
      %s14 = sadd.s32 1, %s10
    $region7: #{_lambda_.15} parent=1 // loop_footer_branch
      %9 = sbr.rel target = $region3
    $region8: #{_lambda_.15} parent=1 // loop_exit
      _

// kernel: _lambda_.14
$region0: #{_lambda_.14}
  #allocation0 [shape = 'u32[]', space=smem, size = 0x4, offset = 0x4, fixed_abs, tag = 'smem constant byte address 0x4 - core index']
  #allocation1 [shape = 'u32[144,128]{1,0:T(1,128)}', space=vmem, size = 0x12000, scoped, tag = 'internal scratch']
  #allocation2 [shape = 'f32[8,512]{1,0:T(8,128)}', space=vmem, size = 0x4000, scoped, tag = 'scratch operand']
  %s0 = inlined_call_operand.vmem [shape: bf16[8,1024], index: 0, kind: input, shape index: {}]
  %s1 = inlined_call_operand.vmem [shape: bf16[1024,1024], index: 1, kind: input, shape index: {}]
  %s2 = inlined_call_operand.vmem [shape: f32[1,1024], index: 2, kind: input, shape index: {}]
  %s3 = inlined_call_operand.vmem [shape: bf16[8,1024], index: 3, kind: output, shape index: {}]
  %s4 = sld [smem:[#allocation0]]
  $region76: #{_lambda_.14} parent=0
    _
  %s6 = ssub.s32 1, %s4
  %s7 = scalar_select 0, %s6, %s4
  $region1: #{_lambda_.14} parent=0
    #allocation3 [shape = 'u8[1048576]{0}', space=vmem, size = 0x100000, scoped, tag = 'input window, operand 1']
    loop: start=0, step=1, limit=6
    $region2: #{_lambda_.14} parent=1 // loop_pre_header
      _
    $region3: #{_lambda_.14} parent=1 // loop_header
      %s9 = sphi 0, %s13
      %p10 = scmp.ge.s32.totalorder %s9, 6
      %s16 = sphi 0, %s35
      %s17 = sphi 0, %s31
      %s18 = sphi 0, %s27
      %s19 = sphi 0, %s16
      %s20 = sphi 0, %s17
      %s21 = sphi 0, %s18
      %s22 = sphi 0, %s19
      %s23 = sphi 0, %s20
      %s24 = sphi 0, %s21
      %s40 = sphi 0, %s42
      %s43 = sphi 0, %s40
      %s44 = sphi 0, %s43
      %s60 = sphi 0, %s44
      %s68 = sphi 0, %s70
      %s71 = sphi 0, %s68
      %s72 = sphi 0, %s71
      %s88 = sphi 0, %s72
      %s94 = sphi 0, %s96
      %s97 = sphi 0, %s94
      %s98 = sphi 0, %s97
      %s114 = sphi 0, %s98
      %s122 = sphi 0, %s124
      %s125 = sphi 0, %s122
      %s126 = sphi 0, %s125
      %s142 = sphi 0, %s126
    $region4: #{_lambda_.14} parent=1 // loop_header_branch
      %12 = sbr.rel (%p10) target = $region8
    $region5: #{_lambda_.14} parent=1 // loop_body
      %s14 = ssub.s32 %s9, 1
      %s15 = ssub.s32 %s9, 2
      %s25 = sadd.s32 1, %s18
      %p26 = scmp.ge.s32.totalorder %s25, 2
      %s27 = scalar_select %p26, 0, %s25
      %s28 = sadd.s32 1, %s17
      %s29 = scalar_select %p26, %s28, %s17
      %p30 = scmp.ge.s32.totalorder %s29, 2
      %s31 = scalar_select %p30, 0, %s29
      %s32 = sadd.s32 1, %s16
      %s33 = scalar_select %p30, %s32, %s16
      %p34 = scmp.ge.s32.totalorder %s33, 1
      %s35 = scalar_select %p34, 0, %s33
      %s36 = ssub.s32 %s16, %s35
      %s37 = ssub.s32 %s18, %s27
      %s38 = sor.u32 %s36, %s37
      %p39 = scmp.eq.s32.totalorder %s38, 0
      %s41 = sadd.s32 %s40, 1
      %s42 = scalar_select %p39, %s40, %s41
      %p45 = pneg %p39
      %p46 = scmp.eq.s32.totalorder %s9, 3
      %p47 = por %p45, %p46
      %p48 = scmp.ne.s32.totalorder %s40, %s43
      %p49 = scmp.eq.s32.totalorder %s9, 0
      %p50 = por %p48, %p49
      %p51 = scmp.ne.s32.totalorder %s40, %s43
      %p52 = scmp.eq.s32.totalorder %s14, 3
      %p53 = por %p51, %p52
      %p54 = scmp.ne.s32.totalorder %s43, %s44
      %p55 = scmp.eq.s32.totalorder %s14, 0
      %p56 = por %p54, %p55
      %p57 = scmp.ne.s32.totalorder %s43, %s44
      %p58 = scmp.eq.s32.totalorder %s15, 3
      %p59 = por %p57, %p58
      %p61 = scmp.ne.s32.totalorder %s44, %s60
      %p62 = scmp.eq.s32.totalorder %s15, 0
      %p63 = por %p61, %p62
      %s64 = ssub.s32 %s18, %s27
      %s65 = ssub.s32 %s17, %s31
      %s66 = sor.u32 %s64, %s65
      %p67 = scmp.eq.s32.totalorder %s66, 0
      %s69 = sadd.s32 %s68, 1
      %s70 = scalar_select %p67, %s68, %s69
      %p73 = pneg %p67
      %p74 = scmp.eq.s32.totalorder %s9, 3
      %p75 = por %p73, %p74
      %p76 = scmp.ne.s32.totalorder %s68, %s71
      %p77 = scmp.eq.s32.totalorder %s9, 0
      %p78 = por %p76, %p77
      %p79 = scmp.ne.s32.totalorder %s68, %s71
      %p80 = scmp.eq.s32.totalorder %s14, 3
      %p81 = por %p79, %p80
      %p82 = scmp.ne.s32.totalorder %s71, %s72
      %p83 = scmp.eq.s32.totalorder %s14, 0
      %p84 = por %p82, %p83
      %p85 = scmp.ne.s32.totalorder %s71, %s72
      %p86 = scmp.eq.s32.totalorder %s15, 3
      %p87 = por %p85, %p86
      %p89 = scmp.ne.s32.totalorder %s72, %s88
      %p90 = scmp.eq.s32.totalorder %s15, 0
      %p91 = por %p89, %p90
      %s92 = ssub.s32 %s17, %s31
      %p93 = scmp.eq.s32.totalorder %s92, 0
      %s95 = sadd.s32 %s94, 1
      %s96 = scalar_select %p93, %s94, %s95
      %p99 = pneg %p93
      %p100 = scmp.eq.s32.totalorder %s9, 3
      %p101 = por %p99, %p100
      %p102 = scmp.ne.s32.totalorder %s94, %s97
      %p103 = scmp.eq.s32.totalorder %s9, 0
      %p104 = por %p102, %p103
      %p105 = scmp.ne.s32.totalorder %s94, %s97
      %p106 = scmp.eq.s32.totalorder %s14, 3
      %p107 = por %p105, %p106
      %p108 = scmp.ne.s32.totalorder %s97, %s98
      %p109 = scmp.eq.s32.totalorder %s14, 0
      %p110 = por %p108, %p109
      %p111 = scmp.ne.s32.totalorder %s97, %s98
      %p112 = scmp.eq.s32.totalorder %s15, 3
      %p113 = por %p111, %p112
      %p115 = scmp.ne.s32.totalorder %s98, %s114
      %p116 = scmp.eq.s32.totalorder %s15, 0
      %p117 = por %p115, %p116
      %s118 = ssub.s32 %s16, %s35
      %s119 = ssub.s32 %s17, %s31
      %s120 = sor.u32 %s118, %s119
      %p121 = scmp.eq.s32.totalorder %s120, 0
      %s123 = sadd.s32 %s122, 1
      %s124 = scalar_select %p121, %s122, %s123
      %p127 = pneg %p121
      %p128 = scmp.eq.s32.totalorder %s9, 3
      %p129 = por %p127, %p128
      %p130 = scmp.ne.s32.totalorder %s122, %s125
      %p131 = scmp.eq.s32.totalorder %s9, 0
      %p132 = por %p130, %p131
      %p133 = scmp.ne.s32.totalorder %s122, %s125
      %p134 = scmp.eq.s32.totalorder %s14, 3
      %p135 = por %p133, %p134
      %p136 = scmp.ne.s32.totalorder %s125, %s126
      %p137 = scmp.eq.s32.totalorder %s14, 0
      %p138 = por %p136, %p137
      %p139 = scmp.ne.s32.totalorder %s125, %s126
      %p140 = scmp.eq.s32.totalorder %s15, 3
      %p141 = por %p139, %p140
      %p143 = scmp.ne.s32.totalorder %s126, %s142
      %p144 = scmp.eq.s32.totalorder %s15, 0
      %p145 = por %p143, %p144
      %p146 = scmp.le.s32.totalorder 1, %s9
      %p147 = scmp.lt.s32.totalorder %s9, 5
      %p148 = pnand %p146, %p147
      %p149 = pneg %p148
      // Predicated region
      $region9: #{_lambda_.14} parent=5 // pred_check
        _
      $region10: #{_lambda_.14} parent=5 // pred_check_branch
        %151 = sbr.rel (%p148) target = $region12
      $region11: #{_lambda_.14} parent=5 // pred_region
        %s152 = ssub.s32 %s9, 1
      $region12: #{_lambda_.14} parent=5 // pred_fallthru
        _
      %p153 = scmp.lt.s32.totalorder %s9, 4
      // Predicated region
      $region13: #{_lambda_.14} parent=5 // pred_check
        %p154 = pneg %p153
      $region14: #{_lambda_.14} parent=5 // pred_check_branch
        %156 = sbr.rel (%p154) target = $region16
      $region15: #{_lambda_.14} parent=5 // pred_region
        // Predicated region
        $region17: #{_lambda_.14} parent=15 // pred_check
          %p157 = pneg %p50
        $region18: #{_lambda_.14} parent=15 // pred_check_branch
          %159 = sbr.rel (%p157) target = $region20
        $region19: #{_lambda_.14} parent=15 // pred_region
          %s160 = smul.u32 4, %s18
          %p161 = scmp.lt.s32.totalorder %s16, 0
          %s162 = scalar_select %p161, %s16, 0
          %p163 = scmp.lt.s32.totalorder %s160, 7
          %s164 = scalar_select %p163, %s160, 7
          %s165 = smul.addr %s162, 8
          %s166 = sadd.s32 %s164, %s165
          %s167 = smul.addr %s166, 4
          %s168 = scalar_lea.vmem %s0, %s167
          %s169 = smul.u32 4, %s18
        $region20: #{_lambda_.14} parent=15 // pred_fallthru
          _
        // Predicated region
        $region21: #{_lambda_.14} parent=15 // pred_check
          %p170 = pneg %p78
        $region22: #{_lambda_.14} parent=15 // pred_check_branch
          %172 = sbr.rel (%p170) target = $region24
        $region23: #{_lambda_.14} parent=15 // pred_region
          %s173 = sand.u32 %s68, 1
          %s174 = sand.u32 %s68, 1
          %s175 = smul.addr %s174, 1024
          %s176 = scalar_lea.vmem [#allocation3], %s175
          %s177 = smul.u32 64, %s18
          %s178 = smul.u32 4, %s17
          %s179 = smul.addr %s177, 8
          %s180 = sadd.s32 %s178, %s179
          %s181 = smul.addr %s180, 4
          %s182 = scalar_lea.vmem %s1, %s181
          // Predicated region
          $region25: #{_lambda_.14} parent=23 // pred_check
            _
          $region26: #{_lambda_.14} parent=23 // pred_check_branch
            %184 = sbr.rel (0) target = $region28
          $region27: #{_lambda_.14} parent=23 // pred_region
            // Predicated region
            $region29: #{_lambda_.14} parent=27 // pred_check
              _
            $region30: #{_lambda_.14} parent=27 // pred_check_branch
              %186 = sbr.rel (0) target = $region32
            $region31: #{_lambda_.14} parent=27 // pred_region
              loop: start=0, step=1, limit=1
              $region33: #{_lambda_.14} parent=31 // loop_pre_header
                _
              $region34: #{_lambda_.14} parent=31 // loop_header
                %s188 = sphi 0, %s192
                %p189 = scmp.ge.s32.totalorder %s188, 1
                %s193 = sphi %s182, %s182
                %s194 = sphi %s176, %s176
              $region35: #{_lambda_.14} parent=31 // loop_header_branch
                %191 = sbr.rel (%p189) target = $region39
              $region36: #{_lambda_.14} parent=31 // loop_body
                %v195 = vld [vmem:[%s193] sm:$0xff]
                %196 = vst [vmem:[%s194] sm:$0xff] %v195
                %v197 = vld [vmem:[%s193 + $0x8] sm:$0xff]
                %198 = vst [vmem:[%s194 + $0x8] sm:$0xff] %v197
                %v199 = vld [vmem:[%s193 + $0x20] sm:$0xff]
                %200 = vst [vmem:[%s194 + $0x10] sm:$0xff] %v199
                %v201 = vld [vmem:[%s193 + $0x28] sm:$0xff]
                %202 = vst [vmem:[%s194 + $0x18] sm:$0xff] %v201
                %v203 = vld [vmem:[%s193 + $0x40] sm:$0xff]
                %204 = vst [vmem:[%s194 + $0x20] sm:$0xff] %v203
                %v205 = vld [vmem:[%s193 + $0x48] sm:$0xff]
                %206 = vst [vmem:[%s194 + $0x28] sm:$0xff] %v205
                %v207 = vld [vmem:[%s193 + $0x60] sm:$0xff]
                %208 = vst [vmem:[%s194 + $0x30] sm:$0xff] %v207
                %v209 = vld [vmem:[%s193 + $0x68] sm:$0xff]
                %210 = vst [vmem:[%s194 + $0x38] sm:$0xff] %v209
                %v211 = vld [vmem:[%s193 + $0x80] sm:$0xff]
                %212 = vst [vmem:[%s194 + $0x40] sm:$0xff] %v211
                %v213 = vld [vmem:[%s193 + $0x88] sm:$0xff]
                %214 = vst [vmem:[%s194 + $0x48] sm:$0xff] %v213
                %v215 = vld [vmem:[%s193 + $0xa0] sm:$0xff]
                %216 = vst [vmem:[%s194 + $0x50] sm:$0xff] %v215
                %v217 = vld [vmem:[%s193 + $0xa8] sm:$0xff]
                %218 = vst [vmem:[%s194 + $0x58] sm:$0xff] %v217
                %v219 = vld [vmem:[%s193 + $0xc0] sm:$0xff]
                %220 = vst [vmem:[%s194 + $0x60] sm:$0xff] %v219
                %v221 = vld [vmem:[%s193 + $0xc8] sm:$0xff]
                %222 = vst [vmem:[%s194 + $0x68] sm:$0xff] %v221
                %v223 = vld [vmem:[%s193 + $0xe0] sm:$0xff]
                %224 = vst [vmem:[%s194 + $0x70] sm:$0xff] %v223
                %v225 = vld [vmem:[%s193 + $0xe8] sm:$0xff]
                %226 = vst [vmem:[%s194 + $0x78] sm:$0xff] %v225
                %v227 = vld [vmem:[%s193 + $0x100] sm:$0xff]
                %228 = vst [vmem:[%s194 + $0x80] sm:$0xff] %v227
                %v229 = vld [vmem:[%s193 + $0x108] sm:$0xff]
                %230 = vst [vmem:[%s194 + $0x88] sm:$0xff] %v229
                %v231 = vld [vmem:[%s193 + $0x120] sm:$0xff]
                %232 = vst [vmem:[%s194 + $0x90] sm:$0xff] %v231
                %v233 = vld [vmem:[%s193 + $0x128] sm:$0xff]
                %234 = vst [vmem:[%s194 + $0x98] sm:$0xff] %v233
                %v235 = vld [vmem:[%s193 + $0x140] sm:$0xff]
                %236 = vst [vmem:[%s194 + $0xa0] sm:$0xff] %v235
                %v237 = vld [vmem:[%s193 + $0x148] sm:$0xff]
                %238 = vst [vmem:[%s194 + $0xa8] sm:$0xff] %v237
                %v239 = vld [vmem:[%s193 + $0x160] sm:$0xff]
                %240 = vst [vmem:[%s194 + $0xb0] sm:$0xff] %v239
                %v241 = vld [vmem:[%s193 + $0x168] sm:$0xff]
                %242 = vst [vmem:[%s194 + $0xb8] sm:$0xff] %v241
                %v243 = vld [vmem:[%s193 + $0x180] sm:$0xff]
                %244 = vst [vmem:[%s194 + $0xc0] sm:$0xff] %v243
                %v245 = vld [vmem:[%s193 + $0x188] sm:$0xff]
                %246 = vst [vmem:[%s194 + $0xc8] sm:$0xff] %v245
                %v247 = vld [vmem:[%s193 + $0x1a0] sm:$0xff]
                %248 = vst [vmem:[%s194 + $0xd0] sm:$0xff] %v247
                %v249 = vld [vmem:[%s193 + $0x1a8] sm:$0xff]
                %250 = vst [vmem:[%s194 + $0xd8] sm:$0xff] %v249
                %v251 = vld [vmem:[%s193 + $0x1c0] sm:$0xff]
                %252 = vst [vmem:[%s194 + $0xe0] sm:$0xff] %v251
                %v253 = vld [vmem:[%s193 + $0x1c8] sm:$0xff]
                %254 = vst [vmem:[%s194 + $0xe8] sm:$0xff] %v253
                %v255 = vld [vmem:[%s193 + $0x1e0] sm:$0xff]
                %256 = vst [vmem:[%s194 + $0xf0] sm:$0xff] %v255
                %v257 = vld [vmem:[%s193 + $0x1e8] sm:$0xff]
                %258 = vst [vmem:[%s194 + $0xf8] sm:$0xff] %v257
                %v259 = vld [vmem:[%s193 + $0x200] sm:$0xff]
                %260 = vst [vmem:[%s194 + $0x100] sm:$0xff] %v259
                %v261 = vld [vmem:[%s193 + $0x208] sm:$0xff]
                %262 = vst [vmem:[%s194 + $0x108] sm:$0xff] %v261
                %v263 = vld [vmem:[%s193 + $0x220] sm:$0xff]
                %264 = vst [vmem:[%s194 + $0x110] sm:$0xff] %v263
                %v265 = vld [vmem:[%s193 + $0x228] sm:$0xff]
                %266 = vst [vmem:[%s194 + $0x118] sm:$0xff] %v265
                %v267 = vld [vmem:[%s193 + $0x240] sm:$0xff]
                %268 = vst [vmem:[%s194 + $0x120] sm:$0xff] %v267
                %v269 = vld [vmem:[%s193 + $0x248] sm:$0xff]
                %270 = vst [vmem:[%s194 + $0x128] sm:$0xff] %v269
                %v271 = vld [vmem:[%s193 + $0x260] sm:$0xff]
                %272 = vst [vmem:[%s194 + $0x130] sm:$0xff] %v271
                %v273 = vld [vmem:[%s193 + $0x268] sm:$0xff]
                %274 = vst [vmem:[%s194 + $0x138] sm:$0xff] %v273
                %v275 = vld [vmem:[%s193 + $0x280] sm:$0xff]
                %276 = vst [vmem:[%s194 + $0x140] sm:$0xff] %v275
                %v277 = vld [vmem:[%s193 + $0x288] sm:$0xff]
                %278 = vst [vmem:[%s194 + $0x148] sm:$0xff] %v277
                %v279 = vld [vmem:[%s193 + $0x2a0] sm:$0xff]
                %280 = vst [vmem:[%s194 + $0x150] sm:$0xff] %v279
                %v281 = vld [vmem:[%s193 + $0x2a8] sm:$0xff]
                %282 = vst [vmem:[%s194 + $0x158] sm:$0xff] %v281
                %v283 = vld [vmem:[%s193 + $0x2c0] sm:$0xff]
                %284 = vst [vmem:[%s194 + $0x160] sm:$0xff] %v283
                %v285 = vld [vmem:[%s193 + $0x2c8] sm:$0xff]
                %286 = vst [vmem:[%s194 + $0x168] sm:$0xff] %v285
                %v287 = vld [vmem:[%s193 + $0x2e0] sm:$0xff]
                %288 = vst [vmem:[%s194 + $0x170] sm:$0xff] %v287
                %v289 = vld [vmem:[%s193 + $0x2e8] sm:$0xff]
                %290 = vst [vmem:[%s194 + $0x178] sm:$0xff] %v289
                %v291 = vld [vmem:[%s193 + $0x300] sm:$0xff]
                %292 = vst [vmem:[%s194 + $0x180] sm:$0xff] %v291
                %v293 = vld [vmem:[%s193 + $0x308] sm:$0xff]
                %294 = vst [vmem:[%s194 + $0x188] sm:$0xff] %v293
                %v295 = vld [vmem:[%s193 + $0x320] sm:$0xff]
                %296 = vst [vmem:[%s194 + $0x190] sm:$0xff] %v295
                %v297 = vld [vmem:[%s193 + $0x328] sm:$0xff]
                %298 = vst [vmem:[%s194 + $0x198] sm:$0xff] %v297
                %v299 = vld [vmem:[%s193 + $0x340] sm:$0xff]
                %300 = vst [vmem:[%s194 + $0x1a0] sm:$0xff] %v299
                %v301 = vld [vmem:[%s193 + $0x348] sm:$0xff]
                %302 = vst [vmem:[%s194 + $0x1a8] sm:$0xff] %v301
                %v303 = vld [vmem:[%s193 + $0x360] sm:$0xff]
                %304 = vst [vmem:[%s194 + $0x1b0] sm:$0xff] %v303
                %v305 = vld [vmem:[%s193 + $0x368] sm:$0xff]
                %306 = vst [vmem:[%s194 + $0x1b8] sm:$0xff] %v305
                %v307 = vld [vmem:[%s193 + $0x380] sm:$0xff]
                %308 = vst [vmem:[%s194 + $0x1c0] sm:$0xff] %v307
                %v309 = vld [vmem:[%s193 + $0x388] sm:$0xff]
                %310 = vst [vmem:[%s194 + $0x1c8] sm:$0xff] %v309
                %v311 = vld [vmem:[%s193 + $0x3a0] sm:$0xff]
                %312 = vst [vmem:[%s194 + $0x1d0] sm:$0xff] %v311
                %v313 = vld [vmem:[%s193 + $0x3a8] sm:$0xff]
                %314 = vst [vmem:[%s194 + $0x1d8] sm:$0xff] %v313
                %v315 = vld [vmem:[%s193 + $0x3c0] sm:$0xff]
                %316 = vst [vmem:[%s194 + $0x1e0] sm:$0xff] %v315
                %v317 = vld [vmem:[%s193 + $0x3c8] sm:$0xff]
                %318 = vst [vmem:[%s194 + $0x1e8] sm:$0xff] %v317
                %v319 = vld [vmem:[%s193 + $0x3e0] sm:$0xff]
                %320 = vst [vmem:[%s194 + $0x1f0] sm:$0xff] %v319
                %v321 = vld [vmem:[%s193 + $0x3e8] sm:$0xff]
                %322 = vst [vmem:[%s194 + $0x1f8] sm:$0xff] %v321
                %v323 = vld [vmem:[%s193 + $0x400] sm:$0xff]
                %324 = vst [vmem:[%s194 + $0x200] sm:$0xff] %v323
                %v325 = vld [vmem:[%s193 + $0x408] sm:$0xff]
                %326 = vst [vmem:[%s194 + $0x208] sm:$0xff] %v325
                %v327 = vld [vmem:[%s193 + $0x420] sm:$0xff]
                %328 = vst [vmem:[%s194 + $0x210] sm:$0xff] %v327
                %v329 = vld [vmem:[%s193 + $0x428] sm:$0xff]
                %330 = vst [vmem:[%s194 + $0x218] sm:$0xff] %v329
                %v331 = vld [vmem:[%s193 + $0x440] sm:$0xff]
                %332 = vst [vmem:[%s194 + $0x220] sm:$0xff] %v331
                %v333 = vld [vmem:[%s193 + $0x448] sm:$0xff]
                %334 = vst [vmem:[%s194 + $0x228] sm:$0xff] %v333
                %v335 = vld [vmem:[%s193 + $0x460] sm:$0xff]
                %336 = vst [vmem:[%s194 + $0x230] sm:$0xff] %v335
                %v337 = vld [vmem:[%s193 + $0x468] sm:$0xff]
                %338 = vst [vmem:[%s194 + $0x238] sm:$0xff] %v337
                %v339 = vld [vmem:[%s193 + $0x480] sm:$0xff]
                %340 = vst [vmem:[%s194 + $0x240] sm:$0xff] %v339
                %v341 = vld [vmem:[%s193 + $0x488] sm:$0xff]
                %342 = vst [vmem:[%s194 + $0x248] sm:$0xff] %v341
                %v343 = vld [vmem:[%s193 + $0x4a0] sm:$0xff]
                %344 = vst [vmem:[%s194 + $0x250] sm:$0xff] %v343
                %v345 = vld [vmem:[%s193 + $0x4a8] sm:$0xff]
                %346 = vst [vmem:[%s194 + $0x258] sm:$0xff] %v345
                %v347 = vld [vmem:[%s193 + $0x4c0] sm:$0xff]
                %348 = vst [vmem:[%s194 + $0x260] sm:$0xff] %v347
                %v349 = vld [vmem:[%s193 + $0x4c8] sm:$0xff]
                %350 = vst [vmem:[%s194 + $0x268] sm:$0xff] %v349
                %v351 = vld [vmem:[%s193 + $0x4e0] sm:$0xff]
                %352 = vst [vmem:[%s194 + $0x270] sm:$0xff] %v351
                %v353 = vld [vmem:[%s193 + $0x4e8] sm:$0xff]
                %354 = vst [vmem:[%s194 + $0x278] sm:$0xff] %v353
                %v355 = vld [vmem:[%s193 + $0x500] sm:$0xff]
                %356 = vst [vmem:[%s194 + $0x280] sm:$0xff] %v355
                %v357 = vld [vmem:[%s193 + $0x508] sm:$0xff]
                %358 = vst [vmem:[%s194 + $0x288] sm:$0xff] %v357
                %v359 = vld [vmem:[%s193 + $0x520] sm:$0xff]
                %360 = vst [vmem:[%s194 + $0x290] sm:$0xff] %v359
                %v361 = vld [vmem:[%s193 + $0x528] sm:$0xff]
                %362 = vst [vmem:[%s194 + $0x298] sm:$0xff] %v361
                %v363 = vld [vmem:[%s193 + $0x540] sm:$0xff]
                %364 = vst [vmem:[%s194 + $0x2a0] sm:$0xff] %v363
                %v365 = vld [vmem:[%s193 + $0x548] sm:$0xff]
                %366 = vst [vmem:[%s194 + $0x2a8] sm:$0xff] %v365
                %v367 = vld [vmem:[%s193 + $0x560] sm:$0xff]
                %368 = vst [vmem:[%s194 + $0x2b0] sm:$0xff] %v367
                %v369 = vld [vmem:[%s193 + $0x568] sm:$0xff]
                %370 = vst [vmem:[%s194 + $0x2b8] sm:$0xff] %v369
                %v371 = vld [vmem:[%s193 + $0x580] sm:$0xff]
                %372 = vst [vmem:[%s194 + $0x2c0] sm:$0xff] %v371
                %v373 = vld [vmem:[%s193 + $0x588] sm:$0xff]
                %374 = vst [vmem:[%s194 + $0x2c8] sm:$0xff] %v373
                %v375 = vld [vmem:[%s193 + $0x5a0] sm:$0xff]
                %376 = vst [vmem:[%s194 + $0x2d0] sm:$0xff] %v375
                %v377 = vld [vmem:[%s193 + $0x5a8] sm:$0xff]
                %378 = vst [vmem:[%s194 + $0x2d8] sm:$0xff] %v377
                %v379 = vld [vmem:[%s193 + $0x5c0] sm:$0xff]
                %380 = vst [vmem:[%s194 + $0x2e0] sm:$0xff] %v379
                %v381 = vld [vmem:[%s193 + $0x5c8] sm:$0xff]
                %382 = vst [vmem:[%s194 + $0x2e8] sm:$0xff] %v381
                %v383 = vld [vmem:[%s193 + $0x5e0] sm:$0xff]
                %384 = vst [vmem:[%s194 + $0x2f0] sm:$0xff] %v383
                %v385 = vld [vmem:[%s193 + $0x5e8] sm:$0xff]
                %386 = vst [vmem:[%s194 + $0x2f8] sm:$0xff] %v385
                %v387 = vld [vmem:[%s193 + $0x600] sm:$0xff]
                %388 = vst [vmem:[%s194 + $0x300] sm:$0xff] %v387
                %v389 = vld [vmem:[%s193 + $0x608] sm:$0xff]
                %390 = vst [vmem:[%s194 + $0x308] sm:$0xff] %v389
                %v391 = vld [vmem:[%s193 + $0x620] sm:$0xff]
                %392 = vst [vmem:[%s194 + $0x310] sm:$0xff] %v391
                %v393 = vld [vmem:[%s193 + $0x628] sm:$0xff]
                %394 = vst [vmem:[%s194 + $0x318] sm:$0xff] %v393
                %v395 = vld [vmem:[%s193 + $0x640] sm:$0xff]
                %396 = vst [vmem:[%s194 + $0x320] sm:$0xff] %v395
                %v397 = vld [vmem:[%s193 + $0x648] sm:$0xff]
                %398 = vst [vmem:[%s194 + $0x328] sm:$0xff] %v397
                %v399 = vld [vmem:[%s193 + $0x660] sm:$0xff]
                %400 = vst [vmem:[%s194 + $0x330] sm:$0xff] %v399
                %v401 = vld [vmem:[%s193 + $0x668] sm:$0xff]
                %402 = vst [vmem:[%s194 + $0x338] sm:$0xff] %v401
                %v403 = vld [vmem:[%s193 + $0x680] sm:$0xff]
                %404 = vst [vmem:[%s194 + $0x340] sm:$0xff] %v403
                %v405 = vld [vmem:[%s193 + $0x688] sm:$0xff]
                %406 = vst [vmem:[%s194 + $0x348] sm:$0xff] %v405
                %v407 = vld [vmem:[%s193 + $0x6a0] sm:$0xff]
                %408 = vst [vmem:[%s194 + $0x350] sm:$0xff] %v407
                %v409 = vld [vmem:[%s193 + $0x6a8] sm:$0xff]
                %410 = vst [vmem:[%s194 + $0x358] sm:$0xff] %v409
                %v411 = vld [vmem:[%s193 + $0x6c0] sm:$0xff]
                %412 = vst [vmem:[%s194 + $0x360] sm:$0xff] %v411
                %v413 = vld [vmem:[%s193 + $0x6c8] sm:$0xff]
                %414 = vst [vmem:[%s194 + $0x368] sm:$0xff] %v413
                %v415 = vld [vmem:[%s193 + $0x6e0] sm:$0xff]
                %416 = vst [vmem:[%s194 + $0x370] sm:$0xff] %v415
                %v417 = vld [vmem:[%s193 + $0x6e8] sm:$0xff]
                %418 = vst [vmem:[%s194 + $0x378] sm:$0xff] %v417
                %v419 = vld [vmem:[%s193 + $0x700] sm:$0xff]
                %420 = vst [vmem:[%s194 + $0x380] sm:$0xff] %v419
                %v421 = vld [vmem:[%s193 + $0x708] sm:$0xff]
                %422 = vst [vmem:[%s194 + $0x388] sm:$0xff] %v421
                %v423 = vld [vmem:[%s193 + $0x720] sm:$0xff]
                %424 = vst [vmem:[%s194 + $0x390] sm:$0xff] %v423
                %v425 = vld [vmem:[%s193 + $0x728] sm:$0xff]
                %426 = vst [vmem:[%s194 + $0x398] sm:$0xff] %v425
                %v427 = vld [vmem:[%s193 + $0x740] sm:$0xff]
                %428 = vst [vmem:[%s194 + $0x3a0] sm:$0xff] %v427
                %v429 = vld [vmem:[%s193 + $0x748] sm:$0xff]
                %430 = vst [vmem:[%s194 + $0x3a8] sm:$0xff] %v429
                %v431 = vld [vmem:[%s193 + $0x760] sm:$0xff]
                %432 = vst [vmem:[%s194 + $0x3b0] sm:$0xff] %v431
                %v433 = vld [vmem:[%s193 + $0x768] sm:$0xff]
                %434 = vst [vmem:[%s194 + $0x3b8] sm:$0xff] %v433
                %v435 = vld [vmem:[%s193 + $0x780] sm:$0xff]
                %436 = vst [vmem:[%s194 + $0x3c0] sm:$0xff] %v435
                %v437 = vld [vmem:[%s193 + $0x788] sm:$0xff]
                %438 = vst [vmem:[%s194 + $0x3c8] sm:$0xff] %v437
                %v439 = vld [vmem:[%s193 + $0x7a0] sm:$0xff]
                %440 = vst [vmem:[%s194 + $0x3d0] sm:$0xff] %v439
                %v441 = vld [vmem:[%s193 + $0x7a8] sm:$0xff]
                %442 = vst [vmem:[%s194 + $0x3d8] sm:$0xff] %v441
                %v443 = vld [vmem:[%s193 + $0x7c0] sm:$0xff]
                %444 = vst [vmem:[%s194 + $0x3e0] sm:$0xff] %v443
                %v445 = vld [vmem:[%s193 + $0x7c8] sm:$0xff]
                %446 = vst [vmem:[%s194 + $0x3e8] sm:$0xff] %v445
                %v447 = vld [vmem:[%s193 + $0x7e0] sm:$0xff]
                %448 = vst [vmem:[%s194 + $0x3f0] sm:$0xff] %v447
                %v449 = vld [vmem:[%s193 + $0x7e8] sm:$0xff]
                %450 = vst [vmem:[%s194 + $0x3f8] sm:$0xff] %v449
              $region37: #{_lambda_.14} parent=31 // loop_footer
                %s192 = sadd.s32 1, %s188
              $region38: #{_lambda_.14} parent=31 // loop_footer_branch
                %187 = sbr.rel target = $region34
              $region39: #{_lambda_.14} parent=31 // loop_exit
                _
            $region32: #{_lambda_.14} parent=27 // pred_fallthru
              _
            // Predicated region
            $region40: #{_lambda_.14} parent=27 // pred_check
              _
            $region41: #{_lambda_.14} parent=27 // pred_check_branch
              %452 = sbr.rel target = $region43
            $region42: #{_lambda_.14} parent=27 // pred_region
              _
            $region43: #{_lambda_.14} parent=27 // pred_fallthru
              _
          $region28: #{_lambda_.14} parent=23 // pred_fallthru
            _
          %453 = vnop
        $region24: #{_lambda_.14} parent=15 // pred_fallthru
          _
        // Predicated region
        $region44: #{_lambda_.14} parent=15 // pred_check
          %p454 = pneg %p104
        $region45: #{_lambda_.14} parent=15 // pred_check_branch
          %456 = sbr.rel (%p454) target = $region47
        $region46: #{_lambda_.14} parent=15 // pred_region
          %s457 = smul.u32 4, %s17
          %p458 = scmp.lt.s32.totalorder %s457, 7
          %s459 = scalar_select %p458, %s457, 7
          %s460 = scalar_lea.vmem %s2, %s459
          %s461 = smul.u32 4, %s17
        $region47: #{_lambda_.14} parent=15 // pred_fallthru
          _
      $region16: #{_lambda_.14} parent=5 // pred_fallthru
        _
      %p462 = scmp.le.s32.totalorder 1, %s9
      %p463 = scmp.lt.s32.totalorder %s9, 5
      %p464 = pnand %p462, %p463
      %p465 = pneg %p464
      // Predicated region
      $region48: #{_lambda_.14} parent=5 // pred_check
        _
      $region49: #{_lambda_.14} parent=5 // pred_check_branch
        %467 = sbr.rel (%p464) target = $region51
      $region50: #{_lambda_.14} parent=5 // pred_region
        %s468 = ssub.s32 %s9, 1
        %s469 = sand.u32 %s71, 1
        %s470 = sand.u32 %s71, 1
        %s471 = smul.addr %s470, 1024
        %s472 = scalar_lea.vmem [#allocation3], %s471
        // Predicated region
        $region52: #{_lambda_.14} parent=50 // pred_check
          %p473 = pneg %p84
        $region53: #{_lambda_.14} parent=50 // pred_check_branch
          %475 = sbr.rel (%p473) target = $region55
        $region54: #{_lambda_.14} parent=50 // pred_region
          _
        $region55: #{_lambda_.14} parent=50 // pred_fallthru
          _
        %s476 = smul.u32 4, %s21
        %p477 = scmp.lt.s32.totalorder %s19, 0
        %s478 = scalar_select %p477, %s19, 0
        %p479 = scmp.lt.s32.totalorder %s476, 7
        %s480 = scalar_select %p479, %s476, 7
        %s481 = smul.addr %s478, 8
        %s482 = sadd.s32 %s480, %s481
        %s483 = smul.addr %s482, 4
        %s484 = scalar_lea.vmem %s0, %s483
        %p485 = pneg %p56
        %p486 = pneg %p53
        %s487 = sand.u32 %s71, 1
        %s488 = sand.u32 %s71, 1
        %s489 = smul.addr %s488, 1024
        %s490 = scalar_lea.vmem [#allocation3], %s489
        %p491 = pneg %p84
        %p492 = pneg %p81
        %s493 = smul.u32 4, %s20
        %p494 = scmp.lt.s32.totalorder %s493, 7
        %s495 = scalar_select %p494, %s493, 7
        %s496 = scalar_lea.vmem %s2, %s495
        %p497 = pneg %p110
        %p498 = pneg %p107
        %p499 = pneg %p138
        %p500 = pneg %p135
        %s501 = smul.u32 4, %s20
        %p502 = scmp.lt.s32.totalorder %s19, 0
        %s503 = scalar_select %p502, %s19, 0
        %p504 = scmp.lt.s32.totalorder %s501, 7
        %s505 = scalar_select %p504, %s501, 7
        %s506 = smul.addr %s503, 8
        %s507 = sadd.s32 %s505, %s506
        %s508 = smul.addr %s507, 4
        %s509 = scalar_lea.vmem %s3, %s508
        %s510 = smul.u32 4, %s21
        %p511 = scmp.lt.s32.totalorder %s19, 0
        %s512 = scalar_select %p511, %s19, 0
        %p513 = scmp.lt.s32.totalorder %s510, 7
        %s514 = scalar_select %p513, %s510, 7
        %s515 = smul.addr %s512, 8
        %s516 = sadd.s32 %s514, %s515
        %s517 = smul.addr %s516, 4
        %s518 = scalar_lea.vmem %s0, %s517
        %s519 = smul.u32 4, %s21
        %s520 = smul.u32 64, %s21
        %s521 = smul.u32 4, %s20
        %s522 = smul.u32 4, %s20
        %p523 = scmp.lt.s32.totalorder %s522, 7
        %s524 = scalar_select %p523, %s522, 7
        %s525 = scalar_lea.vmem %s2, %s524
        %s526 = smul.u32 4, %s20
        %s527 = smul.u32 4, %s20
        %p528 = scmp.lt.s32.totalorder %s19, 0
        %s529 = scalar_select %p528, %s19, 0
        %p530 = scmp.lt.s32.totalorder %s527, 7
        %s531 = scalar_select %p530, %s527, 7
        %s532 = smul.addr %s529, 8
        %s533 = sadd.s32 %s531, %s532
        %s534 = smul.addr %s533, 4
        %s535 = scalar_lea.vmem %s3, %s534
        %s536 = smul.u32 4, %s20
        %p537 = scmp.eq.s32.totalorder %s21, 0
        // Predicated region
        $region56: #{_lambda_.14} parent=50 // pred_check
          %p538 = pneg %p537
        $region57: #{_lambda_.14} parent=50 // pred_check_branch
          %540 = sbr.rel (%p538) target = $region59
        $region58: #{_lambda_.14} parent=50 // pred_region
          %541 = vst [vmem:[#allocation2] sm:$0xff] 0.0
          %542 = vst [vmem:[#allocation2 + $0x8] sm:$0xff] 0.0
          %543 = vst [vmem:[#allocation2 + $0x10] sm:$0xff] 0.0
          %544 = vst [vmem:[#allocation2 + $0x18] sm:$0xff] 0.0
        $region59: #{_lambda_.14} parent=50 // pred_fallthru
          _
        %v545 = vld [vmem:[#allocation2] sm:$0xff]
        %v546 = vld [vmem:[#allocation2 + $0x8] sm:$0xff]
        %v547 = vld [vmem:[#allocation2 + $0x10] sm:$0xff]
        %v548 = vld [vmem:[#allocation2 + $0x18] sm:$0xff]
        %v549 = vld [vmem:[%s518] sm:$0xff]
        %v550 = vld [vmem:[%s518 + $0x8] sm:$0xff]
        %v551 = vld [vmem:[%s472] sm:$0xff]
        %v552 = vld [vmem:[%s472 + $0x8] sm:$0xff]
        %v553 = vld [vmem:[%s472 + $0x10] sm:$0xff]
        %v554 = vld [vmem:[%s472 + $0x18] sm:$0xff]
        %v555 = vld [vmem:[%s472 + $0x20] sm:$0xff]
        %v556 = vld [vmem:[%s472 + $0x28] sm:$0xff]
        %v557 = vld [vmem:[%s472 + $0x30] sm:$0xff]
        %v558 = vld [vmem:[%s472 + $0x38] sm:$0xff]
        %v559 = vld [vmem:[%s472 + $0x40] sm:$0xff]
        %v560 = vld [vmem:[%s472 + $0x48] sm:$0xff]
        %v561 = vld [vmem:[%s472 + $0x50] sm:$0xff]
        %v562 = vld [vmem:[%s472 + $0x58] sm:$0xff]
        %v563 = vld [vmem:[%s472 + $0x60] sm:$0xff]
        %v564 = vld [vmem:[%s472 + $0x68] sm:$0xff]
        %v565 = vld [vmem:[%s472 + $0x70] sm:$0xff]
        %v566 = vld [vmem:[%s472 + $0x78] sm:$0xff]
        %v567 = vld [vmem:[%s472 + $0x80] sm:$0xff]
        %v568 = vld [vmem:[%s472 + $0x88] sm:$0xff]
        %v569 = vld [vmem:[%s472 + $0x90] sm:$0xff]
        %v570 = vld [vmem:[%s472 + $0x98] sm:$0xff]
        %v571 = vld [vmem:[%s472 + $0xa0] sm:$0xff]
        %v572 = vld [vmem:[%s472 + $0xa8] sm:$0xff]
        %v573 = vld [vmem:[%s472 + $0xb0] sm:$0xff]
        %v574 = vld [vmem:[%s472 + $0xb8] sm:$0xff]
        %v575 = vld [vmem:[%s472 + $0xc0] sm:$0xff]
        %v576 = vld [vmem:[%s472 + $0xc8] sm:$0xff]
        %v577 = vld [vmem:[%s472 + $0xd0] sm:$0xff]
        %v578 = vld [vmem:[%s472 + $0xd8] sm:$0xff]
        %v579 = vld [vmem:[%s472 + $0xe0] sm:$0xff]
        %v580 = vld [vmem:[%s472 + $0xe8] sm:$0xff]
        %v581 = vld [vmem:[%s472 + $0xf0] sm:$0xff]
        %v582 = vld [vmem:[%s472 + $0xf8] sm:$0xff]
        %v583 = vld [vmem:[%s472 + $0x100] sm:$0xff]
        %v584 = vld [vmem:[%s472 + $0x108] sm:$0xff]
        %v585 = vld [vmem:[%s472 + $0x110] sm:$0xff]
        %v586 = vld [vmem:[%s472 + $0x118] sm:$0xff]
        %v587 = vld [vmem:[%s472 + $0x120] sm:$0xff]
        %v588 = vld [vmem:[%s472 + $0x128] sm:$0xff]
        %v589 = vld [vmem:[%s472 + $0x130] sm:$0xff]
        %v590 = vld [vmem:[%s472 + $0x138] sm:$0xff]
        %v591 = vld [vmem:[%s472 + $0x140] sm:$0xff]
        %v592 = vld [vmem:[%s472 + $0x148] sm:$0xff]
        %v593 = vld [vmem:[%s472 + $0x150] sm:$0xff]
        %v594 = vld [vmem:[%s472 + $0x158] sm:$0xff]
        %v595 = vld [vmem:[%s472 + $0x160] sm:$0xff]
        %v596 = vld [vmem:[%s472 + $0x168] sm:$0xff]
        %v597 = vld [vmem:[%s472 + $0x170] sm:$0xff]
        %v598 = vld [vmem:[%s472 + $0x178] sm:$0xff]
        %v599 = vld [vmem:[%s472 + $0x180] sm:$0xff]
        %v600 = vld [vmem:[%s472 + $0x188] sm:$0xff]
        %v601 = vld [vmem:[%s472 + $0x190] sm:$0xff]
        %v602 = vld [vmem:[%s472 + $0x198] sm:$0xff]
        %v603 = vld [vmem:[%s472 + $0x1a0] sm:$0xff]
        %v604 = vld [vmem:[%s472 + $0x1a8] sm:$0xff]
        %v605 = vld [vmem:[%s472 + $0x1b0] sm:$0xff]
        %v606 = vld [vmem:[%s472 + $0x1b8] sm:$0xff]
        %v607 = vld [vmem:[%s472 + $0x1c0] sm:$0xff]
        %v608 = vld [vmem:[%s472 + $0x1c8] sm:$0xff]
        %v609 = vld [vmem:[%s472 + $0x1d0] sm:$0xff]
        %v610 = vld [vmem:[%s472 + $0x1d8] sm:$0xff]
        %v611 = vld [vmem:[%s472 + $0x1e0] sm:$0xff]
        %v612 = vld [vmem:[%s472 + $0x1e8] sm:$0xff]
        %v613 = vld [vmem:[%s472 + $0x1f0] sm:$0xff]
        %v614 = vld [vmem:[%s472 + $0x1f8] sm:$0xff]
        %v615 = vld [vmem:[%s472 + $0x200] sm:$0xff]
        %v616 = vld [vmem:[%s472 + $0x208] sm:$0xff]
        %v617 = vld [vmem:[%s472 + $0x210] sm:$0xff]
        %v618 = vld [vmem:[%s472 + $0x218] sm:$0xff]
        %v619 = vld [vmem:[%s472 + $0x220] sm:$0xff]
        %v620 = vld [vmem:[%s472 + $0x228] sm:$0xff]
        %v621 = vld [vmem:[%s472 + $0x230] sm:$0xff]
        %v622 = vld [vmem:[%s472 + $0x238] sm:$0xff]
        %v623 = vld [vmem:[%s472 + $0x240] sm:$0xff]
        %v624 = vld [vmem:[%s472 + $0x248] sm:$0xff]
        %v625 = vld [vmem:[%s472 + $0x250] sm:$0xff]
        %v626 = vld [vmem:[%s472 + $0x258] sm:$0xff]
        %v627 = vld [vmem:[%s472 + $0x260] sm:$0xff]
        %v628 = vld [vmem:[%s472 + $0x268] sm:$0xff]
        %v629 = vld [vmem:[%s472 + $0x270] sm:$0xff]
        %v630 = vld [vmem:[%s472 + $0x278] sm:$0xff]
        %v631 = vld [vmem:[%s472 + $0x280] sm:$0xff]
        %v632 = vld [vmem:[%s472 + $0x288] sm:$0xff]
        %v633 = vld [vmem:[%s472 + $0x290] sm:$0xff]
        %v634 = vld [vmem:[%s472 + $0x298] sm:$0xff]
        %v635 = vld [vmem:[%s472 + $0x2a0] sm:$0xff]
        %v636 = vld [vmem:[%s472 + $0x2a8] sm:$0xff]
        %v637 = vld [vmem:[%s472 + $0x2b0] sm:$0xff]
        %v638 = vld [vmem:[%s472 + $0x2b8] sm:$0xff]
        %v639 = vld [vmem:[%s472 + $0x2c0] sm:$0xff]
        %v640 = vld [vmem:[%s472 + $0x2c8] sm:$0xff]
        %v641 = vld [vmem:[%s472 + $0x2d0] sm:$0xff]
        %v642 = vld [vmem:[%s472 + $0x2d8] sm:$0xff]
        %v643 = vld [vmem:[%s472 + $0x2e0] sm:$0xff]
        %v644 = vld [vmem:[%s472 + $0x2e8] sm:$0xff]
        %v645 = vld [vmem:[%s472 + $0x2f0] sm:$0xff]
        %v646 = vld [vmem:[%s472 + $0x2f8] sm:$0xff]
        %v647 = vld [vmem:[%s472 + $0x300] sm:$0xff]
        %v648 = vld [vmem:[%s472 + $0x308] sm:$0xff]
        %v649 = vld [vmem:[%s472 + $0x310] sm:$0xff]
        %v650 = vld [vmem:[%s472 + $0x318] sm:$0xff]
        %v651 = vld [vmem:[%s472 + $0x320] sm:$0xff]
        %v652 = vld [vmem:[%s472 + $0x328] sm:$0xff]
        %v653 = vld [vmem:[%s472 + $0x330] sm:$0xff]
        %v654 = vld [vmem:[%s472 + $0x338] sm:$0xff]
        %v655 = vld [vmem:[%s472 + $0x340] sm:$0xff]
        %v656 = vld [vmem:[%s472 + $0x348] sm:$0xff]
        %v657 = vld [vmem:[%s472 + $0x350] sm:$0xff]
        %v658 = vld [vmem:[%s472 + $0x358] sm:$0xff]
        %v659 = vld [vmem:[%s472 + $0x360] sm:$0xff]
        %v660 = vld [vmem:[%s472 + $0x368] sm:$0xff]
        %v661 = vld [vmem:[%s472 + $0x370] sm:$0xff]
        %v662 = vld [vmem:[%s472 + $0x378] sm:$0xff]
        %v663 = vld [vmem:[%s472 + $0x380] sm:$0xff]
        %v664 = vld [vmem:[%s472 + $0x388] sm:$0xff]
        %v665 = vld [vmem:[%s472 + $0x390] sm:$0xff]
        %v666 = vld [vmem:[%s472 + $0x398] sm:$0xff]
        %v667 = vld [vmem:[%s472 + $0x3a0] sm:$0xff]
        %v668 = vld [vmem:[%s472 + $0x3a8] sm:$0xff]
        %v669 = vld [vmem:[%s472 + $0x3b0] sm:$0xff]
        %v670 = vld [vmem:[%s472 + $0x3b8] sm:$0xff]
        %v671 = vld [vmem:[%s472 + $0x3c0] sm:$0xff]
        %v672 = vld [vmem:[%s472 + $0x3c8] sm:$0xff]
        %v673 = vld [vmem:[%s472 + $0x3d0] sm:$0xff]
        %v674 = vld [vmem:[%s472 + $0x3d8] sm:$0xff]
        %v675 = vld [vmem:[%s472 + $0x3e0] sm:$0xff]
        %v676 = vld [vmem:[%s472 + $0x3e8] sm:$0xff]
        %v677 = vld [vmem:[%s472 + $0x3f0] sm:$0xff]
        %v678 = vld [vmem:[%s472 + $0x3f8] sm:$0xff]
        %v681 = vunpack.c.l.b16 %v549
        %v682 = vunpack.c.h.b16 %v549
        %v683 = vunpack.c.l.b16 %v550
        %v684 = vunpack.c.h.b16 %v550
        %v685 = vpack.c.b16 %v681, %v681
        %v686 = vpack.c.b16 %v682, %v682
        %v687 = vpack.c.b16 %v683, %v683
        %v688 = vpack.c.b16 %v684, %v684
        %v821 = vunpack.c.l.b16 %v551
        %v822 = vunpack.c.h.b16 %v551
        %v823 = vunpack.c.l.b16 %v552
        %v824 = vunpack.c.h.b16 %v552
        %v825 = vunpack.c.l.b16 %v553
        %v826 = vunpack.c.h.b16 %v553
        %v827 = vunpack.c.l.b16 %v554
        %v828 = vunpack.c.h.b16 %v554
        %v829 = vunpack.c.l.b16 %v555
        %v830 = vunpack.c.h.b16 %v555
        %v831 = vunpack.c.l.b16 %v556
        %v832 = vunpack.c.h.b16 %v556
        %v833 = vunpack.c.l.b16 %v557
        %v834 = vunpack.c.h.b16 %v557
        %v835 = vunpack.c.l.b16 %v558
        %v836 = vunpack.c.h.b16 %v558
        %v837 = vunpack.c.l.b16 %v559
        %v838 = vunpack.c.h.b16 %v559
        %v839 = vunpack.c.l.b16 %v560
        %v840 = vunpack.c.h.b16 %v560
        %v841 = vunpack.c.l.b16 %v561
        %v842 = vunpack.c.h.b16 %v561
        %v843 = vunpack.c.l.b16 %v562
        %v844 = vunpack.c.h.b16 %v562
        %v845 = vunpack.c.l.b16 %v563
        %v846 = vunpack.c.h.b16 %v563
        %v847 = vunpack.c.l.b16 %v564
        %v848 = vunpack.c.h.b16 %v564
        %v849 = vunpack.c.l.b16 %v565
        %v850 = vunpack.c.h.b16 %v565
        %v851 = vunpack.c.l.b16 %v566
        %v852 = vunpack.c.h.b16 %v566
        %v853 = vunpack.c.l.b16 %v567
        %v854 = vunpack.c.h.b16 %v567
        %v855 = vunpack.c.l.b16 %v568
        %v856 = vunpack.c.h.b16 %v568
        %v857 = vunpack.c.l.b16 %v569
        %v858 = vunpack.c.h.b16 %v569
        %v859 = vunpack.c.l.b16 %v570
        %v860 = vunpack.c.h.b16 %v570
        %v861 = vunpack.c.l.b16 %v571
        %v862 = vunpack.c.h.b16 %v571
        %v863 = vunpack.c.l.b16 %v572
        %v864 = vunpack.c.h.b16 %v572
        %v865 = vunpack.c.l.b16 %v573
        %v866 = vunpack.c.h.b16 %v573
        %v867 = vunpack.c.l.b16 %v574
        %v868 = vunpack.c.h.b16 %v574
        %v869 = vunpack.c.l.b16 %v575
        %v870 = vunpack.c.h.b16 %v575
        %v871 = vunpack.c.l.b16 %v576
        %v872 = vunpack.c.h.b16 %v576
        %v873 = vunpack.c.l.b16 %v577
        %v874 = vunpack.c.h.b16 %v577
        %v875 = vunpack.c.l.b16 %v578
        %v876 = vunpack.c.h.b16 %v578
        %v877 = vunpack.c.l.b16 %v579
        %v878 = vunpack.c.h.b16 %v579
        %v879 = vunpack.c.l.b16 %v580
        %v880 = vunpack.c.h.b16 %v580
        %v881 = vunpack.c.l.b16 %v581
        %v882 = vunpack.c.h.b16 %v581
        %v883 = vunpack.c.l.b16 %v582
        %v884 = vunpack.c.h.b16 %v582
        %v885 = vunpack.c.l.b16 %v583
        %v886 = vunpack.c.h.b16 %v583
        %v887 = vunpack.c.l.b16 %v584
        %v888 = vunpack.c.h.b16 %v584
        %v889 = vunpack.c.l.b16 %v585
        %v890 = vunpack.c.h.b16 %v585
        %v891 = vunpack.c.l.b16 %v586
        %v892 = vunpack.c.h.b16 %v586
        %v893 = vunpack.c.l.b16 %v587
        %v894 = vunpack.c.h.b16 %v587
        %v895 = vunpack.c.l.b16 %v588
        %v896 = vunpack.c.h.b16 %v588
        %v897 = vunpack.c.l.b16 %v589
        %v898 = vunpack.c.h.b16 %v589
        %v899 = vunpack.c.l.b16 %v590
        %v900 = vunpack.c.h.b16 %v590
        %v901 = vunpack.c.l.b16 %v591
        %v902 = vunpack.c.h.b16 %v591
        %v903 = vunpack.c.l.b16 %v592
        %v904 = vunpack.c.h.b16 %v592
        %v905 = vunpack.c.l.b16 %v593
        %v906 = vunpack.c.h.b16 %v593
        %v907 = vunpack.c.l.b16 %v594
        %v908 = vunpack.c.h.b16 %v594
        %v909 = vunpack.c.l.b16 %v595
        %v910 = vunpack.c.h.b16 %v595
        %v911 = vunpack.c.l.b16 %v596
        %v912 = vunpack.c.h.b16 %v596
        %v913 = vunpack.c.l.b16 %v597
        %v914 = vunpack.c.h.b16 %v597
        %v915 = vunpack.c.l.b16 %v598
        %v916 = vunpack.c.h.b16 %v598
        %v917 = vunpack.c.l.b16 %v599
        %v918 = vunpack.c.h.b16 %v599
        %v919 = vunpack.c.l.b16 %v600
        %v920 = vunpack.c.h.b16 %v600
        %v921 = vunpack.c.l.b16 %v601
        %v922 = vunpack.c.h.b16 %v601
        %v923 = vunpack.c.l.b16 %v602
        %v924 = vunpack.c.h.b16 %v602
        %v925 = vunpack.c.l.b16 %v603
        %v926 = vunpack.c.h.b16 %v603
        %v927 = vunpack.c.l.b16 %v604
        %v928 = vunpack.c.h.b16 %v604
        %v929 = vunpack.c.l.b16 %v605
        %v930 = vunpack.c.h.b16 %v605
        %v931 = vunpack.c.l.b16 %v606
        %v932 = vunpack.c.h.b16 %v606
        %v933 = vunpack.c.l.b16 %v607
        %v934 = vunpack.c.h.b16 %v607
        %v935 = vunpack.c.l.b16 %v608
        %v936 = vunpack.c.h.b16 %v608
        %v937 = vunpack.c.l.b16 %v609
        %v938 = vunpack.c.h.b16 %v609
        %v939 = vunpack.c.l.b16 %v610
        %v940 = vunpack.c.h.b16 %v610
        %v941 = vunpack.c.l.b16 %v611
        %v942 = vunpack.c.h.b16 %v611
        %v943 = vunpack.c.l.b16 %v612
        %v944 = vunpack.c.h.b16 %v612
        %v945 = vunpack.c.l.b16 %v613
        %v946 = vunpack.c.h.b16 %v613
        %v947 = vunpack.c.l.b16 %v614
        %v948 = vunpack.c.h.b16 %v614
        %v949 = vunpack.c.l.b16 %v615
        %v950 = vunpack.c.h.b16 %v615
        %v951 = vunpack.c.l.b16 %v616
        %v952 = vunpack.c.h.b16 %v616
        %v953 = vunpack.c.l.b16 %v617
        %v954 = vunpack.c.h.b16 %v617
        %v955 = vunpack.c.l.b16 %v618
        %v956 = vunpack.c.h.b16 %v618
        %v957 = vunpack.c.l.b16 %v619
        %v958 = vunpack.c.h.b16 %v619
        %v959 = vunpack.c.l.b16 %v620
        %v960 = vunpack.c.h.b16 %v620
        %v961 = vunpack.c.l.b16 %v621
        %v962 = vunpack.c.h.b16 %v621
        %v963 = vunpack.c.l.b16 %v622
        %v964 = vunpack.c.h.b16 %v622
        %v965 = vunpack.c.l.b16 %v623
        %v966 = vunpack.c.h.b16 %v623
        %v967 = vunpack.c.l.b16 %v624
        %v968 = vunpack.c.h.b16 %v624
        %v969 = vunpack.c.l.b16 %v625
        %v970 = vunpack.c.h.b16 %v625
        %v971 = vunpack.c.l.b16 %v626
        %v972 = vunpack.c.h.b16 %v626
        %v973 = vunpack.c.l.b16 %v627
        %v974 = vunpack.c.h.b16 %v627
        %v975 = vunpack.c.l.b16 %v628
        %v976 = vunpack.c.h.b16 %v628
        %v977 = vunpack.c.l.b16 %v629
        %v978 = vunpack.c.h.b16 %v629
        %v979 = vunpack.c.l.b16 %v630
        %v980 = vunpack.c.h.b16 %v630
        %v981 = vunpack.c.l.b16 %v631
        %v982 = vunpack.c.h.b16 %v631
        %v983 = vunpack.c.l.b16 %v632
        %v984 = vunpack.c.h.b16 %v632
        %v985 = vunpack.c.l.b16 %v633
        %v986 = vunpack.c.h.b16 %v633
        %v987 = vunpack.c.l.b16 %v634
        %v988 = vunpack.c.h.b16 %v634
        %v989 = vunpack.c.l.b16 %v635
        %v990 = vunpack.c.h.b16 %v635
        %v991 = vunpack.c.l.b16 %v636
        %v992 = vunpack.c.h.b16 %v636
        %v993 = vunpack.c.l.b16 %v637
        %v994 = vunpack.c.h.b16 %v637
        %v995 = vunpack.c.l.b16 %v638
        %v996 = vunpack.c.h.b16 %v638
        %v997 = vunpack.c.l.b16 %v639
        %v998 = vunpack.c.h.b16 %v639
        %v999 = vunpack.c.l.b16 %v640
        %v1000 = vunpack.c.h.b16 %v640
        %v1001 = vunpack.c.l.b16 %v641
        %v1002 = vunpack.c.h.b16 %v641
        %v1003 = vunpack.c.l.b16 %v642
        %v1004 = vunpack.c.h.b16 %v642
        %v1005 = vunpack.c.l.b16 %v643
        %v1006 = vunpack.c.h.b16 %v643
        %v1007 = vunpack.c.l.b16 %v644
        %v1008 = vunpack.c.h.b16 %v644
        %v1009 = vunpack.c.l.b16 %v645
        %v1010 = vunpack.c.h.b16 %v645
        %v1011 = vunpack.c.l.b16 %v646
        %v1012 = vunpack.c.h.b16 %v646
        %v1013 = vunpack.c.l.b16 %v647
        %v1014 = vunpack.c.h.b16 %v647
        %v1015 = vunpack.c.l.b16 %v648
        %v1016 = vunpack.c.h.b16 %v648
        %v1017 = vunpack.c.l.b16 %v649
        %v1018 = vunpack.c.h.b16 %v649
        %v1019 = vunpack.c.l.b16 %v650
        %v1020 = vunpack.c.h.b16 %v650
        %v1021 = vunpack.c.l.b16 %v651
        %v1022 = vunpack.c.h.b16 %v651
        %v1023 = vunpack.c.l.b16 %v652
        %v1024 = vunpack.c.h.b16 %v652
        %v1025 = vunpack.c.l.b16 %v653
        %v1026 = vunpack.c.h.b16 %v653
        %v1027 = vunpack.c.l.b16 %v654
        %v1028 = vunpack.c.h.b16 %v654
        %v1029 = vunpack.c.l.b16 %v655
        %v1030 = vunpack.c.h.b16 %v655
        %v1031 = vunpack.c.l.b16 %v656
        %v1032 = vunpack.c.h.b16 %v656
        %v1033 = vunpack.c.l.b16 %v657
        %v1034 = vunpack.c.h.b16 %v657
        %v1035 = vunpack.c.l.b16 %v658
        %v1036 = vunpack.c.h.b16 %v658
        %v1037 = vunpack.c.l.b16 %v659
        %v1038 = vunpack.c.h.b16 %v659
        %v1039 = vunpack.c.l.b16 %v660
        %v1040 = vunpack.c.h.b16 %v660
        %v1041 = vunpack.c.l.b16 %v661
        %v1042 = vunpack.c.h.b16 %v661
        %v1043 = vunpack.c.l.b16 %v662
        %v1044 = vunpack.c.h.b16 %v662
        %v1045 = vunpack.c.l.b16 %v663
        %v1046 = vunpack.c.h.b16 %v663
        %v1047 = vunpack.c.l.b16 %v664
        %v1048 = vunpack.c.h.b16 %v664
        %v1049 = vunpack.c.l.b16 %v665
        %v1050 = vunpack.c.h.b16 %v665
        %v1051 = vunpack.c.l.b16 %v666
        %v1052 = vunpack.c.h.b16 %v666
        %v1053 = vunpack.c.l.b16 %v667
        %v1054 = vunpack.c.h.b16 %v667
        %v1055 = vunpack.c.l.b16 %v668
        %v1056 = vunpack.c.h.b16 %v668
        %v1057 = vunpack.c.l.b16 %v669
        %v1058 = vunpack.c.h.b16 %v669
        %v1059 = vunpack.c.l.b16 %v670
        %v1060 = vunpack.c.h.b16 %v670
        %v1061 = vunpack.c.l.b16 %v671
        %v1062 = vunpack.c.h.b16 %v671
        %v1063 = vunpack.c.l.b16 %v672
        %v1064 = vunpack.c.h.b16 %v672
        %v1065 = vunpack.c.l.b16 %v673
        %v1066 = vunpack.c.h.b16 %v673
        %v1067 = vunpack.c.l.b16 %v674
        %v1068 = vunpack.c.h.b16 %v674
        %v1069 = vunpack.c.l.b16 %v675
        %v1070 = vunpack.c.h.b16 %v675
        %v1071 = vunpack.c.l.b16 %v676
        %v1072 = vunpack.c.h.b16 %v676
        %v1073 = vunpack.c.l.b16 %v677
        %v1074 = vunpack.c.h.b16 %v677
        %v1075 = vunpack.c.l.b16 %v678
        %v1076 = vunpack.c.h.b16 %v678
        %v1077 = vpack.c.b16 %v825, %v821
        %v1078 = vpack.c.b16 %v826, %v822
        %v1079 = vpack.c.b16 %v827, %v823
        %v1080 = vpack.c.b16 %v828, %v824
        %v1081 = vpack.c.b16 %v833, %v829
        %v1082 = vpack.c.b16 %v834, %v830
        %v1083 = vpack.c.b16 %v835, %v831
        %v1084 = vpack.c.b16 %v836, %v832
        %v1085 = vpack.c.b16 %v841, %v837
        %v1086 = vpack.c.b16 %v842, %v838
        %v1087 = vpack.c.b16 %v843, %v839
        %v1088 = vpack.c.b16 %v844, %v840
        %v1089 = vpack.c.b16 %v849, %v845
        %v1090 = vpack.c.b16 %v850, %v846
        %v1091 = vpack.c.b16 %v851, %v847
        %v1092 = vpack.c.b16 %v852, %v848
        %v1093 = vpack.c.b16 %v857, %v853
        %v1094 = vpack.c.b16 %v858, %v854
        %v1095 = vpack.c.b16 %v859, %v855
        %v1096 = vpack.c.b16 %v860, %v856
        %v1097 = vpack.c.b16 %v865, %v861
        %v1098 = vpack.c.b16 %v866, %v862
        %v1099 = vpack.c.b16 %v867, %v863
        %v1100 = vpack.c.b16 %v868, %v864
        %v1101 = vpack.c.b16 %v873, %v869
        %v1102 = vpack.c.b16 %v874, %v870
        %v1103 = vpack.c.b16 %v875, %v871
        %v1104 = vpack.c.b16 %v876, %v872
        %v1105 = vpack.c.b16 %v881, %v877
        %v1106 = vpack.c.b16 %v882, %v878
        %v1107 = vpack.c.b16 %v883, %v879
        %v1108 = vpack.c.b16 %v884, %v880
        %v1109 = vpack.c.b16 %v889, %v885
        %v1110 = vpack.c.b16 %v890, %v886
        %v1111 = vpack.c.b16 %v891, %v887
        %v1112 = vpack.c.b16 %v892, %v888
        %v1113 = vpack.c.b16 %v897, %v893
        %v1114 = vpack.c.b16 %v898, %v894
        %v1115 = vpack.c.b16 %v899, %v895
        %v1116 = vpack.c.b16 %v900, %v896
        %v1117 = vpack.c.b16 %v905, %v901
        %v1118 = vpack.c.b16 %v906, %v902
        %v1119 = vpack.c.b16 %v907, %v903
        %v1120 = vpack.c.b16 %v908, %v904
        %v1121 = vpack.c.b16 %v913, %v909
        %v1122 = vpack.c.b16 %v914, %v910
        %v1123 = vpack.c.b16 %v915, %v911
        %v1124 = vpack.c.b16 %v916, %v912
        %v1125 = vpack.c.b16 %v921, %v917
        %v1126 = vpack.c.b16 %v922, %v918
        %v1127 = vpack.c.b16 %v923, %v919
        %v1128 = vpack.c.b16 %v924, %v920
        %v1129 = vpack.c.b16 %v929, %v925
        %v1130 = vpack.c.b16 %v930, %v926
        %v1131 = vpack.c.b16 %v931, %v927
        %v1132 = vpack.c.b16 %v932, %v928
        %v1133 = vpack.c.b16 %v937, %v933
        %v1134 = vpack.c.b16 %v938, %v934
        %v1135 = vpack.c.b16 %v939, %v935
        %v1136 = vpack.c.b16 %v940, %v936
        %v1137 = vpack.c.b16 %v945, %v941
        %v1138 = vpack.c.b16 %v946, %v942
        %v1139 = vpack.c.b16 %v947, %v943
        %v1140 = vpack.c.b16 %v948, %v944
        %v1141 = vpack.c.b16 %v953, %v949
        %v1142 = vpack.c.b16 %v954, %v950
        %v1143 = vpack.c.b16 %v955, %v951
        %v1144 = vpack.c.b16 %v956, %v952
        %v1145 = vpack.c.b16 %v961, %v957
        %v1146 = vpack.c.b16 %v962, %v958
        %v1147 = vpack.c.b16 %v963, %v959
        %v1148 = vpack.c.b16 %v964, %v960
        %v1149 = vpack.c.b16 %v969, %v965
        %v1150 = vpack.c.b16 %v970, %v966
        %v1151 = vpack.c.b16 %v971, %v967
        %v1152 = vpack.c.b16 %v972, %v968
        %v1153 = vpack.c.b16 %v977, %v973
        %v1154 = vpack.c.b16 %v978, %v974
        %v1155 = vpack.c.b16 %v979, %v975
        %v1156 = vpack.c.b16 %v980, %v976
        %v1157 = vpack.c.b16 %v985, %v981
        %v1158 = vpack.c.b16 %v986, %v982
        %v1159 = vpack.c.b16 %v987, %v983
        %v1160 = vpack.c.b16 %v988, %v984
        %v1161 = vpack.c.b16 %v993, %v989
        %v1162 = vpack.c.b16 %v994, %v990
        %v1163 = vpack.c.b16 %v995, %v991
        %v1164 = vpack.c.b16 %v996, %v992
        %v1165 = vpack.c.b16 %v1001, %v997
        %v1166 = vpack.c.b16 %v1002, %v998
        %v1167 = vpack.c.b16 %v1003, %v999
        %v1168 = vpack.c.b16 %v1004, %v1000
        %v1169 = vpack.c.b16 %v1009, %v1005
        %v1170 = vpack.c.b16 %v1010, %v1006
        %v1171 = vpack.c.b16 %v1011, %v1007
        %v1172 = vpack.c.b16 %v1012, %v1008
        %v1173 = vpack.c.b16 %v1017, %v1013
        %v1174 = vpack.c.b16 %v1018, %v1014
        %v1175 = vpack.c.b16 %v1019, %v1015
        %v1176 = vpack.c.b16 %v1020, %v1016
        %v1177 = vpack.c.b16 %v1025, %v1021
        %v1178 = vpack.c.b16 %v1026, %v1022
        %v1179 = vpack.c.b16 %v1027, %v1023
        %v1180 = vpack.c.b16 %v1028, %v1024
        %v1181 = vpack.c.b16 %v1033, %v1029
        %v1182 = vpack.c.b16 %v1034, %v1030
        %v1183 = vpack.c.b16 %v1035, %v1031
        %v1184 = vpack.c.b16 %v1036, %v1032
        %v1185 = vpack.c.b16 %v1041, %v1037
        %v1186 = vpack.c.b16 %v1042, %v1038
        %v1187 = vpack.c.b16 %v1043, %v1039
        %v1188 = vpack.c.b16 %v1044, %v1040
        %v1189 = vpack.c.b16 %v1049, %v1045
        %v1190 = vpack.c.b16 %v1050, %v1046
        %v1191 = vpack.c.b16 %v1051, %v1047
        %v1192 = vpack.c.b16 %v1052, %v1048
        %v1193 = vpack.c.b16 %v1057, %v1053
        %v1194 = vpack.c.b16 %v1058, %v1054
        %v1195 = vpack.c.b16 %v1059, %v1055
        %v1196 = vpack.c.b16 %v1060, %v1056
        %v1197 = vpack.c.b16 %v1065, %v1061
        %v1198 = vpack.c.b16 %v1066, %v1062
        %v1199 = vpack.c.b16 %v1067, %v1063
        %v1200 = vpack.c.b16 %v1068, %v1064
        %v1201 = vpack.c.b16 %v1073, %v1069
        %v1202 = vpack.c.b16 %v1074, %v1070
        %v1203 = vpack.c.b16 %v1075, %v1071
        %v1204 = vpack.c.b16 %v1076, %v1072
        %1333 = vmatprep.subr.bf16.mxu0 %v1078
        %1334 = vmatpush1.bf16.msra.mxu0 %v1077
        %1335 = vmatprep.subr.bf16.mxu0 %v1082
        %1336 = vmatpush1.bf16.msra.mxu0 %v1081
        %1337 = vmatprep.subr.bf16.mxu0 %v1086
        %1338 = vmatpush1.bf16.msra.mxu0 %v1085
        %1339 = vmatprep.subr.bf16.mxu0 %v1090
        %1340 = vmatpush1.bf16.msra.mxu0 %v1089
        %1341 = vmatprep.subr.bf16.mxu0 %v1094
        %1342 = vmatpush1.bf16.msra.mxu0 %v1093
        %1343 = vmatprep.subr.bf16.mxu0 %v1098
        %1344 = vmatpush1.bf16.msra.mxu0 %v1097
        %1345 = vmatprep.subr.bf16.mxu0 %v1102
        %1346 = vmatpush1.bf16.msra.mxu0 %v1101
        %1347 = vmatprep.subr.bf16.mxu0 %v1106
        %1348 = vmatpush1.bf16.msra.mxu0 %v1105
        %1349 = vmatprep.subr.bf16.mxu0 %v1110
        %1350 = vmatpush1.bf16.msra.mxu0 %v1109
        %1351 = vmatprep.subr.bf16.mxu0 %v1114
        %1352 = vmatpush1.bf16.msra.mxu0 %v1113
        %1353 = vmatprep.subr.bf16.mxu0 %v1118
        %1354 = vmatpush1.bf16.msra.mxu0 %v1117
        %1355 = vmatprep.subr.bf16.mxu0 %v1122
        %1356 = vmatpush1.bf16.msra.mxu0 %v1121
        %1357 = vmatprep.subr.bf16.mxu0 %v1126
        %1358 = vmatpush1.bf16.msra.mxu0 %v1125
        %1359 = vmatprep.subr.bf16.mxu0 %v1130
        %1360 = vmatpush1.bf16.msra.mxu0 %v1129
        %1361 = vmatprep.subr.bf16.mxu0 %v1134
        %1362 = vmatpush1.bf16.msra.mxu0 %v1133
        %1363 = vmatprep.subr.bf16.mxu0 %v1138
        %1364 = vmatpush1.bf16.msra.mxu0 %v1137
        %1365 = vmatprep.mubr.bf16.mxu0 %v686
        %1366 = vmatmul.mubr.bf16.gmra.mrb[0].mxu0 %v685
        %v1367 = vpop.f32.mrb[0].mxu0
        %v1368 = vadd.f32 0.0, %v1367
        %v1369 = vpop.f32.mrb[0].mxu0
        %v1370 = vadd.f32 0.0, %v1369
        %v1371 = vpop.f32.mrb[0].mxu0
        %v1372 = vpop.f32.mrb[0].mxu0
        %1373 = vdwg.mxu0
        %1374 = vmatprep.subr.bf16.mxu0 %v1142
        %1375 = vmatpush1.bf16.msra.mxu0 %v1141
        %1376 = vmatprep.subr.bf16.mxu0 %v1146
        %1377 = vmatpush1.bf16.msra.mxu0 %v1145
        %1378 = vmatprep.subr.bf16.mxu0 %v1150
        %1379 = vmatpush1.bf16.msra.mxu0 %v1149
        %1380 = vmatprep.subr.bf16.mxu0 %v1154
        %1381 = vmatpush1.bf16.msra.mxu0 %v1153
        %1382 = vmatprep.subr.bf16.mxu0 %v1158
        %1383 = vmatpush1.bf16.msra.mxu0 %v1157
        %1384 = vmatprep.subr.bf16.mxu0 %v1162
        %1385 = vmatpush1.bf16.msra.mxu0 %v1161
        %1386 = vmatprep.subr.bf16.mxu0 %v1166
        %1387 = vmatpush1.bf16.msra.mxu0 %v1165
        %1388 = vmatprep.subr.bf16.mxu0 %v1170
        %1389 = vmatpush1.bf16.msra.mxu0 %v1169
        %1390 = vmatprep.subr.bf16.mxu0 %v1174
        %1391 = vmatpush1.bf16.msra.mxu0 %v1173
        %1392 = vmatprep.subr.bf16.mxu0 %v1178
        %1393 = vmatpush1.bf16.msra.mxu0 %v1177
        %1394 = vmatprep.subr.bf16.mxu0 %v1182
        %1395 = vmatpush1.bf16.msra.mxu0 %v1181
        %1396 = vmatprep.subr.bf16.mxu0 %v1186
        %1397 = vmatpush1.bf16.msra.mxu0 %v1185
        %1398 = vmatprep.subr.bf16.mxu0 %v1190
        %1399 = vmatpush1.bf16.msra.mxu0 %v1189
        %1400 = vmatprep.subr.bf16.mxu0 %v1194
        %1401 = vmatpush1.bf16.msra.mxu0 %v1193
        %1402 = vmatprep.subr.bf16.mxu0 %v1198
        %1403 = vmatpush1.bf16.msra.mxu0 %v1197
        %1404 = vmatprep.subr.bf16.mxu0 %v1202
        %1405 = vmatpush1.bf16.msra.mxu0 %v1201
        %1406 = vmatprep.mubr.bf16.mxu0 %v688
        %1407 = vmatmul.mubr.bf16.gmra.mrb[0].mxu0 %v687
        %v1408 = vpop.f32.mrb[0].mxu0
        %v1409 = vadd.f32 %v1368, %v1408
        %v1410 = vpop.f32.mrb[0].mxu0
        %v1411 = vadd.f32 %v1370, %v1410
        %v1412 = vpop.f32.mrb[0].mxu0
        %v1413 = vpop.f32.mrb[0].mxu0
        %1414 = vdwg.mxu0
        %1415 = vmatprep.subr.bf16.mxu0 %v1080
        %1416 = vmatpush1.bf16.msra.mxu0 %v1079
        %1417 = vmatprep.subr.bf16.mxu0 %v1084
        %1418 = vmatpush1.bf16.msra.mxu0 %v1083
        %1419 = vmatprep.subr.bf16.mxu0 %v1088
        %1420 = vmatpush1.bf16.msra.mxu0 %v1087
        %1421 = vmatprep.subr.bf16.mxu0 %v1092
        %1422 = vmatpush1.bf16.msra.mxu0 %v1091
        %1423 = vmatprep.subr.bf16.mxu0 %v1096
        %1424 = vmatpush1.bf16.msra.mxu0 %v1095
        %1425 = vmatprep.subr.bf16.mxu0 %v1100
        %1426 = vmatpush1.bf16.msra.mxu0 %v1099
        %1427 = vmatprep.subr.bf16.mxu0 %v1104
        %1428 = vmatpush1.bf16.msra.mxu0 %v1103
        %1429 = vmatprep.subr.bf16.mxu0 %v1108
        %1430 = vmatpush1.bf16.msra.mxu0 %v1107
        %1431 = vmatprep.subr.bf16.mxu0 %v1112
        %1432 = vmatpush1.bf16.msra.mxu0 %v1111
        %1433 = vmatprep.subr.bf16.mxu0 %v1116
        %1434 = vmatpush1.bf16.msra.mxu0 %v1115
        %1435 = vmatprep.subr.bf16.mxu0 %v1120
        %1436 = vmatpush1.bf16.msra.mxu0 %v1119
        %1437 = vmatprep.subr.bf16.mxu0 %v1124
        %1438 = vmatpush1.bf16.msra.mxu0 %v1123
        %1439 = vmatprep.subr.bf16.mxu0 %v1128
        %1440 = vmatpush1.bf16.msra.mxu0 %v1127
        %1441 = vmatprep.subr.bf16.mxu0 %v1132
        %1442 = vmatpush1.bf16.msra.mxu0 %v1131
        %1443 = vmatprep.subr.bf16.mxu0 %v1136
        %1444 = vmatpush1.bf16.msra.mxu0 %v1135
        %1445 = vmatprep.subr.bf16.mxu0 %v1140
        %1446 = vmatpush1.bf16.msra.mxu0 %v1139
        %1447 = vmatprep.mubr.bf16.mxu0 %v686
        %1448 = vmatmul.mubr.bf16.gmra.mrb[0].mxu0 %v685
        %v1449 = vpop.f32.mrb[0].mxu0
        %v1450 = vadd.f32 0.0, %v1449
        %v1451 = vpop.f32.mrb[0].mxu0
        %v1452 = vadd.f32 0.0, %v1451
        %v1453 = vpop.f32.mrb[0].mxu0
        %v1454 = vpop.f32.mrb[0].mxu0
        %1455 = vdwg.mxu0
        %1456 = vmatprep.subr.bf16.mxu0 %v1144
        %1457 = vmatpush1.bf16.msra.mxu0 %v1143
        %1458 = vmatprep.subr.bf16.mxu0 %v1148
        %1459 = vmatpush1.bf16.msra.mxu0 %v1147
        %1460 = vmatprep.subr.bf16.mxu0 %v1152
        %1461 = vmatpush1.bf16.msra.mxu0 %v1151
        %1462 = vmatprep.subr.bf16.mxu0 %v1156
        %1463 = vmatpush1.bf16.msra.mxu0 %v1155
        %1464 = vmatprep.subr.bf16.mxu0 %v1160
        %1465 = vmatpush1.bf16.msra.mxu0 %v1159
        %1466 = vmatprep.subr.bf16.mxu0 %v1164
        %1467 = vmatpush1.bf16.msra.mxu0 %v1163
        %1468 = vmatprep.subr.bf16.mxu0 %v1168
        %1469 = vmatpush1.bf16.msra.mxu0 %v1167
        %1470 = vmatprep.subr.bf16.mxu0 %v1172
        %1471 = vmatpush1.bf16.msra.mxu0 %v1171
        %1472 = vmatprep.subr.bf16.mxu0 %v1176
        %1473 = vmatpush1.bf16.msra.mxu0 %v1175
        %1474 = vmatprep.subr.bf16.mxu0 %v1180
        %1475 = vmatpush1.bf16.msra.mxu0 %v1179
        %1476 = vmatprep.subr.bf16.mxu0 %v1184
        %1477 = vmatpush1.bf16.msra.mxu0 %v1183
        %1478 = vmatprep.subr.bf16.mxu0 %v1188
        %1479 = vmatpush1.bf16.msra.mxu0 %v1187
        %1480 = vmatprep.subr.bf16.mxu0 %v1192
        %1481 = vmatpush1.bf16.msra.mxu0 %v1191
        %1482 = vmatprep.subr.bf16.mxu0 %v1196
        %1483 = vmatpush1.bf16.msra.mxu0 %v1195
        %1484 = vmatprep.subr.bf16.mxu0 %v1200
        %1485 = vmatpush1.bf16.msra.mxu0 %v1199
        %1486 = vmatprep.subr.bf16.mxu0 %v1204
        %1487 = vmatpush1.bf16.msra.mxu0 %v1203
        %1488 = vmatprep.mubr.bf16.mxu0 %v688
        %1489 = vmatmul.mubr.bf16.gmra.mrb[0].mxu0 %v687
        %v1490 = vpop.f32.mrb[0].mxu0
        %v1491 = vadd.f32 %v1450, %v1490
        %v1492 = vpop.f32.mrb[0].mxu0
        %v1493 = vadd.f32 %v1452, %v1492
        %v1494 = vpop.f32.mrb[0].mxu0
        %v1495 = vpop.f32.mrb[0].mxu0
        %1496 = vdwg.mxu0
        %v1497 = vadd.f32 %v545, %v1409
        %v1498 = vadd.f32 %v546, %v1411
        %v1499 = vadd.f32 %v547, %v1491
        %v1500 = vadd.f32 %v548, %v1493
        %1501 = vst [vmem:[#allocation2] sm:$0xff] %v1497
        %1502 = vst [vmem:[#allocation2 + $0x8] sm:$0xff] %v1498
        %1503 = vst [vmem:[#allocation2 + $0x10] sm:$0xff] %v1499
        %1504 = vst [vmem:[#allocation2 + $0x18] sm:$0xff] %v1500
        %p1505 = scmp.eq.s32.totalorder %s21, 1
        // Predicated region
        $region60: #{_lambda_.14} parent=50 // pred_check
          %p1506 = pneg %p1505
        $region61: #{_lambda_.14} parent=50 // pred_check_branch
          %1508 = sbr.rel (%p1506) target = $region63
        $region62: #{_lambda_.14} parent=50 // pred_region
          %v1509 = vld [vmem:[#allocation2] sm:$0xff]
          %v1510 = vld [vmem:[#allocation2 + $0x8] sm:$0xff]
          %v1511 = vld [vmem:[#allocation2 + $0x10] sm:$0xff]
          %v1512 = vld [vmem:[#allocation2 + $0x18] sm:$0xff]
          %v1513 = vld [vmem:[%s525] sm:$0xf]
          %v1515 = vlaneseq
          %v1516 = vshrl.u32 %v1515, 7
          %v1517 = vsub.s32 0, %v1516
          %v1518 = vrot.slane %v1513, %v1517
          %v1519 = vlaneseq
          %v1520 = vshrl.u32 %v1519, 7
          %v1521 = vsub.s32 1, %v1520
          %v1522 = vrot.slane %v1513, %v1521
          %v1523 = vlaneseq
          %v1524 = vshrl.u32 %v1523, 7
          %v1525 = vsub.s32 2, %v1524
          %v1526 = vrot.slane %v1513, %v1525
          %v1527 = vlaneseq
          %v1528 = vshrl.u32 %v1527, 7
          %v1529 = vsub.s32 3, %v1528
          %v1530 = vrot.slane %v1513, %v1529
          %v1535 = vadd.f32 %v1509, %v1518
          %v1536 = vadd.f32 %v1510, %v1522
          %v1537 = vadd.f32 %v1511, %v1526
          %v1538 = vadd.f32 %v1512, %v1530
          %v1539 = vpack.c.bf16 %v1535, %v1535
          %v1540 = vpack.c.bf16 %v1536, %v1536
          %v1541 = vpack.c.bf16 %v1537, %v1537
          %v1542 = vpack.c.bf16 %v1538, %v1538
          %v1547 = vunpack.c.l.b16 %v1539
          %v1548 = vunpack.c.l.b16 %v1540
          %v1549 = vunpack.c.l.b16 %v1541
          %v1550 = vunpack.c.l.b16 %v1542
          %v1551 = vpack.c.b16 %v1548, %v1547
          %v1552 = vpack.c.b16 %v1550, %v1549
          %1555 = vst [vmem:[%s535] sm:$0xff] %v1551
          %1556 = vst [vmem:[%s535 + $0x8] sm:$0xff] %v1552
        $region63: #{_lambda_.14} parent=50 // pred_fallthru
          _
        %s1557 = smul.u32 4, %s20
        %p1558 = scmp.lt.s32.totalorder %s19, 0
        %s1559 = scalar_select %p1558, %s19, 0
        %p1560 = scmp.lt.s32.totalorder %s1557, 7
        %s1561 = scalar_select %p1560, %s1557, 7
        %s1562 = smul.addr %s1559, 8
        %s1563 = sadd.s32 %s1561, %s1562
        %s1564 = smul.addr %s1563, 4
        %s1565 = scalar_lea.vmem %s3, %s1564
        // Predicated region
        $region64: #{_lambda_.14} parent=50 // pred_check
          %p1566 = pneg %p135
        $region65: #{_lambda_.14} parent=50 // pred_check_branch
          %1568 = sbr.rel (%p1566) target = $region67
        $region66: #{_lambda_.14} parent=50 // pred_region
          %s1569 = smul.u32 4, %s20
        $region67: #{_lambda_.14} parent=50 // pred_fallthru
          _
      $region51: #{_lambda_.14} parent=5 // pred_fallthru
        _
      %p1570 = scmp.le.s32.totalorder 2, %s9
      // Predicated region
      $region68: #{_lambda_.14} parent=5 // pred_check
        %p1571 = pneg %p1570
      $region69: #{_lambda_.14} parent=5 // pred_check_branch
        %1573 = sbr.rel (%p1571) target = $region71
      $region70: #{_lambda_.14} parent=5 // pred_region
        %s1574 = ssub.s32 %s9, 2
        // Predicated region
        $region72: #{_lambda_.14} parent=70 // pred_check
          %p1575 = pneg %p141
        $region73: #{_lambda_.14} parent=70 // pred_check_branch
          %1577 = sbr.rel (%p1575) target = $region75
        $region74: #{_lambda_.14} parent=70 // pred_region
          %s1578 = smul.u32 4, %s23
          %p1579 = scmp.lt.s32.totalorder %s22, 0
          %s1580 = scalar_select %p1579, %s22, 0
          %p1581 = scmp.lt.s32.totalorder %s1578, 7
          %s1582 = scalar_select %p1581, %s1578, 7
          %s1583 = smul.addr %s1580, 8
          %s1584 = sadd.s32 %s1582, %s1583
          %s1585 = smul.addr %s1584, 4
          %s1586 = scalar_lea.vmem %s3, %s1585
        $region75: #{_lambda_.14} parent=70 // pred_fallthru
          _
      $region71: #{_lambda_.14} parent=5 // pred_fallthru
        _
    $region6: #{_lambda_.14} parent=1 // loop_footer
      %s13 = sadd.s32 1, %s9
    $region7: #{_lambda_.14} parent=1 // loop_footer_branch
      %8 = sbr.rel target = $region3
    $region8: #{_lambda_.14} parent=1 // loop_exit
      _

</llo_original>
